<compile_context>
chip_gen: v7x
topology: tpu7x:2x2x1
jax: 0.10.0
libtpu: 0.0.40
codegen_flags: <defaults>
</compile_context>

<pallas_src>
import numpy as np
import jax
import jax.numpy as jnp
from jax import lax
from jax.experimental import pallas as pl
from jax.experimental.pallas import tpu as pltpu

_VMEM_LIMIT = 32 * 1024 * 1024  # safe scoped-VMEM budget on v5e/v6e (128 MiB) and v7x (64 MiB)


# ----------------------------- max pool 2x2x2 -----------------------------

def _maxpool_2x2x2_kernel(x_ref, o_ref):
    # x_ref: (2, H, W, C) -- the two input depth planes feeding one output depth.
    # o_ref: (Ho, Wo, C)
    _, H, W, C = x_ref.shape
    Ho, Wo = H // 2, W // 2
    v = x_ref[...]
    # pool depth + height first (reshape keeps the last two dims untouched -> trivial layout)
    v = jnp.max(v.reshape(2, Ho, 2, W, C), axis=(0, 2))        # (Ho, W, C)
    # pool width pairs (sublane-local split; the channel/lane dim is unchanged)
    v = jnp.max(v.reshape(Ho, Wo, 2, C), axis=2)               # (Ho, Wo, C)
    o_ref[...] = v


def maxpool_2x2x2(x):
    """x: (N, D, H, W, C) -> (N, D//2, H//2, W//2, C), max over 2x2x2 windows."""
    N, D, H, W, C = x.shape
    Do, Ho, Wo = D // 2, H // 2, W // 2
    # PyTorch MaxPool3d(2) floors odd sizes: crop (no-op for even sizes).
    x = x[:, :2 * Do, :2 * Ho, :2 * Wo, :]
    return pl.pallas_call(
        _maxpool_2x2x2_kernel,
        out_shape=jax.ShapeDtypeStruct((N, Do, Ho, Wo, C), x.dtype),
        grid=(N, Do),
        in_specs=[pl.BlockSpec((None, 2, 2 * Ho, 2 * Wo, C),
                               lambda n, d: (n, d, 0, 0, 0))],
        out_specs=pl.BlockSpec((None, None, Ho, Wo, C),
                               lambda n, d: (n, d, 0, 0, 0)),
        compiler_params=pltpu.CompilerParams(
            dimension_semantics=("parallel", "parallel"),
            vmem_limit_bytes=_VMEM_LIMIT),
    )(x)


# ------------------- conv3d k=3, pad=1 (+bias, +ReLU), fused im2col -------------------

def _conv3d_k3_bias_relu_kernel(x0_ref, x1_ref, x2_ref, w_ref, b_ref, o_ref):
    # x{0,1,2}_ref: (Hp, Wp, Ci) -- padded planes at depths d, d+1, d+2 of the padded
    #               input (= depths d-1, d, d+1 of the unpadded input).
    # w_ref: (3, 3, 3, Ci, Co); b_ref: (1, Co); o_ref: (H, W, Co)
    Hp, Wp, Ci = x0_ref.shape
    H, W = Hp - 2, Wp - 2
    Co = o_ref.shape[-1]

    acc = jnp.zeros((H * W, Co), jnp.float32)
    planes = (x0_ref[...], x1_ref[...], x2_ref[...])
    for kd in range(3):
        xpl = planes[kd]
        for kh in range(3):
            for kw in range(3):
                # fused im2col: shifted window of the padded plane, flattened to (M, Ci).
                tap = xpl[kh:kh + H, kw:kw + W, :].reshape(H * W, Ci)
                acc = acc + jnp.dot(tap, w_ref[kd, kh, kw],
                                    preferred_element_type=jnp.float32)
    out = jnp.maximum(acc + b_ref[...].astype(jnp.float32), 0.0)
    o_ref[...] = out.reshape(H, W, Co).astype(o_ref.dtype)


def conv3x3x3_bias_relu(x, w, b, compute_dtype=jnp.float32, out_dtype=None):
    """3D conv (kernel=3, stride=1, padding=1) + bias + ReLU, im2col fused in-kernel.

    x: (N, D, H, W, Ci) channels-last; w: (3, 3, 3, Ci, Co); b: (Co,)
    """
    N, D, H, W, Ci = x.shape
    Co = w.shape[-1]
    if out_dtype is None:
        out_dtype = x.dtype
    Hp, Wp = H + 2, W + 2

    xp = jnp.pad(x, ((0, 0), (1, 1), (1, 1), (1, 1), (0, 0))).astype(compute_dtype)
    wc = w.astype(compute_dtype)
    b2 = b.reshape(1, Co).astype(jnp.float32)

    def plane_spec(kd):
        # Depth plane d + kd of the padded activation (halo handled by the view offset).
        return pl.BlockSpec((None, None, Hp, Wp, Ci),
                            lambda n, d, kd=kd: (n, d + kd, 0, 0, 0))

    return pl.pallas_call(
        _conv3d_k3_bias_relu_kernel,
        out_shape=jax.ShapeDtypeStruct((N, D, H, W, Co), out_dtype),
        grid=(N, D),
        in_specs=[plane_spec(0), plane_spec(1), plane_spec(2),
                  pl.BlockSpec((3, 3, 3, Ci, Co), lambda n, d: (0, 0, 0, 0, 0)),
                  pl.BlockSpec((1, Co), lambda n, d: (0, 0))],
        out_specs=pl.BlockSpec((None, None, H, W, Co),
                               lambda n, d: (n, d, 0, 0, 0)),
        compiler_params=pltpu.CompilerParams(
            dimension_semantics=("parallel", "parallel"),
            vmem_limit_bytes=_VMEM_LIMIT),
    )(xp, xp, xp, wc, b2)


# ----------------------------- Encoder forward -----------------------------

def init_encoder_params(key, in_channels, out_channels):
    # DoubleConv(encoder=True, order='cr'): conv1_out = max(out//2, in); bias=True.
    c_mid = out_channels // 2
    if c_mid < in_channels:
        c_mid = in_channels
    k1, k2, k3, k4 = jax.random.split(key, 4)
    s1 = 1.0 / np.sqrt(in_channels * 27)
    s2 = 1.0 / np.sqrt(c_mid * 27)
    return {
        "w1": jax.random.normal(k1, (3, 3, 3, in_channels, c_mid), jnp.float32) * s1,
        "b1": jax.random.normal(k2, (c_mid,), jnp.float32) * s1,
        "w2": jax.random.normal(k3, (3, 3, 3, c_mid, out_channels), jnp.float32) * s2,
        "b2": jax.random.normal(k4, (out_channels,), jnp.float32) * s2,
    }


def encoder_forward(x_ncdhw, params, compute_dtype=jnp.float32):
    """Encoder forward: MaxPool3d(2) -> Conv3d+ReLU -> Conv3d+ReLU. I/O in PyTorch NCDHW.

    compute_dtype=jnp.bfloat16 halves activation/weight HBM traffic and doubles MXU
    throughput on v6e/v7x (accumulation stays f32). Default f32 matches the reference.
    """
    # TODO(synk): fold the NCDHW->NDHWC relayout and the pooling into the first conv's
    #             input pipeline so the full-resolution input only makes a single HBM pass.
    x = jnp.transpose(x_ncdhw, (0, 2, 3, 4, 1))                  # NCDHW -> NDHWC
    x = maxpool_2x2x2(x)
    y = conv3x3x3_bias_relu(x, params["w1"], params["b1"],
                            compute_dtype=compute_dtype, out_dtype=compute_dtype)
    z = conv3x3x3_bias_relu(y, params["w2"], params["b2"],
                            compute_dtype=compute_dtype, out_dtype=jnp.float32)
    return jnp.transpose(z, (0, 4, 1, 2, 3))                     # NDHWC -> NCDHW


def reference_forward(x_ncdhw, params):
    # Pure-JAX reference (matches the PyTorch module semantics).
    x = jnp.transpose(x_ncdhw, (0, 2, 3, 4, 1))
    p = lax.reduce_window(x, -jnp.inf, lax.max,
                          (1, 2, 2, 2, 1), (1, 2, 2, 2, 1), "VALID")
    dn = ("NDHWC", "DHWIO", "NDHWC")
    y = lax.conv_general_dilated(p, params["w1"], (1, 1, 1), "SAME",
                                 dimension_numbers=dn)
    y = jnp.maximum(y + params["b1"], 0.0)
    z = lax.conv_general_dilated(y, params["w2"], (1, 1, 1), "SAME",
                                 dimension_numbers=dn)
    z = jnp.maximum(z + params["b2"], 0.0)
    return jnp.transpose(z, (0, 4, 1, 2, 3))


if __name__ == "__main__":
    key = jax.random.PRNGKey(0)
    kx, kp = jax.random.split(key)
    N, Cin, Cout, D, H, W = 2, 4, 8, 16, 16, 16
    x = jax.random.normal(kx, (N, Cin, D, H, W), jnp.float32)
    params = init_encoder_params(kp, Cin, Cout)

    out = jax.jit(encoder_forward)(x, params)
    out = jax.block_until_ready(out)
    assert out.shape == (N, Cout, D // 2, H // 2, W // 2), out.shape

    ref = reference_forward(x, params)
    np.testing.assert_allclose(np.asarray(out), np.asarray(ref), rtol=1e-4, atol=1e-4)
    print("KERNEL_OK")
</pallas_src>

<mosaic_0001>
module attributes {stable_mosaic.version = 11 : i64} {
  func.func @_maxpool_2x2x2_kernel(%arg0: i32, %arg1: i32, %arg2: memref<1x2x16x16x4xf32, #tpu.memory_space<vmem>>, %arg3: memref<1x1x8x8x4xf32, #tpu.memory_space<vmem>>) attributes {dimension_semantics = [#tpu.dimension_semantics<parallel>, #tpu.dimension_semantics<parallel>], iteration_bounds = array<i64: 2, 8>, scalar_prefetch = 0 : i64, scratch_operands = 0 : i64, tpu.core_type = #tpu.core_type<tc>, window_params = [{transform_indices = @transform_0, window_bounds = array<i64: 1, 2, 16, 16, 4>}, {transform_indices = @transform_1, window_bounds = array<i64: 1, 1, 8, 8, 4>}]} {
    %c0 = arith.constant 0 : index
    %c0_0 = arith.constant 0 : index
    %c0_1 = arith.constant 0 : index
    %c0_2 = arith.constant 0 : index
    %c0_3 = arith.constant 0 : index
    %0 = vector.load %arg2[%c0, %c0_0, %c0_1, %c0_2, %c0_3] : memref<1x2x16x16x4xf32, #tpu.memory_space<vmem>>, vector<1x2x16x16x4xf32>
    %1 = vector.shape_cast %0 : vector<1x2x16x16x4xf32> to vector<2x16x16x4xf32>
    %2 = vector.shape_cast %1 : vector<2x16x16x4xf32> to vector<2x8x2x16x4xf32>
    %cst = arith.constant dense<0xFF800000> : vector<8x16x4xf32>
    %3 = vector.multi_reduction <maximumf>, %2, %cst [0, 2] : vector<2x8x2x16x4xf32> to vector<8x16x4xf32>
    %4 = vector.shape_cast %3 : vector<8x16x4xf32> to vector<8x8x2x4xf32>
    %cst_4 = arith.constant dense<0xFF800000> : vector<8x8x4xf32>
    %5 = vector.multi_reduction <maximumf>, %4, %cst_4 [2] : vector<8x8x2x4xf32> to vector<8x8x4xf32>
    %c0_5 = arith.constant 0 : index
    %c0_6 = arith.constant 0 : index
    %c0_7 = arith.constant 0 : index
    %c0_8 = arith.constant 0 : index
    %c0_9 = arith.constant 0 : index
    %6 = vector.load %arg3[%c0_5, %c0_6, %c0_7, %c0_8, %c0_9] : memref<1x1x8x8x4xf32, #tpu.memory_space<vmem>>, vector<1x1x8x8x4xf32>
    %7 = vector.shape_cast %6 : vector<1x1x8x8x4xf32> to vector<8x8x4xf32>
    %8 = vector.shape_cast %5 : vector<8x8x4xf32> to vector<1x1x8x8x4xf32>
    tpu.vector_store %arg3[%c0_5, %c0_6, %c0_7, %c0_8, %c0_9], %8 {strides = array<i32>} : memref<1x1x8x8x4xf32, #tpu.memory_space<vmem>>, vector<1x1x8x8x4xf32>,
    return
  }
  func.func @transform_0(%arg0: i32, %arg1: i32) -> (i32, i32, i32, i32, i32) {
    %c0_i32 = arith.constant 0 : i32
    %c0_i32_0 = arith.constant 0 : i32
    %c0_i32_1 = arith.constant 0 : i32
    %c0_i32_2 = arith.constant 0 : i32
    return %arg0, %arg1, %c0_i32, %c0_i32_0, %c0_i32_1 : i32, i32, i32, i32, i32
  }
  func.func @transform_1(%arg0: i32, %arg1: i32) -> (i32, i32, i32, i32, i32) {
    %c0_i32 = arith.constant 0 : i32
    %c0_i32_0 = arith.constant 0 : i32
    %c0_i32_1 = arith.constant 0 : i32
    %c0_i32_2 = arith.constant 0 : i32
    return %arg0, %arg1, %c0_i32, %c0_i32_0, %c0_i32_1 : i32, i32, i32, i32, i32
  }
}

module attributes {stable_mosaic.version = 11 : i64} {
  func.func @_conv3d_k3_bias_relu_kernel(%arg0: i32, %arg1: i32, %arg2: memref<1x1x10x10x4xf32, #tpu.memory_space<vmem>>, %arg3: memref<1x1x10x10x4xf32, #tpu.memory_space<vmem>>, %arg4: memref<1x1x10x10x4xf32, #tpu.memory_space<vmem>>, %arg5: memref<3x3x3x4x4xf32, #tpu.memory_space<vmem>>, %arg6: memref<1x4xf32, #tpu.memory_space<vmem>>, %arg7: memref<1x1x8x8x4xf32, #tpu.memory_space<vmem>>) attributes {dimension_semantics = [#tpu.dimension_semantics<parallel>, #tpu.dimension_semantics<parallel>], iteration_bounds = array<i64: 2, 8>, scalar_prefetch = 0 : i64, scratch_operands = 0 : i64, tpu.core_type = #tpu.core_type<tc>, window_params = [{transform_indices = @transform_0, window_bounds = array<i64: 1, 1, 10, 10, 4>}, {transform_indices = @transform_1, window_bounds = array<i64: 1, 1, 10, 10, 4>}, {transform_indices = @transform_2, window_bounds = array<i64: 1, 1, 10, 10, 4>}, {pipeline_mode = #tpu.pipeline_mode<synchronous>, transform_indices = @transform_3, window_bounds = array<i64: 3, 3, 3, 4, 4>}, {pipeline_mode = #tpu.pipeline_mode<synchronous>, transform_indices = @transform_4, window_bounds = array<i64: 1, 4>}, {transform_indices = @transform_5, window_bounds = array<i64: 1, 1, 8, 8, 4>}]} {
    %cst = arith.constant 0.000000e+00 : f32
    %0 = vector.broadcast %cst : f32 to vector<64x4xf32>
    %c0 = arith.constant 0 : index
    %c0_0 = arith.constant 0 : index
    %c0_1 = arith.constant 0 : index
    %c0_2 = arith.constant 0 : index
    %c0_3 = arith.constant 0 : index
    %1 = vector.load %arg2[%c0, %c0_0, %c0_1, %c0_2, %c0_3] : memref<1x1x10x10x4xf32, #tpu.memory_space<vmem>>, vector<1x1x10x10x4xf32>
    %2 = vector.shape_cast %1 : vector<1x1x10x10x4xf32> to vector<10x10x4xf32>
    %c0_4 = arith.constant 0 : index
    %c0_5 = arith.constant 0 : index
    %c0_6 = arith.constant 0 : index
    %c0_7 = arith.constant 0 : index
    %c0_8 = arith.constant 0 : index
    %3 = vector.load %arg3[%c0_4, %c0_5, %c0_6, %c0_7, %c0_8] : memref<1x1x10x10x4xf32, #tpu.memory_space<vmem>>, vector<1x1x10x10x4xf32>
    %4 = vector.shape_cast %3 : vector<1x1x10x10x4xf32> to vector<10x10x4xf32>
    %c0_9 = arith.constant 0 : index
    %c0_10 = arith.constant 0 : index
    %c0_11 = arith.constant 0 : index
    %c0_12 = arith.constant 0 : index
    %c0_13 = arith.constant 0 : index
    %5 = vector.load %arg4[%c0_9, %c0_10, %c0_11, %c0_12, %c0_13] : memref<1x1x10x10x4xf32, #tpu.memory_space<vmem>>, vector<1x1x10x10x4xf32>
    %6 = vector.shape_cast %5 : vector<1x1x10x10x4xf32> to vector<10x10x4xf32>
    %7 = vector.extract_strided_slice %2 {offsets = [0, 0, 0], sizes = [8, 8, 4], strides = [1, 1, 1]} : vector<10x10x4xf32> to vector<8x8x4xf32>
    %8 = vector.shape_cast %7 : vector<8x8x4xf32> to vector<64x4xf32>
    %c0_14 = arith.constant 0 : index
    %c0_15 = arith.constant 0 : index
    %c0_16 = arith.constant 0 : index
    %c0_17 = arith.constant 0 : index
    %c0_18 = arith.constant 0 : index
    %9 = vector.load %arg5[%c0_14, %c0_15, %c0_16, %c0_17, %c0_18] : memref<3x3x3x4x4xf32, #tpu.memory_space<vmem>>, vector<1x1x1x4x4xf32>
    %10 = vector.shape_cast %9 : vector<1x1x1x4x4xf32> to vector<4x4xf32>
    %cst_19 = arith.constant dense<0.000000e+00> : vector<64x4xf32>
    %11 = tpu.matmul %8, %10, %cst_19 {dimension_numbers = #tpu.dot_dimension_numbers<[1], [0], [0], [1], [0, 0, 1, 1], [], []>} : vector<64x4xf32>, vector<4x4xf32>, vector<64x4xf32> -> vector<64x4xf32>
    %12 = arith.addf %0, %11 : vector<64x4xf32>
    %13 = vector.extract_strided_slice %2 {offsets = [0, 1, 0], sizes = [8, 8, 4], strides = [1, 1, 1]} : vector<10x10x4xf32> to vector<8x8x4xf32>
    %14 = vector.shape_cast %13 : vector<8x8x4xf32> to vector<64x4xf32>
    %c0_20 = arith.constant 0 : index
    %c0_21 = arith.constant 0 : index
    %c1 = arith.constant 1 : index
    %c0_22 = arith.constant 0 : index
    %c0_23 = arith.constant 0 : index
    %15 = vector.load %arg5[%c0_20, %c0_21, %c1, %c0_22, %c0_23] : memref<3x3x3x4x4xf32, #tpu.memory_space<vmem>>, vector<1x1x1x4x4xf32>
    %16 = vector.shape_cast %15 : vector<1x1x1x4x4xf32> to vector<4x4xf32>
    %cst_24 = arith.constant dense<0.000000e+00> : vector<64x4xf32>
    %17 = tpu.matmul %14, %16, %cst_24 {dimension_numbers = #tpu.dot_dimension_numbers<[1], [0], [0], [1], [0, 0, 1, 1], [], []>} : vector<64x4xf32>, vector<4x4xf32>, vector<64x4xf32> -> vector<64x4xf32>
    %18 = arith.addf %12, %17 : vector<64x4xf32>
    %19 = vector.extract_strided_slice %2 {offsets = [0, 2, 0], sizes = [8, 8, 4], strides = [1, 1, 1]} : vector<10x10x4xf32> to vector<8x8x4xf32>
    %20 = vector.shape_cast %19 : vector<8x8x4xf32> to vector<64x4xf32>
    %c0_25 = arith.constant 0 : index
    %c0_26 = arith.constant 0 : index
    %c2 = arith.constant 2 : index
    %c0_27 = arith.constant 0 : index
    %c0_28 = arith.constant 0 : index
    %21 = vector.load %arg5[%c0_25, %c0_26, %c2, %c0_27, %c0_28] : memref<3x3x3x4x4xf32, #tpu.memory_space<vmem>>, vector<1x1x1x4x4xf32>
    %22 = vector.shape_cast %21 : vector<1x1x1x4x4xf32> to vector<4x4xf32>
    %cst_29 = arith.constant dense<0.000000e+00> : vector<64x4xf32>
    %23 = tpu.matmul %20, %22, %cst_29 {dimension_numbers = #tpu.dot_dimension_numbers<[1], [0], [0], [1], [0, 0, 1, 1], [], []>} : vector<64x4xf32>, vector<4x4xf32>, vector<64x4xf32> -> vector<64x4xf32>
    %24 = arith.addf %18, %23 : vector<64x4xf32>
    %25 = vector.extract_strided_slice %2 {offsets = [1, 0, 0], sizes = [8, 8, 4], strides = [1, 1, 1]} : vector<10x10x4xf32> to vector<8x8x4xf32>
    %26 = vector.shape_cast %25 : vector<8x8x4xf32> to vector<64x4xf32>
    %c0_30 = arith.constant 0 : index
    %c1_31 = arith.constant 1 : index
    %c0_32 = arith.constant 0 : index
    %c0_33 = arith.constant 0 : index
    %c0_34 = arith.constant 0 : index
    %27 = vector.load %arg5[%c0_30, %c1_31, %c0_32, %c0_33, %c0_34] : memref<3x3x3x4x4xf32, #tpu.memory_space<vmem>>, vector<1x1x1x4x4xf32>
    %28 = vector.shape_cast %27 : vector<1x1x1x4x4xf32> to vector<4x4xf32>
    %cst_35 = arith.constant dense<0.000000e+00> : vector<64x4xf32>
    %29 = tpu.matmul %26, %28, %cst_35 {dimension_numbers = #tpu.dot_dimension_numbers<[1], [0], [0], [1], [0, 0, 1, 1], [], []>} : vector<64x4xf32>, vector<4x4xf32>, vector<64x4xf32> -> vector<64x4xf32>
    %30 = arith.addf %24, %29 : vector<64x4xf32>
    %31 = vector.extract_strided_slice %2 {offsets = [1, 1, 0], sizes = [8, 8, 4], strides = [1, 1, 1]} : vector<10x10x4xf32> to vector<8x8x4xf32>
    %32 = vector.shape_cast %31 : vector<8x8x4xf32> to vector<64x4xf32>
    %c0_36 = arith.constant 0 : index
    %c1_37 = arith.constant 1 : index
    %c1_38 = arith.constant 1 : index
    %c0_39 = arith.constant 0 : index
    %c0_40 = arith.constant 0 : index
    %33 = vector.load %arg5[%c0_36, %c1_37, %c1_38, %c0_39, %c0_40] : memref<3x3x3x4x4xf32, #tpu.memory_space<vmem>>, vector<1x1x1x4x4xf32>
    %34 = vector.shape_cast %33 : vector<1x1x1x4x4xf32> to vector<4x4xf32>
    %cst_41 = arith.constant dense<0.000000e+00> : vector<64x4xf32>
    %35 = tpu.matmul %32, %34, %cst_41 {dimension_numbers = #tpu.dot_dimension_numbers<[1], [0], [0], [1], [0, 0, 1, 1], [], []>} : vector<64x4xf32>, vector<4x4xf32>, vector<64x4xf32> -> vector<64x4xf32>
    %36 = arith.addf %30, %35 : vector<64x4xf32>
    %37 = vector.extract_strided_slice %2 {offsets = [1, 2, 0], sizes = [8, 8, 4], strides = [1, 1, 1]} : vector<10x10x4xf32> to vector<8x8x4xf32>
    %38 = vector.shape_cast %37 : vector<8x8x4xf32> to vector<64x4xf32>
    %c0_42 = arith.constant 0 : index
    %c1_43 = arith.constant 1 : index
    %c2_44 = arith.constant 2 : index
    %c0_45 = arith.constant 0 : index
    %c0_46 = arith.constant 0 : index
    %39 = vector.load %arg5[%c0_42, %c1_43, %c2_44, %c0_45, %c0_46] : memref<3x3x3x4x4xf32, #tpu.memory_space<vmem>>, vector<1x1x1x4x4xf32>
    %40 = vector.shape_cast %39 : vector<1x1x1x4x4xf32> to vector<4x4xf32>
    %cst_47 = arith.constant dense<0.000000e+00> : vector<64x4xf32>
    %41 = tpu.matmul %38, %40, %cst_47 {dimension_numbers = #tpu.dot_dimension_numbers<[1], [0], [0], [1], [0, 0, 1, 1], [], []>} : vector<64x4xf32>, vector<4x4xf32>, vector<64x4xf32> -> vector<64x4xf32>
    %42 = arith.addf %36, %41 : vector<64x4xf32>
    %43 = vector.extract_strided_slice %2 {offsets = [2, 0, 0], sizes = [8, 8, 4], strides = [1, 1, 1]} : vector<10x10x4xf32> to vector<8x8x4xf32>
    %44 = vector.shape_cast %43 : vector<8x8x4xf32> to vector<64x4xf32>
    %c0_48 = arith.constant 0 : index
    %c2_49 = arith.constant 2 : index
    %c0_50 = arith.constant 0 : index
    %c0_51 = arith.constant 0 : index
    %c0_52 = arith.constant 0 : index
    %45 = vector.load %arg5[%c0_48, %c2_49, %c0_50, %c0_51, %c0_52] : memref<3x3x3x4x4xf32, #tpu.memory_space<vmem>>, vector<1x1x1x4x4xf32>
    %46 = vector.shape_cast %45 : vector<1x1x1x4x4xf32> to vector<4x4xf32>
    %cst_53 = arith.constant dense<0.000000e+00> : vector<64x4xf32>
    %47 = tpu.matmul %44, %46, %cst_53 {dimension_numbers = #tpu.dot_dimension_numbers<[1], [0], [0], [1], [0, 0, 1, 1], [], []>} : vector<64x4xf32>, vector<4x4xf32>, vector<64x4xf32> -> vector<64x4xf32>
    %48 = arith.addf %42, %47 : vector<64x4xf32>
    %49 = vector.extract_strided_slice %2 {offsets = [2, 1, 0], sizes = [8, 8, 4], strides = [1, 1, 1]} : vector<10x10x4xf32> to vector<8x8x4xf32>
    %50 = vector.shape_cast %49 : vector<8x8x4xf32> to vector<64x4xf32>
    %c0_54 = arith.constant 0 : index
    %c2_55 = arith.constant 2 : index
    %c1_56 = arith.constant 1 : index
    %c0_57 = arith.constant 0 : index
    %c0_58 = arith.constant 0 : index
    %51 = vector.load %arg5[%c0_54, %c2_55, %c1_56, %c0_57, %c0_58] : memref<3x3x3x4x4xf32, #tpu.memory_space<vmem>>, vector<1x1x1x4x4xf32>
    %52 = vector.shape_cast %51 : vector<1x1x1x4x4xf32> to vector<4x4xf32>
    %cst_59 = arith.constant dense<0.000000e+00> : vector<64x4xf32>
    %53 = tpu.matmul %50, %52, %cst_59 {dimension_numbers = #tpu.dot_dimension_numbers<[1], [0], [0], [1], [0, 0, 1, 1], [], []>} : vector<64x4xf32>, vector<4x4xf32>, vector<64x4xf32> -> vector<64x4xf32>
    %54 = arith.addf %48, %53 : vector<64x4xf32>
    %55 = vector.extract_strided_slice %2 {offsets = [2, 2, 0], sizes = [8, 8, 4], strides = [1, 1, 1]} : vector<10x10x4xf32> to vector<8x8x4xf32>
    %56 = vector.shape_cast %55 : vector<8x8x4xf32> to vector<64x4xf32>
    %c0_60 = arith.constant 0 : index
    %c2_61 = arith.constant 2 : index
    %c2_62 = arith.constant 2 : index
    %c0_63 = arith.constant 0 : index
    %c0_64 = arith.constant 0 : index
    %57 = vector.load %arg5[%c0_60, %c2_61, %c2_62, %c0_63, %c0_64] : memref<3x3x3x4x4xf32, #tpu.memory_space<vmem>>, vector<1x1x1x4x4xf32>
    %58 = vector.shape_cast %57 : vector<1x1x1x4x4xf32> to vector<4x4xf32>
    %cst_65 = arith.constant dense<0.000000e+00> : vector<64x4xf32>
    %59 = tpu.matmul %56, %58, %cst_65 {dimension_numbers = #tpu.dot_dimension_numbers<[1], [0], [0], [1], [0, 0, 1, 1], [], []>} : vector<64x4xf32>, vector<4x4xf32>, vector<64x4xf32> -> vector<64x4xf32>
    %60 = arith.addf %54, %59 : vector<64x4xf32>
    %61 = vector.extract_strided_slice %4 {offsets = [0, 0, 0], sizes = [8, 8, 4], strides = [1, 1, 1]} : vector<10x10x4xf32> to vector<8x8x4xf32>
    %62 = vector.shape_cast %61 : vector<8x8x4xf32> to vector<64x4xf32>
    %c1_66 = arith.constant 1 : index
    %c0_67 = arith.constant 0 : index
    %c0_68 = arith.constant 0 : index
    %c0_69 = arith.constant 0 : index
    %c0_70 = arith.constant 0 : index
    %63 = vector.load %arg5[%c1_66, %c0_67, %c0_68, %c0_69, %c0_70] : memref<3x3x3x4x4xf32, #tpu.memory_space<vmem>>, vector<1x1x1x4x4xf32>
    %64 = vector.shape_cast %63 : vector<1x1x1x4x4xf32> to vector<4x4xf32>
    %cst_71 = arith.constant dense<0.000000e+00> : vector<64x4xf32>
    %65 = tpu.matmul %62, %64, %cst_71 {dimension_numbers = #tpu.dot_dimension_numbers<[1], [0], [0], [1], [0, 0, 1, 1], [], []>} : vector<64x4xf32>, vector<4x4xf32>, vector<64x4xf32> -> vector<64x4xf32>
    %66 = arith.addf %60, %65 : vector<64x4xf32>
    %67 = vector.extract_strided_slice %4 {offsets = [0, 1, 0], sizes = [8, 8, 4], strides = [1, 1, 1]} : vector<10x10x4xf32> to vector<8x8x4xf32>
    %68 = vector.shape_cast %67 : vector<8x8x4xf32> to vector<64x4xf32>
    %c1_72 = arith.constant 1 : index
    %c0_73 = arith.constant 0 : index
    %c1_74 = arith.constant 1 : index
    %c0_75 = arith.constant 0 : index
    %c0_76 = arith.constant 0 : index
    %69 = vector.load %arg5[%c1_72, %c0_73, %c1_74, %c0_75, %c0_76] : memref<3x3x3x4x4xf32, #tpu.memory_space<vmem>>, vector<1x1x1x4x4xf32>
    %70 = vector.shape_cast %69 : vector<1x1x1x4x4xf32> to vector<4x4xf32>
    %cst_77 = arith.constant dense<0.000000e+00> : vector<64x4xf32>
    %71 = tpu.matmul %68, %70, %cst_77 {dimension_numbers = #tpu.dot_dimension_numbers<[1], [0], [0], [1], [0, 0, 1, 1], [], []>} : vector<64x4xf32>, vector<4x4xf32>, vector<64x4xf32> -> vector<64x4xf32>
    %72 = arith.addf %66, %71 : vector<64x4xf32>
    %73 = vector.extract_strided_slice %4 {offsets = [0, 2, 0], sizes = [8, 8, 4], strides = [1, 1, 1]} : vector<10x10x4xf32> to vector<8x8x4xf32>
    %74 = vector.shape_cast %73 : vector<8x8x4xf32> to vector<64x4xf32>
    %c1_78 = arith.constant 1 : index
    %c0_79 = arith.constant 0 : index
    %c2_80 = arith.constant 2 : index
    %c0_81 = arith.constant 0 : index
    %c0_82 = arith.constant 0 : index
    %75 = vector.load %arg5[%c1_78, %c0_79, %c2_80, %c0_81, %c0_82] : memref<3x3x3x4x4xf32, #tpu.memory_space<vmem>>, vector<1x1x1x4x4xf32>
    %76 = vector.shape_cast %75 : vector<1x1x1x4x4xf32> to vector<4x4xf32>
    %cst_83 = arith.constant dense<0.000000e+00> : vector<64x4xf32>
    %77 = tpu.matmul %74, %76, %cst_83 {dimension_numbers = #tpu.dot_dimension_numbers<[1], [0], [0], [1], [0, 0, 1, 1], [], []>} : vector<64x4xf32>, vector<4x4xf32>, vector<64x4xf32> -> vector<64x4xf32>
    %78 = arith.addf %72, %77 : vector<64x4xf32>
    %79 = vector.extract_strided_slice %4 {offsets = [1, 0, 0], sizes = [8, 8, 4], strides = [1, 1, 1]} : vector<10x10x4xf32> to vector<8x8x4xf32>
    %80 = vector.shape_cast %79 : vector<8x8x4xf32> to vector<64x4xf32>
    %c1_84 = arith.constant 1 : index
    %c1_85 = arith.constant 1 : index
    %c0_86 = arith.constant 0 : index
    %c0_87 = arith.constant 0 : index
    %c0_88 = arith.constant 0 : index
    %81 = vector.load %arg5[%c1_84, %c1_85, %c0_86, %c0_87, %c0_88] : memref<3x3x3x4x4xf32, #tpu.memory_space<vmem>>, vector<1x1x1x4x4xf32>
    %82 = vector.shape_cast %81 : vector<1x1x1x4x4xf32> to vector<4x4xf32>
    %cst_89 = arith.constant dense<0.000000e+00> : vector<64x4xf32>
    %83 = tpu.matmul %80, %82, %cst_89 {dimension_numbers = #tpu.dot_dimension_numbers<[1], [0], [0], [1], [0, 0, 1, 1], [], []>} : vector<64x4xf32>, vector<4x4xf32>, vector<64x4xf32> -> vector<64x4xf32>
    %84 = arith.addf %78, %83 : vector<64x4xf32>
    %85 = vector.extract_strided_slice %4 {offsets = [1, 1, 0], sizes = [8, 8, 4], strides = [1, 1, 1]} : vector<10x10x4xf32> to vector<8x8x4xf32>
    %86 = vector.shape_cast %85 : vector<8x8x4xf32> to vector<64x4xf32>
    %c1_90 = arith.constant 1 : index
    %c1_91 = arith.constant 1 : index
    %c1_92 = arith.constant 1 : index
    %c0_93 = arith.constant 0 : index
    %c0_94 = arith.constant 0 : index
    %87 = vector.load %arg5[%c1_90, %c1_91, %c1_92, %c0_93, %c0_94] : memref<3x3x3x4x4xf32, #tpu.memory_space<vmem>>, vector<1x1x1x4x4xf32>
    %88 = vector.shape_cast %87 : vector<1x1x1x4x4xf32> to vector<4x4xf32>
    %cst_95 = arith.constant dense<0.000000e+00> : vector<64x4xf32>
    %89 = tpu.matmul %86, %88, %cst_95 {dimension_numbers = #tpu.dot_dimension_numbers<[1], [0], [0], [1], [0, 0, 1, 1], [], []>} : vector<64x4xf32>, vector<4x4xf32>, vector<64x4xf32> -> vector<64x4xf32>
    %90 = arith.addf %84, %89 : vector<64x4xf32>
    %91 = vector.extract_strided_slice %4 {offsets = [1, 2, 0], sizes = [8, 8, 4], strides = [1, 1, 1]} : vector<10x10x4xf32> to vector<8x8x4xf32>
    %92 = vector.shape_cast %91 : vector<8x8x4xf32> to vector<64x4xf32>
    %c1_96 = arith.constant 1 : index
    %c1_97 = arith.constant 1 : index
    %c2_98 = arith.constant 2 : index
    %c0_99 = arith.constant 0 : index
    %c0_100 = arith.constant 0 : index
    %93 = vector.load %arg5[%c1_96, %c1_97, %c2_98, %c0_99, %c0_100] : memref<3x3x3x4x4xf32, #tpu.memory_space<vmem>>, vector<1x1x1x4x4xf32>
    %94 = vector.shape_cast %93 : vector<1x1x1x4x4xf32> to vector<4x4xf32>
    %cst_101 = arith.constant dense<0.000000e+00> : vector<64x4xf32>
    %95 = tpu.matmul %92, %94, %cst_101 {dimension_numbers = #tpu.dot_dimension_numbers<[1], [0], [0], [1], [0, 0, 1, 1], [], []>} : vector<64x4xf32>, vector<4x4xf32>, vector<64x4xf32> -> vector<64x4xf32>
    %96 = arith.addf %90, %95 : vector<64x4xf32>
    %97 = vector.extract_strided_slice %4 {offsets = [2, 0, 0], sizes = [8, 8, 4], strides = [1, 1, 1]} : vector<10x10x4xf32> to vector<8x8x4xf32>
    %98 = vector.shape_cast %97 : vector<8x8x4xf32> to vector<64x4xf32>
    %c1_102 = arith.constant 1 : index
    %c2_103 = arith.constant 2 : index
    %c0_104 = arith.constant 0 : index
    %c0_105 = arith.constant 0 : index
    %c0_106 = arith.constant 0 : index
    %99 = vector.load %arg5[%c1_102, %c2_103, %c0_104, %c0_105, %c0_106] : memref<3x3x3x4x4xf32, #tpu.memory_space<vmem>>, vector<1x1x1x4x4xf32>
    %100 = vector.shape_cast %99 : vector<1x1x1x4x4xf32> to vector<4x4xf32>
    %cst_107 = arith.constant dense<0.000000e+00> : vector<64x4xf32>
    %101 = tpu.matmul %98, %100, %cst_107 {dimension_numbers = #tpu.dot_dimension_numbers<[1], [0], [0], [1], [0, 0, 1, 1], [], []>} : vector<64x4xf32>, vector<4x4xf32>, vector<64x4xf32> -> vector<64x4xf32>
    %102 = arith.addf %96, %101 : vector<64x4xf32>
    %103 = vector.extract_strided_slice %4 {offsets = [2, 1, 0], sizes = [8, 8, 4], strides = [1, 1, 1]} : vector<10x10x4xf32> to vector<8x8x4xf32>
    %104 = vector.shape_cast %103 : vector<8x8x4xf32> to vector<64x4xf32>
    %c1_108 = arith.constant 1 : index
    %c2_109 = arith.constant 2 : index
    %c1_110 = arith.constant 1 : index
    %c0_111 = arith.constant 0 : index
    %c0_112 = arith.constant 0 : index
    %105 = vector.load %arg5[%c1_108, %c2_109, %c1_110, %c0_111, %c0_112] : memref<3x3x3x4x4xf32, #tpu.memory_space<vmem>>, vector<1x1x1x4x4xf32>
    %106 = vector.shape_cast %105 : vector<1x1x1x4x4xf32> to vector<4x4xf32>
    %cst_113 = arith.constant dense<0.000000e+00> : vector<64x4xf32>
    %107 = tpu.matmul %104, %106, %cst_113 {dimension_numbers = #tpu.dot_dimension_numbers<[1], [0], [0], [1], [0, 0, 1, 1], [], []>} : vector<64x4xf32>, vector<4x4xf32>, vector<64x4xf32> -> vector<64x4xf32>
    %108 = arith.addf %102, %107 : vector<64x4xf32>
    %109 = vector.extract_strided_slice %4 {offsets = [2, 2, 0], sizes = [8, 8, 4], strides = [1, 1, 1]} : vector<10x10x4xf32> to vector<8x8x4xf32>
    %110 = vector.shape_cast %109 : vector<8x8x4xf32> to vector<64x4xf32>
    %c1_114 = arith.constant 1 : index
    %c2_115 = arith.constant 2 : index
    %c2_116 = arith.constant 2 : index
    %c0_117 = arith.constant 0 : index
    %c0_118 = arith.constant 0 : index
    %111 = vector.load %arg5[%c1_114, %c2_115, %c2_116, %c0_117, %c0_118] : memref<3x3x3x4x4xf32, #tpu.memory_space<vmem>>, vector<1x1x1x4x4xf32>
    %112 = vector.shape_cast %111 : vector<1x1x1x4x4xf32> to vector<4x4xf32>
    %cst_119 = arith.constant dense<0.000000e+00> : vector<64x4xf32>
    %113 = tpu.matmul %110, %112, %cst_119 {dimension_numbers = #tpu.dot_dimension_numbers<[1], [0], [0], [1], [0, 0, 1, 1], [], []>} : vector<64x4xf32>, vector<4x4xf32>, vector<64x4xf32> -> vector<64x4xf32>
    %114 = arith.addf %108, %113 : vector<64x4xf32>
    %115 = vector.extract_strided_slice %6 {offsets = [0, 0, 0], sizes = [8, 8, 4], strides = [1, 1, 1]} : vector<10x10x4xf32> to vector<8x8x4xf32>
    %116 = vector.shape_cast %115 : vector<8x8x4xf32> to vector<64x4xf32>
    %c2_120 = arith.constant 2 : index
    %c0_121 = arith.constant 0 : index
    %c0_122 = arith.constant 0 : index
    %c0_123 = arith.constant 0 : index
    %c0_124 = arith.constant 0 : index
    %117 = vector.load %arg5[%c2_120, %c0_121, %c0_122, %c0_123, %c0_124] : memref<3x3x3x4x4xf32, #tpu.memory_space<vmem>>, vector<1x1x1x4x4xf32>
    %118 = vector.shape_cast %117 : vector<1x1x1x4x4xf32> to vector<4x4xf32>
    %cst_125 = arith.constant dense<0.000000e+00> : vector<64x4xf32>
    %119 = tpu.matmul %116, %118, %cst_125 {dimension_numbers = #tpu.dot_dimension_numbers<[1], [0], [0], [1], [0, 0, 1, 1], [], []>} : vector<64x4xf32>, vector<4x4xf32>, vector<64x4xf32> -> vector<64x4xf32>
    %120 = arith.addf %114, %119 : vector<64x4xf32>
    %121 = vector.extract_strided_slice %6 {offsets = [0, 1, 0], sizes = [8, 8, 4], strides = [1, 1, 1]} : vector<10x10x4xf32> to vector<8x8x4xf32>
    %122 = vector.shape_cast %121 : vector<8x8x4xf32> to vector<64x4xf32>
    %c2_126 = arith.constant 2 : index
    %c0_127 = arith.constant 0 : index
    %c1_128 = arith.constant 1 : index
    %c0_129 = arith.constant 0 : index
    %c0_130 = arith.constant 0 : index
    %123 = vector.load %arg5[%c2_126, %c0_127, %c1_128, %c0_129, %c0_130] : memref<3x3x3x4x4xf32, #tpu.memory_space<vmem>>, vector<1x1x1x4x4xf32>
    %124 = vector.shape_cast %123 : vector<1x1x1x4x4xf32> to vector<4x4xf32>
    %cst_131 = arith.constant dense<0.000000e+00> : vector<64x4xf32>
    %125 = tpu.matmul %122, %124, %cst_131 {dimension_numbers = #tpu.dot_dimension_numbers<[1], [0], [0], [1], [0, 0, 1, 1], [], []>} : vector<64x4xf32>, vector<4x4xf32>, vector<64x4xf32> -> vector<64x4xf32>
    %126 = arith.addf %120, %125 : vector<64x4xf32>
    %127 = vector.extract_strided_slice %6 {offsets = [0, 2, 0], sizes = [8, 8, 4], strides = [1, 1, 1]} : vector<10x10x4xf32> to vector<8x8x4xf32>
    %128 = vector.shape_cast %127 : vector<8x8x4xf32> to vector<64x4xf32>
    %c2_132 = arith.constant 2 : index
    %c0_133 = arith.constant 0 : index
    %c2_134 = arith.constant 2 : index
    %c0_135 = arith.constant 0 : index
    %c0_136 = arith.constant 0 : index
    %129 = vector.load %arg5[%c2_132, %c0_133, %c2_134, %c0_135, %c0_136] : memref<3x3x3x4x4xf32, #tpu.memory_space<vmem>>, vector<1x1x1x4x4xf32>
    %130 = vector.shape_cast %129 : vector<1x1x1x4x4xf32> to vector<4x4xf32>
    %cst_137 = arith.constant dense<0.000000e+00> : vector<64x4xf32>
    %131 = tpu.matmul %128, %130, %cst_137 {dimension_numbers = #tpu.dot_dimension_numbers<[1], [0], [0], [1], [0, 0, 1, 1], [], []>} : vector<64x4xf32>, vector<4x4xf32>, vector<64x4xf32> -> vector<64x4xf32>
    %132 = arith.addf %126, %131 : vector<64x4xf32>
    %133 = vector.extract_strided_slice %6 {offsets = [1, 0, 0], sizes = [8, 8, 4], strides = [1, 1, 1]} : vector<10x10x4xf32> to vector<8x8x4xf32>
    %134 = vector.shape_cast %133 : vector<8x8x4xf32> to vector<64x4xf32>
    %c2_138 = arith.constant 2 : index
    %c1_139 = arith.constant 1 : index
    %c0_140 = arith.constant 0 : index
    %c0_141 = arith.constant 0 : index
    %c0_142 = arith.constant 0 : index
    %135 = vector.load %arg5[%c2_138, %c1_139, %c0_140, %c0_141, %c0_142] : memref<3x3x3x4x4xf32, #tpu.memory_space<vmem>>, vector<1x1x1x4x4xf32>
    %136 = vector.shape_cast %135 : vector<1x1x1x4x4xf32> to vector<4x4xf32>
    %cst_143 = arith.constant dense<0.000000e+00> : vector<64x4xf32>
    %137 = tpu.matmul %134, %136, %cst_143 {dimension_numbers = #tpu.dot_dimension_numbers<[1], [0], [0], [1], [0, 0, 1, 1], [], []>} : vector<64x4xf32>, vector<4x4xf32>, vector<64x4xf32> -> vector<64x4xf32>
    %138 = arith.addf %132, %137 : vector<64x4xf32>
    %139 = vector.extract_strided_slice %6 {offsets = [1, 1, 0], sizes = [8, 8, 4], strides = [1, 1, 1]} : vector<10x10x4xf32> to vector<8x8x4xf32>
    %140 = vector.shape_cast %139 : vector<8x8x4xf32> to vector<64x4xf32>
    %c2_144 = arith.constant 2 : index
    %c1_145 = arith.constant 1 : index
    %c1_146 = arith.constant 1 : index
    %c0_147 = arith.constant 0 : index
    %c0_148 = arith.constant 0 : index
    %141 = vector.load %arg5[%c2_144, %c1_145, %c1_146, %c0_147, %c0_148] : memref<3x3x3x4x4xf32, #tpu.memory_space<vmem>>, vector<1x1x1x4x4xf32>
    %142 = vector.shape_cast %141 : vector<1x1x1x4x4xf32> to vector<4x4xf32>
    %cst_149 = arith.constant dense<0.000000e+00> : vector<64x4xf32>
    %143 = tpu.matmul %140, %142, %cst_149 {dimension_numbers = #tpu.dot_dimension_numbers<[1], [0], [0], [1], [0, 0, 1, 1], [], []>} : vector<64x4xf32>, vector<4x4xf32>, vector<64x4xf32> -> vector<64x4xf32>
    %144 = arith.addf %138, %143 : vector<64x4xf32>
    %145 = vector.extract_strided_slice %6 {offsets = [1, 2, 0], sizes = [8, 8, 4], strides = [1, 1, 1]} : vector<10x10x4xf32> to vector<8x8x4xf32>
    %146 = vector.shape_cast %145 : vector<8x8x4xf32> to vector<64x4xf32>
    %c2_150 = arith.constant 2 : index
    %c1_151 = arith.constant 1 : index
    %c2_152 = arith.constant 2 : index
    %c0_153 = arith.constant 0 : index
    %c0_154 = arith.constant 0 : index
    %147 = vector.load %arg5[%c2_150, %c1_151, %c2_152, %c0_153, %c0_154] : memref<3x3x3x4x4xf32, #tpu.memory_space<vmem>>, vector<1x1x1x4x4xf32>
    %148 = vector.shape_cast %147 : vector<1x1x1x4x4xf32> to vector<4x4xf32>
    %cst_155 = arith.constant dense<0.000000e+00> : vector<64x4xf32>
    %149 = tpu.matmul %146, %148, %cst_155 {dimension_numbers = #tpu.dot_dimension_numbers<[1], [0], [0], [1], [0, 0, 1, 1], [], []>} : vector<64x4xf32>, vector<4x4xf32>, vector<64x4xf32> -> vector<64x4xf32>
    %150 = arith.addf %144, %149 : vector<64x4xf32>
    %151 = vector.extract_strided_slice %6 {offsets = [2, 0, 0], sizes = [8, 8, 4], strides = [1, 1, 1]} : vector<10x10x4xf32> to vector<8x8x4xf32>
    %152 = vector.shape_cast %151 : vector<8x8x4xf32> to vector<64x4xf32>
    %c2_156 = arith.constant 2 : index
    %c2_157 = arith.constant 2 : index
    %c0_158 = arith.constant 0 : index
    %c0_159 = arith.constant 0 : index
    %c0_160 = arith.constant 0 : index
    %153 = vector.load %arg5[%c2_156, %c2_157, %c0_158, %c0_159, %c0_160] : memref<3x3x3x4x4xf32, #tpu.memory_space<vmem>>, vector<1x1x1x4x4xf32>
    %154 = vector.shape_cast %153 : vector<1x1x1x4x4xf32> to vector<4x4xf32>
    %cst_161 = arith.constant dense<0.000000e+00> : vector<64x4xf32>
    %155 = tpu.matmul %152, %154, %cst_161 {dimension_numbers = #tpu.dot_dimension_numbers<[1], [0], [0], [1], [0, 0, 1, 1], [], []>} : vector<64x4xf32>, vector<4x4xf32>, vector<64x4xf32> -> vector<64x4xf32>
    %156 = arith.addf %150, %155 : vector<64x4xf32>
    %157 = vector.extract_strided_slice %6 {offsets = [2, 1, 0], sizes = [8, 8, 4], strides = [1, 1, 1]} : vector<10x10x4xf32> to vector<8x8x4xf32>
    %158 = vector.shape_cast %157 : vector<8x8x4xf32> to vector<64x4xf32>
    %c2_162 = arith.constant 2 : index
    %c2_163 = arith.constant 2 : index
    %c1_164 = arith.constant 1 : index
    %c0_165 = arith.constant 0 : index
    %c0_166 = arith.constant 0 : index
    %159 = vector.load %arg5[%c2_162, %c2_163, %c1_164, %c0_165, %c0_166] : memref<3x3x3x4x4xf32, #tpu.memory_space<vmem>>, vector<1x1x1x4x4xf32>
    %160 = vector.shape_cast %159 : vector<1x1x1x4x4xf32> to vector<4x4xf32>
    %cst_167 = arith.constant dense<0.000000e+00> : vector<64x4xf32>
    %161 = tpu.matmul %158, %160, %cst_167 {dimension_numbers = #tpu.dot_dimension_numbers<[1], [0], [0], [1], [0, 0, 1, 1], [], []>} : vector<64x4xf32>, vector<4x4xf32>, vector<64x4xf32> -> vector<64x4xf32>
    %162 = arith.addf %156, %161 : vector<64x4xf32>
    %163 = vector.extract_strided_slice %6 {offsets = [2, 2, 0], sizes = [8, 8, 4], strides = [1, 1, 1]} : vector<10x10x4xf32> to vector<8x8x4xf32>
    %164 = vector.shape_cast %163 : vector<8x8x4xf32> to vector<64x4xf32>
    %c2_168 = arith.constant 2 : index
    %c2_169 = arith.constant 2 : index
    %c2_170 = arith.constant 2 : index
    %c0_171 = arith.constant 0 : index
    %c0_172 = arith.constant 0 : index
    %165 = vector.load %arg5[%c2_168, %c2_169, %c2_170, %c0_171, %c0_172] : memref<3x3x3x4x4xf32, #tpu.memory_space<vmem>>, vector<1x1x1x4x4xf32>
    %166 = vector.shape_cast %165 : vector<1x1x1x4x4xf32> to vector<4x4xf32>
    %cst_173 = arith.constant dense<0.000000e+00> : vector<64x4xf32>
    %167 = tpu.matmul %164, %166, %cst_173 {dimension_numbers = #tpu.dot_dimension_numbers<[1], [0], [0], [1], [0, 0, 1, 1], [], []>} : vector<64x4xf32>, vector<4x4xf32>, vector<64x4xf32> -> vector<64x4xf32>
    %168 = arith.addf %162, %167 : vector<64x4xf32>
    %c0_174 = arith.constant 0 : index
    %c0_175 = arith.constant 0 : index
    %169 = vector.load %arg6[%c0_174, %c0_175] : memref<1x4xf32, #tpu.memory_space<vmem>>, vector<1x4xf32>
    %170 = vector.broadcast %169 : vector<1x4xf32> to vector<64x4xf32>
    %171 = arith.addf %168, %170 : vector<64x4xf32>
    %cst_176 = arith.constant 0.000000e+00 : f32
    %172 = vector.broadcast %cst_176 : f32 to vector<64x4xf32>
    %173 = arith.maximumf %171, %172 : vector<64x4xf32>
    %174 = vector.shape_cast %173 : vector<64x4xf32> to vector<8x8x4xf32>
    %c0_177 = arith.constant 0 : index
    %c0_178 = arith.constant 0 : index
    %c0_179 = arith.constant 0 : index
    %c0_180 = arith.constant 0 : index
    %c0_181 = arith.constant 0 : index
    %175 = vector.load %arg7[%c0_177, %c0_178, %c0_179, %c0_180, %c0_181] : memref<1x1x8x8x4xf32, #tpu.memory_space<vmem>>, vector<1x1x8x8x4xf32>
    %176 = vector.shape_cast %175 : vector<1x1x8x8x4xf32> to vector<8x8x4xf32>
    %177 = vector.shape_cast %174 : vector<8x8x4xf32> to vector<1x1x8x8x4xf32>
    tpu.vector_store %arg7[%c0_177, %c0_178, %c0_179, %c0_180, %c0_181], %177 {strides = array<i32>} : memref<1x1x8x8x4xf32, #tpu.memory_space<vmem>>, vector<1x1x8x8x4xf32>,
    return
  }
  func.func @transform_0(%arg0: i32, %arg1: i32) -> (i32, i32, i32, i32, i32) {
    %c0_i32 = arith.constant 0 : i32
    %0 = arith.addi %arg1, %c0_i32 : i32
    %c0_i32_0 = arith.constant 0 : i32
    %c0_i32_1 = arith.constant 0 : i32
    %c0_i32_2 = arith.constant 0 : i32
    %c0_i32_3 = arith.constant 0 : i32
    return %arg0, %0, %c0_i32_0, %c0_i32_1, %c0_i32_2 : i32, i32, i32, i32, i32
  }
  func.func @transform_1(%arg0: i32, %arg1: i32) -> (i32, i32, i32, i32, i32) {
    %c1_i32 = arith.constant 1 : i32
    %0 = arith.addi %arg1, %c1_i32 : i32
    %c0_i32 = arith.constant 0 : i32
    %c0_i32_0 = arith.constant 0 : i32
    %c0_i32_1 = arith.constant 0 : i32
    %c0_i32_2 = arith.constant 0 : i32
    return %arg0, %0, %c0_i32, %c0_i32_0, %c0_i32_1 : i32, i32, i32, i32, i32
  }
  func.func @transform_2(%arg0: i32, %arg1: i32) -> (i32, i32, i32, i32, i32) {
    %c2_i32 = arith.constant 2 : i32
    %0 = arith.addi %arg1, %c2_i32 : i32
    %c0_i32 = arith.constant 0 : i32
    %c0_i32_0 = arith.constant 0 : i32
    %c0_i32_1 = arith.constant 0 : i32
    %c0_i32_2 = arith.constant 0 : i32
    return %arg0, %0, %c0_i32, %c0_i32_0, %c0_i32_1 : i32, i32, i32, i32, i32
  }
  func.func @transform_3(%arg0: i32, %arg1: i32) -> (i32, i32, i32, i32, i32) {
    %c0_i32 = arith.constant 0 : i32
    %c0_i32_0 = arith.constant 0 : i32
    %c0_i32_1 = arith.constant 0 : i32
    %c0_i32_2 = arith.constant 0 : i32
    %c0_i32_3 = arith.constant 0 : i32
    %c0_i32_4 = arith.constant 0 : i32
    return %c0_i32, %c0_i32_0, %c0_i32_1, %c0_i32_2, %c0_i32_3 : i32, i32, i32, i32, i32
  }
  func.func @transform_4(%arg0: i32, %arg1: i32) -> (i32, i32) {
    %c0_i32 = arith.constant 0 : i32
    %c0_i32_0 = arith.constant 0 : i32
    %c0_i32_1 = arith.constant 0 : i32
    return %c0_i32, %c0_i32_0 : i32, i32
  }
  func.func @transform_5(%arg0: i32, %arg1: i32) -> (i32, i32, i32, i32, i32) {
    %c0_i32 = arith.constant 0 : i32
    %c0_i32_0 = arith.constant 0 : i32
    %c0_i32_1 = arith.constant 0 : i32
    %c0_i32_2 = arith.constant 0 : i32
    return %arg0, %arg1, %c0_i32, %c0_i32_0, %c0_i32_1 : i32, i32, i32, i32, i32
  }
}

module attributes {stable_mosaic.version = 11 : i64} {
  func.func @_conv3d_k3_bias_relu_kernel(%arg0: i32, %arg1: i32, %arg2: memref<1x1x10x10x4xf32, #tpu.memory_space<vmem>>, %arg3: memref<1x1x10x10x4xf32, #tpu.memory_space<vmem>>, %arg4: memref<1x1x10x10x4xf32, #tpu.memory_space<vmem>>, %arg5: memref<3x3x3x4x8xf32, #tpu.memory_space<vmem>>, %arg6: memref<1x8xf32, #tpu.memory_space<vmem>>, %arg7: memref<1x1x8x8x8xf32, #tpu.memory_space<vmem>>) attributes {dimension_semantics = [#tpu.dimension_semantics<parallel>, #tpu.dimension_semantics<parallel>], iteration_bounds = array<i64: 2, 8>, scalar_prefetch = 0 : i64, scratch_operands = 0 : i64, tpu.core_type = #tpu.core_type<tc>, window_params = [{transform_indices = @transform_0, window_bounds = array<i64: 1, 1, 10, 10, 4>}, {transform_indices = @transform_1, window_bounds = array<i64: 1, 1, 10, 10, 4>}, {transform_indices = @transform_2, window_bounds = array<i64: 1, 1, 10, 10, 4>}, {pipeline_mode = #tpu.pipeline_mode<synchronous>, transform_indices = @transform_3, window_bounds = array<i64: 3, 3, 3, 4, 8>}, {pipeline_mode = #tpu.pipeline_mode<synchronous>, transform_indices = @transform_4, window_bounds = array<i64: 1, 8>}, {transform_indices = @transform_5, window_bounds = array<i64: 1, 1, 8, 8, 8>}]} {
    %cst = arith.constant 0.000000e+00 : f32
    %0 = vector.broadcast %cst : f32 to vector<64x8xf32>
    %c0 = arith.constant 0 : index
    %c0_0 = arith.constant 0 : index
    %c0_1 = arith.constant 0 : index
    %c0_2 = arith.constant 0 : index
    %c0_3 = arith.constant 0 : index
    %1 = vector.load %arg2[%c0, %c0_0, %c0_1, %c0_2, %c0_3] : memref<1x1x10x10x4xf32, #tpu.memory_space<vmem>>, vector<1x1x10x10x4xf32>
    %2 = vector.shape_cast %1 : vector<1x1x10x10x4xf32> to vector<10x10x4xf32>
    %c0_4 = arith.constant 0 : index
    %c0_5 = arith.constant 0 : index
    %c0_6 = arith.constant 0 : index
    %c0_7 = arith.constant 0 : index
    %c0_8 = arith.constant 0 : index
    %3 = vector.load %arg3[%c0_4, %c0_5, %c0_6, %c0_7, %c0_8] : memref<1x1x10x10x4xf32, #tpu.memory_space<vmem>>, vector<1x1x10x10x4xf32>
    %4 = vector.shape_cast %3 : vector<1x1x10x10x4xf32> to vector<10x10x4xf32>
    %c0_9 = arith.constant 0 : index
    %c0_10 = arith.constant 0 : index
    %c0_11 = arith.constant 0 : index
    %c0_12 = arith.constant 0 : index
    %c0_13 = arith.constant 0 : index
    %5 = vector.load %arg4[%c0_9, %c0_10, %c0_11, %c0_12, %c0_13] : memref<1x1x10x10x4xf32, #tpu.memory_space<vmem>>, vector<1x1x10x10x4xf32>
    %6 = vector.shape_cast %5 : vector<1x1x10x10x4xf32> to vector<10x10x4xf32>
    %7 = vector.extract_strided_slice %2 {offsets = [0, 0, 0], sizes = [8, 8, 4], strides = [1, 1, 1]} : vector<10x10x4xf32> to vector<8x8x4xf32>
    %8 = vector.shape_cast %7 : vector<8x8x4xf32> to vector<64x4xf32>
    %c0_14 = arith.constant 0 : index
    %c0_15 = arith.constant 0 : index
    %c0_16 = arith.constant 0 : index
    %c0_17 = arith.constant 0 : index
    %c0_18 = arith.constant 0 : index
    %9 = vector.load %arg5[%c0_14, %c0_15, %c0_16, %c0_17, %c0_18] : memref<3x3x3x4x8xf32, #tpu.memory_space<vmem>>, vector<1x1x1x4x8xf32>
    %10 = vector.shape_cast %9 : vector<1x1x1x4x8xf32> to vector<4x8xf32>
    %cst_19 = arith.constant dense<0.000000e+00> : vector<64x8xf32>
    %11 = tpu.matmul %8, %10, %cst_19 {dimension_numbers = #tpu.dot_dimension_numbers<[1], [0], [0], [1], [0, 0, 1, 1], [], []>} : vector<64x4xf32>, vector<4x8xf32>, vector<64x8xf32> -> vector<64x8xf32>
    %12 = arith.addf %0, %11 : vector<64x8xf32>
    %13 = vector.extract_strided_slice %2 {offsets = [0, 1, 0], sizes = [8, 8, 4], strides = [1, 1, 1]} : vector<10x10x4xf32> to vector<8x8x4xf32>
    %14 = vector.shape_cast %13 : vector<8x8x4xf32> to vector<64x4xf32>
    %c0_20 = arith.constant 0 : index
    %c0_21 = arith.constant 0 : index
    %c1 = arith.constant 1 : index
    %c0_22 = arith.constant 0 : index
    %c0_23 = arith.constant 0 : index
    %15 = vector.load %arg5[%c0_20, %c0_21, %c1, %c0_22, %c0_23] : memref<3x3x3x4x8xf32, #tpu.memory_space<vmem>>, vector<1x1x1x4x8xf32>
    %16 = vector.shape_cast %15 : vector<1x1x1x4x8xf32> to vector<4x8xf32>
    %cst_24 = arith.constant dense<0.000000e+00> : vector<64x8xf32>
    %17 = tpu.matmul %14, %16, %cst_24 {dimension_numbers = #tpu.dot_dimension_numbers<[1], [0], [0], [1], [0, 0, 1, 1], [], []>} : vector<64x4xf32>, vector<4x8xf32>, vector<64x8xf32> -> vector<64x8xf32>
    %18 = arith.addf %12, %17 : vector<64x8xf32>
    %19 = vector.extract_strided_slice %2 {offsets = [0, 2, 0], sizes = [8, 8, 4], strides = [1, 1, 1]} : vector<10x10x4xf32> to vector<8x8x4xf32>
    %20 = vector.shape_cast %19 : vector<8x8x4xf32> to vector<64x4xf32>
    %c0_25 = arith.constant 0 : index
    %c0_26 = arith.constant 0 : index
    %c2 = arith.constant 2 : index
    %c0_27 = arith.constant 0 : index
    %c0_28 = arith.constant 0 : index
    %21 = vector.load %arg5[%c0_25, %c0_26, %c2, %c0_27, %c0_28] : memref<3x3x3x4x8xf32, #tpu.memory_space<vmem>>, vector<1x1x1x4x8xf32>
    %22 = vector.shape_cast %21 : vector<1x1x1x4x8xf32> to vector<4x8xf32>
    %cst_29 = arith.constant dense<0.000000e+00> : vector<64x8xf32>
    %23 = tpu.matmul %20, %22, %cst_29 {dimension_numbers = #tpu.dot_dimension_numbers<[1], [0], [0], [1], [0, 0, 1, 1], [], []>} : vector<64x4xf32>, vector<4x8xf32>, vector<64x8xf32> -> vector<64x8xf32>
    %24 = arith.addf %18, %23 : vector<64x8xf32>
    %25 = vector.extract_strided_slice %2 {offsets = [1, 0, 0], sizes = [8, 8, 4], strides = [1, 1, 1]} : vector<10x10x4xf32> to vector<8x8x4xf32>
    %26 = vector.shape_cast %25 : vector<8x8x4xf32> to vector<64x4xf32>
    %c0_30 = arith.constant 0 : index
    %c1_31 = arith.constant 1 : index
    %c0_32 = arith.constant 0 : index
    %c0_33 = arith.constant 0 : index
    %c0_34 = arith.constant 0 : index
    %27 = vector.load %arg5[%c0_30, %c1_31, %c0_32, %c0_33, %c0_34] : memref<3x3x3x4x8xf32, #tpu.memory_space<vmem>>, vector<1x1x1x4x8xf32>
    %28 = vector.shape_cast %27 : vector<1x1x1x4x8xf32> to vector<4x8xf32>
    %cst_35 = arith.constant dense<0.000000e+00> : vector<64x8xf32>
    %29 = tpu.matmul %26, %28, %cst_35 {dimension_numbers = #tpu.dot_dimension_numbers<[1], [0], [0], [1], [0, 0, 1, 1], [], []>} : vector<64x4xf32>, vector<4x8xf32>, vector<64x8xf32> -> vector<64x8xf32>
    %30 = arith.addf %24, %29 : vector<64x8xf32>
    %31 = vector.extract_strided_slice %2 {offsets = [1, 1, 0], sizes = [8, 8, 4], strides = [1, 1, 1]} : vector<10x10x4xf32> to vector<8x8x4xf32>
    %32 = vector.shape_cast %31 : vector<8x8x4xf32> to vector<64x4xf32>
    %c0_36 = arith.constant 0 : index
    %c1_37 = arith.constant 1 : index
    %c1_38 = arith.constant 1 : index
    %c0_39 = arith.constant 0 : index
    %c0_40 = arith.constant 0 : index
    %33 = vector.load %arg5[%c0_36, %c1_37, %c1_38, %c0_39, %c0_40] : memref<3x3x3x4x8xf32, #tpu.memory_space<vmem>>, vector<1x1x1x4x8xf32>
    %34 = vector.shape_cast %33 : vector<1x1x1x4x8xf32> to vector<4x8xf32>
    %cst_41 = arith.constant dense<0.000000e+00> : vector<64x8xf32>
    %35 = tpu.matmul %32, %34, %cst_41 {dimension_numbers = #tpu.dot_dimension_numbers<[1], [0], [0], [1], [0, 0, 1, 1], [], []>} : vector<64x4xf32>, vector<4x8xf32>, vector<64x8xf32> -> vector<64x8xf32>
    %36 = arith.addf %30, %35 : vector<64x8xf32>
    %37 = vector.extract_strided_slice %2 {offsets = [1, 2, 0], sizes = [8, 8, 4], strides = [1, 1, 1]} : vector<10x10x4xf32> to vector<8x8x4xf32>
    %38 = vector.shape_cast %37 : vector<8x8x4xf32> to vector<64x4xf32>
    %c0_42 = arith.constant 0 : index
    %c1_43 = arith.constant 1 : index
    %c2_44 = arith.constant 2 : index
    %c0_45 = arith.constant 0 : index
    %c0_46 = arith.constant 0 : index
    %39 = vector.load %arg5[%c0_42, %c1_43, %c2_44, %c0_45, %c0_46] : memref<3x3x3x4x8xf32, #tpu.memory_space<vmem>>, vector<1x1x1x4x8xf32>
    %40 = vector.shape_cast %39 : vector<1x1x1x4x8xf32> to vector<4x8xf32>
    %cst_47 = arith.constant dense<0.000000e+00> : vector<64x8xf32>
    %41 = tpu.matmul %38, %40, %cst_47 {dimension_numbers = #tpu.dot_dimension_numbers<[1], [0], [0], [1], [0, 0, 1, 1], [], []>} : vector<64x4xf32>, vector<4x8xf32>, vector<64x8xf32> -> vector<64x8xf32>
    %42 = arith.addf %36, %41 : vector<64x8xf32>
    %43 = vector.extract_strided_slice %2 {offsets = [2, 0, 0], sizes = [8, 8, 4], strides = [1, 1, 1]} : vector<10x10x4xf32> to vector<8x8x4xf32>
    %44 = vector.shape_cast %43 : vector<8x8x4xf32> to vector<64x4xf32>
    %c0_48 = arith.constant 0 : index
    %c2_49 = arith.constant 2 : index
    %c0_50 = arith.constant 0 : index
    %c0_51 = arith.constant 0 : index
    %c0_52 = arith.constant 0 : index
    %45 = vector.load %arg5[%c0_48, %c2_49, %c0_50, %c0_51, %c0_52] : memref<3x3x3x4x8xf32, #tpu.memory_space<vmem>>, vector<1x1x1x4x8xf32>
    %46 = vector.shape_cast %45 : vector<1x1x1x4x8xf32> to vector<4x8xf32>
    %cst_53 = arith.constant dense<0.000000e+00> : vector<64x8xf32>
    %47 = tpu.matmul %44, %46, %cst_53 {dimension_numbers = #tpu.dot_dimension_numbers<[1], [0], [0], [1], [0, 0, 1, 1], [], []>} : vector<64x4xf32>, vector<4x8xf32>, vector<64x8xf32> -> vector<64x8xf32>
    %48 = arith.addf %42, %47 : vector<64x8xf32>
    %49 = vector.extract_strided_slice %2 {offsets = [2, 1, 0], sizes = [8, 8, 4], strides = [1, 1, 1]} : vector<10x10x4xf32> to vector<8x8x4xf32>
    %50 = vector.shape_cast %49 : vector<8x8x4xf32> to vector<64x4xf32>
    %c0_54 = arith.constant 0 : index
    %c2_55 = arith.constant 2 : index
    %c1_56 = arith.constant 1 : index
    %c0_57 = arith.constant 0 : index
    %c0_58 = arith.constant 0 : index
    %51 = vector.load %arg5[%c0_54, %c2_55, %c1_56, %c0_57, %c0_58] : memref<3x3x3x4x8xf32, #tpu.memory_space<vmem>>, vector<1x1x1x4x8xf32>
    %52 = vector.shape_cast %51 : vector<1x1x1x4x8xf32> to vector<4x8xf32>
    %cst_59 = arith.constant dense<0.000000e+00> : vector<64x8xf32>
    %53 = tpu.matmul %50, %52, %cst_59 {dimension_numbers = #tpu.dot_dimension_numbers<[1], [0], [0], [1], [0, 0, 1, 1], [], []>} : vector<64x4xf32>, vector<4x8xf32>, vector<64x8xf32> -> vector<64x8xf32>
    %54 = arith.addf %48, %53 : vector<64x8xf32>
    %55 = vector.extract_strided_slice %2 {offsets = [2, 2, 0], sizes = [8, 8, 4], strides = [1, 1, 1]} : vector<10x10x4xf32> to vector<8x8x4xf32>
    %56 = vector.shape_cast %55 : vector<8x8x4xf32> to vector<64x4xf32>
    %c0_60 = arith.constant 0 : index
    %c2_61 = arith.constant 2 : index
    %c2_62 = arith.constant 2 : index
    %c0_63 = arith.constant 0 : index
    %c0_64 = arith.constant 0 : index
    %57 = vector.load %arg5[%c0_60, %c2_61, %c2_62, %c0_63, %c0_64] : memref<3x3x3x4x8xf32, #tpu.memory_space<vmem>>, vector<1x1x1x4x8xf32>
    %58 = vector.shape_cast %57 : vector<1x1x1x4x8xf32> to vector<4x8xf32>
    %cst_65 = arith.constant dense<0.000000e+00> : vector<64x8xf32>
    %59 = tpu.matmul %56, %58, %cst_65 {dimension_numbers = #tpu.dot_dimension_numbers<[1], [0], [0], [1], [0, 0, 1, 1], [], []>} : vector<64x4xf32>, vector<4x8xf32>, vector<64x8xf32> -> vector<64x8xf32>
    %60 = arith.addf %54, %59 : vector<64x8xf32>
    %61 = vector.extract_strided_slice %4 {offsets = [0, 0, 0], sizes = [8, 8, 4], strides = [1, 1, 1]} : vector<10x10x4xf32> to vector<8x8x4xf32>
    %62 = vector.shape_cast %61 : vector<8x8x4xf32> to vector<64x4xf32>
    %c1_66 = arith.constant 1 : index
    %c0_67 = arith.constant 0 : index
    %c0_68 = arith.constant 0 : index
    %c0_69 = arith.constant 0 : index
    %c0_70 = arith.constant 0 : index
    %63 = vector.load %arg5[%c1_66, %c0_67, %c0_68, %c0_69, %c0_70] : memref<3x3x3x4x8xf32, #tpu.memory_space<vmem>>, vector<1x1x1x4x8xf32>
    %64 = vector.shape_cast %63 : vector<1x1x1x4x8xf32> to vector<4x8xf32>
    %cst_71 = arith.constant dense<0.000000e+00> : vector<64x8xf32>
    %65 = tpu.matmul %62, %64, %cst_71 {dimension_numbers = #tpu.dot_dimension_numbers<[1], [0], [0], [1], [0, 0, 1, 1], [], []>} : vector<64x4xf32>, vector<4x8xf32>, vector<64x8xf32> -> vector<64x8xf32>
    %66 = arith.addf %60, %65 : vector<64x8xf32>
    %67 = vector.extract_strided_slice %4 {offsets = [0, 1, 0], sizes = [8, 8, 4], strides = [1, 1, 1]} : vector<10x10x4xf32> to vector<8x8x4xf32>
    %68 = vector.shape_cast %67 : vector<8x8x4xf32> to vector<64x4xf32>
    %c1_72 = arith.constant 1 : index
    %c0_73 = arith.constant 0 : index
    %c1_74 = arith.constant 1 : index
    %c0_75 = arith.constant 0 : index
    %c0_76 = arith.constant 0 : index
    %69 = vector.load %arg5[%c1_72, %c0_73, %c1_74, %c0_75, %c0_76] : memref<3x3x3x4x8xf32, #tpu.memory_space<vmem>>, vector<1x1x1x4x8xf32>
    %70 = vector.shape_cast %69 : vector<1x1x1x4x8xf32> to vector<4x8xf32>
    %cst_77 = arith.constant dense<0.000000e+00> : vector<64x8xf32>
    %71 = tpu.matmul %68, %70, %cst_77 {dimension_numbers = #tpu.dot_dimension_numbers<[1], [0], [0], [1], [0, 0, 1, 1], [], []>} : vector<64x4xf32>, vector<4x8xf32>, vector<64x8xf32> -> vector<64x8xf32>
    %72 = arith.addf %66, %71 : vector<64x8xf32>
    %73 = vector.extract_strided_slice %4 {offsets = [0, 2, 0], sizes = [8, 8, 4], strides = [1, 1, 1]} : vector<10x10x4xf32> to vector<8x8x4xf32>
    %74 = vector.shape_cast %73 : vector<8x8x4xf32> to vector<64x4xf32>
    %c1_78 = arith.constant 1 : index
    %c0_79 = arith.constant 0 : index
    %c2_80 = arith.constant 2 : index
    %c0_81 = arith.constant 0 : index
    %c0_82 = arith.constant 0 : index
    %75 = vector.load %arg5[%c1_78, %c0_79, %c2_80, %c0_81, %c0_82] : memref<3x3x3x4x8xf32, #tpu.memory_space<vmem>>, vector<1x1x1x4x8xf32>
    %76 = vector.shape_cast %75 : vector<1x1x1x4x8xf32> to vector<4x8xf32>
    %cst_83 = arith.constant dense<0.000000e+00> : vector<64x8xf32>
    %77 = tpu.matmul %74, %76, %cst_83 {dimension_numbers = #tpu.dot_dimension_numbers<[1], [0], [0], [1], [0, 0, 1, 1], [], []>} : vector<64x4xf32>, vector<4x8xf32>, vector<64x8xf32> -> vector<64x8xf32>
    %78 = arith.addf %72, %77 : vector<64x8xf32>
    %79 = vector.extract_strided_slice %4 {offsets = [1, 0, 0], sizes = [8, 8, 4], strides = [1, 1, 1]} : vector<10x10x4xf32> to vector<8x8x4xf32>
    %80 = vector.shape_cast %79 : vector<8x8x4xf32> to vector<64x4xf32>
    %c1_84 = arith.constant 1 : index
    %c1_85 = arith.constant 1 : index
    %c0_86 = arith.constant 0 : index
    %c0_87 = arith.constant 0 : index
    %c0_88 = arith.constant 0 : index
    %81 = vector.load %arg5[%c1_84, %c1_85, %c0_86, %c0_87, %c0_88] : memref<3x3x3x4x8xf32, #tpu.memory_space<vmem>>, vector<1x1x1x4x8xf32>
    %82 = vector.shape_cast %81 : vector<1x1x1x4x8xf32> to vector<4x8xf32>
    %cst_89 = arith.constant dense<0.000000e+00> : vector<64x8xf32>
    %83 = tpu.matmul %80, %82, %cst_89 {dimension_numbers = #tpu.dot_dimension_numbers<[1], [0], [0], [1], [0, 0, 1, 1], [], []>} : vector<64x4xf32>, vector<4x8xf32>, vector<64x8xf32> -> vector<64x8xf32>
    %84 = arith.addf %78, %83 : vector<64x8xf32>
    %85 = vector.extract_strided_slice %4 {offsets = [1, 1, 0], sizes = [8, 8, 4], strides = [1, 1, 1]} : vector<10x10x4xf32> to vector<8x8x4xf32>
    %86 = vector.shape_cast %85 : vector<8x8x4xf32> to vector<64x4xf32>
    %c1_90 = arith.constant 1 : index
    %c1_91 = arith.constant 1 : index
    %c1_92 = arith.constant 1 : index
    %c0_93 = arith.constant 0 : index
    %c0_94 = arith.constant 0 : index
    %87 = vector.load %arg5[%c1_90, %c1_91, %c1_92, %c0_93, %c0_94] : memref<3x3x3x4x8xf32, #tpu.memory_space<vmem>>, vector<1x1x1x4x8xf32>
    %88 = vector.shape_cast %87 : vector<1x1x1x4x8xf32> to vector<4x8xf32>
    %cst_95 = arith.constant dense<0.000000e+00> : vector<64x8xf32>
    %89 = tpu.matmul %86, %88, %cst_95 {dimension_numbers = #tpu.dot_dimension_numbers<[1], [0], [0], [1], [0, 0, 1, 1], [], []>} : vector<64x4xf32>, vector<4x8xf32>, vector<64x8xf32> -> vector<64x8xf32>
    %90 = arith.addf %84, %89 : vector<64x8xf32>
    %91 = vector.extract_strided_slice %4 {offsets = [1, 2, 0], sizes = [8, 8, 4], strides = [1, 1, 1]} : vector<10x10x4xf32> to vector<8x8x4xf32>
    %92 = vector.shape_cast %91 : vector<8x8x4xf32> to vector<64x4xf32>
    %c1_96 = arith.constant 1 : index
    %c1_97 = arith.constant 1 : index
    %c2_98 = arith.constant 2 : index
    %c0_99 = arith.constant 0 : index
    %c0_100 = arith.constant 0 : index
    %93 = vector.load %arg5[%c1_96, %c1_97, %c2_98, %c0_99, %c0_100] : memref<3x3x3x4x8xf32, #tpu.memory_space<vmem>>, vector<1x1x1x4x8xf32>
    %94 = vector.shape_cast %93 : vector<1x1x1x4x8xf32> to vector<4x8xf32>
    %cst_101 = arith.constant dense<0.000000e+00> : vector<64x8xf32>
    %95 = tpu.matmul %92, %94, %cst_101 {dimension_numbers = #tpu.dot_dimension_numbers<[1], [0], [0], [1], [0, 0, 1, 1], [], []>} : vector<64x4xf32>, vector<4x8xf32>, vector<64x8xf32> -> vector<64x8xf32>
    %96 = arith.addf %90, %95 : vector<64x8xf32>
    %97 = vector.extract_strided_slice %4 {offsets = [2, 0, 0], sizes = [8, 8, 4], strides = [1, 1, 1]} : vector<10x10x4xf32> to vector<8x8x4xf32>
    %98 = vector.shape_cast %97 : vector<8x8x4xf32> to vector<64x4xf32>
    %c1_102 = arith.constant 1 : index
    %c2_103 = arith.constant 2 : index
    %c0_104 = arith.constant 0 : index
    %c0_105 = arith.constant 0 : index
    %c0_106 = arith.constant 0 : index
    %99 = vector.load %arg5[%c1_102, %c2_103, %c0_104, %c0_105, %c0_106] : memref<3x3x3x4x8xf32, #tpu.memory_space<vmem>>, vector<1x1x1x4x8xf32>
    %100 = vector.shape_cast %99 : vector<1x1x1x4x8xf32> to vector<4x8xf32>
    %cst_107 = arith.constant dense<0.000000e+00> : vector<64x8xf32>
    %101 = tpu.matmul %98, %100, %cst_107 {dimension_numbers = #tpu.dot_dimension_numbers<[1], [0], [0], [1], [0, 0, 1, 1], [], []>} : vector<64x4xf32>, vector<4x8xf32>, vector<64x8xf32> -> vector<64x8xf32>
    %102 = arith.addf %96, %101 : vector<64x8xf32>
    %103 = vector.extract_strided_slice %4 {offsets = [2, 1, 0], sizes = [8, 8, 4], strides = [1, 1, 1]} : vector<10x10x4xf32> to vector<8x8x4xf32>
    %104 = vector.shape_cast %103 : vector<8x8x4xf32> to vector<64x4xf32>
    %c1_108 = arith.constant 1 : index
    %c2_109 = arith.constant 2 : index
    %c1_110 = arith.constant 1 : index
    %c0_111 = arith.constant 0 : index
    %c0_112 = arith.constant 0 : index
    %105 = vector.load %arg5[%c1_108, %c2_109, %c1_110, %c0_111, %c0_112] : memref<3x3x3x4x8xf32, #tpu.memory_space<vmem>>, vector<1x1x1x4x8xf32>
    %106 = vector.shape_cast %105 : vector<1x1x1x4x8xf32> to vector<4x8xf32>
    %cst_113 = arith.constant dense<0.000000e+00> : vector<64x8xf32>
    %107 = tpu.matmul %104, %106, %cst_113 {dimension_numbers = #tpu.dot_dimension_numbers<[1], [0], [0], [1], [0, 0, 1, 1], [], []>} : vector<64x4xf32>, vector<4x8xf32>, vector<64x8xf32> -> vector<64x8xf32>
    %108 = arith.addf %102, %107 : vector<64x8xf32>
    %109 = vector.extract_strided_slice %4 {offsets = [2, 2, 0], sizes = [8, 8, 4], strides = [1, 1, 1]} : vector<10x10x4xf32> to vector<8x8x4xf32>
    %110 = vector.shape_cast %109 : vector<8x8x4xf32> to vector<64x4xf32>
    %c1_114 = arith.constant 1 : index
    %c2_115 = arith.constant 2 : index
    %c2_116 = arith.constant 2 : index
    %c0_117 = arith.constant 0 : index
    %c0_118 = arith.constant 0 : index
    %111 = vector.load %arg5[%c1_114, %c2_115, %c2_116, %c0_117, %c0_118] : memref<3x3x3x4x8xf32, #tpu.memory_space<vmem>>, vector<1x1x1x4x8xf32>
    %112 = vector.shape_cast %111 : vector<1x1x1x4x8xf32> to vector<4x8xf32>
    %cst_119 = arith.constant dense<0.000000e+00> : vector<64x8xf32>
    %113 = tpu.matmul %110, %112, %cst_119 {dimension_numbers = #tpu.dot_dimension_numbers<[1], [0], [0], [1], [0, 0, 1, 1], [], []>} : vector<64x4xf32>, vector<4x8xf32>, vector<64x8xf32> -> vector<64x8xf32>
    %114 = arith.addf %108, %113 : vector<64x8xf32>
    %115 = vector.extract_strided_slice %6 {offsets = [0, 0, 0], sizes = [8, 8, 4], strides = [1, 1, 1]} : vector<10x10x4xf32> to vector<8x8x4xf32>
    %116 = vector.shape_cast %115 : vector<8x8x4xf32> to vector<64x4xf32>
    %c2_120 = arith.constant 2 : index
    %c0_121 = arith.constant 0 : index
    %c0_122 = arith.constant 0 : index
    %c0_123 = arith.constant 0 : index
    %c0_124 = arith.constant 0 : index
    %117 = vector.load %arg5[%c2_120, %c0_121, %c0_122, %c0_123, %c0_124] : memref<3x3x3x4x8xf32, #tpu.memory_space<vmem>>, vector<1x1x1x4x8xf32>
    %118 = vector.shape_cast %117 : vector<1x1x1x4x8xf32> to vector<4x8xf32>
    %cst_125 = arith.constant dense<0.000000e+00> : vector<64x8xf32>
    %119 = tpu.matmul %116, %118, %cst_125 {dimension_numbers = #tpu.dot_dimension_numbers<[1], [0], [0], [1], [0, 0, 1, 1], [], []>} : vector<64x4xf32>, vector<4x8xf32>, vector<64x8xf32> -> vector<64x8xf32>
    %120 = arith.addf %114, %119 : vector<64x8xf32>
    %121 = vector.extract_strided_slice %6 {offsets = [0, 1, 0], sizes = [8, 8, 4], strides = [1, 1, 1]} : vector<10x10x4xf32> to vector<8x8x4xf32>
    %122 = vector.shape_cast %121 : vector<8x8x4xf32> to vector<64x4xf32>
    %c2_126 = arith.constant 2 : index
    %c0_127 = arith.constant 0 : index
    %c1_128 = arith.constant 1 : index
    %c0_129 = arith.constant 0 : index
    %c0_130 = arith.constant 0 : index
    %123 = vector.load %arg5[%c2_126, %c0_127, %c1_128, %c0_129, %c0_130] : memref<3x3x3x4x8xf32, #tpu.memory_space<vmem>>, vector<1x1x1x4x8xf32>
    %124 = vector.shape_cast %123 : vector<1x1x1x4x8xf32> to vector<4x8xf32>
    %cst_131 = arith.constant dense<0.000000e+00> : vector<64x8xf32>
    %125 = tpu.matmul %122, %124, %cst_131 {dimension_numbers = #tpu.dot_dimension_numbers<[1], [0], [0], [1], [0, 0, 1, 1], [], []>} : vector<64x4xf32>, vector<4x8xf32>, vector<64x8xf32> -> vector<64x8xf32>
    %126 = arith.addf %120, %125 : vector<64x8xf32>
    %127 = vector.extract_strided_slice %6 {offsets = [0, 2, 0], sizes = [8, 8, 4], strides = [1, 1, 1]} : vector<10x10x4xf32> to vector<8x8x4xf32>
    %128 = vector.shape_cast %127 : vector<8x8x4xf32> to vector<64x4xf32>
    %c2_132 = arith.constant 2 : index
    %c0_133 = arith.constant 0 : index
    %c2_134 = arith.constant 2 : index
    %c0_135 = arith.constant 0 : index
    %c0_136 = arith.constant 0 : index
    %129 = vector.load %arg5[%c2_132, %c0_133, %c2_134, %c0_135, %c0_136] : memref<3x3x3x4x8xf32, #tpu.memory_space<vmem>>, vector<1x1x1x4x8xf32>
    %130 = vector.shape_cast %129 : vector<1x1x1x4x8xf32> to vector<4x8xf32>
    %cst_137 = arith.constant dense<0.000000e+00> : vector<64x8xf32>
    %131 = tpu.matmul %128, %130, %cst_137 {dimension_numbers = #tpu.dot_dimension_numbers<[1], [0], [0], [1], [0, 0, 1, 1], [], []>} : vector<64x4xf32>, vector<4x8xf32>, vector<64x8xf32> -> vector<64x8xf32>
    %132 = arith.addf %126, %131 : vector<64x8xf32>
    %133 = vector.extract_strided_slice %6 {offsets = [1, 0, 0], sizes = [8, 8, 4], strides = [1, 1, 1]} : vector<10x10x4xf32> to vector<8x8x4xf32>
    %134 = vector.shape_cast %133 : vector<8x8x4xf32> to vector<64x4xf32>
    %c2_138 = arith.constant 2 : index
    %c1_139 = arith.constant 1 : index
    %c0_140 = arith.constant 0 : index
    %c0_141 = arith.constant 0 : index
    %c0_142 = arith.constant 0 : index
    %135 = vector.load %arg5[%c2_138, %c1_139, %c0_140, %c0_141, %c0_142] : memref<3x3x3x4x8xf32, #tpu.memory_space<vmem>>, vector<1x1x1x4x8xf32>
    %136 = vector.shape_cast %135 : vector<1x1x1x4x8xf32> to vector<4x8xf32>
    %cst_143 = arith.constant dense<0.000000e+00> : vector<64x8xf32>
    %137 = tpu.matmul %134, %136, %cst_143 {dimension_numbers = #tpu.dot_dimension_numbers<[1], [0], [0], [1], [0, 0, 1, 1], [], []>} : vector<64x4xf32>, vector<4x8xf32>, vector<64x8xf32> -> vector<64x8xf32>
    %138 = arith.addf %132, %137 : vector<64x8xf32>
    %139 = vector.extract_strided_slice %6 {offsets = [1, 1, 0], sizes = [8, 8, 4], strides = [1, 1, 1]} : vector<10x10x4xf32> to vector<8x8x4xf32>
    %140 = vector.shape_cast %139 : vector<8x8x4xf32> to vector<64x4xf32>
    %c2_144 = arith.constant 2 : index
    %c1_145 = arith.constant 1 : index
    %c1_146 = arith.constant 1 : index
    %c0_147 = arith.constant 0 : index
    %c0_148 = arith.constant 0 : index
    %141 = vector.load %arg5[%c2_144, %c1_145, %c1_146, %c0_147, %c0_148] : memref<3x3x3x4x8xf32, #tpu.memory_space<vmem>>, vector<1x1x1x4x8xf32>
    %142 = vector.shape_cast %141 : vector<1x1x1x4x8xf32> to vector<4x8xf32>
    %cst_149 = arith.constant dense<0.000000e+00> : vector<64x8xf32>
    %143 = tpu.matmul %140, %142, %cst_149 {dimension_numbers = #tpu.dot_dimension_numbers<[1], [0], [0], [1], [0, 0, 1, 1], [], []>} : vector<64x4xf32>, vector<4x8xf32>, vector<64x8xf32> -> vector<64x8xf32>
    %144 = arith.addf %138, %143 : vector<64x8xf32>
    %145 = vector.extract_strided_slice %6 {offsets = [1, 2, 0], sizes = [8, 8, 4], strides = [1, 1, 1]} : vector<10x10x4xf32> to vector<8x8x4xf32>
    %146 = vector.shape_cast %145 : vector<8x8x4xf32> to vector<64x4xf32>
    %c2_150 = arith.constant 2 : index
    %c1_151 = arith.constant 1 : index
    %c2_152 = arith.constant 2 : index
    %c0_153 = arith.constant 0 : index
    %c0_154 = arith.constant 0 : index
    %147 = vector.load %arg5[%c2_150, %c1_151, %c2_152, %c0_153, %c0_154] : memref<3x3x3x4x8xf32, #tpu.memory_space<vmem>>, vector<1x1x1x4x8xf32>
    %148 = vector.shape_cast %147 : vector<1x1x1x4x8xf32> to vector<4x8xf32>
    %cst_155 = arith.constant dense<0.000000e+00> : vector<64x8xf32>
    %149 = tpu.matmul %146, %148, %cst_155 {dimension_numbers = #tpu.dot_dimension_numbers<[1], [0], [0], [1], [0, 0, 1, 1], [], []>} : vector<64x4xf32>, vector<4x8xf32>, vector<64x8xf32> -> vector<64x8xf32>
    %150 = arith.addf %144, %149 : vector<64x8xf32>
    %151 = vector.extract_strided_slice %6 {offsets = [2, 0, 0], sizes = [8, 8, 4], strides = [1, 1, 1]} : vector<10x10x4xf32> to vector<8x8x4xf32>
    %152 = vector.shape_cast %151 : vector<8x8x4xf32> to vector<64x4xf32>
    %c2_156 = arith.constant 2 : index
    %c2_157 = arith.constant 2 : index
    %c0_158 = arith.constant 0 : index
    %c0_159 = arith.constant 0 : index
    %c0_160 = arith.constant 0 : index
    %153 = vector.load %arg5[%c2_156, %c2_157, %c0_158, %c0_159, %c0_160] : memref<3x3x3x4x8xf32, #tpu.memory_space<vmem>>, vector<1x1x1x4x8xf32>
    %154 = vector.shape_cast %153 : vector<1x1x1x4x8xf32> to vector<4x8xf32>
    %cst_161 = arith.constant dense<0.000000e+00> : vector<64x8xf32>
    %155 = tpu.matmul %152, %154, %cst_161 {dimension_numbers = #tpu.dot_dimension_numbers<[1], [0], [0], [1], [0, 0, 1, 1], [], []>} : vector<64x4xf32>, vector<4x8xf32>, vector<64x8xf32> -> vector<64x8xf32>
    %156 = arith.addf %150, %155 : vector<64x8xf32>
    %157 = vector.extract_strided_slice %6 {offsets = [2, 1, 0], sizes = [8, 8, 4], strides = [1, 1, 1]} : vector<10x10x4xf32> to vector<8x8x4xf32>
    %158 = vector.shape_cast %157 : vector<8x8x4xf32> to vector<64x4xf32>
    %c2_162 = arith.constant 2 : index
    %c2_163 = arith.constant 2 : index
    %c1_164 = arith.constant 1 : index
    %c0_165 = arith.constant 0 : index
    %c0_166 = arith.constant 0 : index
    %159 = vector.load %arg5[%c2_162, %c2_163, %c1_164, %c0_165, %c0_166] : memref<3x3x3x4x8xf32, #tpu.memory_space<vmem>>, vector<1x1x1x4x8xf32>
    %160 = vector.shape_cast %159 : vector<1x1x1x4x8xf32> to vector<4x8xf32>
    %cst_167 = arith.constant dense<0.000000e+00> : vector<64x8xf32>
    %161 = tpu.matmul %158, %160, %cst_167 {dimension_numbers = #tpu.dot_dimension_numbers<[1], [0], [0], [1], [0, 0, 1, 1], [], []>} : vector<64x4xf32>, vector<4x8xf32>, vector<64x8xf32> -> vector<64x8xf32>
    %162 = arith.addf %156, %161 : vector<64x8xf32>
    %163 = vector.extract_strided_slice %6 {offsets = [2, 2, 0], sizes = [8, 8, 4], strides = [1, 1, 1]} : vector<10x10x4xf32> to vector<8x8x4xf32>
    %164 = vector.shape_cast %163 : vector<8x8x4xf32> to vector<64x4xf32>
    %c2_168 = arith.constant 2 : index
    %c2_169 = arith.constant 2 : index
    %c2_170 = arith.constant 2 : index
    %c0_171 = arith.constant 0 : index
    %c0_172 = arith.constant 0 : index
    %165 = vector.load %arg5[%c2_168, %c2_169, %c2_170, %c0_171, %c0_172] : memref<3x3x3x4x8xf32, #tpu.memory_space<vmem>>, vector<1x1x1x4x8xf32>
    %166 = vector.shape_cast %165 : vector<1x1x1x4x8xf32> to vector<4x8xf32>
    %cst_173 = arith.constant dense<0.000000e+00> : vector<64x8xf32>
    %167 = tpu.matmul %164, %166, %cst_173 {dimension_numbers = #tpu.dot_dimension_numbers<[1], [0], [0], [1], [0, 0, 1, 1], [], []>} : vector<64x4xf32>, vector<4x8xf32>, vector<64x8xf32> -> vector<64x8xf32>
    %168 = arith.addf %162, %167 : vector<64x8xf32>
    %c0_174 = arith.constant 0 : index
    %c0_175 = arith.constant 0 : index
    %169 = vector.load %arg6[%c0_174, %c0_175] : memref<1x8xf32, #tpu.memory_space<vmem>>, vector<1x8xf32>
    %170 = vector.broadcast %169 : vector<1x8xf32> to vector<64x8xf32>
    %171 = arith.addf %168, %170 : vector<64x8xf32>
    %cst_176 = arith.constant 0.000000e+00 : f32
    %172 = vector.broadcast %cst_176 : f32 to vector<64x8xf32>
    %173 = arith.maximumf %171, %172 : vector<64x8xf32>
    %174 = vector.shape_cast %173 : vector<64x8xf32> to vector<8x8x8xf32>
    %c0_177 = arith.constant 0 : index
    %c0_178 = arith.constant 0 : index
    %c0_179 = arith.constant 0 : index
    %c0_180 = arith.constant 0 : index
    %c0_181 = arith.constant 0 : index
    %175 = vector.load %arg7[%c0_177, %c0_178, %c0_179, %c0_180, %c0_181] : memref<1x1x8x8x8xf32, #tpu.memory_space<vmem>>, vector<1x1x8x8x8xf32>
    %176 = vector.shape_cast %175 : vector<1x1x8x8x8xf32> to vector<8x8x8xf32>
    %177 = vector.shape_cast %174 : vector<8x8x8xf32> to vector<1x1x8x8x8xf32>
    tpu.vector_store %arg7[%c0_177, %c0_178, %c0_179, %c0_180, %c0_181], %177 {strides = array<i32>} : memref<1x1x8x8x8xf32, #tpu.memory_space<vmem>>, vector<1x1x8x8x8xf32>,
    return
  }
  func.func @transform_0(%arg0: i32, %arg1: i32) -> (i32, i32, i32, i32, i32) {
    %c0_i32 = arith.constant 0 : i32
    %0 = arith.addi %arg1, %c0_i32 : i32
    %c0_i32_0 = arith.constant 0 : i32
    %c0_i32_1 = arith.constant 0 : i32
    %c0_i32_2 = arith.constant 0 : i32
    %c0_i32_3 = arith.constant 0 : i32
    return %arg0, %0, %c0_i32_0, %c0_i32_1, %c0_i32_2 : i32, i32, i32, i32, i32
  }
  func.func @transform_1(%arg0: i32, %arg1: i32) -> (i32, i32, i32, i32, i32) {
    %c1_i32 = arith.constant 1 : i32
    %0 = arith.addi %arg1, %c1_i32 : i32
    %c0_i32 = arith.constant 0 : i32
    %c0_i32_0 = arith.constant 0 : i32
    %c0_i32_1 = arith.constant 0 : i32
    %c0_i32_2 = arith.constant 0 : i32
    return %arg0, %0, %c0_i32, %c0_i32_0, %c0_i32_1 : i32, i32, i32, i32, i32
  }
  func.func @transform_2(%arg0: i32, %arg1: i32) -> (i32, i32, i32, i32, i32) {
    %c2_i32 = arith.constant 2 : i32
    %0 = arith.addi %arg1, %c2_i32 : i32
    %c0_i32 = arith.constant 0 : i32
    %c0_i32_0 = arith.constant 0 : i32
    %c0_i32_1 = arith.constant 0 : i32
    %c0_i32_2 = arith.constant 0 : i32
    return %arg0, %0, %c0_i32, %c0_i32_0, %c0_i32_1 : i32, i32, i32, i32, i32
  }
  func.func @transform_3(%arg0: i32, %arg1: i32) -> (i32, i32, i32, i32, i32) {
    %c0_i32 = arith.constant 0 : i32
    %c0_i32_0 = arith.constant 0 : i32
    %c0_i32_1 = arith.constant 0 : i32
    %c0_i32_2 = arith.constant 0 : i32
    %c0_i32_3 = arith.constant 0 : i32
    %c0_i32_4 = arith.constant 0 : i32
    return %c0_i32, %c0_i32_0, %c0_i32_1, %c0_i32_2, %c0_i32_3 : i32, i32, i32, i32, i32
  }
  func.func @transform_4(%arg0: i32, %arg1: i32) -> (i32, i32) {
    %c0_i32 = arith.constant 0 : i32
    %c0_i32_0 = arith.constant 0 : i32
    %c0_i32_1 = arith.constant 0 : i32
    return %c0_i32, %c0_i32_0 : i32, i32
  }
  func.func @transform_5(%arg0: i32, %arg1: i32) -> (i32, i32, i32, i32, i32) {
    %c0_i32 = arith.constant 0 : i32
    %c0_i32_0 = arith.constant 0 : i32
    %c0_i32_1 = arith.constant 0 : i32
    %c0_i32_2 = arith.constant 0 : i32
    return %arg0, %arg1, %c0_i32, %c0_i32_0, %c0_i32_1 : i32, i32, i32, i32, i32
  }
}

</mosaic_0001>

<llo_original>
// kernel: encoder_forward.3
$region0: #{encoder_forward.3}
  #allocation0 [shape = 'u32[]', space=smem, size = 0x4, offset = 0x4, fixed_abs, tag = 'smem constant byte address 0x4 - core index']
  #allocation1 [shape = 'u32[144,128]{1,0:T(1,128)}', space=vmem, size = 0x12000, scoped, tag = 'internal scratch']
  %s0 = inlined_call_operand.vmem [shape: f32[2,16,16,16,4], index: 0, kind: input, shape index: {}]
  %s1 = inlined_call_operand.vmem [shape: f32[2,8,8,8,4], index: 1, kind: output, shape index: {}]
  %s2 = sld [smem:[#allocation0]]
  $region37: #{encoder_forward.3} parent=0
    _
  %s4 = ssub.s32 1, %s2
  %s5 = scalar_select 0, %s4, %s2
  loop: start=0, step=1, limit=18
  $region2: #{encoder_forward.3} parent=0 // loop_pre_header
    _
  $region3: #{encoder_forward.3} parent=0 // loop_header
    %s7 = sphi 0, %s11
    %p8 = scmp.ge.s32.totalorder %s7, 18
    %s14 = sphi 0, %s26
    %s15 = sphi 0, %s22
    %s16 = sphi 0, %s14
    %s17 = sphi 0, %s15
    %s18 = sphi 0, %s16
    %s19 = sphi 0, %s17
    %s31 = sphi 0, %s33
    %s34 = sphi 0, %s31
    %s35 = sphi 0, %s34
    %s51 = sphi 0, %s35
    %s59 = sphi 0, %s61
    %s62 = sphi 0, %s59
    %s63 = sphi 0, %s62
    %s79 = sphi 0, %s63
  $region4: #{encoder_forward.3} parent=0 // loop_header_branch
    %10 = sbr.rel (%p8) target = $region8
  $region5: #{encoder_forward.3} parent=0 // loop_body
    %s12 = ssub.s32 %s7, 1
    %s13 = ssub.s32 %s7, 2
    %s20 = sadd.s32 1, %s15
    %p21 = scmp.ge.s32.totalorder %s20, 8
    %s22 = scalar_select %p21, 0, %s20
    %s23 = sadd.s32 1, %s14
    %s24 = scalar_select %p21, %s23, %s14
    %p25 = scmp.ge.s32.totalorder %s24, 2
    %s26 = scalar_select %p25, 0, %s24
    %s27 = ssub.s32 %s14, %s26
    %s28 = ssub.s32 %s15, %s22
    %s29 = sor.u32 %s27, %s28
    %p30 = scmp.eq.s32.totalorder %s29, 0
    %s32 = sadd.s32 %s31, 1
    %s33 = scalar_select %p30, %s31, %s32
    %p36 = pneg %p30
    %p37 = scmp.eq.s32.totalorder %s7, 15
    %p38 = por %p36, %p37
    %p39 = scmp.ne.s32.totalorder %s31, %s34
    %p40 = scmp.eq.s32.totalorder %s7, 0
    %p41 = por %p39, %p40
    %p42 = scmp.ne.s32.totalorder %s31, %s34
    %p43 = scmp.eq.s32.totalorder %s12, 15
    %p44 = por %p42, %p43
    %p45 = scmp.ne.s32.totalorder %s34, %s35
    %p46 = scmp.eq.s32.totalorder %s12, 0
    %p47 = por %p45, %p46
    %p48 = scmp.ne.s32.totalorder %s34, %s35
    %p49 = scmp.eq.s32.totalorder %s13, 15
    %p50 = por %p48, %p49
    %p52 = scmp.ne.s32.totalorder %s35, %s51
    %p53 = scmp.eq.s32.totalorder %s13, 0
    %p54 = por %p52, %p53
    %s55 = ssub.s32 %s14, %s26
    %s56 = ssub.s32 %s15, %s22
    %s57 = sor.u32 %s55, %s56
    %p58 = scmp.eq.s32.totalorder %s57, 0
    %s60 = sadd.s32 %s59, 1
    %s61 = scalar_select %p58, %s59, %s60
    %p64 = pneg %p58
    %p65 = scmp.eq.s32.totalorder %s7, 15
    %p66 = por %p64, %p65
    %p67 = scmp.ne.s32.totalorder %s59, %s62
    %p68 = scmp.eq.s32.totalorder %s7, 0
    %p69 = por %p67, %p68
    %p70 = scmp.ne.s32.totalorder %s59, %s62
    %p71 = scmp.eq.s32.totalorder %s12, 15
    %p72 = por %p70, %p71
    %p73 = scmp.ne.s32.totalorder %s62, %s63
    %p74 = scmp.eq.s32.totalorder %s12, 0
    %p75 = por %p73, %p74
    %p76 = scmp.ne.s32.totalorder %s62, %s63
    %p77 = scmp.eq.s32.totalorder %s13, 15
    %p78 = por %p76, %p77
    %p80 = scmp.ne.s32.totalorder %s63, %s79
    %p81 = scmp.eq.s32.totalorder %s13, 0
    %p82 = por %p80, %p81
    %p83 = scmp.le.s32.totalorder 1, %s7
    %p84 = scmp.lt.s32.totalorder %s7, 17
    %p85 = pnand %p83, %p84
    %p86 = pneg %p85
    // Predicated region
    $region9: #{encoder_forward.3} parent=5 // pred_check
      _
    $region10: #{encoder_forward.3} parent=5 // pred_check_branch
      %88 = sbr.rel (%p85) target = $region12
    $region11: #{encoder_forward.3} parent=5 // pred_region
      %s89 = ssub.s32 %s7, 1
    $region12: #{encoder_forward.3} parent=5 // pred_fallthru
      _
    %p90 = scmp.lt.s32.totalorder %s7, 16
    // Predicated region
    $region13: #{encoder_forward.3} parent=5 // pred_check
      %p91 = pneg %p90
    $region14: #{encoder_forward.3} parent=5 // pred_check_branch
      %93 = sbr.rel (%p91) target = $region16
    $region15: #{encoder_forward.3} parent=5 // pred_region
      // Predicated region
      $region17: #{encoder_forward.3} parent=15 // pred_check
        %p94 = pneg %p41
      $region18: #{encoder_forward.3} parent=15 // pred_check_branch
        %96 = sbr.rel (%p94) target = $region20
      $region19: #{encoder_forward.3} parent=15 // pred_region
        %s97 = smul.u32 2, %s15
        %p98 = scmp.lt.s32.totalorder %s14, 1
        %s99 = scalar_select %p98, %s14, 1
        %p100 = scmp.lt.s32.totalorder %s97, 15
        %s101 = scalar_select %p100, %s97, 15
        %s102 = smul.addr %s101, 32
        %s103 = smul.addr %s99, 512
        %s104 = sadd.s32 %s102, %s103
        %s105 = smul.addr %s104, 8
        %s106 = scalar_lea.vmem %s0, %s105
        %s107 = smul.u32 2, %s15
      $region20: #{encoder_forward.3} parent=15 // pred_fallthru
        _
    $region16: #{encoder_forward.3} parent=5 // pred_fallthru
      _
    %p108 = scmp.le.s32.totalorder 1, %s7
    %p109 = scmp.lt.s32.totalorder %s7, 17
    %p110 = pnand %p108, %p109
    %p111 = pneg %p110
    // Predicated region
    $region21: #{encoder_forward.3} parent=5 // pred_check
      _
    $region22: #{encoder_forward.3} parent=5 // pred_check_branch
      %113 = sbr.rel (%p110) target = $region24
    $region23: #{encoder_forward.3} parent=5 // pred_region
      %s114 = ssub.s32 %s7, 1
      %s115 = smul.u32 2, %s17
      %p116 = scmp.lt.s32.totalorder %s16, 1
      %s117 = scalar_select %p116, %s16, 1
      %p118 = scmp.lt.s32.totalorder %s115, 15
      %s119 = scalar_select %p118, %s115, 15
      %s120 = smul.addr %s119, 32
      %s121 = smul.addr %s117, 512
      %s122 = sadd.s32 %s120, %s121
      %s123 = smul.addr %s122, 8
      %s124 = scalar_lea.vmem %s0, %s123
      %p125 = pneg %p47
      %p126 = pneg %p44
      %p127 = pneg %p75
      %p128 = pneg %p72
      %p129 = scmp.lt.s32.totalorder %s16, 1
      %s130 = scalar_select %p129, %s16, 1
      %p131 = scmp.lt.s32.totalorder %s17, 7
      %s132 = scalar_select %p131, %s17, 7
      %s133 = smul.addr %s132, 8
      %s134 = smul.addr %s130, 64
      %s135 = sadd.s32 %s133, %s134
      %s136 = smul.addr %s135, 8
      %s137 = scalar_lea.vmem %s1, %s136
      %s138 = smul.u32 2, %s17
      %p139 = scmp.lt.s32.totalorder %s16, 1
      %s140 = scalar_select %p139, %s16, 1
      %p141 = scmp.lt.s32.totalorder %s138, 15
      %s142 = scalar_select %p141, %s138, 15
      %s143 = smul.addr %s142, 32
      %s144 = smul.addr %s140, 512
      %s145 = sadd.s32 %s143, %s144
      %s146 = smul.addr %s145, 8
      %s147 = scalar_lea.vmem %s0, %s146
      %s148 = smul.u32 2, %s17
      %p149 = scmp.lt.s32.totalorder %s16, 1
      %s150 = scalar_select %p149, %s16, 1
      %p151 = scmp.lt.s32.totalorder %s17, 7
      %s152 = scalar_select %p151, %s17, 7
      %s153 = smul.addr %s152, 8
      %s154 = smul.addr %s150, 64
      %s155 = sadd.s32 %s153, %s154
      %s156 = smul.addr %s155, 8
      %s157 = scalar_lea.vmem %s1, %s156
      %v158 = vld [vmem:[%s147] sm:$0xff]
      %v159 = vld [vmem:[%s147 + $0x8] sm:$0xff]
      %v160 = vld [vmem:[%s147 + $0x10] sm:$0xff]
      %v161 = vld [vmem:[%s147 + $0x18] sm:$0xff]
      %v162 = vld [vmem:[%s147 + $0x20] sm:$0xff]
      %v163 = vld [vmem:[%s147 + $0x28] sm:$0xff]
      %v164 = vld [vmem:[%s147 + $0x30] sm:$0xff]
      %v165 = vld [vmem:[%s147 + $0x38] sm:$0xff]
      %v166 = vld [vmem:[%s147 + $0x40] sm:$0xff]
      %v167 = vld [vmem:[%s147 + $0x48] sm:$0xff]
      %v168 = vld [vmem:[%s147 + $0x50] sm:$0xff]
      %v169 = vld [vmem:[%s147 + $0x58] sm:$0xff]
      %v170 = vld [vmem:[%s147 + $0x60] sm:$0xff]
      %v171 = vld [vmem:[%s147 + $0x68] sm:$0xff]
      %v172 = vld [vmem:[%s147 + $0x70] sm:$0xff]
      %v173 = vld [vmem:[%s147 + $0x78] sm:$0xff]
      %v174 = vld [vmem:[%s147 + $0x80] sm:$0xff]
      %v175 = vld [vmem:[%s147 + $0x88] sm:$0xff]
      %v176 = vld [vmem:[%s147 + $0x90] sm:$0xff]
      %v177 = vld [vmem:[%s147 + $0x98] sm:$0xff]
      %v178 = vld [vmem:[%s147 + $0xa0] sm:$0xff]
      %v179 = vld [vmem:[%s147 + $0xa8] sm:$0xff]
      %v180 = vld [vmem:[%s147 + $0xb0] sm:$0xff]
      %v181 = vld [vmem:[%s147 + $0xb8] sm:$0xff]
      %v182 = vld [vmem:[%s147 + $0xc0] sm:$0xff]
      %v183 = vld [vmem:[%s147 + $0xc8] sm:$0xff]
      %v184 = vld [vmem:[%s147 + $0xd0] sm:$0xff]
      %v185 = vld [vmem:[%s147 + $0xd8] sm:$0xff]
      %v186 = vld [vmem:[%s147 + $0xe0] sm:$0xff]
      %v187 = vld [vmem:[%s147 + $0xe8] sm:$0xff]
      %v188 = vld [vmem:[%s147 + $0xf0] sm:$0xff]
      %v189 = vld [vmem:[%s147 + $0xf8] sm:$0xff]
      %v190 = vld [vmem:[%s147 + $0x100] sm:$0xff]
      %v191 = vld [vmem:[%s147 + $0x108] sm:$0xff]
      %v192 = vld [vmem:[%s147 + $0x110] sm:$0xff]
      %v193 = vld [vmem:[%s147 + $0x118] sm:$0xff]
      %v194 = vld [vmem:[%s147 + $0x120] sm:$0xff]
      %v195 = vld [vmem:[%s147 + $0x128] sm:$0xff]
      %v196 = vld [vmem:[%s147 + $0x130] sm:$0xff]
      %v197 = vld [vmem:[%s147 + $0x138] sm:$0xff]
      %v198 = vld [vmem:[%s147 + $0x140] sm:$0xff]
      %v199 = vld [vmem:[%s147 + $0x148] sm:$0xff]
      %v200 = vld [vmem:[%s147 + $0x150] sm:$0xff]
      %v201 = vld [vmem:[%s147 + $0x158] sm:$0xff]
      %v202 = vld [vmem:[%s147 + $0x160] sm:$0xff]
      %v203 = vld [vmem:[%s147 + $0x168] sm:$0xff]
      %v204 = vld [vmem:[%s147 + $0x170] sm:$0xff]
      %v205 = vld [vmem:[%s147 + $0x178] sm:$0xff]
      %v206 = vld [vmem:[%s147 + $0x180] sm:$0xff]
      %v207 = vld [vmem:[%s147 + $0x188] sm:$0xff]
      %v208 = vld [vmem:[%s147 + $0x190] sm:$0xff]
      %v209 = vld [vmem:[%s147 + $0x198] sm:$0xff]
      %v210 = vld [vmem:[%s147 + $0x1a0] sm:$0xff]
      %v211 = vld [vmem:[%s147 + $0x1a8] sm:$0xff]
      %v212 = vld [vmem:[%s147 + $0x1b0] sm:$0xff]
      %v213 = vld [vmem:[%s147 + $0x1b8] sm:$0xff]
      %v214 = vld [vmem:[%s147 + $0x1c0] sm:$0xff]
      %v215 = vld [vmem:[%s147 + $0x1c8] sm:$0xff]
      %v216 = vld [vmem:[%s147 + $0x1d0] sm:$0xff]
      %v217 = vld [vmem:[%s147 + $0x1d8] sm:$0xff]
      %v218 = vld [vmem:[%s147 + $0x1e0] sm:$0xff]
      %v219 = vld [vmem:[%s147 + $0x1e8] sm:$0xff]
      %v220 = vld [vmem:[%s147 + $0x1f0] sm:$0xff]
      %v221 = vld [vmem:[%s147 + $0x1f8] sm:$0xff]
      %vm222 = vcmask 31744
      %v223 = vsel %vm222, %v158, -inf
      %v224 = vsel %vm222, %v160, -inf
      %v225 = vmax.f32 %v223, %v224
      %v226 = vsel %vm222, %v190, -inf
      %v227 = vmax.f32 %v225, %v226
      %v228 = vsel %vm222, %v192, -inf
      %v229 = vmax.f32 %v227, %v228
      %v230 = vsel %vm222, %v159, -inf
      %v231 = vsel %vm222, %v161, -inf
      %v232 = vmax.f32 %v230, %v231
      %v233 = vsel %vm222, %v191, -inf
      %v234 = vmax.f32 %v232, %v233
      %v235 = vsel %vm222, %v193, -inf
      %v236 = vmax.f32 %v234, %v235
      %v237 = vsel %vm222, %v162, -inf
      %v238 = vsel %vm222, %v164, -inf
      %v239 = vmax.f32 %v237, %v238
      %v240 = vsel %vm222, %v194, -inf
      %v241 = vmax.f32 %v239, %v240
      %v242 = vsel %vm222, %v196, -inf
      %v243 = vmax.f32 %v241, %v242
      %v244 = vsel %vm222, %v163, -inf
      %v245 = vsel %vm222, %v165, -inf
      %v246 = vmax.f32 %v244, %v245
      %v247 = vsel %vm222, %v195, -inf
      %v248 = vmax.f32 %v246, %v247
      %v249 = vsel %vm222, %v197, -inf
      %v250 = vmax.f32 %v248, %v249
      %v251 = vsel %vm222, %v166, -inf
      %v252 = vsel %vm222, %v168, -inf
      %v253 = vmax.f32 %v251, %v252
      %v254 = vsel %vm222, %v198, -inf
      %v255 = vmax.f32 %v253, %v254
      %v256 = vsel %vm222, %v200, -inf
      %v257 = vmax.f32 %v255, %v256
      %v258 = vsel %vm222, %v167, -inf
      %v259 = vsel %vm222, %v169, -inf
      %v260 = vmax.f32 %v258, %v259
      %v261 = vsel %vm222, %v199, -inf
      %v262 = vmax.f32 %v260, %v261
      %v263 = vsel %vm222, %v201, -inf
      %v264 = vmax.f32 %v262, %v263
      %v265 = vsel %vm222, %v170, -inf
      %v266 = vsel %vm222, %v172, -inf
      %v267 = vmax.f32 %v265, %v266
      %v268 = vsel %vm222, %v202, -inf
      %v269 = vmax.f32 %v267, %v268
      %v270 = vsel %vm222, %v204, -inf
      %v271 = vmax.f32 %v269, %v270
      %v272 = vsel %vm222, %v171, -inf
      %v273 = vsel %vm222, %v173, -inf
      %v274 = vmax.f32 %v272, %v273
      %v275 = vsel %vm222, %v203, -inf
      %v276 = vmax.f32 %v274, %v275
      %v277 = vsel %vm222, %v205, -inf
      %v278 = vmax.f32 %v276, %v277
      %v279 = vsel %vm222, %v174, -inf
      %v280 = vsel %vm222, %v176, -inf
      %v281 = vmax.f32 %v279, %v280
      %v282 = vsel %vm222, %v206, -inf
      %v283 = vmax.f32 %v281, %v282
      %v284 = vsel %vm222, %v208, -inf
      %v285 = vmax.f32 %v283, %v284
      %v286 = vsel %vm222, %v175, -inf
      %v287 = vsel %vm222, %v177, -inf
      %v288 = vmax.f32 %v286, %v287
      %v289 = vsel %vm222, %v207, -inf
      %v290 = vmax.f32 %v288, %v289
      %v291 = vsel %vm222, %v209, -inf
      %v292 = vmax.f32 %v290, %v291
      %v293 = vsel %vm222, %v178, -inf
      %v294 = vsel %vm222, %v180, -inf
      %v295 = vmax.f32 %v293, %v294
      %v296 = vsel %vm222, %v210, -inf
      %v297 = vmax.f32 %v295, %v296
      %v298 = vsel %vm222, %v212, -inf
      %v299 = vmax.f32 %v297, %v298
      %v300 = vsel %vm222, %v179, -inf
      %v301 = vsel %vm222, %v181, -inf
      %v302 = vmax.f32 %v300, %v301
      %v303 = vsel %vm222, %v211, -inf
      %v304 = vmax.f32 %v302, %v303
      %v305 = vsel %vm222, %v213, -inf
      %v306 = vmax.f32 %v304, %v305
      %v307 = vsel %vm222, %v182, -inf
      %v308 = vsel %vm222, %v184, -inf
      %v309 = vmax.f32 %v307, %v308
      %v310 = vsel %vm222, %v214, -inf
      %v311 = vmax.f32 %v309, %v310
      %v312 = vsel %vm222, %v216, -inf
      %v313 = vmax.f32 %v311, %v312
      %v314 = vsel %vm222, %v183, -inf
      %v315 = vsel %vm222, %v185, -inf
      %v316 = vmax.f32 %v314, %v315
      %v317 = vsel %vm222, %v215, -inf
      %v318 = vmax.f32 %v316, %v317
      %v319 = vsel %vm222, %v217, -inf
      %v320 = vmax.f32 %v318, %v319
      %v321 = vsel %vm222, %v186, -inf
      %v322 = vsel %vm222, %v188, -inf
      %v323 = vmax.f32 %v321, %v322
      %v324 = vsel %vm222, %v218, -inf
      %v325 = vmax.f32 %v323, %v324
      %v326 = vsel %vm222, %v220, -inf
      %v327 = vmax.f32 %v325, %v326
      %v328 = vsel %vm222, %v187, -inf
      %v329 = vsel %vm222, %v189, -inf
      %v330 = vmax.f32 %v328, %v329
      %v331 = vsel %vm222, %v219, -inf
      %v332 = vmax.f32 %v330, %v331
      %v333 = vsel %vm222, %v221, -inf
      %v334 = vmax.f32 %v332, %v333
      %v351 = vcombine.high %v229, %v229
      %v353 = vunpack.c.l.s4 1983009808
      %v354 = vunpack.c.0.s8 %v353
      %v355 = vlaneseq
      %v356 = vshrl.u32 %v355, 7
      %v357 = vsub.s32 %v354, %v356
      %v358 = vrot.slane %v229, %v357
      %v360 = vunpack.c.l.s4 1983009808
      %v361 = vunpack.c.0.s8 %v360
      %v362 = vlaneseq
      %v363 = vshrl.u32 %v362, 7
      %v364 = vsub.s32 %v361, %v363
      %v365 = vrot.slane %v351, %v364
      %v366 = vcombine.high %v358, %v358
      %v367 = vcombine.high %v365, %v365
      %v368 = vcombine.high %v236, %v236
      %v370 = vunpack.c.l.s4 1983009808
      %v371 = vunpack.c.0.s8 %v370
      %v372 = vlaneseq
      %v373 = vshrl.u32 %v372, 7
      %v374 = vsub.s32 %v371, %v373
      %v375 = vrot.slane %v236, %v374
      %v377 = vunpack.c.l.s4 1983009808
      %v378 = vunpack.c.0.s8 %v377
      %v379 = vlaneseq
      %v380 = vshrl.u32 %v379, 7
      %v381 = vsub.s32 %v378, %v380
      %v382 = vrot.slane %v368, %v381
      %v383 = vcombine.high %v375, %v375
      %v384 = vcombine.high %v382, %v382
      %v385 = vcombine.high %v243, %v243
      %v387 = vunpack.c.l.s4 1983009808
      %v388 = vunpack.c.0.s8 %v387
      %v389 = vlaneseq
      %v390 = vshrl.u32 %v389, 7
      %v391 = vsub.s32 %v388, %v390
      %v392 = vrot.slane %v243, %v391
      %v394 = vunpack.c.l.s4 1983009808
      %v395 = vunpack.c.0.s8 %v394
      %v396 = vlaneseq
      %v397 = vshrl.u32 %v396, 7
      %v398 = vsub.s32 %v395, %v397
      %v399 = vrot.slane %v385, %v398
      %v400 = vcombine.high %v392, %v392
      %v401 = vcombine.high %v399, %v399
      %v402 = vcombine.high %v250, %v250
      %v404 = vunpack.c.l.s4 1983009808
      %v405 = vunpack.c.0.s8 %v404
      %v406 = vlaneseq
      %v407 = vshrl.u32 %v406, 7
      %v408 = vsub.s32 %v405, %v407
      %v409 = vrot.slane %v250, %v408
      %v411 = vunpack.c.l.s4 1983009808
      %v412 = vunpack.c.0.s8 %v411
      %v413 = vlaneseq
      %v414 = vshrl.u32 %v413, 7
      %v415 = vsub.s32 %v412, %v414
      %v416 = vrot.slane %v402, %v415
      %v417 = vcombine.high %v409, %v409
      %v418 = vcombine.high %v416, %v416
      %v419 = vcombine.high %v257, %v257
      %v421 = vunpack.c.l.s4 1983009808
      %v422 = vunpack.c.0.s8 %v421
      %v423 = vlaneseq
      %v424 = vshrl.u32 %v423, 7
      %v425 = vsub.s32 %v422, %v424
      %v426 = vrot.slane %v257, %v425
      %v428 = vunpack.c.l.s4 1983009808
      %v429 = vunpack.c.0.s8 %v428
      %v430 = vlaneseq
      %v431 = vshrl.u32 %v430, 7
      %v432 = vsub.s32 %v429, %v431
      %v433 = vrot.slane %v419, %v432
      %v434 = vcombine.high %v426, %v426
      %v435 = vcombine.high %v433, %v433
      %v436 = vcombine.high %v264, %v264
      %v438 = vunpack.c.l.s4 1983009808
      %v439 = vunpack.c.0.s8 %v438
      %v440 = vlaneseq
      %v441 = vshrl.u32 %v440, 7
      %v442 = vsub.s32 %v439, %v441
      %v443 = vrot.slane %v264, %v442
      %v445 = vunpack.c.l.s4 1983009808
      %v446 = vunpack.c.0.s8 %v445
      %v447 = vlaneseq
      %v448 = vshrl.u32 %v447, 7
      %v449 = vsub.s32 %v446, %v448
      %v450 = vrot.slane %v436, %v449
      %v451 = vcombine.high %v443, %v443
      %v452 = vcombine.high %v450, %v450
      %v453 = vcombine.high %v271, %v271
      %v455 = vunpack.c.l.s4 1983009808
      %v456 = vunpack.c.0.s8 %v455
      %v457 = vlaneseq
      %v458 = vshrl.u32 %v457, 7
      %v459 = vsub.s32 %v456, %v458
      %v460 = vrot.slane %v271, %v459
      %v462 = vunpack.c.l.s4 1983009808
      %v463 = vunpack.c.0.s8 %v462
      %v464 = vlaneseq
      %v465 = vshrl.u32 %v464, 7
      %v466 = vsub.s32 %v463, %v465
      %v467 = vrot.slane %v453, %v466
      %v468 = vcombine.high %v460, %v460
      %v469 = vcombine.high %v467, %v467
      %v470 = vcombine.high %v278, %v278
      %v472 = vunpack.c.l.s4 1983009808
      %v473 = vunpack.c.0.s8 %v472
      %v474 = vlaneseq
      %v475 = vshrl.u32 %v474, 7
      %v476 = vsub.s32 %v473, %v475
      %v477 = vrot.slane %v278, %v476
      %v479 = vunpack.c.l.s4 1983009808
      %v480 = vunpack.c.0.s8 %v479
      %v481 = vlaneseq
      %v482 = vshrl.u32 %v481, 7
      %v483 = vsub.s32 %v480, %v482
      %v484 = vrot.slane %v470, %v483
      %v485 = vcombine.high %v477, %v477
      %v486 = vcombine.high %v484, %v484
      %v487 = vcombine.high %v285, %v285
      %v489 = vunpack.c.l.s4 1983009808
      %v490 = vunpack.c.0.s8 %v489
      %v491 = vlaneseq
      %v492 = vshrl.u32 %v491, 7
      %v493 = vsub.s32 %v490, %v492
      %v494 = vrot.slane %v285, %v493
      %v496 = vunpack.c.l.s4 1983009808
      %v497 = vunpack.c.0.s8 %v496
      %v498 = vlaneseq
      %v499 = vshrl.u32 %v498, 7
      %v500 = vsub.s32 %v497, %v499
      %v501 = vrot.slane %v487, %v500
      %v502 = vcombine.high %v494, %v494
      %v503 = vcombine.high %v501, %v501
      %v504 = vcombine.high %v292, %v292
      %v506 = vunpack.c.l.s4 1983009808
      %v507 = vunpack.c.0.s8 %v506
      %v508 = vlaneseq
      %v509 = vshrl.u32 %v508, 7
      %v510 = vsub.s32 %v507, %v509
      %v511 = vrot.slane %v292, %v510
      %v513 = vunpack.c.l.s4 1983009808
      %v514 = vunpack.c.0.s8 %v513
      %v515 = vlaneseq
      %v516 = vshrl.u32 %v515, 7
      %v517 = vsub.s32 %v514, %v516
      %v518 = vrot.slane %v504, %v517
      %v519 = vcombine.high %v511, %v511
      %v520 = vcombine.high %v518, %v518
      %v521 = vcombine.high %v299, %v299
      %v523 = vunpack.c.l.s4 1983009808
      %v524 = vunpack.c.0.s8 %v523
      %v525 = vlaneseq
      %v526 = vshrl.u32 %v525, 7
      %v527 = vsub.s32 %v524, %v526
      %v528 = vrot.slane %v299, %v527
      %v530 = vunpack.c.l.s4 1983009808
      %v531 = vunpack.c.0.s8 %v530
      %v532 = vlaneseq
      %v533 = vshrl.u32 %v532, 7
      %v534 = vsub.s32 %v531, %v533
      %v535 = vrot.slane %v521, %v534
      %v536 = vcombine.high %v528, %v528
      %v537 = vcombine.high %v535, %v535
      %v538 = vcombine.high %v306, %v306
      %v540 = vunpack.c.l.s4 1983009808
      %v541 = vunpack.c.0.s8 %v540
      %v542 = vlaneseq
      %v543 = vshrl.u32 %v542, 7
      %v544 = vsub.s32 %v541, %v543
      %v545 = vrot.slane %v306, %v544
      %v547 = vunpack.c.l.s4 1983009808
      %v548 = vunpack.c.0.s8 %v547
      %v549 = vlaneseq
      %v550 = vshrl.u32 %v549, 7
      %v551 = vsub.s32 %v548, %v550
      %v552 = vrot.slane %v538, %v551
      %v553 = vcombine.high %v545, %v545
      %v554 = vcombine.high %v552, %v552
      %v555 = vcombine.high %v313, %v313
      %v557 = vunpack.c.l.s4 1983009808
      %v558 = vunpack.c.0.s8 %v557
      %v559 = vlaneseq
      %v560 = vshrl.u32 %v559, 7
      %v561 = vsub.s32 %v558, %v560
      %v562 = vrot.slane %v313, %v561
      %v564 = vunpack.c.l.s4 1983009808
      %v565 = vunpack.c.0.s8 %v564
      %v566 = vlaneseq
      %v567 = vshrl.u32 %v566, 7
      %v568 = vsub.s32 %v565, %v567
      %v569 = vrot.slane %v555, %v568
      %v570 = vcombine.high %v562, %v562
      %v571 = vcombine.high %v569, %v569
      %v572 = vcombine.high %v320, %v320
      %v574 = vunpack.c.l.s4 1983009808
      %v575 = vunpack.c.0.s8 %v574
      %v576 = vlaneseq
      %v577 = vshrl.u32 %v576, 7
      %v578 = vsub.s32 %v575, %v577
      %v579 = vrot.slane %v320, %v578
      %v581 = vunpack.c.l.s4 1983009808
      %v582 = vunpack.c.0.s8 %v581
      %v583 = vlaneseq
      %v584 = vshrl.u32 %v583, 7
      %v585 = vsub.s32 %v582, %v584
      %v586 = vrot.slane %v572, %v585
      %v587 = vcombine.high %v579, %v579
      %v588 = vcombine.high %v586, %v586
      %v589 = vcombine.high %v327, %v327
      %v591 = vunpack.c.l.s4 1983009808
      %v592 = vunpack.c.0.s8 %v591
      %v593 = vlaneseq
      %v594 = vshrl.u32 %v593, 7
      %v595 = vsub.s32 %v592, %v594
      %v596 = vrot.slane %v327, %v595
      %v598 = vunpack.c.l.s4 1983009808
      %v599 = vunpack.c.0.s8 %v598
      %v600 = vlaneseq
      %v601 = vshrl.u32 %v600, 7
      %v602 = vsub.s32 %v599, %v601
      %v603 = vrot.slane %v589, %v602
      %v604 = vcombine.high %v596, %v596
      %v605 = vcombine.high %v603, %v603
      %v606 = vcombine.high %v334, %v334
      %v608 = vunpack.c.l.s4 1983009808
      %v609 = vunpack.c.0.s8 %v608
      %v610 = vlaneseq
      %v611 = vshrl.u32 %v610, 7
      %v612 = vsub.s32 %v609, %v611
      %v613 = vrot.slane %v334, %v612
      %v615 = vunpack.c.l.s4 1983009808
      %v616 = vunpack.c.0.s8 %v615
      %v617 = vlaneseq
      %v618 = vshrl.u32 %v617, 7
      %v619 = vsub.s32 %v616, %v618
      %v620 = vrot.slane %v606, %v619
      %v621 = vcombine.high %v613, %v613
      %v622 = vcombine.high %v620, %v620
      %vm687 = vcmask 25600
      %v688 = vsel %vm687, %v358, -inf
      %v689 = vrot.slane %v688, 4
      %v690 = vmax.f32 %v688, %v689
      %v691 = vrot.slane %v690, 2
      %v692 = vmax.f32 %v690, %v691
      %v693 = vrot.slane %v692, 1
      %v694 = vmax.f32 %v692, %v693
      %v695 = vsel %vm687, %v366, -inf
      %v696 = vrot.slane %v695, 4
      %v697 = vmax.f32 %v695, %v696
      %v698 = vrot.slane %v697, 2
      %v699 = vmax.f32 %v697, %v698
      %v700 = vrot.slane %v699, 1
      %v701 = vmax.f32 %v699, %v700
      %v702 = vsel %vm687, %v365, -inf
      %v703 = vrot.slane %v702, 4
      %v704 = vmax.f32 %v702, %v703
      %v705 = vrot.slane %v704, 2
      %v706 = vmax.f32 %v704, %v705
      %v707 = vrot.slane %v706, 1
      %v708 = vmax.f32 %v706, %v707
      %v709 = vsel %vm687, %v367, -inf
      %v710 = vrot.slane %v709, 4
      %v711 = vmax.f32 %v709, %v710
      %v712 = vrot.slane %v711, 2
      %v713 = vmax.f32 %v711, %v712
      %v714 = vrot.slane %v713, 1
      %v715 = vmax.f32 %v713, %v714
      %v716 = vsel %vm687, %v375, -inf
      %v717 = vrot.slane %v716, 4
      %v718 = vmax.f32 %v716, %v717
      %v719 = vrot.slane %v718, 2
      %v720 = vmax.f32 %v718, %v719
      %v721 = vrot.slane %v720, 1
      %v722 = vmax.f32 %v720, %v721
      %v723 = vsel %vm687, %v383, -inf
      %v724 = vrot.slane %v723, 4
      %v725 = vmax.f32 %v723, %v724
      %v726 = vrot.slane %v725, 2
      %v727 = vmax.f32 %v725, %v726
      %v728 = vrot.slane %v727, 1
      %v729 = vmax.f32 %v727, %v728
      %v730 = vsel %vm687, %v382, -inf
      %v731 = vrot.slane %v730, 4
      %v732 = vmax.f32 %v730, %v731
      %v733 = vrot.slane %v732, 2
      %v734 = vmax.f32 %v732, %v733
      %v735 = vrot.slane %v734, 1
      %v736 = vmax.f32 %v734, %v735
      %v737 = vsel %vm687, %v384, -inf
      %v738 = vrot.slane %v737, 4
      %v739 = vmax.f32 %v737, %v738
      %v740 = vrot.slane %v739, 2
      %v741 = vmax.f32 %v739, %v740
      %v742 = vrot.slane %v741, 1
      %v743 = vmax.f32 %v741, %v742
      %v744 = vsel %vm687, %v392, -inf
      %v745 = vrot.slane %v744, 4
      %v746 = vmax.f32 %v744, %v745
      %v747 = vrot.slane %v746, 2
      %v748 = vmax.f32 %v746, %v747
      %v749 = vrot.slane %v748, 1
      %v750 = vmax.f32 %v748, %v749
      %v751 = vsel %vm687, %v400, -inf
      %v752 = vrot.slane %v751, 4
      %v753 = vmax.f32 %v751, %v752
      %v754 = vrot.slane %v753, 2
      %v755 = vmax.f32 %v753, %v754
      %v756 = vrot.slane %v755, 1
      %v757 = vmax.f32 %v755, %v756
      %v758 = vsel %vm687, %v399, -inf
      %v759 = vrot.slane %v758, 4
      %v760 = vmax.f32 %v758, %v759
      %v761 = vrot.slane %v760, 2
      %v762 = vmax.f32 %v760, %v761
      %v763 = vrot.slane %v762, 1
      %v764 = vmax.f32 %v762, %v763
      %v765 = vsel %vm687, %v401, -inf
      %v766 = vrot.slane %v765, 4
      %v767 = vmax.f32 %v765, %v766
      %v768 = vrot.slane %v767, 2
      %v769 = vmax.f32 %v767, %v768
      %v770 = vrot.slane %v769, 1
      %v771 = vmax.f32 %v769, %v770
      %v772 = vsel %vm687, %v409, -inf
      %v773 = vrot.slane %v772, 4
      %v774 = vmax.f32 %v772, %v773
      %v775 = vrot.slane %v774, 2
      %v776 = vmax.f32 %v774, %v775
      %v777 = vrot.slane %v776, 1
      %v778 = vmax.f32 %v776, %v777
      %v779 = vsel %vm687, %v417, -inf
      %v780 = vrot.slane %v779, 4
      %v781 = vmax.f32 %v779, %v780
      %v782 = vrot.slane %v781, 2
      %v783 = vmax.f32 %v781, %v782
      %v784 = vrot.slane %v783, 1
      %v785 = vmax.f32 %v783, %v784
      %v786 = vsel %vm687, %v416, -inf
      %v787 = vrot.slane %v786, 4
      %v788 = vmax.f32 %v786, %v787
      %v789 = vrot.slane %v788, 2
      %v790 = vmax.f32 %v788, %v789
      %v791 = vrot.slane %v790, 1
      %v792 = vmax.f32 %v790, %v791
      %v793 = vsel %vm687, %v418, -inf
      %v794 = vrot.slane %v793, 4
      %v795 = vmax.f32 %v793, %v794
      %v796 = vrot.slane %v795, 2
      %v797 = vmax.f32 %v795, %v796
      %v798 = vrot.slane %v797, 1
      %v799 = vmax.f32 %v797, %v798
      %v800 = vsel %vm687, %v426, -inf
      %v801 = vrot.slane %v800, 4
      %v802 = vmax.f32 %v800, %v801
      %v803 = vrot.slane %v802, 2
      %v804 = vmax.f32 %v802, %v803
      %v805 = vrot.slane %v804, 1
      %v806 = vmax.f32 %v804, %v805
      %v807 = vsel %vm687, %v434, -inf
      %v808 = vrot.slane %v807, 4
      %v809 = vmax.f32 %v807, %v808
      %v810 = vrot.slane %v809, 2
      %v811 = vmax.f32 %v809, %v810
      %v812 = vrot.slane %v811, 1
      %v813 = vmax.f32 %v811, %v812
      %v814 = vsel %vm687, %v433, -inf
      %v815 = vrot.slane %v814, 4
      %v816 = vmax.f32 %v814, %v815
      %v817 = vrot.slane %v816, 2
      %v818 = vmax.f32 %v816, %v817
      %v819 = vrot.slane %v818, 1
      %v820 = vmax.f32 %v818, %v819
      %v821 = vsel %vm687, %v435, -inf
      %v822 = vrot.slane %v821, 4
      %v823 = vmax.f32 %v821, %v822
      %v824 = vrot.slane %v823, 2
      %v825 = vmax.f32 %v823, %v824
      %v826 = vrot.slane %v825, 1
      %v827 = vmax.f32 %v825, %v826
      %v828 = vsel %vm687, %v443, -inf
      %v829 = vrot.slane %v828, 4
      %v830 = vmax.f32 %v828, %v829
      %v831 = vrot.slane %v830, 2
      %v832 = vmax.f32 %v830, %v831
      %v833 = vrot.slane %v832, 1
      %v834 = vmax.f32 %v832, %v833
      %v835 = vsel %vm687, %v451, -inf
      %v836 = vrot.slane %v835, 4
      %v837 = vmax.f32 %v835, %v836
      %v838 = vrot.slane %v837, 2
      %v839 = vmax.f32 %v837, %v838
      %v840 = vrot.slane %v839, 1
      %v841 = vmax.f32 %v839, %v840
      %v842 = vsel %vm687, %v450, -inf
      %v843 = vrot.slane %v842, 4
      %v844 = vmax.f32 %v842, %v843
      %v845 = vrot.slane %v844, 2
      %v846 = vmax.f32 %v844, %v845
      %v847 = vrot.slane %v846, 1
      %v848 = vmax.f32 %v846, %v847
      %v849 = vsel %vm687, %v452, -inf
      %v850 = vrot.slane %v849, 4
      %v851 = vmax.f32 %v849, %v850
      %v852 = vrot.slane %v851, 2
      %v853 = vmax.f32 %v851, %v852
      %v854 = vrot.slane %v853, 1
      %v855 = vmax.f32 %v853, %v854
      %v856 = vsel %vm687, %v460, -inf
      %v857 = vrot.slane %v856, 4
      %v858 = vmax.f32 %v856, %v857
      %v859 = vrot.slane %v858, 2
      %v860 = vmax.f32 %v858, %v859
      %v861 = vrot.slane %v860, 1
      %v862 = vmax.f32 %v860, %v861
      %v863 = vsel %vm687, %v468, -inf
      %v864 = vrot.slane %v863, 4
      %v865 = vmax.f32 %v863, %v864
      %v866 = vrot.slane %v865, 2
      %v867 = vmax.f32 %v865, %v866
      %v868 = vrot.slane %v867, 1
      %v869 = vmax.f32 %v867, %v868
      %v870 = vsel %vm687, %v467, -inf
      %v871 = vrot.slane %v870, 4
      %v872 = vmax.f32 %v870, %v871
      %v873 = vrot.slane %v872, 2
      %v874 = vmax.f32 %v872, %v873
      %v875 = vrot.slane %v874, 1
      %v876 = vmax.f32 %v874, %v875
      %v877 = vsel %vm687, %v469, -inf
      %v878 = vrot.slane %v877, 4
      %v879 = vmax.f32 %v877, %v878
      %v880 = vrot.slane %v879, 2
      %v881 = vmax.f32 %v879, %v880
      %v882 = vrot.slane %v881, 1
      %v883 = vmax.f32 %v881, %v882
      %v884 = vsel %vm687, %v477, -inf
      %v885 = vrot.slane %v884, 4
      %v886 = vmax.f32 %v884, %v885
      %v887 = vrot.slane %v886, 2
      %v888 = vmax.f32 %v886, %v887
      %v889 = vrot.slane %v888, 1
      %v890 = vmax.f32 %v888, %v889
      %v891 = vsel %vm687, %v485, -inf
      %v892 = vrot.slane %v891, 4
      %v893 = vmax.f32 %v891, %v892
      %v894 = vrot.slane %v893, 2
      %v895 = vmax.f32 %v893, %v894
      %v896 = vrot.slane %v895, 1
      %v897 = vmax.f32 %v895, %v896
      %v898 = vsel %vm687, %v484, -inf
      %v899 = vrot.slane %v898, 4
      %v900 = vmax.f32 %v898, %v899
      %v901 = vrot.slane %v900, 2
      %v902 = vmax.f32 %v900, %v901
      %v903 = vrot.slane %v902, 1
      %v904 = vmax.f32 %v902, %v903
      %v905 = vsel %vm687, %v486, -inf
      %v906 = vrot.slane %v905, 4
      %v907 = vmax.f32 %v905, %v906
      %v908 = vrot.slane %v907, 2
      %v909 = vmax.f32 %v907, %v908
      %v910 = vrot.slane %v909, 1
      %v911 = vmax.f32 %v909, %v910
      %v912 = vsel %vm687, %v494, -inf
      %v913 = vrot.slane %v912, 4
      %v914 = vmax.f32 %v912, %v913
      %v915 = vrot.slane %v914, 2
      %v916 = vmax.f32 %v914, %v915
      %v917 = vrot.slane %v916, 1
      %v918 = vmax.f32 %v916, %v917
      %v919 = vsel %vm687, %v502, -inf
      %v920 = vrot.slane %v919, 4
      %v921 = vmax.f32 %v919, %v920
      %v922 = vrot.slane %v921, 2
      %v923 = vmax.f32 %v921, %v922
      %v924 = vrot.slane %v923, 1
      %v925 = vmax.f32 %v923, %v924
      %v926 = vsel %vm687, %v501, -inf
      %v927 = vrot.slane %v926, 4
      %v928 = vmax.f32 %v926, %v927
      %v929 = vrot.slane %v928, 2
      %v930 = vmax.f32 %v928, %v929
      %v931 = vrot.slane %v930, 1
      %v932 = vmax.f32 %v930, %v931
      %v933 = vsel %vm687, %v503, -inf
      %v934 = vrot.slane %v933, 4
      %v935 = vmax.f32 %v933, %v934
      %v936 = vrot.slane %v935, 2
      %v937 = vmax.f32 %v935, %v936
      %v938 = vrot.slane %v937, 1
      %v939 = vmax.f32 %v937, %v938
      %v940 = vsel %vm687, %v511, -inf
      %v941 = vrot.slane %v940, 4
      %v942 = vmax.f32 %v940, %v941
      %v943 = vrot.slane %v942, 2
      %v944 = vmax.f32 %v942, %v943
      %v945 = vrot.slane %v944, 1
      %v946 = vmax.f32 %v944, %v945
      %v947 = vsel %vm687, %v519, -inf
      %v948 = vrot.slane %v947, 4
      %v949 = vmax.f32 %v947, %v948
      %v950 = vrot.slane %v949, 2
      %v951 = vmax.f32 %v949, %v950
      %v952 = vrot.slane %v951, 1
      %v953 = vmax.f32 %v951, %v952
      %v954 = vsel %vm687, %v518, -inf
      %v955 = vrot.slane %v954, 4
      %v956 = vmax.f32 %v954, %v955
      %v957 = vrot.slane %v956, 2
      %v958 = vmax.f32 %v956, %v957
      %v959 = vrot.slane %v958, 1
      %v960 = vmax.f32 %v958, %v959
      %v961 = vsel %vm687, %v520, -inf
      %v962 = vrot.slane %v961, 4
      %v963 = vmax.f32 %v961, %v962
      %v964 = vrot.slane %v963, 2
      %v965 = vmax.f32 %v963, %v964
      %v966 = vrot.slane %v965, 1
      %v967 = vmax.f32 %v965, %v966
      %v968 = vsel %vm687, %v528, -inf
      %v969 = vrot.slane %v968, 4
      %v970 = vmax.f32 %v968, %v969
      %v971 = vrot.slane %v970, 2
      %v972 = vmax.f32 %v970, %v971
      %v973 = vrot.slane %v972, 1
      %v974 = vmax.f32 %v972, %v973
      %v975 = vsel %vm687, %v536, -inf
      %v976 = vrot.slane %v975, 4
      %v977 = vmax.f32 %v975, %v976
      %v978 = vrot.slane %v977, 2
      %v979 = vmax.f32 %v977, %v978
      %v980 = vrot.slane %v979, 1
      %v981 = vmax.f32 %v979, %v980
      %v982 = vsel %vm687, %v535, -inf
      %v983 = vrot.slane %v982, 4
      %v984 = vmax.f32 %v982, %v983
      %v985 = vrot.slane %v984, 2
      %v986 = vmax.f32 %v984, %v985
      %v987 = vrot.slane %v986, 1
      %v988 = vmax.f32 %v986, %v987
      %v989 = vsel %vm687, %v537, -inf
      %v990 = vrot.slane %v989, 4
      %v991 = vmax.f32 %v989, %v990
      %v992 = vrot.slane %v991, 2
      %v993 = vmax.f32 %v991, %v992
      %v994 = vrot.slane %v993, 1
      %v995 = vmax.f32 %v993, %v994
      %v996 = vsel %vm687, %v545, -inf
      %v997 = vrot.slane %v996, 4
      %v998 = vmax.f32 %v996, %v997
      %v999 = vrot.slane %v998, 2
      %v1000 = vmax.f32 %v998, %v999
      %v1001 = vrot.slane %v1000, 1
      %v1002 = vmax.f32 %v1000, %v1001
      %v1003 = vsel %vm687, %v553, -inf
      %v1004 = vrot.slane %v1003, 4
      %v1005 = vmax.f32 %v1003, %v1004
      %v1006 = vrot.slane %v1005, 2
      %v1007 = vmax.f32 %v1005, %v1006
      %v1008 = vrot.slane %v1007, 1
      %v1009 = vmax.f32 %v1007, %v1008
      %v1010 = vsel %vm687, %v552, -inf
      %v1011 = vrot.slane %v1010, 4
      %v1012 = vmax.f32 %v1010, %v1011
      %v1013 = vrot.slane %v1012, 2
      %v1014 = vmax.f32 %v1012, %v1013
      %v1015 = vrot.slane %v1014, 1
      %v1016 = vmax.f32 %v1014, %v1015
      %v1017 = vsel %vm687, %v554, -inf
      %v1018 = vrot.slane %v1017, 4
      %v1019 = vmax.f32 %v1017, %v1018
      %v1020 = vrot.slane %v1019, 2
      %v1021 = vmax.f32 %v1019, %v1020
      %v1022 = vrot.slane %v1021, 1
      %v1023 = vmax.f32 %v1021, %v1022
      %v1024 = vsel %vm687, %v562, -inf
      %v1025 = vrot.slane %v1024, 4
      %v1026 = vmax.f32 %v1024, %v1025
      %v1027 = vrot.slane %v1026, 2
      %v1028 = vmax.f32 %v1026, %v1027
      %v1029 = vrot.slane %v1028, 1
      %v1030 = vmax.f32 %v1028, %v1029
      %v1031 = vsel %vm687, %v570, -inf
      %v1032 = vrot.slane %v1031, 4
      %v1033 = vmax.f32 %v1031, %v1032
      %v1034 = vrot.slane %v1033, 2
      %v1035 = vmax.f32 %v1033, %v1034
      %v1036 = vrot.slane %v1035, 1
      %v1037 = vmax.f32 %v1035, %v1036
      %v1038 = vsel %vm687, %v569, -inf
      %v1039 = vrot.slane %v1038, 4
      %v1040 = vmax.f32 %v1038, %v1039
      %v1041 = vrot.slane %v1040, 2
      %v1042 = vmax.f32 %v1040, %v1041
      %v1043 = vrot.slane %v1042, 1
      %v1044 = vmax.f32 %v1042, %v1043
      %v1045 = vsel %vm687, %v571, -inf
      %v1046 = vrot.slane %v1045, 4
      %v1047 = vmax.f32 %v1045, %v1046
      %v1048 = vrot.slane %v1047, 2
      %v1049 = vmax.f32 %v1047, %v1048
      %v1050 = vrot.slane %v1049, 1
      %v1051 = vmax.f32 %v1049, %v1050
      %v1052 = vsel %vm687, %v579, -inf
      %v1053 = vrot.slane %v1052, 4
      %v1054 = vmax.f32 %v1052, %v1053
      %v1055 = vrot.slane %v1054, 2
      %v1056 = vmax.f32 %v1054, %v1055
      %v1057 = vrot.slane %v1056, 1
      %v1058 = vmax.f32 %v1056, %v1057
      %v1059 = vsel %vm687, %v587, -inf
      %v1060 = vrot.slane %v1059, 4
      %v1061 = vmax.f32 %v1059, %v1060
      %v1062 = vrot.slane %v1061, 2
      %v1063 = vmax.f32 %v1061, %v1062
      %v1064 = vrot.slane %v1063, 1
      %v1065 = vmax.f32 %v1063, %v1064
      %v1066 = vsel %vm687, %v586, -inf
      %v1067 = vrot.slane %v1066, 4
      %v1068 = vmax.f32 %v1066, %v1067
      %v1069 = vrot.slane %v1068, 2
      %v1070 = vmax.f32 %v1068, %v1069
      %v1071 = vrot.slane %v1070, 1
      %v1072 = vmax.f32 %v1070, %v1071
      %v1073 = vsel %vm687, %v588, -inf
      %v1074 = vrot.slane %v1073, 4
      %v1075 = vmax.f32 %v1073, %v1074
      %v1076 = vrot.slane %v1075, 2
      %v1077 = vmax.f32 %v1075, %v1076
      %v1078 = vrot.slane %v1077, 1
      %v1079 = vmax.f32 %v1077, %v1078
      %v1080 = vsel %vm687, %v596, -inf
      %v1081 = vrot.slane %v1080, 4
      %v1082 = vmax.f32 %v1080, %v1081
      %v1083 = vrot.slane %v1082, 2
      %v1084 = vmax.f32 %v1082, %v1083
      %v1085 = vrot.slane %v1084, 1
      %v1086 = vmax.f32 %v1084, %v1085
      %v1087 = vsel %vm687, %v604, -inf
      %v1088 = vrot.slane %v1087, 4
      %v1089 = vmax.f32 %v1087, %v1088
      %v1090 = vrot.slane %v1089, 2
      %v1091 = vmax.f32 %v1089, %v1090
      %v1092 = vrot.slane %v1091, 1
      %v1093 = vmax.f32 %v1091, %v1092
      %v1094 = vsel %vm687, %v603, -inf
      %v1095 = vrot.slane %v1094, 4
      %v1096 = vmax.f32 %v1094, %v1095
      %v1097 = vrot.slane %v1096, 2
      %v1098 = vmax.f32 %v1096, %v1097
      %v1099 = vrot.slane %v1098, 1
      %v1100 = vmax.f32 %v1098, %v1099
      %v1101 = vsel %vm687, %v605, -inf
      %v1102 = vrot.slane %v1101, 4
      %v1103 = vmax.f32 %v1101, %v1102
      %v1104 = vrot.slane %v1103, 2
      %v1105 = vmax.f32 %v1103, %v1104
      %v1106 = vrot.slane %v1105, 1
      %v1107 = vmax.f32 %v1105, %v1106
      %v1108 = vsel %vm687, %v613, -inf
      %v1109 = vrot.slane %v1108, 4
      %v1110 = vmax.f32 %v1108, %v1109
      %v1111 = vrot.slane %v1110, 2
      %v1112 = vmax.f32 %v1110, %v1111
      %v1113 = vrot.slane %v1112, 1
      %v1114 = vmax.f32 %v1112, %v1113
      %v1115 = vsel %vm687, %v621, -inf
      %v1116 = vrot.slane %v1115, 4
      %v1117 = vmax.f32 %v1115, %v1116
      %v1118 = vrot.slane %v1117, 2
      %v1119 = vmax.f32 %v1117, %v1118
      %v1120 = vrot.slane %v1119, 1
      %v1121 = vmax.f32 %v1119, %v1120
      %v1122 = vsel %vm687, %v620, -inf
      %v1123 = vrot.slane %v1122, 4
      %v1124 = vmax.f32 %v1122, %v1123
      %v1125 = vrot.slane %v1124, 2
      %v1126 = vmax.f32 %v1124, %v1125
      %v1127 = vrot.slane %v1126, 1
      %v1128 = vmax.f32 %v1126, %v1127
      %v1129 = vsel %vm687, %v622, -inf
      %v1130 = vrot.slane %v1129, 4
      %v1131 = vmax.f32 %v1129, %v1130
      %v1132 = vrot.slane %v1131, 2
      %v1133 = vmax.f32 %v1131, %v1132
      %v1134 = vrot.slane %v1133, 1
      %v1135 = vmax.f32 %v1133, %v1134
      %vm1200 = vcmask 1041409
      %v1201 = vsel %vm1200, %v701, %v694
      %vm1202 = vcmask 1042434
      %v1203 = vsel %vm1202, %v708, %v1201
      %vm1204 = vcmask 1043459
      %v1205 = vsel %vm1204, %v715, %v1203
      %vm1206 = vcmask 1044484
      %v1207 = vsel %vm1206, %v722, %v1205
      %vm1208 = vcmask 1045509
      %v1209 = vsel %vm1208, %v729, %v1207
      %vm1210 = vcmask 1046534
      %v1211 = vsel %vm1210, %v736, %v1209
      %vm1212 = vcmask 1047559
      %v1213 = vsel %vm1212, %v743, %v1211
      %v1214 = vsel %vm1200, %v757, %v750
      %v1215 = vsel %vm1202, %v764, %v1214
      %v1216 = vsel %vm1204, %v771, %v1215
      %v1217 = vsel %vm1206, %v778, %v1216
      %v1218 = vsel %vm1208, %v785, %v1217
      %v1219 = vsel %vm1210, %v792, %v1218
      %v1220 = vsel %vm1212, %v799, %v1219
      %v1221 = vsel %vm1200, %v813, %v806
      %v1222 = vsel %vm1202, %v820, %v1221
      %v1223 = vsel %vm1204, %v827, %v1222
      %v1224 = vsel %vm1206, %v834, %v1223
      %v1225 = vsel %vm1208, %v841, %v1224
      %v1226 = vsel %vm1210, %v848, %v1225
      %v1227 = vsel %vm1212, %v855, %v1226
      %v1228 = vsel %vm1200, %v869, %v862
      %v1229 = vsel %vm1202, %v876, %v1228
      %v1230 = vsel %vm1204, %v883, %v1229
      %v1231 = vsel %vm1206, %v890, %v1230
      %v1232 = vsel %vm1208, %v897, %v1231
      %v1233 = vsel %vm1210, %v904, %v1232
      %v1234 = vsel %vm1212, %v911, %v1233
      %v1235 = vsel %vm1200, %v925, %v918
      %v1236 = vsel %vm1202, %v932, %v1235
      %v1237 = vsel %vm1204, %v939, %v1236
      %v1238 = vsel %vm1206, %v946, %v1237
      %v1239 = vsel %vm1208, %v953, %v1238
      %v1240 = vsel %vm1210, %v960, %v1239
      %v1241 = vsel %vm1212, %v967, %v1240
      %v1242 = vsel %vm1200, %v981, %v974
      %v1243 = vsel %vm1202, %v988, %v1242
      %v1244 = vsel %vm1204, %v995, %v1243
      %v1245 = vsel %vm1206, %v1002, %v1244
      %v1246 = vsel %vm1208, %v1009, %v1245
      %v1247 = vsel %vm1210, %v1016, %v1246
      %v1248 = vsel %vm1212, %v1023, %v1247
      %v1249 = vsel %vm1200, %v1037, %v1030
      %v1250 = vsel %vm1202, %v1044, %v1249
      %v1251 = vsel %vm1204, %v1051, %v1250
      %v1252 = vsel %vm1206, %v1058, %v1251
      %v1253 = vsel %vm1208, %v1065, %v1252
      %v1254 = vsel %vm1210, %v1072, %v1253
      %v1255 = vsel %vm1212, %v1079, %v1254
      %v1256 = vsel %vm1200, %v1093, %v1086
      %v1257 = vsel %vm1202, %v1100, %v1256
      %v1258 = vsel %vm1204, %v1107, %v1257
      %v1259 = vsel %vm1206, %v1114, %v1258
      %v1260 = vsel %vm1208, %v1121, %v1259
      %v1261 = vsel %vm1210, %v1128, %v1260
      %v1262 = vsel %vm1212, %v1135, %v1261
      %1271 = vst.msk [vmem:[%s157] sm:$0xff] %vm222, %v1213
      %1272 = vst.msk [vmem:[%s157 + $0x8] sm:$0xff] %vm222, %v1220
      %1273 = vst.msk [vmem:[%s157 + $0x10] sm:$0xff] %vm222, %v1227
      %1274 = vst.msk [vmem:[%s157 + $0x18] sm:$0xff] %vm222, %v1234
      %1275 = vst.msk [vmem:[%s157 + $0x20] sm:$0xff] %vm222, %v1241
      %1276 = vst.msk [vmem:[%s157 + $0x28] sm:$0xff] %vm222, %v1248
      %1277 = vst.msk [vmem:[%s157 + $0x30] sm:$0xff] %vm222, %v1255
      %1278 = vst.msk [vmem:[%s157 + $0x38] sm:$0xff] %vm222, %v1262
      %p1279 = scmp.lt.s32.totalorder %s16, 1
      %s1280 = scalar_select %p1279, %s16, 1
      %p1281 = scmp.lt.s32.totalorder %s17, 7
      %s1282 = scalar_select %p1281, %s17, 7
      %s1283 = smul.addr %s1282, 8
      %s1284 = smul.addr %s1280, 64
      %s1285 = sadd.s32 %s1283, %s1284
      %s1286 = smul.addr %s1285, 8
      %s1287 = scalar_lea.vmem %s1, %s1286
      // Predicated region
      $region25: #{encoder_forward.3} parent=23 // pred_check
        %p1288 = pneg %p72
      $region26: #{encoder_forward.3} parent=23 // pred_check_branch
        %1290 = sbr.rel (%p1288) target = $region28
      $region27: #{encoder_forward.3} parent=23 // pred_region
        _
      $region28: #{encoder_forward.3} parent=23 // pred_fallthru
        _
    $region24: #{encoder_forward.3} parent=5 // pred_fallthru
      _
    %p1291 = scmp.le.s32.totalorder 2, %s7
    // Predicated region
    $region29: #{encoder_forward.3} parent=5 // pred_check
      %p1292 = pneg %p1291
    $region30: #{encoder_forward.3} parent=5 // pred_check_branch
      %1294 = sbr.rel (%p1292) target = $region32
    $region31: #{encoder_forward.3} parent=5 // pred_region
      %s1295 = ssub.s32 %s7, 2
      // Predicated region
      $region33: #{encoder_forward.3} parent=31 // pred_check
        %p1296 = pneg %p78
      $region34: #{encoder_forward.3} parent=31 // pred_check_branch
        %1298 = sbr.rel (%p1296) target = $region36
      $region35: #{encoder_forward.3} parent=31 // pred_region
        %p1299 = scmp.lt.s32.totalorder %s18, 1
        %s1300 = scalar_select %p1299, %s18, 1
        %p1301 = scmp.lt.s32.totalorder %s19, 7
        %s1302 = scalar_select %p1301, %s19, 7
        %s1303 = smul.addr %s1302, 8
        %s1304 = smul.addr %s1300, 64
        %s1305 = sadd.s32 %s1303, %s1304
        %s1306 = smul.addr %s1305, 8
        %s1307 = scalar_lea.vmem %s1, %s1306
      $region36: #{encoder_forward.3} parent=31 // pred_fallthru
        _
    $region32: #{encoder_forward.3} parent=5 // pred_fallthru
      _
  $region6: #{encoder_forward.3} parent=0 // loop_footer
    %s11 = sadd.s32 1, %s7
  $region7: #{encoder_forward.3} parent=0 // loop_footer_branch
    %6 = sbr.rel target = $region3
  $region8: #{encoder_forward.3} parent=0 // loop_exit
    _

// kernel: encoder_forward.4
$region0: #{encoder_forward.4}
  #allocation0 [shape = 'u32[]', space=smem, size = 0x4, offset = 0x4, fixed_abs, tag = 'smem constant byte address 0x4 - core index']
  #allocation1 [shape = 'u32[144,128]{1,0:T(1,128)}', space=vmem, size = 0x12000, scoped, tag = 'internal scratch']
  %s0 = inlined_call_operand.vmem [shape: f32[2,10,10,10,4], index: 0, kind: input, shape index: {}, may-alias: {0,1,2}]
  %s1 = inlined_call_operand.vmem [shape: f32[2,10,10,10,4], index: 1, kind: input, shape index: {}, may-alias: {0,1,2}]
  %s2 = inlined_call_operand.vmem [shape: f32[2,10,10,10,4], index: 2, kind: input, shape index: {}, may-alias: {0,1,2}]
  %s3 = inlined_call_operand.vmem [shape: f32[3,3,3,4,4], index: 3, kind: input, shape index: {}]
  %s4 = inlined_call_operand.vmem [shape: f32[1,4], index: 4, kind: input, shape index: {}]
  %s5 = inlined_call_operand.vmem [shape: f32[2,8,8,8,4], index: 5, kind: output, shape index: {}]
  %s6 = sld [smem:[#allocation0]]
  $region53: #{encoder_forward.4} parent=0
    _
  %s8 = ssub.s32 1, %s6
  %s9 = scalar_select 0, %s8, %s6
  loop: start=0, step=1, limit=18
  $region2: #{encoder_forward.4} parent=0 // loop_pre_header
    _
  $region3: #{encoder_forward.4} parent=0 // loop_header
    %s11 = sphi 0, %s15
    %p12 = scmp.ge.s32.totalorder %s11, 18
    %s18 = sphi 0, %s30
    %s19 = sphi 0, %s26
    %s20 = sphi 0, %s18
    %s21 = sphi 0, %s19
    %s22 = sphi 0, %s20
    %s23 = sphi 0, %s21
    %s35 = sphi 0, %s37
    %s38 = sphi 0, %s35
    %s39 = sphi 0, %s38
    %s55 = sphi 0, %s39
    %s65 = sphi 0, %s67
    %s68 = sphi 0, %s65
    %s69 = sphi 0, %s68
    %s85 = sphi 0, %s69
    %s95 = sphi 0, %s97
    %s98 = sphi 0, %s95
    %s99 = sphi 0, %s98
    %s115 = sphi 0, %s99
    %s119 = sphi 0, %s119
    %s121 = sphi 0, %s119
    %s122 = sphi 0, %s121
    %s136 = sphi 0, %s122
    %s140 = sphi 0, %s140
    %s142 = sphi 0, %s140
    %s143 = sphi 0, %s142
    %s157 = sphi 0, %s143
    %s165 = sphi 0, %s167
    %s168 = sphi 0, %s165
    %s169 = sphi 0, %s168
    %s185 = sphi 0, %s169
  $region4: #{encoder_forward.4} parent=0 // loop_header_branch
    %14 = sbr.rel (%p12) target = $region8
  $region5: #{encoder_forward.4} parent=0 // loop_body
    %s16 = ssub.s32 %s11, 1
    %s17 = ssub.s32 %s11, 2
    %s24 = sadd.s32 1, %s19
    %p25 = scmp.ge.s32.totalorder %s24, 8
    %s26 = scalar_select %p25, 0, %s24
    %s27 = sadd.s32 1, %s18
    %s28 = scalar_select %p25, %s27, %s18
    %p29 = scmp.ge.s32.totalorder %s28, 2
    %s30 = scalar_select %p29, 0, %s28
    %s31 = ssub.s32 %s18, %s30
    %s32 = ssub.s32 %s19, %s26
    %s33 = sor.u32 %s31, %s32
    %p34 = scmp.eq.s32.totalorder %s33, 0
    %s36 = sadd.s32 %s35, 1
    %s37 = scalar_select %p34, %s35, %s36
    %p40 = pneg %p34
    %p41 = scmp.eq.s32.totalorder %s11, 15
    %p42 = por %p40, %p41
    %p43 = scmp.ne.s32.totalorder %s35, %s38
    %p44 = scmp.eq.s32.totalorder %s11, 0
    %p45 = por %p43, %p44
    %p46 = scmp.ne.s32.totalorder %s35, %s38
    %p47 = scmp.eq.s32.totalorder %s16, 15
    %p48 = por %p46, %p47
    %p49 = scmp.ne.s32.totalorder %s38, %s39
    %p50 = scmp.eq.s32.totalorder %s16, 0
    %p51 = por %p49, %p50
    %p52 = scmp.ne.s32.totalorder %s38, %s39
    %p53 = scmp.eq.s32.totalorder %s17, 15
    %p54 = por %p52, %p53
    %p56 = scmp.ne.s32.totalorder %s39, %s55
    %p57 = scmp.eq.s32.totalorder %s17, 0
    %p58 = por %p56, %p57
    %s59 = sadd.s32 %s19, 1
    %s60 = sadd.s32 %s26, 1
    %s61 = ssub.s32 %s18, %s30
    %s62 = ssub.s32 %s59, %s60
    %s63 = sor.u32 %s61, %s62
    %p64 = scmp.eq.s32.totalorder %s63, 0
    %s66 = sadd.s32 %s65, 1
    %s67 = scalar_select %p64, %s65, %s66
    %p70 = pneg %p64
    %p71 = scmp.eq.s32.totalorder %s11, 15
    %p72 = por %p70, %p71
    %p73 = scmp.ne.s32.totalorder %s65, %s68
    %p74 = scmp.eq.s32.totalorder %s11, 0
    %p75 = por %p73, %p74
    %p76 = scmp.ne.s32.totalorder %s65, %s68
    %p77 = scmp.eq.s32.totalorder %s16, 15
    %p78 = por %p76, %p77
    %p79 = scmp.ne.s32.totalorder %s68, %s69
    %p80 = scmp.eq.s32.totalorder %s16, 0
    %p81 = por %p79, %p80
    %p82 = scmp.ne.s32.totalorder %s68, %s69
    %p83 = scmp.eq.s32.totalorder %s17, 15
    %p84 = por %p82, %p83
    %p86 = scmp.ne.s32.totalorder %s69, %s85
    %p87 = scmp.eq.s32.totalorder %s17, 0
    %p88 = por %p86, %p87
    %s89 = sadd.s32 %s19, 2
    %s90 = sadd.s32 %s26, 2
    %s91 = ssub.s32 %s18, %s30
    %s92 = ssub.s32 %s89, %s90
    %s93 = sor.u32 %s91, %s92
    %p94 = scmp.eq.s32.totalorder %s93, 0
    %s96 = sadd.s32 %s95, 1
    %s97 = scalar_select %p94, %s95, %s96
    %p100 = pneg %p94
    %p101 = scmp.eq.s32.totalorder %s11, 15
    %p102 = por %p100, %p101
    %p103 = scmp.ne.s32.totalorder %s95, %s98
    %p104 = scmp.eq.s32.totalorder %s11, 0
    %p105 = por %p103, %p104
    %p106 = scmp.ne.s32.totalorder %s95, %s98
    %p107 = scmp.eq.s32.totalorder %s16, 15
    %p108 = por %p106, %p107
    %p109 = scmp.ne.s32.totalorder %s98, %s99
    %p110 = scmp.eq.s32.totalorder %s16, 0
    %p111 = por %p109, %p110
    %p112 = scmp.ne.s32.totalorder %s98, %s99
    %p113 = scmp.eq.s32.totalorder %s17, 15
    %p114 = por %p112, %p113
    %p116 = scmp.ne.s32.totalorder %s99, %s115
    %p117 = scmp.eq.s32.totalorder %s17, 0
    %p118 = por %p116, %p117
    %s120 = sadd.s32 %s119, 1
    %p123 = scmp.eq.s32.totalorder %s11, 15
    %p124 = scmp.ne.s32.totalorder %s119, %s121
    %p125 = scmp.eq.s32.totalorder %s11, 0
    %p126 = por %p124, %p125
    %p127 = scmp.ne.s32.totalorder %s119, %s121
    %p128 = scmp.eq.s32.totalorder %s16, 15
    %p129 = por %p127, %p128
    %p130 = scmp.ne.s32.totalorder %s121, %s122
    %p131 = scmp.eq.s32.totalorder %s16, 0
    %p132 = por %p130, %p131
    %p133 = scmp.ne.s32.totalorder %s121, %s122
    %p134 = scmp.eq.s32.totalorder %s17, 15
    %p135 = por %p133, %p134
    %p137 = scmp.ne.s32.totalorder %s122, %s136
    %p138 = scmp.eq.s32.totalorder %s17, 0
    %p139 = por %p137, %p138
    %s141 = sadd.s32 %s140, 1
    %p144 = scmp.eq.s32.totalorder %s11, 15
    %p145 = scmp.ne.s32.totalorder %s140, %s142
    %p146 = scmp.eq.s32.totalorder %s11, 0
    %p147 = por %p145, %p146
    %p148 = scmp.ne.s32.totalorder %s140, %s142
    %p149 = scmp.eq.s32.totalorder %s16, 15
    %p150 = por %p148, %p149
    %p151 = scmp.ne.s32.totalorder %s142, %s143
    %p152 = scmp.eq.s32.totalorder %s16, 0
    %p153 = por %p151, %p152
    %p154 = scmp.ne.s32.totalorder %s142, %s143
    %p155 = scmp.eq.s32.totalorder %s17, 15
    %p156 = por %p154, %p155
    %p158 = scmp.ne.s32.totalorder %s143, %s157
    %p159 = scmp.eq.s32.totalorder %s17, 0
    %p160 = por %p158, %p159
    %s161 = ssub.s32 %s18, %s30
    %s162 = ssub.s32 %s19, %s26
    %s163 = sor.u32 %s161, %s162
    %p164 = scmp.eq.s32.totalorder %s163, 0
    %s166 = sadd.s32 %s165, 1
    %s167 = scalar_select %p164, %s165, %s166
    %p170 = pneg %p164
    %p171 = scmp.eq.s32.totalorder %s11, 15
    %p172 = por %p170, %p171
    %p173 = scmp.ne.s32.totalorder %s165, %s168
    %p174 = scmp.eq.s32.totalorder %s11, 0
    %p175 = por %p173, %p174
    %p176 = scmp.ne.s32.totalorder %s165, %s168
    %p177 = scmp.eq.s32.totalorder %s16, 15
    %p178 = por %p176, %p177
    %p179 = scmp.ne.s32.totalorder %s168, %s169
    %p180 = scmp.eq.s32.totalorder %s16, 0
    %p181 = por %p179, %p180
    %p182 = scmp.ne.s32.totalorder %s168, %s169
    %p183 = scmp.eq.s32.totalorder %s17, 15
    %p184 = por %p182, %p183
    %p186 = scmp.ne.s32.totalorder %s169, %s185
    %p187 = scmp.eq.s32.totalorder %s17, 0
    %p188 = por %p186, %p187
    %p189 = scmp.le.s32.totalorder 1, %s11
    %p190 = scmp.lt.s32.totalorder %s11, 17
    %p191 = pnand %p189, %p190
    %p192 = pneg %p191
    // Predicated region
    $region9: #{encoder_forward.4} parent=5 // pred_check
      _
    $region10: #{encoder_forward.4} parent=5 // pred_check_branch
      %194 = sbr.rel (%p191) target = $region12
    $region11: #{encoder_forward.4} parent=5 // pred_region
      %s195 = ssub.s32 %s11, 1
      // Predicated region
      $region13: #{encoder_forward.4} parent=11 // pred_check
        %p196 = pneg %p132
      $region14: #{encoder_forward.4} parent=11 // pred_check_branch
        %198 = sbr.rel (%p196) target = $region16
      $region15: #{encoder_forward.4} parent=11 // pred_region
        _
      $region16: #{encoder_forward.4} parent=11 // pred_fallthru
        _
      // Predicated region
      $region17: #{encoder_forward.4} parent=11 // pred_check
        %p199 = pneg %p153
      $region18: #{encoder_forward.4} parent=11 // pred_check_branch
        %201 = sbr.rel (%p199) target = $region20
      $region19: #{encoder_forward.4} parent=11 // pred_region
        _
      $region20: #{encoder_forward.4} parent=11 // pred_fallthru
        _
    $region12: #{encoder_forward.4} parent=5 // pred_fallthru
      _
    %p202 = scmp.lt.s32.totalorder %s11, 16
    // Predicated region
    $region21: #{encoder_forward.4} parent=5 // pred_check
      %p203 = pneg %p202
    $region22: #{encoder_forward.4} parent=5 // pred_check_branch
      %205 = sbr.rel (%p203) target = $region24
    $region23: #{encoder_forward.4} parent=5 // pred_region
      // Predicated region
      $region25: #{encoder_forward.4} parent=23 // pred_check
        %p206 = pneg %p45
      $region26: #{encoder_forward.4} parent=23 // pred_check_branch
        %208 = sbr.rel (%p206) target = $region28
      $region27: #{encoder_forward.4} parent=23 // pred_region
        %p209 = scmp.lt.s32.totalorder %s18, 1
        %s210 = scalar_select %p209, %s18, 1
        %p211 = scmp.lt.s32.totalorder %s19, 9
        %s212 = scalar_select %p211, %s19, 9
        %s213 = smul.addr %s212, 20
        %s214 = smul.addr %s210, 200
        %s215 = sadd.s32 %s213, %s214
        %s216 = smul.addr %s215, 8
        %s217 = scalar_lea.vmem %s0, %s216
      $region28: #{encoder_forward.4} parent=23 // pred_fallthru
        _
      // Predicated region
      $region29: #{encoder_forward.4} parent=23 // pred_check
        %p218 = pneg %p75
      $region30: #{encoder_forward.4} parent=23 // pred_check_branch
        %220 = sbr.rel (%p218) target = $region32
      $region31: #{encoder_forward.4} parent=23 // pred_region
        %s221 = sadd.s32 %s19, 1
        %p222 = scmp.lt.s32.totalorder %s18, 1
        %s223 = scalar_select %p222, %s18, 1
        %p224 = scmp.lt.s32.totalorder %s221, 9
        %s225 = scalar_select %p224, %s221, 9
        %s226 = smul.addr %s225, 20
        %s227 = smul.addr %s223, 200
        %s228 = sadd.s32 %s226, %s227
        %s229 = smul.addr %s228, 8
        %s230 = scalar_lea.vmem %s1, %s229
        %s231 = sadd.s32 %s19, 1
      $region32: #{encoder_forward.4} parent=23 // pred_fallthru
        _
      // Predicated region
      $region33: #{encoder_forward.4} parent=23 // pred_check
        %p232 = pneg %p105
      $region34: #{encoder_forward.4} parent=23 // pred_check_branch
        %234 = sbr.rel (%p232) target = $region36
      $region35: #{encoder_forward.4} parent=23 // pred_region
        %s235 = sadd.s32 %s19, 2
        %p236 = scmp.lt.s32.totalorder %s18, 1
        %s237 = scalar_select %p236, %s18, 1
        %p238 = scmp.lt.s32.totalorder %s235, 9
        %s239 = scalar_select %p238, %s235, 9
        %s240 = smul.addr %s239, 20
        %s241 = smul.addr %s237, 200
        %s242 = sadd.s32 %s240, %s241
        %s243 = smul.addr %s242, 8
        %s244 = scalar_lea.vmem %s2, %s243
        %s245 = sadd.s32 %s19, 2
      $region36: #{encoder_forward.4} parent=23 // pred_fallthru
        _
    $region24: #{encoder_forward.4} parent=5 // pred_fallthru
      _
    %p246 = scmp.le.s32.totalorder 1, %s11
    %p247 = scmp.lt.s32.totalorder %s11, 17
    %p248 = pnand %p246, %p247
    %p249 = pneg %p248
    // Predicated region
    $region37: #{encoder_forward.4} parent=5 // pred_check
      _
    $region38: #{encoder_forward.4} parent=5 // pred_check_branch
      %251 = sbr.rel (%p248) target = $region40
    $region39: #{encoder_forward.4} parent=5 // pred_region
      %s252 = ssub.s32 %s11, 1
      %p253 = scmp.lt.s32.totalorder %s20, 1
      %s254 = scalar_select %p253, %s20, 1
      %p255 = scmp.lt.s32.totalorder %s21, 9
      %s256 = scalar_select %p255, %s21, 9
      %s257 = smul.addr %s256, 20
      %s258 = smul.addr %s254, 200
      %s259 = sadd.s32 %s257, %s258
      %s260 = smul.addr %s259, 8
      %s261 = scalar_lea.vmem %s0, %s260
      %p262 = pneg %p51
      %p263 = pneg %p48
      %s264 = sadd.s32 %s21, 1
      %p265 = scmp.lt.s32.totalorder %s20, 1
      %s266 = scalar_select %p265, %s20, 1
      %p267 = scmp.lt.s32.totalorder %s264, 9
      %s268 = scalar_select %p267, %s264, 9
      %s269 = smul.addr %s268, 20
      %s270 = smul.addr %s266, 200
      %s271 = sadd.s32 %s269, %s270
      %s272 = smul.addr %s271, 8
      %s273 = scalar_lea.vmem %s1, %s272
      %p274 = pneg %p81
      %p275 = pneg %p78
      %s276 = sadd.s32 %s21, 2
      %p277 = scmp.lt.s32.totalorder %s20, 1
      %s278 = scalar_select %p277, %s20, 1
      %p279 = scmp.lt.s32.totalorder %s276, 9
      %s280 = scalar_select %p279, %s276, 9
      %s281 = smul.addr %s280, 20
      %s282 = smul.addr %s278, 200
      %s283 = sadd.s32 %s281, %s282
      %s284 = smul.addr %s283, 8
      %s285 = scalar_lea.vmem %s2, %s284
      %p286 = pneg %p111
      %p287 = pneg %p108
      %p288 = pneg %p132
      %p289 = pneg %p129
      %p290 = pneg %p153
      %p291 = pneg %p150
      %p292 = pneg %p181
      %p293 = pneg %p178
      %p294 = scmp.lt.s32.totalorder %s20, 1
      %s295 = scalar_select %p294, %s20, 1
      %p296 = scmp.lt.s32.totalorder %s21, 7
      %s297 = scalar_select %p296, %s21, 7
      %s298 = smul.addr %s297, 8
      %s299 = smul.addr %s295, 64
      %s300 = sadd.s32 %s298, %s299
      %s301 = smul.addr %s300, 8
      %s302 = scalar_lea.vmem %s5, %s301
      %p303 = scmp.lt.s32.totalorder %s20, 1
      %s304 = scalar_select %p303, %s20, 1
      %p305 = scmp.lt.s32.totalorder %s21, 9
      %s306 = scalar_select %p305, %s21, 9
      %s307 = smul.addr %s306, 20
      %s308 = smul.addr %s304, 200
      %s309 = sadd.s32 %s307, %s308
      %s310 = smul.addr %s309, 8
      %s311 = scalar_lea.vmem %s0, %s310
      %s312 = sadd.s32 %s21, 1
      %p313 = scmp.lt.s32.totalorder %s20, 1
      %s314 = scalar_select %p313, %s20, 1
      %p315 = scmp.lt.s32.totalorder %s312, 9
      %s316 = scalar_select %p315, %s312, 9
      %s317 = smul.addr %s316, 20
      %s318 = smul.addr %s314, 200
      %s319 = sadd.s32 %s317, %s318
      %s320 = smul.addr %s319, 8
      %s321 = scalar_lea.vmem %s1, %s320
      %s322 = sadd.s32 %s21, 1
      %s323 = sadd.s32 %s21, 2
      %p324 = scmp.lt.s32.totalorder %s20, 1
      %s325 = scalar_select %p324, %s20, 1
      %p326 = scmp.lt.s32.totalorder %s323, 9
      %s327 = scalar_select %p326, %s323, 9
      %s328 = smul.addr %s327, 20
      %s329 = smul.addr %s325, 200
      %s330 = sadd.s32 %s328, %s329
      %s331 = smul.addr %s330, 8
      %s332 = scalar_lea.vmem %s2, %s331
      %s333 = sadd.s32 %s21, 2
      %p334 = scmp.lt.s32.totalorder %s20, 1
      %s335 = scalar_select %p334, %s20, 1
      %p336 = scmp.lt.s32.totalorder %s21, 7
      %s337 = scalar_select %p336, %s21, 7
      %s338 = smul.addr %s337, 8
      %s339 = smul.addr %s335, 64
      %s340 = sadd.s32 %s338, %s339
      %s341 = smul.addr %s340, 8
      %s342 = scalar_lea.vmem %s5, %s341
      %v343 = vld [vmem:[%s311] sm:$0xff]
      %v344 = vld [vmem:[%s311 + $0x8] sm:$0x3]
      %v345 = vld [vmem:[%s311 + $0x10] sm:$0xff]
      %v346 = vld [vmem:[%s311 + $0x18] sm:$0x3]
      %v347 = vld [vmem:[%s311 + $0x20] sm:$0xff]
      %v348 = vld [vmem:[%s311 + $0x28] sm:$0x3]
      %v349 = vld [vmem:[%s311 + $0x30] sm:$0xff]
      %v350 = vld [vmem:[%s311 + $0x38] sm:$0x3]
      %v351 = vld [vmem:[%s311 + $0x40] sm:$0xff]
      %v352 = vld [vmem:[%s311 + $0x48] sm:$0x3]
      %v353 = vld [vmem:[%s311 + $0x50] sm:$0xff]
      %v354 = vld [vmem:[%s311 + $0x58] sm:$0x3]
      %v355 = vld [vmem:[%s311 + $0x60] sm:$0xff]
      %v356 = vld [vmem:[%s311 + $0x68] sm:$0x3]
      %v357 = vld [vmem:[%s311 + $0x70] sm:$0xff]
      %v358 = vld [vmem:[%s311 + $0x78] sm:$0x3]
      %v359 = vld [vmem:[%s311 + $0x80] sm:$0xff]
      %v360 = vld [vmem:[%s311 + $0x88] sm:$0x3]
      %v361 = vld [vmem:[%s311 + $0x90] sm:$0xff]
      %v362 = vld [vmem:[%s311 + $0x98] sm:$0x3]
      %v363 = vld [vmem:[%s321] sm:$0xff]
      %v364 = vld [vmem:[%s321 + $0x8] sm:$0x3]
      %v365 = vld [vmem:[%s321 + $0x10] sm:$0xff]
      %v366 = vld [vmem:[%s321 + $0x18] sm:$0x3]
      %v367 = vld [vmem:[%s321 + $0x20] sm:$0xff]
      %v368 = vld [vmem:[%s321 + $0x28] sm:$0x3]
      %v369 = vld [vmem:[%s321 + $0x30] sm:$0xff]
      %v370 = vld [vmem:[%s321 + $0x38] sm:$0x3]
      %v371 = vld [vmem:[%s321 + $0x40] sm:$0xff]
      %v372 = vld [vmem:[%s321 + $0x48] sm:$0x3]
      %v373 = vld [vmem:[%s321 + $0x50] sm:$0xff]
      %v374 = vld [vmem:[%s321 + $0x58] sm:$0x3]
      %v375 = vld [vmem:[%s321 + $0x60] sm:$0xff]
      %v376 = vld [vmem:[%s321 + $0x68] sm:$0x3]
      %v377 = vld [vmem:[%s321 + $0x70] sm:$0xff]
      %v378 = vld [vmem:[%s321 + $0x78] sm:$0x3]
      %v379 = vld [vmem:[%s321 + $0x80] sm:$0xff]
      %v380 = vld [vmem:[%s321 + $0x88] sm:$0x3]
      %v381 = vld [vmem:[%s321 + $0x90] sm:$0xff]
      %v382 = vld [vmem:[%s321 + $0x98] sm:$0x3]
      %v383 = vld [vmem:[%s332] sm:$0xff]
      %v384 = vld [vmem:[%s332 + $0x8] sm:$0x3]
      %v385 = vld [vmem:[%s332 + $0x10] sm:$0xff]
      %v386 = vld [vmem:[%s332 + $0x18] sm:$0x3]
      %v387 = vld [vmem:[%s332 + $0x20] sm:$0xff]
      %v388 = vld [vmem:[%s332 + $0x28] sm:$0x3]
      %v389 = vld [vmem:[%s332 + $0x30] sm:$0xff]
      %v390 = vld [vmem:[%s332 + $0x38] sm:$0x3]
      %v391 = vld [vmem:[%s332 + $0x40] sm:$0xff]
      %v392 = vld [vmem:[%s332 + $0x48] sm:$0x3]
      %v393 = vld [vmem:[%s332 + $0x50] sm:$0xff]
      %v394 = vld [vmem:[%s332 + $0x58] sm:$0x3]
      %v395 = vld [vmem:[%s332 + $0x60] sm:$0xff]
      %v396 = vld [vmem:[%s332 + $0x68] sm:$0x3]
      %v397 = vld [vmem:[%s332 + $0x70] sm:$0xff]
      %v398 = vld [vmem:[%s332 + $0x78] sm:$0x3]
      %v399 = vld [vmem:[%s332 + $0x80] sm:$0xff]
      %v400 = vld [vmem:[%s332 + $0x88] sm:$0x3]
      %v401 = vld [vmem:[%s332 + $0x90] sm:$0xff]
      %v402 = vld [vmem:[%s332 + $0x98] sm:$0x3]
      %v403 = vld [vmem:[%s3] sm:$0xf]
      %vm420 = vcmask 1046528
      %v421 = vrot.slane %v343, 1
      %v422 = vrot.slane %v344, 1
      %v423 = vsel %vm420, %v421, %v422
      %v424 = vrot.slane %v345, 1
      %v425 = vrot.slane %v346, 1
      %v426 = vsel %vm420, %v424, %v425
      %v427 = vrot.slane %v347, 1
      %v428 = vrot.slane %v348, 1
      %v429 = vsel %vm420, %v427, %v428
      %v430 = vrot.slane %v349, 1
      %v431 = vrot.slane %v350, 1
      %v432 = vsel %vm420, %v430, %v431
      %v433 = vrot.slane %v351, 1
      %v434 = vrot.slane %v352, 1
      %v435 = vsel %vm420, %v433, %v434
      %v436 = vrot.slane %v353, 1
      %v437 = vrot.slane %v354, 1
      %v438 = vsel %vm420, %v436, %v437
      %v439 = vrot.slane %v355, 1
      %v440 = vrot.slane %v356, 1
      %v441 = vsel %vm420, %v439, %v440
      %v442 = vrot.slane %v357, 1
      %v443 = vrot.slane %v358, 1
      %v444 = vsel %vm420, %v442, %v443
      %s445 = scalar_lea.vmem %s3, 4
      %v446 = vld [vmem:[%s445] sm:$0xf]
      %vm447 = vcmask 31744
      %v448 = vsel %vm447, %v423, 0
      %v450 = vsel %vm447, %v426, 0
      %v452 = vsel %vm447, %v429, 0
      %v454 = vsel %vm447, %v432, 0
      %v456 = vsel %vm447, %v435, 0
      %v458 = vsel %vm447, %v438, 0
      %v460 = vsel %vm447, %v441, 0
      %v462 = vsel %vm447, %v444, 0
      %vm464 = vcmask 1043456
      %v466 = vsel %vm464, %v446, 0
      %468 = vmatprep.subr.mxu0 0.0
      %469 = vmatpush1.msra.mxu0 %v466
      %470 = vmatprep.subr.mxu0 0.0
      %471 = vmatpush1.msra.mxu0 0.0
      %472 = vmatprep.subr.mxu0 0.0
      %473 = vmatpush1.msra.mxu0 0.0
      %474 = vmatprep.subr.mxu0 0.0
      %475 = vmatpush1.msra.mxu0 0.0
      %476 = vmatprep.subr.mxu0 0.0
      %477 = vmatpush1.msra.mxu0 0.0
      %478 = vmatprep.subr.mxu0 0.0
      %479 = vmatpush1.msra.mxu0 0.0
      %480 = vmatprep.subr.mxu0 0.0
      %481 = vmatpush1.msra.mxu0 0.0
      %482 = vmatprep.subr.mxu0 0.0
      %483 = vmatpush1.msra.mxu0 0.0
      %484 = vmatprep.subr.mxu0 0.0
      %485 = vmatpush1.msra.mxu0 0.0
      %486 = vmatprep.subr.mxu0 0.0
      %487 = vmatpush1.msra.mxu0 0.0
      %488 = vmatprep.subr.mxu0 0.0
      %489 = vmatpush1.msra.mxu0 0.0
      %490 = vmatprep.subr.mxu0 0.0
      %491 = vmatpush1.msra.mxu0 0.0
      %492 = vmatprep.subr.mxu0 0.0
      %493 = vmatpush1.msra.mxu0 0.0
      %494 = vmatprep.subr.mxu0 0.0
      %495 = vmatpush1.msra.mxu0 0.0
      %496 = vmatprep.subr.mxu0 0.0
      %497 = vmatpush1.msra.mxu0 0.0
      %498 = vmatprep.subr.mxu0 0.0
      %499 = vmatpush1.msra.mxu0 0.0
      %500 = vmatprep.subr.mxu0 0.0
      %501 = vmatpush1.msra.mxu0 0.0
      %502 = vmatprep.subr.mxu0 0.0
      %503 = vmatpush1.msra.mxu0 0.0
      %504 = vmatprep.subr.mxu0 0.0
      %505 = vmatpush1.msra.mxu0 0.0
      %506 = vmatprep.subr.mxu0 0.0
      %507 = vmatpush1.msra.mxu0 0.0
      %508 = vmatprep.subr.mxu0 0.0
      %509 = vmatpush1.msra.mxu0 0.0
      %510 = vmatprep.subr.mxu0 0.0
      %511 = vmatpush1.msra.mxu0 0.0
      %512 = vmatprep.subr.mxu0 0.0
      %513 = vmatpush1.msra.mxu0 0.0
      %514 = vmatprep.subr.mxu0 0.0
      %515 = vmatpush1.msra.mxu0 0.0
      %516 = vmatprep.subr.mxu0 0.0
      %517 = vmatpush1.msra.mxu0 0.0
      %518 = vmatprep.subr.mxu0 0.0
      %519 = vmatpush1.msra.mxu0 0.0
      %520 = vmatprep.subr.mxu0 0.0
      %521 = vmatpush1.msra.mxu0 0.0
      %522 = vmatprep.subr.mxu0 0.0
      %523 = vmatpush1.msra.mxu0 0.0
      %524 = vmatprep.subr.mxu0 0.0
      %525 = vmatpush1.msra.mxu0 0.0
      %526 = vmatprep.subr.mxu0 0.0
      %527 = vmatpush1.msra.mxu0 0.0
      %528 = vmatprep.subr.mxu0 0.0
      %529 = vmatpush1.msra.mxu0 0.0
      %530 = vmatprep.subr.mxu0 0.0
      %531 = vmatpush1.msra.mxu0 0.0
      %532 = vmatprep.mubr.f32.mxu0 0.0
      %533 = vmatmul.mubr.f32.gmra.mrb[0].mxu0 %v448
      %v534 = vpop.f32.mrb[0].mxu0
      %v535 = vadd.f32 0.0, %v534
      %v536 = vpop.f32.mrb[0].mxu0
      %537 = vmatprep.mubr.f32.mxu0 0.0
      %538 = vmatmul.mubr.f32.gmra.mrb[0].mxu0 %v450
      %v539 = vpop.f32.mrb[0].mxu0
      %v540 = vadd.f32 0.0, %v539
      %v541 = vpop.f32.mrb[0].mxu0
      %542 = vmatprep.mubr.f32.mxu0 0.0
      %543 = vmatmul.mubr.f32.gmra.mrb[0].mxu0 %v452
      %v544 = vpop.f32.mrb[0].mxu0
      %v545 = vadd.f32 0.0, %v544
      %v546 = vpop.f32.mrb[0].mxu0
      %547 = vmatprep.mubr.f32.mxu0 0.0
      %548 = vmatmul.mubr.f32.gmra.mrb[0].mxu0 %v454
      %v549 = vpop.f32.mrb[0].mxu0
      %v550 = vadd.f32 0.0, %v549
      %v551 = vpop.f32.mrb[0].mxu0
      %552 = vmatprep.mubr.f32.mxu0 0.0
      %553 = vmatmul.mubr.f32.gmra.mrb[0].mxu0 %v456
      %v554 = vpop.f32.mrb[0].mxu0
      %v555 = vadd.f32 0.0, %v554
      %v556 = vpop.f32.mrb[0].mxu0
      %557 = vmatprep.mubr.f32.mxu0 0.0
      %558 = vmatmul.mubr.f32.gmra.mrb[0].mxu0 %v458
      %v559 = vpop.f32.mrb[0].mxu0
      %v560 = vadd.f32 0.0, %v559
      %v561 = vpop.f32.mrb[0].mxu0
      %562 = vmatprep.mubr.f32.mxu0 0.0
      %563 = vmatmul.mubr.f32.gmra.mrb[0].mxu0 %v460
      %v564 = vpop.f32.mrb[0].mxu0
      %v565 = vadd.f32 0.0, %v564
      %v566 = vpop.f32.mrb[0].mxu0
      %567 = vmatprep.mubr.f32.mxu0 0.0
      %568 = vmatmul.mubr.f32.gmra.mrb[0].mxu0 %v462
      %v569 = vpop.f32.mrb[0].mxu0
      %v570 = vadd.f32 0.0, %v569
      %v571 = vpop.f32.mrb[0].mxu0
      %572 = vdwg.mxu0
      %v573 = vsel %vm447, %v343, 0
      %v575 = vsel %vm447, %v345, 0
      %v577 = vsel %vm447, %v347, 0
      %v579 = vsel %vm447, %v349, 0
      %v581 = vsel %vm447, %v351, 0
      %v583 = vsel %vm447, %v353, 0
      %v585 = vsel %vm447, %v355, 0
      %v587 = vsel %vm447, %v357, 0
      %v590 = vsel %vm464, %v403, 0
      %592 = vmatprep.subr.mxu0 0.0
      %593 = vmatpush1.msra.mxu0 %v590
      %594 = vmatprep.subr.mxu0 0.0
      %595 = vmatpush1.msra.mxu0 0.0
      %596 = vmatprep.subr.mxu0 0.0
      %597 = vmatpush1.msra.mxu0 0.0
      %598 = vmatprep.subr.mxu0 0.0
      %599 = vmatpush1.msra.mxu0 0.0
      %600 = vmatprep.subr.mxu0 0.0
      %601 = vmatpush1.msra.mxu0 0.0
      %602 = vmatprep.subr.mxu0 0.0
      %603 = vmatpush1.msra.mxu0 0.0
      %604 = vmatprep.subr.mxu0 0.0
      %605 = vmatpush1.msra.mxu0 0.0
      %606 = vmatprep.subr.mxu0 0.0
      %607 = vmatpush1.msra.mxu0 0.0
      %608 = vmatprep.subr.mxu0 0.0
      %609 = vmatpush1.msra.mxu0 0.0
      %610 = vmatprep.subr.mxu0 0.0
      %611 = vmatpush1.msra.mxu0 0.0
      %612 = vmatprep.subr.mxu0 0.0
      %613 = vmatpush1.msra.mxu0 0.0
      %614 = vmatprep.subr.mxu0 0.0
      %615 = vmatpush1.msra.mxu0 0.0
      %616 = vmatprep.subr.mxu0 0.0
      %617 = vmatpush1.msra.mxu0 0.0
      %618 = vmatprep.subr.mxu0 0.0
      %619 = vmatpush1.msra.mxu0 0.0
      %620 = vmatprep.subr.mxu0 0.0
      %621 = vmatpush1.msra.mxu0 0.0
      %622 = vmatprep.subr.mxu0 0.0
      %623 = vmatpush1.msra.mxu0 0.0
      %624 = vmatprep.subr.mxu0 0.0
      %625 = vmatpush1.msra.mxu0 0.0
      %626 = vmatprep.subr.mxu0 0.0
      %627 = vmatpush1.msra.mxu0 0.0
      %628 = vmatprep.subr.mxu0 0.0
      %629 = vmatpush1.msra.mxu0 0.0
      %630 = vmatprep.subr.mxu0 0.0
      %631 = vmatpush1.msra.mxu0 0.0
      %632 = vmatprep.subr.mxu0 0.0
      %633 = vmatpush1.msra.mxu0 0.0
      %634 = vmatprep.subr.mxu0 0.0
      %635 = vmatpush1.msra.mxu0 0.0
      %636 = vmatprep.subr.mxu0 0.0
      %637 = vmatpush1.msra.mxu0 0.0
      %638 = vmatprep.subr.mxu0 0.0
      %639 = vmatpush1.msra.mxu0 0.0
      %640 = vmatprep.subr.mxu0 0.0
      %641 = vmatpush1.msra.mxu0 0.0
      %642 = vmatprep.subr.mxu0 0.0
      %643 = vmatpush1.msra.mxu0 0.0
      %644 = vmatprep.subr.mxu0 0.0
      %645 = vmatpush1.msra.mxu0 0.0
      %646 = vmatprep.subr.mxu0 0.0
      %647 = vmatpush1.msra.mxu0 0.0
      %648 = vmatprep.subr.mxu0 0.0
      %649 = vmatpush1.msra.mxu0 0.0
      %650 = vmatprep.subr.mxu0 0.0
      %651 = vmatpush1.msra.mxu0 0.0
      %652 = vmatprep.subr.mxu0 0.0
      %653 = vmatpush1.msra.mxu0 0.0
      %654 = vmatprep.subr.mxu0 0.0
      %655 = vmatpush1.msra.mxu0 0.0
      %656 = vmatprep.mubr.f32.mxu0 0.0
      %657 = vmatmul.mubr.f32.gmra.mrb[0].mxu0 %v573
      %v658 = vpop.f32.mrb[0].mxu0
      %v659 = vadd.f32 %v535, %v658
      %v660 = vpop.f32.mrb[0].mxu0
      %661 = vmatprep.mubr.f32.mxu0 0.0
      %662 = vmatmul.mubr.f32.gmra.mrb[0].mxu0 %v575
      %v663 = vpop.f32.mrb[0].mxu0
      %v664 = vadd.f32 %v540, %v663
      %v665 = vpop.f32.mrb[0].mxu0
      %666 = vmatprep.mubr.f32.mxu0 0.0
      %667 = vmatmul.mubr.f32.gmra.mrb[0].mxu0 %v577
      %v668 = vpop.f32.mrb[0].mxu0
      %v669 = vadd.f32 %v545, %v668
      %v670 = vpop.f32.mrb[0].mxu0
      %671 = vmatprep.mubr.f32.mxu0 0.0
      %672 = vmatmul.mubr.f32.gmra.mrb[0].mxu0 %v579
      %v673 = vpop.f32.mrb[0].mxu0
      %v674 = vadd.f32 %v550, %v673
      %v675 = vpop.f32.mrb[0].mxu0
      %676 = vmatprep.mubr.f32.mxu0 0.0
      %677 = vmatmul.mubr.f32.gmra.mrb[0].mxu0 %v581
      %v678 = vpop.f32.mrb[0].mxu0
      %v679 = vadd.f32 %v555, %v678
      %v680 = vpop.f32.mrb[0].mxu0
      %681 = vmatprep.mubr.f32.mxu0 0.0
      %682 = vmatmul.mubr.f32.gmra.mrb[0].mxu0 %v583
      %v683 = vpop.f32.mrb[0].mxu0
      %v684 = vadd.f32 %v560, %v683
      %v685 = vpop.f32.mrb[0].mxu0
      %686 = vmatprep.mubr.f32.mxu0 0.0
      %687 = vmatmul.mubr.f32.gmra.mrb[0].mxu0 %v585
      %v688 = vpop.f32.mrb[0].mxu0
      %v689 = vadd.f32 %v565, %v688
      %v690 = vpop.f32.mrb[0].mxu0
      %691 = vmatprep.mubr.f32.mxu0 0.0
      %692 = vmatmul.mubr.f32.gmra.mrb[0].mxu0 %v587
      %v693 = vpop.f32.mrb[0].mxu0
      %v694 = vadd.f32 %v570, %v693
      %v695 = vpop.f32.mrb[0].mxu0
      %696 = vdwg.mxu0
      %vm697 = vcmask 1045504
      %v698 = vrot.slane %v343, 2
      %v699 = vrot.slane %v344, 2
      %v700 = vsel %vm697, %v698, %v699
      %v701 = vrot.slane %v345, 2
      %v702 = vrot.slane %v346, 2
      %v703 = vsel %vm697, %v701, %v702
      %v704 = vrot.slane %v347, 2
      %v705 = vrot.slane %v348, 2
      %v706 = vsel %vm697, %v704, %v705
      %v707 = vrot.slane %v349, 2
      %v708 = vrot.slane %v350, 2
      %v709 = vsel %vm697, %v707, %v708
      %v710 = vrot.slane %v351, 2
      %v711 = vrot.slane %v352, 2
      %v712 = vsel %vm697, %v710, %v711
      %v713 = vrot.slane %v353, 2
      %v714 = vrot.slane %v354, 2
      %v715 = vsel %vm697, %v713, %v714
      %v716 = vrot.slane %v355, 2
      %v717 = vrot.slane %v356, 2
      %v718 = vsel %vm697, %v716, %v717
      %v719 = vrot.slane %v357, 2
      %v720 = vrot.slane %v358, 2
      %v721 = vsel %vm697, %v719, %v720
      %s722 = scalar_lea.vmem %s3, 8
      %v723 = vld [vmem:[%s722] sm:$0xf]
      %v724 = vsel %vm447, %v700, 0
      %v726 = vsel %vm447, %v703, 0
      %v728 = vsel %vm447, %v706, 0
      %v730 = vsel %vm447, %v709, 0
      %v732 = vsel %vm447, %v712, 0
      %v734 = vsel %vm447, %v715, 0
      %v736 = vsel %vm447, %v718, 0
      %v738 = vsel %vm447, %v721, 0
      %v741 = vsel %vm464, %v723, 0
      %743 = vmatprep.subr.mxu0 0.0
      %744 = vmatpush1.msra.mxu0 %v741
      %745 = vmatprep.subr.mxu0 0.0
      %746 = vmatpush1.msra.mxu0 0.0
      %747 = vmatprep.subr.mxu0 0.0
      %748 = vmatpush1.msra.mxu0 0.0
      %749 = vmatprep.subr.mxu0 0.0
      %750 = vmatpush1.msra.mxu0 0.0
      %751 = vmatprep.subr.mxu0 0.0
      %752 = vmatpush1.msra.mxu0 0.0
      %753 = vmatprep.subr.mxu0 0.0
      %754 = vmatpush1.msra.mxu0 0.0
      %755 = vmatprep.subr.mxu0 0.0
      %756 = vmatpush1.msra.mxu0 0.0
      %757 = vmatprep.subr.mxu0 0.0
      %758 = vmatpush1.msra.mxu0 0.0
      %759 = vmatprep.subr.mxu0 0.0
      %760 = vmatpush1.msra.mxu0 0.0
      %761 = vmatprep.subr.mxu0 0.0
      %762 = vmatpush1.msra.mxu0 0.0
      %763 = vmatprep.subr.mxu0 0.0
      %764 = vmatpush1.msra.mxu0 0.0
      %765 = vmatprep.subr.mxu0 0.0
      %766 = vmatpush1.msra.mxu0 0.0
      %767 = vmatprep.subr.mxu0 0.0
      %768 = vmatpush1.msra.mxu0 0.0
      %769 = vmatprep.subr.mxu0 0.0
      %770 = vmatpush1.msra.mxu0 0.0
      %771 = vmatprep.subr.mxu0 0.0
      %772 = vmatpush1.msra.mxu0 0.0
      %773 = vmatprep.subr.mxu0 0.0
      %774 = vmatpush1.msra.mxu0 0.0
      %775 = vmatprep.subr.mxu0 0.0
      %776 = vmatpush1.msra.mxu0 0.0
      %777 = vmatprep.subr.mxu0 0.0
      %778 = vmatpush1.msra.mxu0 0.0
      %779 = vmatprep.subr.mxu0 0.0
      %780 = vmatpush1.msra.mxu0 0.0
      %781 = vmatprep.subr.mxu0 0.0
      %782 = vmatpush1.msra.mxu0 0.0
      %783 = vmatprep.subr.mxu0 0.0
      %784 = vmatpush1.msra.mxu0 0.0
      %785 = vmatprep.subr.mxu0 0.0
      %786 = vmatpush1.msra.mxu0 0.0
      %787 = vmatprep.subr.mxu0 0.0
      %788 = vmatpush1.msra.mxu0 0.0
      %789 = vmatprep.subr.mxu0 0.0
      %790 = vmatpush1.msra.mxu0 0.0
      %791 = vmatprep.subr.mxu0 0.0
      %792 = vmatpush1.msra.mxu0 0.0
      %793 = vmatprep.subr.mxu0 0.0
      %794 = vmatpush1.msra.mxu0 0.0
      %795 = vmatprep.subr.mxu0 0.0
      %796 = vmatpush1.msra.mxu0 0.0
      %797 = vmatprep.subr.mxu0 0.0
      %798 = vmatpush1.msra.mxu0 0.0
      %799 = vmatprep.subr.mxu0 0.0
      %800 = vmatpush1.msra.mxu0 0.0
      %801 = vmatprep.subr.mxu0 0.0
      %802 = vmatpush1.msra.mxu0 0.0
      %803 = vmatprep.subr.mxu0 0.0
      %804 = vmatpush1.msra.mxu0 0.0
      %805 = vmatprep.subr.mxu0 0.0
      %806 = vmatpush1.msra.mxu0 0.0
      %807 = vmatprep.mubr.f32.mxu0 0.0
      %808 = vmatmul.mubr.f32.gmra.mrb[0].mxu0 %v724
      %v809 = vpop.f32.mrb[0].mxu0
      %v810 = vadd.f32 0.0, %v809
      %v811 = vpop.f32.mrb[0].mxu0
      %812 = vmatprep.mubr.f32.mxu0 0.0
      %813 = vmatmul.mubr.f32.gmra.mrb[0].mxu0 %v726
      %v814 = vpop.f32.mrb[0].mxu0
      %v815 = vadd.f32 0.0, %v814
      %v816 = vpop.f32.mrb[0].mxu0
      %817 = vmatprep.mubr.f32.mxu0 0.0
      %818 = vmatmul.mubr.f32.gmra.mrb[0].mxu0 %v728
      %v819 = vpop.f32.mrb[0].mxu0
      %v820 = vadd.f32 0.0, %v819
      %v821 = vpop.f32.mrb[0].mxu0
      %822 = vmatprep.mubr.f32.mxu0 0.0
      %823 = vmatmul.mubr.f32.gmra.mrb[0].mxu0 %v730
      %v824 = vpop.f32.mrb[0].mxu0
      %v825 = vadd.f32 0.0, %v824
      %v826 = vpop.f32.mrb[0].mxu0
      %827 = vmatprep.mubr.f32.mxu0 0.0
      %828 = vmatmul.mubr.f32.gmra.mrb[0].mxu0 %v732
      %v829 = vpop.f32.mrb[0].mxu0
      %v830 = vadd.f32 0.0, %v829
      %v831 = vpop.f32.mrb[0].mxu0
      %832 = vmatprep.mubr.f32.mxu0 0.0
      %833 = vmatmul.mubr.f32.gmra.mrb[0].mxu0 %v734
      %v834 = vpop.f32.mrb[0].mxu0
      %v835 = vadd.f32 0.0, %v834
      %v836 = vpop.f32.mrb[0].mxu0
      %837 = vmatprep.mubr.f32.mxu0 0.0
      %838 = vmatmul.mubr.f32.gmra.mrb[0].mxu0 %v736
      %v839 = vpop.f32.mrb[0].mxu0
      %v840 = vadd.f32 0.0, %v839
      %v841 = vpop.f32.mrb[0].mxu0
      %842 = vmatprep.mubr.f32.mxu0 0.0
      %843 = vmatmul.mubr.f32.gmra.mrb[0].mxu0 %v738
      %v844 = vpop.f32.mrb[0].mxu0
      %v845 = vadd.f32 0.0, %v844
      %v846 = vpop.f32.mrb[0].mxu0
      %847 = vdwg.mxu0
      %v848 = vadd.f32 %v659, %v810
      %v849 = vadd.f32 %v664, %v815
      %v850 = vadd.f32 %v669, %v820
      %v851 = vadd.f32 %v674, %v825
      %v852 = vadd.f32 %v679, %v830
      %v853 = vadd.f32 %v684, %v835
      %v854 = vadd.f32 %v689, %v840
      %v855 = vadd.f32 %v694, %v845
      %s856 = scalar_lea.vmem %s3, 12
      %v857 = vld [vmem:[%s856] sm:$0xf]
      %v859 = vsel %vm447, %v359, 0
      %v862 = vsel %vm464, %v857, 0
      %864 = vmatprep.subr.mxu0 0.0
      %865 = vmatpush1.msra.mxu0 %v862
      %866 = vmatprep.subr.mxu0 0.0
      %867 = vmatpush1.msra.mxu0 0.0
      %868 = vmatprep.subr.mxu0 0.0
      %869 = vmatpush1.msra.mxu0 0.0
      %870 = vmatprep.subr.mxu0 0.0
      %871 = vmatpush1.msra.mxu0 0.0
      %872 = vmatprep.subr.mxu0 0.0
      %873 = vmatpush1.msra.mxu0 0.0
      %874 = vmatprep.subr.mxu0 0.0
      %875 = vmatpush1.msra.mxu0 0.0
      %876 = vmatprep.subr.mxu0 0.0
      %877 = vmatpush1.msra.mxu0 0.0
      %878 = vmatprep.subr.mxu0 0.0
      %879 = vmatpush1.msra.mxu0 0.0
      %880 = vmatprep.subr.mxu0 0.0
      %881 = vmatpush1.msra.mxu0 0.0
      %882 = vmatprep.subr.mxu0 0.0
      %883 = vmatpush1.msra.mxu0 0.0
      %884 = vmatprep.subr.mxu0 0.0
      %885 = vmatpush1.msra.mxu0 0.0
      %886 = vmatprep.subr.mxu0 0.0
      %887 = vmatpush1.msra.mxu0 0.0
      %888 = vmatprep.subr.mxu0 0.0
      %889 = vmatpush1.msra.mxu0 0.0
      %890 = vmatprep.subr.mxu0 0.0
      %891 = vmatpush1.msra.mxu0 0.0
      %892 = vmatprep.subr.mxu0 0.0
      %893 = vmatpush1.msra.mxu0 0.0
      %894 = vmatprep.subr.mxu0 0.0
      %895 = vmatpush1.msra.mxu0 0.0
      %896 = vmatprep.subr.mxu0 0.0
      %897 = vmatpush1.msra.mxu0 0.0
      %898 = vmatprep.subr.mxu0 0.0
      %899 = vmatpush1.msra.mxu0 0.0
      %900 = vmatprep.subr.mxu0 0.0
      %901 = vmatpush1.msra.mxu0 0.0
      %902 = vmatprep.subr.mxu0 0.0
      %903 = vmatpush1.msra.mxu0 0.0
      %904 = vmatprep.subr.mxu0 0.0
      %905 = vmatpush1.msra.mxu0 0.0
      %906 = vmatprep.subr.mxu0 0.0
      %907 = vmatpush1.msra.mxu0 0.0
      %908 = vmatprep.subr.mxu0 0.0
      %909 = vmatpush1.msra.mxu0 0.0
      %910 = vmatprep.subr.mxu0 0.0
      %911 = vmatpush1.msra.mxu0 0.0
      %912 = vmatprep.subr.mxu0 0.0
      %913 = vmatpush1.msra.mxu0 0.0
      %914 = vmatprep.subr.mxu0 0.0
      %915 = vmatpush1.msra.mxu0 0.0
      %916 = vmatprep.subr.mxu0 0.0
      %917 = vmatpush1.msra.mxu0 0.0
      %918 = vmatprep.subr.mxu0 0.0
      %919 = vmatpush1.msra.mxu0 0.0
      %920 = vmatprep.subr.mxu0 0.0
      %921 = vmatpush1.msra.mxu0 0.0
      %922 = vmatprep.subr.mxu0 0.0
      %923 = vmatpush1.msra.mxu0 0.0
      %924 = vmatprep.subr.mxu0 0.0
      %925 = vmatpush1.msra.mxu0 0.0
      %926 = vmatprep.subr.mxu0 0.0
      %927 = vmatpush1.msra.mxu0 0.0
      %928 = vmatprep.mubr.f32.mxu0 0.0
      %929 = vmatmul.mubr.f32.gmra.mrb[0].mxu0 %v575
      %v930 = vpop.f32.mrb[0].mxu0
      %v931 = vadd.f32 0.0, %v930
      %v932 = vpop.f32.mrb[0].mxu0
      %933 = vmatprep.mubr.f32.mxu0 0.0
      %934 = vmatmul.mubr.f32.gmra.mrb[0].mxu0 %v577
      %v935 = vpop.f32.mrb[0].mxu0
      %v936 = vadd.f32 0.0, %v935
      %v937 = vpop.f32.mrb[0].mxu0
      %938 = vmatprep.mubr.f32.mxu0 0.0
      %939 = vmatmul.mubr.f32.gmra.mrb[0].mxu0 %v579
      %v940 = vpop.f32.mrb[0].mxu0
      %v941 = vadd.f32 0.0, %v940
      %v942 = vpop.f32.mrb[0].mxu0
      %943 = vmatprep.mubr.f32.mxu0 0.0
      %944 = vmatmul.mubr.f32.gmra.mrb[0].mxu0 %v581
      %v945 = vpop.f32.mrb[0].mxu0
      %v946 = vadd.f32 0.0, %v945
      %v947 = vpop.f32.mrb[0].mxu0
      %948 = vmatprep.mubr.f32.mxu0 0.0
      %949 = vmatmul.mubr.f32.gmra.mrb[0].mxu0 %v583
      %v950 = vpop.f32.mrb[0].mxu0
      %v951 = vadd.f32 0.0, %v950
      %v952 = vpop.f32.mrb[0].mxu0
      %953 = vmatprep.mubr.f32.mxu0 0.0
      %954 = vmatmul.mubr.f32.gmra.mrb[0].mxu0 %v585
      %v955 = vpop.f32.mrb[0].mxu0
      %v956 = vadd.f32 0.0, %v955
      %v957 = vpop.f32.mrb[0].mxu0
      %958 = vmatprep.mubr.f32.mxu0 0.0
      %959 = vmatmul.mubr.f32.gmra.mrb[0].mxu0 %v587
      %v960 = vpop.f32.mrb[0].mxu0
      %v961 = vadd.f32 0.0, %v960
      %v962 = vpop.f32.mrb[0].mxu0
      %963 = vmatprep.mubr.f32.mxu0 0.0
      %964 = vmatmul.mubr.f32.gmra.mrb[0].mxu0 %v859
      %v965 = vpop.f32.mrb[0].mxu0
      %v966 = vadd.f32 0.0, %v965
      %v967 = vpop.f32.mrb[0].mxu0
      %968 = vdwg.mxu0
      %v969 = vadd.f32 %v848, %v931
      %v970 = vadd.f32 %v849, %v936
      %v971 = vadd.f32 %v850, %v941
      %v972 = vadd.f32 %v851, %v946
      %v973 = vadd.f32 %v852, %v951
      %v974 = vadd.f32 %v853, %v956
      %v975 = vadd.f32 %v854, %v961
      %v976 = vadd.f32 %v855, %v966
      %v978 = vrot.slane %v359, 1
      %v979 = vrot.slane %v360, 1
      %v980 = vsel %vm420, %v978, %v979
      %s981 = scalar_lea.vmem %s3, 16
      %v982 = vld [vmem:[%s981] sm:$0xf]
      %v983 = vsel %vm447, %v980, 0
      %v986 = vsel %vm464, %v982, 0
      %988 = vmatprep.subr.mxu0 0.0
      %989 = vmatpush1.msra.mxu0 %v986
      %990 = vmatprep.subr.mxu0 0.0
      %991 = vmatpush1.msra.mxu0 0.0
      %992 = vmatprep.subr.mxu0 0.0
      %993 = vmatpush1.msra.mxu0 0.0
      %994 = vmatprep.subr.mxu0 0.0
      %995 = vmatpush1.msra.mxu0 0.0
      %996 = vmatprep.subr.mxu0 0.0
      %997 = vmatpush1.msra.mxu0 0.0
      %998 = vmatprep.subr.mxu0 0.0
      %999 = vmatpush1.msra.mxu0 0.0
      %1000 = vmatprep.subr.mxu0 0.0
      %1001 = vmatpush1.msra.mxu0 0.0
      %1002 = vmatprep.subr.mxu0 0.0
      %1003 = vmatpush1.msra.mxu0 0.0
      %1004 = vmatprep.subr.mxu0 0.0
      %1005 = vmatpush1.msra.mxu0 0.0
      %1006 = vmatprep.subr.mxu0 0.0
      %1007 = vmatpush1.msra.mxu0 0.0
      %1008 = vmatprep.subr.mxu0 0.0
      %1009 = vmatpush1.msra.mxu0 0.0
      %1010 = vmatprep.subr.mxu0 0.0
      %1011 = vmatpush1.msra.mxu0 0.0
      %1012 = vmatprep.subr.mxu0 0.0
      %1013 = vmatpush1.msra.mxu0 0.0
      %1014 = vmatprep.subr.mxu0 0.0
      %1015 = vmatpush1.msra.mxu0 0.0
      %1016 = vmatprep.subr.mxu0 0.0
      %1017 = vmatpush1.msra.mxu0 0.0
      %1018 = vmatprep.subr.mxu0 0.0
      %1019 = vmatpush1.msra.mxu0 0.0
      %1020 = vmatprep.subr.mxu0 0.0
      %1021 = vmatpush1.msra.mxu0 0.0
      %1022 = vmatprep.subr.mxu0 0.0
      %1023 = vmatpush1.msra.mxu0 0.0
      %1024 = vmatprep.subr.mxu0 0.0
      %1025 = vmatpush1.msra.mxu0 0.0
      %1026 = vmatprep.subr.mxu0 0.0
      %1027 = vmatpush1.msra.mxu0 0.0
      %1028 = vmatprep.subr.mxu0 0.0
      %1029 = vmatpush1.msra.mxu0 0.0
      %1030 = vmatprep.subr.mxu0 0.0
      %1031 = vmatpush1.msra.mxu0 0.0
      %1032 = vmatprep.subr.mxu0 0.0
      %1033 = vmatpush1.msra.mxu0 0.0
      %1034 = vmatprep.subr.mxu0 0.0
      %1035 = vmatpush1.msra.mxu0 0.0
      %1036 = vmatprep.subr.mxu0 0.0
      %1037 = vmatpush1.msra.mxu0 0.0
      %1038 = vmatprep.subr.mxu0 0.0
      %1039 = vmatpush1.msra.mxu0 0.0
      %1040 = vmatprep.subr.mxu0 0.0
      %1041 = vmatpush1.msra.mxu0 0.0
      %1042 = vmatprep.subr.mxu0 0.0
      %1043 = vmatpush1.msra.mxu0 0.0
      %1044 = vmatprep.subr.mxu0 0.0
      %1045 = vmatpush1.msra.mxu0 0.0
      %1046 = vmatprep.subr.mxu0 0.0
      %1047 = vmatpush1.msra.mxu0 0.0
      %1048 = vmatprep.subr.mxu0 0.0
      %1049 = vmatpush1.msra.mxu0 0.0
      %1050 = vmatprep.subr.mxu0 0.0
      %1051 = vmatpush1.msra.mxu0 0.0
      %1052 = vmatprep.mubr.f32.mxu0 0.0
      %1053 = vmatmul.mubr.f32.gmra.mrb[0].mxu0 %v450
      %v1054 = vpop.f32.mrb[0].mxu0
      %v1055 = vadd.f32 0.0, %v1054
      %v1056 = vpop.f32.mrb[0].mxu0
      %1057 = vmatprep.mubr.f32.mxu0 0.0
      %1058 = vmatmul.mubr.f32.gmra.mrb[0].mxu0 %v452
      %v1059 = vpop.f32.mrb[0].mxu0
      %v1060 = vadd.f32 0.0, %v1059
      %v1061 = vpop.f32.mrb[0].mxu0
      %1062 = vmatprep.mubr.f32.mxu0 0.0
      %1063 = vmatmul.mubr.f32.gmra.mrb[0].mxu0 %v454
      %v1064 = vpop.f32.mrb[0].mxu0
      %v1065 = vadd.f32 0.0, %v1064
      %v1066 = vpop.f32.mrb[0].mxu0
      %1067 = vmatprep.mubr.f32.mxu0 0.0
      %1068 = vmatmul.mubr.f32.gmra.mrb[0].mxu0 %v456
      %v1069 = vpop.f32.mrb[0].mxu0
      %v1070 = vadd.f32 0.0, %v1069
      %v1071 = vpop.f32.mrb[0].mxu0
      %1072 = vmatprep.mubr.f32.mxu0 0.0
      %1073 = vmatmul.mubr.f32.gmra.mrb[0].mxu0 %v458
      %v1074 = vpop.f32.mrb[0].mxu0
      %v1075 = vadd.f32 0.0, %v1074
      %v1076 = vpop.f32.mrb[0].mxu0
      %1077 = vmatprep.mubr.f32.mxu0 0.0
      %1078 = vmatmul.mubr.f32.gmra.mrb[0].mxu0 %v460
      %v1079 = vpop.f32.mrb[0].mxu0
      %v1080 = vadd.f32 0.0, %v1079
      %v1081 = vpop.f32.mrb[0].mxu0
      %1082 = vmatprep.mubr.f32.mxu0 0.0
      %1083 = vmatmul.mubr.f32.gmra.mrb[0].mxu0 %v462
      %v1084 = vpop.f32.mrb[0].mxu0
      %v1085 = vadd.f32 0.0, %v1084
      %v1086 = vpop.f32.mrb[0].mxu0
      %1087 = vmatprep.mubr.f32.mxu0 0.0
      %1088 = vmatmul.mubr.f32.gmra.mrb[0].mxu0 %v983
      %v1089 = vpop.f32.mrb[0].mxu0
      %v1090 = vadd.f32 0.0, %v1089
      %v1091 = vpop.f32.mrb[0].mxu0
      %1092 = vdwg.mxu0
      %v1093 = vadd.f32 %v969, %v1055
      %v1094 = vadd.f32 %v970, %v1060
      %v1095 = vadd.f32 %v971, %v1065
      %v1096 = vadd.f32 %v972, %v1070
      %v1097 = vadd.f32 %v973, %v1075
      %v1098 = vadd.f32 %v974, %v1080
      %v1099 = vadd.f32 %v975, %v1085
      %v1100 = vadd.f32 %v976, %v1090
      %v1101 = vrot.slane %v359, 2
      %v1102 = vrot.slane %v360, 2
      %v1103 = vsel %vm697, %v1101, %v1102
      %s1104 = scalar_lea.vmem %s3, 20
      %v1105 = vld [vmem:[%s1104] sm:$0xf]
      %v1106 = vsel %vm447, %v1103, 0
      %v1109 = vsel %vm464, %v1105, 0
      %1111 = vmatprep.subr.mxu0 0.0
      %1112 = vmatpush1.msra.mxu0 %v1109
      %1113 = vmatprep.subr.mxu0 0.0
      %1114 = vmatpush1.msra.mxu0 0.0
      %1115 = vmatprep.subr.mxu0 0.0
      %1116 = vmatpush1.msra.mxu0 0.0
      %1117 = vmatprep.subr.mxu0 0.0
      %1118 = vmatpush1.msra.mxu0 0.0
      %1119 = vmatprep.subr.mxu0 0.0
      %1120 = vmatpush1.msra.mxu0 0.0
      %1121 = vmatprep.subr.mxu0 0.0
      %1122 = vmatpush1.msra.mxu0 0.0
      %1123 = vmatprep.subr.mxu0 0.0
      %1124 = vmatpush1.msra.mxu0 0.0
      %1125 = vmatprep.subr.mxu0 0.0
      %1126 = vmatpush1.msra.mxu0 0.0
      %1127 = vmatprep.subr.mxu0 0.0
      %1128 = vmatpush1.msra.mxu0 0.0
      %1129 = vmatprep.subr.mxu0 0.0
      %1130 = vmatpush1.msra.mxu0 0.0
      %1131 = vmatprep.subr.mxu0 0.0
      %1132 = vmatpush1.msra.mxu0 0.0
      %1133 = vmatprep.subr.mxu0 0.0
      %1134 = vmatpush1.msra.mxu0 0.0
      %1135 = vmatprep.subr.mxu0 0.0
      %1136 = vmatpush1.msra.mxu0 0.0
      %1137 = vmatprep.subr.mxu0 0.0
      %1138 = vmatpush1.msra.mxu0 0.0
      %1139 = vmatprep.subr.mxu0 0.0
      %1140 = vmatpush1.msra.mxu0 0.0
      %1141 = vmatprep.subr.mxu0 0.0
      %1142 = vmatpush1.msra.mxu0 0.0
      %1143 = vmatprep.subr.mxu0 0.0
      %1144 = vmatpush1.msra.mxu0 0.0
      %1145 = vmatprep.subr.mxu0 0.0
      %1146 = vmatpush1.msra.mxu0 0.0
      %1147 = vmatprep.subr.mxu0 0.0
      %1148 = vmatpush1.msra.mxu0 0.0
      %1149 = vmatprep.subr.mxu0 0.0
      %1150 = vmatpush1.msra.mxu0 0.0
      %1151 = vmatprep.subr.mxu0 0.0
      %1152 = vmatpush1.msra.mxu0 0.0
      %1153 = vmatprep.subr.mxu0 0.0
      %1154 = vmatpush1.msra.mxu0 0.0
      %1155 = vmatprep.subr.mxu0 0.0
      %1156 = vmatpush1.msra.mxu0 0.0
      %1157 = vmatprep.subr.mxu0 0.0
      %1158 = vmatpush1.msra.mxu0 0.0
      %1159 = vmatprep.subr.mxu0 0.0
      %1160 = vmatpush1.msra.mxu0 0.0
      %1161 = vmatprep.subr.mxu0 0.0
      %1162 = vmatpush1.msra.mxu0 0.0
      %1163 = vmatprep.subr.mxu0 0.0
      %1164 = vmatpush1.msra.mxu0 0.0
      %1165 = vmatprep.subr.mxu0 0.0
      %1166 = vmatpush1.msra.mxu0 0.0
      %1167 = vmatprep.subr.mxu0 0.0
      %1168 = vmatpush1.msra.mxu0 0.0
      %1169 = vmatprep.subr.mxu0 0.0
      %1170 = vmatpush1.msra.mxu0 0.0
      %1171 = vmatprep.subr.mxu0 0.0
      %1172 = vmatpush1.msra.mxu0 0.0
      %1173 = vmatprep.subr.mxu0 0.0
      %1174 = vmatpush1.msra.mxu0 0.0
      %1175 = vmatprep.mubr.f32.mxu0 0.0
      %1176 = vmatmul.mubr.f32.gmra.mrb[0].mxu0 %v726
      %v1177 = vpop.f32.mrb[0].mxu0
      %v1178 = vadd.f32 0.0, %v1177
      %v1179 = vpop.f32.mrb[0].mxu0
      %1180 = vmatprep.mubr.f32.mxu0 0.0
      %1181 = vmatmul.mubr.f32.gmra.mrb[0].mxu0 %v728
      %v1182 = vpop.f32.mrb[0].mxu0
      %v1183 = vadd.f32 0.0, %v1182
      %v1184 = vpop.f32.mrb[0].mxu0
      %1185 = vmatprep.mubr.f32.mxu0 0.0
      %1186 = vmatmul.mubr.f32.gmra.mrb[0].mxu0 %v730
      %v1187 = vpop.f32.mrb[0].mxu0
      %v1188 = vadd.f32 0.0, %v1187
      %v1189 = vpop.f32.mrb[0].mxu0
      %1190 = vmatprep.mubr.f32.mxu0 0.0
      %1191 = vmatmul.mubr.f32.gmra.mrb[0].mxu0 %v732
      %v1192 = vpop.f32.mrb[0].mxu0
      %v1193 = vadd.f32 0.0, %v1192
      %v1194 = vpop.f32.mrb[0].mxu0
      %1195 = vmatprep.mubr.f32.mxu0 0.0
      %1196 = vmatmul.mubr.f32.gmra.mrb[0].mxu0 %v734
      %v1197 = vpop.f32.mrb[0].mxu0
      %v1198 = vadd.f32 0.0, %v1197
      %v1199 = vpop.f32.mrb[0].mxu0
      %1200 = vmatprep.mubr.f32.mxu0 0.0
      %1201 = vmatmul.mubr.f32.gmra.mrb[0].mxu0 %v736
      %v1202 = vpop.f32.mrb[0].mxu0
      %v1203 = vadd.f32 0.0, %v1202
      %v1204 = vpop.f32.mrb[0].mxu0
      %1205 = vmatprep.mubr.f32.mxu0 0.0
      %1206 = vmatmul.mubr.f32.gmra.mrb[0].mxu0 %v738
      %v1207 = vpop.f32.mrb[0].mxu0
      %v1208 = vadd.f32 0.0, %v1207
      %v1209 = vpop.f32.mrb[0].mxu0
      %1210 = vmatprep.mubr.f32.mxu0 0.0
      %1211 = vmatmul.mubr.f32.gmra.mrb[0].mxu0 %v1106
      %v1212 = vpop.f32.mrb[0].mxu0
      %v1213 = vadd.f32 0.0, %v1212
      %v1214 = vpop.f32.mrb[0].mxu0
      %1215 = vdwg.mxu0
      %v1216 = vadd.f32 %v1093, %v1178
      %v1217 = vadd.f32 %v1094, %v1183
      %v1218 = vadd.f32 %v1095, %v1188
      %v1219 = vadd.f32 %v1096, %v1193
      %v1220 = vadd.f32 %v1097, %v1198
      %v1221 = vadd.f32 %v1098, %v1203
      %v1222 = vadd.f32 %v1099, %v1208
      %v1223 = vadd.f32 %v1100, %v1213
      %s1224 = scalar_lea.vmem %s3, 24
      %v1225 = vld [vmem:[%s1224] sm:$0xf]
      %v1227 = vsel %vm447, %v361, 0
      %v1230 = vsel %vm464, %v1225, 0
      %1232 = vmatprep.subr.mxu0 0.0
      %1233 = vmatpush1.msra.mxu0 %v1230
      %1234 = vmatprep.subr.mxu0 0.0
      %1235 = vmatpush1.msra.mxu0 0.0
      %1236 = vmatprep.subr.mxu0 0.0
      %1237 = vmatpush1.msra.mxu0 0.0
      %1238 = vmatprep.subr.mxu0 0.0
      %1239 = vmatpush1.msra.mxu0 0.0
      %1240 = vmatprep.subr.mxu0 0.0
      %1241 = vmatpush1.msra.mxu0 0.0
      %1242 = vmatprep.subr.mxu0 0.0
      %1243 = vmatpush1.msra.mxu0 0.0
      %1244 = vmatprep.subr.mxu0 0.0
      %1245 = vmatpush1.msra.mxu0 0.0
      %1246 = vmatprep.subr.mxu0 0.0
      %1247 = vmatpush1.msra.mxu0 0.0
      %1248 = vmatprep.subr.mxu0 0.0
      %1249 = vmatpush1.msra.mxu0 0.0
      %1250 = vmatprep.subr.mxu0 0.0
      %1251 = vmatpush1.msra.mxu0 0.0
      %1252 = vmatprep.subr.mxu0 0.0
      %1253 = vmatpush1.msra.mxu0 0.0
      %1254 = vmatprep.subr.mxu0 0.0
      %1255 = vmatpush1.msra.mxu0 0.0
      %1256 = vmatprep.subr.mxu0 0.0
      %1257 = vmatpush1.msra.mxu0 0.0
      %1258 = vmatprep.subr.mxu0 0.0
      %1259 = vmatpush1.msra.mxu0 0.0
      %1260 = vmatprep.subr.mxu0 0.0
      %1261 = vmatpush1.msra.mxu0 0.0
      %1262 = vmatprep.subr.mxu0 0.0
      %1263 = vmatpush1.msra.mxu0 0.0
      %1264 = vmatprep.subr.mxu0 0.0
      %1265 = vmatpush1.msra.mxu0 0.0
      %1266 = vmatprep.subr.mxu0 0.0
      %1267 = vmatpush1.msra.mxu0 0.0
      %1268 = vmatprep.subr.mxu0 0.0
      %1269 = vmatpush1.msra.mxu0 0.0
      %1270 = vmatprep.subr.mxu0 0.0
      %1271 = vmatpush1.msra.mxu0 0.0
      %1272 = vmatprep.subr.mxu0 0.0
      %1273 = vmatpush1.msra.mxu0 0.0
      %1274 = vmatprep.subr.mxu0 0.0
      %1275 = vmatpush1.msra.mxu0 0.0
      %1276 = vmatprep.subr.mxu0 0.0
      %1277 = vmatpush1.msra.mxu0 0.0
      %1278 = vmatprep.subr.mxu0 0.0
      %1279 = vmatpush1.msra.mxu0 0.0
      %1280 = vmatprep.subr.mxu0 0.0
      %1281 = vmatpush1.msra.mxu0 0.0
      %1282 = vmatprep.subr.mxu0 0.0
      %1283 = vmatpush1.msra.mxu0 0.0
      %1284 = vmatprep.subr.mxu0 0.0
      %1285 = vmatpush1.msra.mxu0 0.0
      %1286 = vmatprep.subr.mxu0 0.0
      %1287 = vmatpush1.msra.mxu0 0.0
      %1288 = vmatprep.subr.mxu0 0.0
      %1289 = vmatpush1.msra.mxu0 0.0
      %1290 = vmatprep.subr.mxu0 0.0
      %1291 = vmatpush1.msra.mxu0 0.0
      %1292 = vmatprep.subr.mxu0 0.0
      %1293 = vmatpush1.msra.mxu0 0.0
      %1294 = vmatprep.subr.mxu0 0.0
      %1295 = vmatpush1.msra.mxu0 0.0
      %1296 = vmatprep.mubr.f32.mxu0 0.0
      %1297 = vmatmul.mubr.f32.gmra.mrb[0].mxu0 %v577
      %v1298 = vpop.f32.mrb[0].mxu0
      %v1299 = vadd.f32 0.0, %v1298
      %v1300 = vpop.f32.mrb[0].mxu0
      %1301 = vmatprep.mubr.f32.mxu0 0.0
      %1302 = vmatmul.mubr.f32.gmra.mrb[0].mxu0 %v579
      %v1303 = vpop.f32.mrb[0].mxu0
      %v1304 = vadd.f32 0.0, %v1303
      %v1305 = vpop.f32.mrb[0].mxu0
      %1306 = vmatprep.mubr.f32.mxu0 0.0
      %1307 = vmatmul.mubr.f32.gmra.mrb[0].mxu0 %v581
      %v1308 = vpop.f32.mrb[0].mxu0
      %v1309 = vadd.f32 0.0, %v1308
      %v1310 = vpop.f32.mrb[0].mxu0
      %1311 = vmatprep.mubr.f32.mxu0 0.0
      %1312 = vmatmul.mubr.f32.gmra.mrb[0].mxu0 %v583
      %v1313 = vpop.f32.mrb[0].mxu0
      %v1314 = vadd.f32 0.0, %v1313
      %v1315 = vpop.f32.mrb[0].mxu0
      %1316 = vmatprep.mubr.f32.mxu0 0.0
      %1317 = vmatmul.mubr.f32.gmra.mrb[0].mxu0 %v585
      %v1318 = vpop.f32.mrb[0].mxu0
      %v1319 = vadd.f32 0.0, %v1318
      %v1320 = vpop.f32.mrb[0].mxu0
      %1321 = vmatprep.mubr.f32.mxu0 0.0
      %1322 = vmatmul.mubr.f32.gmra.mrb[0].mxu0 %v587
      %v1323 = vpop.f32.mrb[0].mxu0
      %v1324 = vadd.f32 0.0, %v1323
      %v1325 = vpop.f32.mrb[0].mxu0
      %1326 = vmatprep.mubr.f32.mxu0 0.0
      %1327 = vmatmul.mubr.f32.gmra.mrb[0].mxu0 %v859
      %v1328 = vpop.f32.mrb[0].mxu0
      %v1329 = vadd.f32 0.0, %v1328
      %v1330 = vpop.f32.mrb[0].mxu0
      %1331 = vmatprep.mubr.f32.mxu0 0.0
      %1332 = vmatmul.mubr.f32.gmra.mrb[0].mxu0 %v1227
      %v1333 = vpop.f32.mrb[0].mxu0
      %v1334 = vadd.f32 0.0, %v1333
      %v1335 = vpop.f32.mrb[0].mxu0
      %1336 = vdwg.mxu0
      %v1337 = vadd.f32 %v1216, %v1299
      %v1338 = vadd.f32 %v1217, %v1304
      %v1339 = vadd.f32 %v1218, %v1309
      %v1340 = vadd.f32 %v1219, %v1314
      %v1341 = vadd.f32 %v1220, %v1319
      %v1342 = vadd.f32 %v1221, %v1324
      %v1343 = vadd.f32 %v1222, %v1329
      %v1344 = vadd.f32 %v1223, %v1334
      %v1346 = vrot.slane %v361, 1
      %v1347 = vrot.slane %v362, 1
      %v1348 = vsel %vm420, %v1346, %v1347
      %s1349 = scalar_lea.vmem %s3, 28
      %v1350 = vld [vmem:[%s1349] sm:$0xf]
      %v1351 = vsel %vm447, %v1348, 0
      %v1354 = vsel %vm464, %v1350, 0
      %1356 = vmatprep.subr.mxu0 0.0
      %1357 = vmatpush1.msra.mxu0 %v1354
      %1358 = vmatprep.subr.mxu0 0.0
      %1359 = vmatpush1.msra.mxu0 0.0
      %1360 = vmatprep.subr.mxu0 0.0
      %1361 = vmatpush1.msra.mxu0 0.0
      %1362 = vmatprep.subr.mxu0 0.0
      %1363 = vmatpush1.msra.mxu0 0.0
      %1364 = vmatprep.subr.mxu0 0.0
      %1365 = vmatpush1.msra.mxu0 0.0
      %1366 = vmatprep.subr.mxu0 0.0
      %1367 = vmatpush1.msra.mxu0 0.0
      %1368 = vmatprep.subr.mxu0 0.0
      %1369 = vmatpush1.msra.mxu0 0.0
      %1370 = vmatprep.subr.mxu0 0.0
      %1371 = vmatpush1.msra.mxu0 0.0
      %1372 = vmatprep.subr.mxu0 0.0
      %1373 = vmatpush1.msra.mxu0 0.0
      %1374 = vmatprep.subr.mxu0 0.0
      %1375 = vmatpush1.msra.mxu0 0.0
      %1376 = vmatprep.subr.mxu0 0.0
      %1377 = vmatpush1.msra.mxu0 0.0
      %1378 = vmatprep.subr.mxu0 0.0
      %1379 = vmatpush1.msra.mxu0 0.0
      %1380 = vmatprep.subr.mxu0 0.0
      %1381 = vmatpush1.msra.mxu0 0.0
      %1382 = vmatprep.subr.mxu0 0.0
      %1383 = vmatpush1.msra.mxu0 0.0
      %1384 = vmatprep.subr.mxu0 0.0
      %1385 = vmatpush1.msra.mxu0 0.0
      %1386 = vmatprep.subr.mxu0 0.0
      %1387 = vmatpush1.msra.mxu0 0.0
      %1388 = vmatprep.subr.mxu0 0.0
      %1389 = vmatpush1.msra.mxu0 0.0
      %1390 = vmatprep.subr.mxu0 0.0
      %1391 = vmatpush1.msra.mxu0 0.0
      %1392 = vmatprep.subr.mxu0 0.0
      %1393 = vmatpush1.msra.mxu0 0.0
      %1394 = vmatprep.subr.mxu0 0.0
      %1395 = vmatpush1.msra.mxu0 0.0
      %1396 = vmatprep.subr.mxu0 0.0
      %1397 = vmatpush1.msra.mxu0 0.0
      %1398 = vmatprep.subr.mxu0 0.0
      %1399 = vmatpush1.msra.mxu0 0.0
      %1400 = vmatprep.subr.mxu0 0.0
      %1401 = vmatpush1.msra.mxu0 0.0
      %1402 = vmatprep.subr.mxu0 0.0
      %1403 = vmatpush1.msra.mxu0 0.0
      %1404 = vmatprep.subr.mxu0 0.0
      %1405 = vmatpush1.msra.mxu0 0.0
      %1406 = vmatprep.subr.mxu0 0.0
      %1407 = vmatpush1.msra.mxu0 0.0
      %1408 = vmatprep.subr.mxu0 0.0
      %1409 = vmatpush1.msra.mxu0 0.0
      %1410 = vmatprep.subr.mxu0 0.0
      %1411 = vmatpush1.msra.mxu0 0.0
      %1412 = vmatprep.subr.mxu0 0.0
      %1413 = vmatpush1.msra.mxu0 0.0
      %1414 = vmatprep.subr.mxu0 0.0
      %1415 = vmatpush1.msra.mxu0 0.0
      %1416 = vmatprep.subr.mxu0 0.0
      %1417 = vmatpush1.msra.mxu0 0.0
      %1418 = vmatprep.subr.mxu0 0.0
      %1419 = vmatpush1.msra.mxu0 0.0
      %1420 = vmatprep.mubr.f32.mxu0 0.0
      %1421 = vmatmul.mubr.f32.gmra.mrb[0].mxu0 %v452
      %v1422 = vpop.f32.mrb[0].mxu0
      %v1423 = vadd.f32 0.0, %v1422
      %v1424 = vpop.f32.mrb[0].mxu0
      %1425 = vmatprep.mubr.f32.mxu0 0.0
      %1426 = vmatmul.mubr.f32.gmra.mrb[0].mxu0 %v454
      %v1427 = vpop.f32.mrb[0].mxu0
      %v1428 = vadd.f32 0.0, %v1427
      %v1429 = vpop.f32.mrb[0].mxu0
      %1430 = vmatprep.mubr.f32.mxu0 0.0
      %1431 = vmatmul.mubr.f32.gmra.mrb[0].mxu0 %v456
      %v1432 = vpop.f32.mrb[0].mxu0
      %v1433 = vadd.f32 0.0, %v1432
      %v1434 = vpop.f32.mrb[0].mxu0
      %1435 = vmatprep.mubr.f32.mxu0 0.0
      %1436 = vmatmul.mubr.f32.gmra.mrb[0].mxu0 %v458
      %v1437 = vpop.f32.mrb[0].mxu0
      %v1438 = vadd.f32 0.0, %v1437
      %v1439 = vpop.f32.mrb[0].mxu0
      %1440 = vmatprep.mubr.f32.mxu0 0.0
      %1441 = vmatmul.mubr.f32.gmra.mrb[0].mxu0 %v460
      %v1442 = vpop.f32.mrb[0].mxu0
      %v1443 = vadd.f32 0.0, %v1442
      %v1444 = vpop.f32.mrb[0].mxu0
      %1445 = vmatprep.mubr.f32.mxu0 0.0
      %1446 = vmatmul.mubr.f32.gmra.mrb[0].mxu0 %v462
      %v1447 = vpop.f32.mrb[0].mxu0
      %v1448 = vadd.f32 0.0, %v1447
      %v1449 = vpop.f32.mrb[0].mxu0
      %1450 = vmatprep.mubr.f32.mxu0 0.0
      %1451 = vmatmul.mubr.f32.gmra.mrb[0].mxu0 %v983
      %v1452 = vpop.f32.mrb[0].mxu0
      %v1453 = vadd.f32 0.0, %v1452
      %v1454 = vpop.f32.mrb[0].mxu0
      %1455 = vmatprep.mubr.f32.mxu0 0.0
      %1456 = vmatmul.mubr.f32.gmra.mrb[0].mxu0 %v1351
      %v1457 = vpop.f32.mrb[0].mxu0
      %v1458 = vadd.f32 0.0, %v1457
      %v1459 = vpop.f32.mrb[0].mxu0
      %1460 = vdwg.mxu0
      %v1461 = vadd.f32 %v1337, %v1423
      %v1462 = vadd.f32 %v1338, %v1428
      %v1463 = vadd.f32 %v1339, %v1433
      %v1464 = vadd.f32 %v1340, %v1438
      %v1465 = vadd.f32 %v1341, %v1443
      %v1466 = vadd.f32 %v1342, %v1448
      %v1467 = vadd.f32 %v1343, %v1453
      %v1468 = vadd.f32 %v1344, %v1458
      %v1469 = vrot.slane %v361, 2
      %v1470 = vrot.slane %v362, 2
      %v1471 = vsel %vm697, %v1469, %v1470
      %s1472 = scalar_lea.vmem %s3, 32
      %v1473 = vld [vmem:[%s1472] sm:$0xf]
      %v1474 = vsel %vm447, %v1471, 0
      %v1477 = vsel %vm464, %v1473, 0
      %1479 = vmatprep.subr.mxu0 0.0
      %1480 = vmatpush1.msra.mxu0 %v1477
      %1481 = vmatprep.subr.mxu0 0.0
      %1482 = vmatpush1.msra.mxu0 0.0
      %1483 = vmatprep.subr.mxu0 0.0
      %1484 = vmatpush1.msra.mxu0 0.0
      %1485 = vmatprep.subr.mxu0 0.0
      %1486 = vmatpush1.msra.mxu0 0.0
      %1487 = vmatprep.subr.mxu0 0.0
      %1488 = vmatpush1.msra.mxu0 0.0
      %1489 = vmatprep.subr.mxu0 0.0
      %1490 = vmatpush1.msra.mxu0 0.0
      %1491 = vmatprep.subr.mxu0 0.0
      %1492 = vmatpush1.msra.mxu0 0.0
      %1493 = vmatprep.subr.mxu0 0.0
      %1494 = vmatpush1.msra.mxu0 0.0
      %1495 = vmatprep.subr.mxu0 0.0
      %1496 = vmatpush1.msra.mxu0 0.0
      %1497 = vmatprep.subr.mxu0 0.0
      %1498 = vmatpush1.msra.mxu0 0.0
      %1499 = vmatprep.subr.mxu0 0.0
      %1500 = vmatpush1.msra.mxu0 0.0
      %1501 = vmatprep.subr.mxu0 0.0
      %1502 = vmatpush1.msra.mxu0 0.0
      %1503 = vmatprep.subr.mxu0 0.0
      %1504 = vmatpush1.msra.mxu0 0.0
      %1505 = vmatprep.subr.mxu0 0.0
      %1506 = vmatpush1.msra.mxu0 0.0
      %1507 = vmatprep.subr.mxu0 0.0
      %1508 = vmatpush1.msra.mxu0 0.0
      %1509 = vmatprep.subr.mxu0 0.0
      %1510 = vmatpush1.msra.mxu0 0.0
      %1511 = vmatprep.subr.mxu0 0.0
      %1512 = vmatpush1.msra.mxu0 0.0
      %1513 = vmatprep.subr.mxu0 0.0
      %1514 = vmatpush1.msra.mxu0 0.0
      %1515 = vmatprep.subr.mxu0 0.0
      %1516 = vmatpush1.msra.mxu0 0.0
      %1517 = vmatprep.subr.mxu0 0.0
      %1518 = vmatpush1.msra.mxu0 0.0
      %1519 = vmatprep.subr.mxu0 0.0
      %1520 = vmatpush1.msra.mxu0 0.0
      %1521 = vmatprep.subr.mxu0 0.0
      %1522 = vmatpush1.msra.mxu0 0.0
      %1523 = vmatprep.subr.mxu0 0.0
      %1524 = vmatpush1.msra.mxu0 0.0
      %1525 = vmatprep.subr.mxu0 0.0
      %1526 = vmatpush1.msra.mxu0 0.0
      %1527 = vmatprep.subr.mxu0 0.0
      %1528 = vmatpush1.msra.mxu0 0.0
      %1529 = vmatprep.subr.mxu0 0.0
      %1530 = vmatpush1.msra.mxu0 0.0
      %1531 = vmatprep.subr.mxu0 0.0
      %1532 = vmatpush1.msra.mxu0 0.0
      %1533 = vmatprep.subr.mxu0 0.0
      %1534 = vmatpush1.msra.mxu0 0.0
      %1535 = vmatprep.subr.mxu0 0.0
      %1536 = vmatpush1.msra.mxu0 0.0
      %1537 = vmatprep.subr.mxu0 0.0
      %1538 = vmatpush1.msra.mxu0 0.0
      %1539 = vmatprep.subr.mxu0 0.0
      %1540 = vmatpush1.msra.mxu0 0.0
      %1541 = vmatprep.subr.mxu0 0.0
      %1542 = vmatpush1.msra.mxu0 0.0
      %1543 = vmatprep.mubr.f32.mxu0 0.0
      %1544 = vmatmul.mubr.f32.gmra.mrb[0].mxu0 %v728
      %v1545 = vpop.f32.mrb[0].mxu0
      %v1546 = vadd.f32 0.0, %v1545
      %v1547 = vpop.f32.mrb[0].mxu0
      %1548 = vmatprep.mubr.f32.mxu0 0.0
      %1549 = vmatmul.mubr.f32.gmra.mrb[0].mxu0 %v730
      %v1550 = vpop.f32.mrb[0].mxu0
      %v1551 = vadd.f32 0.0, %v1550
      %v1552 = vpop.f32.mrb[0].mxu0
      %1553 = vmatprep.mubr.f32.mxu0 0.0
      %1554 = vmatmul.mubr.f32.gmra.mrb[0].mxu0 %v732
      %v1555 = vpop.f32.mrb[0].mxu0
      %v1556 = vadd.f32 0.0, %v1555
      %v1557 = vpop.f32.mrb[0].mxu0
      %1558 = vmatprep.mubr.f32.mxu0 0.0
      %1559 = vmatmul.mubr.f32.gmra.mrb[0].mxu0 %v734
      %v1560 = vpop.f32.mrb[0].mxu0
      %v1561 = vadd.f32 0.0, %v1560
      %v1562 = vpop.f32.mrb[0].mxu0
      %1563 = vmatprep.mubr.f32.mxu0 0.0
      %1564 = vmatmul.mubr.f32.gmra.mrb[0].mxu0 %v736
      %v1565 = vpop.f32.mrb[0].mxu0
      %v1566 = vadd.f32 0.0, %v1565
      %v1567 = vpop.f32.mrb[0].mxu0
      %1568 = vmatprep.mubr.f32.mxu0 0.0
      %1569 = vmatmul.mubr.f32.gmra.mrb[0].mxu0 %v738
      %v1570 = vpop.f32.mrb[0].mxu0
      %v1571 = vadd.f32 0.0, %v1570
      %v1572 = vpop.f32.mrb[0].mxu0
      %1573 = vmatprep.mubr.f32.mxu0 0.0
      %1574 = vmatmul.mubr.f32.gmra.mrb[0].mxu0 %v1106
      %v1575 = vpop.f32.mrb[0].mxu0
      %v1576 = vadd.f32 0.0, %v1575
      %v1577 = vpop.f32.mrb[0].mxu0
      %1578 = vmatprep.mubr.f32.mxu0 0.0
      %1579 = vmatmul.mubr.f32.gmra.mrb[0].mxu0 %v1474
      %v1580 = vpop.f32.mrb[0].mxu0
      %v1581 = vadd.f32 0.0, %v1580
      %v1582 = vpop.f32.mrb[0].mxu0
      %1583 = vdwg.mxu0
      %v1584 = vadd.f32 %v1461, %v1546
      %v1585 = vadd.f32 %v1462, %v1551
      %v1586 = vadd.f32 %v1463, %v1556
      %v1587 = vadd.f32 %v1464, %v1561
      %v1588 = vadd.f32 %v1465, %v1566
      %v1589 = vadd.f32 %v1466, %v1571
      %v1590 = vadd.f32 %v1467, %v1576
      %v1591 = vadd.f32 %v1468, %v1581
      %s1592 = scalar_lea.vmem %s3, 36
      %v1593 = vld [vmem:[%s1592] sm:$0xf]
      %v1595 = vsel %vm447, %v363, 0
      %v1598 = vsel %vm447, %v365, 0
      %v1601 = vsel %vm447, %v367, 0
      %v1604 = vsel %vm447, %v369, 0
      %v1607 = vsel %vm447, %v371, 0
      %v1610 = vsel %vm447, %v373, 0
      %v1613 = vsel %vm447, %v375, 0
      %v1616 = vsel %vm447, %v377, 0
      %v1619 = vsel %vm464, %v1593, 0
      %1621 = vmatprep.subr.mxu0 0.0
      %1622 = vmatpush1.msra.mxu0 %v1619
      %1623 = vmatprep.subr.mxu0 0.0
      %1624 = vmatpush1.msra.mxu0 0.0
      %1625 = vmatprep.subr.mxu0 0.0
      %1626 = vmatpush1.msra.mxu0 0.0
      %1627 = vmatprep.subr.mxu0 0.0
      %1628 = vmatpush1.msra.mxu0 0.0
      %1629 = vmatprep.subr.mxu0 0.0
      %1630 = vmatpush1.msra.mxu0 0.0
      %1631 = vmatprep.subr.mxu0 0.0
      %1632 = vmatpush1.msra.mxu0 0.0
      %1633 = vmatprep.subr.mxu0 0.0
      %1634 = vmatpush1.msra.mxu0 0.0
      %1635 = vmatprep.subr.mxu0 0.0
      %1636 = vmatpush1.msra.mxu0 0.0
      %1637 = vmatprep.subr.mxu0 0.0
      %1638 = vmatpush1.msra.mxu0 0.0
      %1639 = vmatprep.subr.mxu0 0.0
      %1640 = vmatpush1.msra.mxu0 0.0
      %1641 = vmatprep.subr.mxu0 0.0
      %1642 = vmatpush1.msra.mxu0 0.0
      %1643 = vmatprep.subr.mxu0 0.0
      %1644 = vmatpush1.msra.mxu0 0.0
      %1645 = vmatprep.subr.mxu0 0.0
      %1646 = vmatpush1.msra.mxu0 0.0
      %1647 = vmatprep.subr.mxu0 0.0
      %1648 = vmatpush1.msra.mxu0 0.0
      %1649 = vmatprep.subr.mxu0 0.0
      %1650 = vmatpush1.msra.mxu0 0.0
      %1651 = vmatprep.subr.mxu0 0.0
      %1652 = vmatpush1.msra.mxu0 0.0
      %1653 = vmatprep.subr.mxu0 0.0
      %1654 = vmatpush1.msra.mxu0 0.0
      %1655 = vmatprep.subr.mxu0 0.0
      %1656 = vmatpush1.msra.mxu0 0.0
      %1657 = vmatprep.subr.mxu0 0.0
      %1658 = vmatpush1.msra.mxu0 0.0
      %1659 = vmatprep.subr.mxu0 0.0
      %1660 = vmatpush1.msra.mxu0 0.0
      %1661 = vmatprep.subr.mxu0 0.0
      %1662 = vmatpush1.msra.mxu0 0.0
      %1663 = vmatprep.subr.mxu0 0.0
      %1664 = vmatpush1.msra.mxu0 0.0
      %1665 = vmatprep.subr.mxu0 0.0
      %1666 = vmatpush1.msra.mxu0 0.0
      %1667 = vmatprep.subr.mxu0 0.0
      %1668 = vmatpush1.msra.mxu0 0.0
      %1669 = vmatprep.subr.mxu0 0.0
      %1670 = vmatpush1.msra.mxu0 0.0
      %1671 = vmatprep.subr.mxu0 0.0
      %1672 = vmatpush1.msra.mxu0 0.0
      %1673 = vmatprep.subr.mxu0 0.0
      %1674 = vmatpush1.msra.mxu0 0.0
      %1675 = vmatprep.subr.mxu0 0.0
      %1676 = vmatpush1.msra.mxu0 0.0
      %1677 = vmatprep.subr.mxu0 0.0
      %1678 = vmatpush1.msra.mxu0 0.0
      %1679 = vmatprep.subr.mxu0 0.0
      %1680 = vmatpush1.msra.mxu0 0.0
      %1681 = vmatprep.subr.mxu0 0.0
      %1682 = vmatpush1.msra.mxu0 0.0
      %1683 = vmatprep.subr.mxu0 0.0
      %1684 = vmatpush1.msra.mxu0 0.0
      %1685 = vmatprep.mubr.f32.mxu0 0.0
      %1686 = vmatmul.mubr.f32.gmra.mrb[0].mxu0 %v1595
      %v1687 = vpop.f32.mrb[0].mxu0
      %v1688 = vadd.f32 0.0, %v1687
      %v1689 = vpop.f32.mrb[0].mxu0
      %1690 = vmatprep.mubr.f32.mxu0 0.0
      %1691 = vmatmul.mubr.f32.gmra.mrb[0].mxu0 %v1598
      %v1692 = vpop.f32.mrb[0].mxu0
      %v1693 = vadd.f32 0.0, %v1692
      %v1694 = vpop.f32.mrb[0].mxu0
      %1695 = vmatprep.mubr.f32.mxu0 0.0
      %1696 = vmatmul.mubr.f32.gmra.mrb[0].mxu0 %v1601
      %v1697 = vpop.f32.mrb[0].mxu0
      %v1698 = vadd.f32 0.0, %v1697
      %v1699 = vpop.f32.mrb[0].mxu0
      %1700 = vmatprep.mubr.f32.mxu0 0.0
      %1701 = vmatmul.mubr.f32.gmra.mrb[0].mxu0 %v1604
      %v1702 = vpop.f32.mrb[0].mxu0
      %v1703 = vadd.f32 0.0, %v1702
      %v1704 = vpop.f32.mrb[0].mxu0
      %1705 = vmatprep.mubr.f32.mxu0 0.0
      %1706 = vmatmul.mubr.f32.gmra.mrb[0].mxu0 %v1607
      %v1707 = vpop.f32.mrb[0].mxu0
      %v1708 = vadd.f32 0.0, %v1707
      %v1709 = vpop.f32.mrb[0].mxu0
      %1710 = vmatprep.mubr.f32.mxu0 0.0
      %1711 = vmatmul.mubr.f32.gmra.mrb[0].mxu0 %v1610
      %v1712 = vpop.f32.mrb[0].mxu0
      %v1713 = vadd.f32 0.0, %v1712
      %v1714 = vpop.f32.mrb[0].mxu0
      %1715 = vmatprep.mubr.f32.mxu0 0.0
      %1716 = vmatmul.mubr.f32.gmra.mrb[0].mxu0 %v1613
      %v1717 = vpop.f32.mrb[0].mxu0
      %v1718 = vadd.f32 0.0, %v1717
      %v1719 = vpop.f32.mrb[0].mxu0
      %1720 = vmatprep.mubr.f32.mxu0 0.0
      %1721 = vmatmul.mubr.f32.gmra.mrb[0].mxu0 %v1616
      %v1722 = vpop.f32.mrb[0].mxu0
      %v1723 = vadd.f32 0.0, %v1722
      %v1724 = vpop.f32.mrb[0].mxu0
      %1725 = vdwg.mxu0
      %v1726 = vadd.f32 %v1584, %v1688
      %v1727 = vadd.f32 %v1585, %v1693
      %v1728 = vadd.f32 %v1586, %v1698
      %v1729 = vadd.f32 %v1587, %v1703
      %v1730 = vadd.f32 %v1588, %v1708
      %v1731 = vadd.f32 %v1589, %v1713
      %v1732 = vadd.f32 %v1590, %v1718
      %v1733 = vadd.f32 %v1591, %v1723
      %v1742 = vrot.slane %v363, 1
      %v1743 = vrot.slane %v364, 1
      %v1744 = vsel %vm420, %v1742, %v1743
      %v1745 = vrot.slane %v365, 1
      %v1746 = vrot.slane %v366, 1
      %v1747 = vsel %vm420, %v1745, %v1746
      %v1748 = vrot.slane %v367, 1
      %v1749 = vrot.slane %v368, 1
      %v1750 = vsel %vm420, %v1748, %v1749
      %v1751 = vrot.slane %v369, 1
      %v1752 = vrot.slane %v370, 1
      %v1753 = vsel %vm420, %v1751, %v1752
      %v1754 = vrot.slane %v371, 1
      %v1755 = vrot.slane %v372, 1
      %v1756 = vsel %vm420, %v1754, %v1755
      %v1757 = vrot.slane %v373, 1
      %v1758 = vrot.slane %v374, 1
      %v1759 = vsel %vm420, %v1757, %v1758
      %v1760 = vrot.slane %v375, 1
      %v1761 = vrot.slane %v376, 1
      %v1762 = vsel %vm420, %v1760, %v1761
      %v1763 = vrot.slane %v377, 1
      %v1764 = vrot.slane %v378, 1
      %v1765 = vsel %vm420, %v1763, %v1764
      %s1766 = scalar_lea.vmem %s3, 40
      %v1767 = vld [vmem:[%s1766] sm:$0xf]
      %v1768 = vsel %vm447, %v1744, 0
      %v1770 = vsel %vm447, %v1747, 0
      %v1772 = vsel %vm447, %v1750, 0
      %v1774 = vsel %vm447, %v1753, 0
      %v1776 = vsel %vm447, %v1756, 0
      %v1778 = vsel %vm447, %v1759, 0
      %v1780 = vsel %vm447, %v1762, 0
      %v1782 = vsel %vm447, %v1765, 0
      %v1785 = vsel %vm464, %v1767, 0
      %1787 = vmatprep.subr.mxu0 0.0
      %1788 = vmatpush1.msra.mxu0 %v1785
      %1789 = vmatprep.subr.mxu0 0.0
      %1790 = vmatpush1.msra.mxu0 0.0
      %1791 = vmatprep.subr.mxu0 0.0
      %1792 = vmatpush1.msra.mxu0 0.0
      %1793 = vmatprep.subr.mxu0 0.0
      %1794 = vmatpush1.msra.mxu0 0.0
      %1795 = vmatprep.subr.mxu0 0.0
      %1796 = vmatpush1.msra.mxu0 0.0
      %1797 = vmatprep.subr.mxu0 0.0
      %1798 = vmatpush1.msra.mxu0 0.0
      %1799 = vmatprep.subr.mxu0 0.0
      %1800 = vmatpush1.msra.mxu0 0.0
      %1801 = vmatprep.subr.mxu0 0.0
      %1802 = vmatpush1.msra.mxu0 0.0
      %1803 = vmatprep.subr.mxu0 0.0
      %1804 = vmatpush1.msra.mxu0 0.0
      %1805 = vmatprep.subr.mxu0 0.0
      %1806 = vmatpush1.msra.mxu0 0.0
      %1807 = vmatprep.subr.mxu0 0.0
      %1808 = vmatpush1.msra.mxu0 0.0
      %1809 = vmatprep.subr.mxu0 0.0
      %1810 = vmatpush1.msra.mxu0 0.0
      %1811 = vmatprep.subr.mxu0 0.0
      %1812 = vmatpush1.msra.mxu0 0.0
      %1813 = vmatprep.subr.mxu0 0.0
      %1814 = vmatpush1.msra.mxu0 0.0
      %1815 = vmatprep.subr.mxu0 0.0
      %1816 = vmatpush1.msra.mxu0 0.0
      %1817 = vmatprep.subr.mxu0 0.0
      %1818 = vmatpush1.msra.mxu0 0.0
      %1819 = vmatprep.subr.mxu0 0.0
      %1820 = vmatpush1.msra.mxu0 0.0
      %1821 = vmatprep.subr.mxu0 0.0
      %1822 = vmatpush1.msra.mxu0 0.0
      %1823 = vmatprep.subr.mxu0 0.0
      %1824 = vmatpush1.msra.mxu0 0.0
      %1825 = vmatprep.subr.mxu0 0.0
      %1826 = vmatpush1.msra.mxu0 0.0
      %1827 = vmatprep.subr.mxu0 0.0
      %1828 = vmatpush1.msra.mxu0 0.0
      %1829 = vmatprep.subr.mxu0 0.0
      %1830 = vmatpush1.msra.mxu0 0.0
      %1831 = vmatprep.subr.mxu0 0.0
      %1832 = vmatpush1.msra.mxu0 0.0
      %1833 = vmatprep.subr.mxu0 0.0
      %1834 = vmatpush1.msra.mxu0 0.0
      %1835 = vmatprep.subr.mxu0 0.0
      %1836 = vmatpush1.msra.mxu0 0.0
      %1837 = vmatprep.subr.mxu0 0.0
      %1838 = vmatpush1.msra.mxu0 0.0
      %1839 = vmatprep.subr.mxu0 0.0
      %1840 = vmatpush1.msra.mxu0 0.0
      %1841 = vmatprep.subr.mxu0 0.0
      %1842 = vmatpush1.msra.mxu0 0.0
      %1843 = vmatprep.subr.mxu0 0.0
      %1844 = vmatpush1.msra.mxu0 0.0
      %1845 = vmatprep.subr.mxu0 0.0
      %1846 = vmatpush1.msra.mxu0 0.0
      %1847 = vmatprep.subr.mxu0 0.0
      %1848 = vmatpush1.msra.mxu0 0.0
      %1849 = vmatprep.subr.mxu0 0.0
      %1850 = vmatpush1.msra.mxu0 0.0
      %1851 = vmatprep.mubr.f32.mxu0 0.0
      %1852 = vmatmul.mubr.f32.gmra.mrb[0].mxu0 %v1768
      %v1853 = vpop.f32.mrb[0].mxu0
      %v1854 = vadd.f32 0.0, %v1853
      %v1855 = vpop.f32.mrb[0].mxu0
      %1856 = vmatprep.mubr.f32.mxu0 0.0
      %1857 = vmatmul.mubr.f32.gmra.mrb[0].mxu0 %v1770
      %v1858 = vpop.f32.mrb[0].mxu0
      %v1859 = vadd.f32 0.0, %v1858
      %v1860 = vpop.f32.mrb[0].mxu0
      %1861 = vmatprep.mubr.f32.mxu0 0.0
      %1862 = vmatmul.mubr.f32.gmra.mrb[0].mxu0 %v1772
      %v1863 = vpop.f32.mrb[0].mxu0
      %v1864 = vadd.f32 0.0, %v1863
      %v1865 = vpop.f32.mrb[0].mxu0
      %1866 = vmatprep.mubr.f32.mxu0 0.0
      %1867 = vmatmul.mubr.f32.gmra.mrb[0].mxu0 %v1774
      %v1868 = vpop.f32.mrb[0].mxu0
      %v1869 = vadd.f32 0.0, %v1868
      %v1870 = vpop.f32.mrb[0].mxu0
      %1871 = vmatprep.mubr.f32.mxu0 0.0
      %1872 = vmatmul.mubr.f32.gmra.mrb[0].mxu0 %v1776
      %v1873 = vpop.f32.mrb[0].mxu0
      %v1874 = vadd.f32 0.0, %v1873
      %v1875 = vpop.f32.mrb[0].mxu0
      %1876 = vmatprep.mubr.f32.mxu0 0.0
      %1877 = vmatmul.mubr.f32.gmra.mrb[0].mxu0 %v1778
      %v1878 = vpop.f32.mrb[0].mxu0
      %v1879 = vadd.f32 0.0, %v1878
      %v1880 = vpop.f32.mrb[0].mxu0
      %1881 = vmatprep.mubr.f32.mxu0 0.0
      %1882 = vmatmul.mubr.f32.gmra.mrb[0].mxu0 %v1780
      %v1883 = vpop.f32.mrb[0].mxu0
      %v1884 = vadd.f32 0.0, %v1883
      %v1885 = vpop.f32.mrb[0].mxu0
      %1886 = vmatprep.mubr.f32.mxu0 0.0
      %1887 = vmatmul.mubr.f32.gmra.mrb[0].mxu0 %v1782
      %v1888 = vpop.f32.mrb[0].mxu0
      %v1889 = vadd.f32 0.0, %v1888
      %v1890 = vpop.f32.mrb[0].mxu0
      %1891 = vdwg.mxu0
      %v1892 = vadd.f32 %v1726, %v1854
      %v1893 = vadd.f32 %v1727, %v1859
      %v1894 = vadd.f32 %v1728, %v1864
      %v1895 = vadd.f32 %v1729, %v1869
      %v1896 = vadd.f32 %v1730, %v1874
      %v1897 = vadd.f32 %v1731, %v1879
      %v1898 = vadd.f32 %v1732, %v1884
      %v1899 = vadd.f32 %v1733, %v1889
      %v1900 = vrot.slane %v363, 2
      %v1901 = vrot.slane %v364, 2
      %v1902 = vsel %vm697, %v1900, %v1901
      %v1903 = vrot.slane %v365, 2
      %v1904 = vrot.slane %v366, 2
      %v1905 = vsel %vm697, %v1903, %v1904
      %v1906 = vrot.slane %v367, 2
      %v1907 = vrot.slane %v368, 2
      %v1908 = vsel %vm697, %v1906, %v1907
      %v1909 = vrot.slane %v369, 2
      %v1910 = vrot.slane %v370, 2
      %v1911 = vsel %vm697, %v1909, %v1910
      %v1912 = vrot.slane %v371, 2
      %v1913 = vrot.slane %v372, 2
      %v1914 = vsel %vm697, %v1912, %v1913
      %v1915 = vrot.slane %v373, 2
      %v1916 = vrot.slane %v374, 2
      %v1917 = vsel %vm697, %v1915, %v1916
      %v1918 = vrot.slane %v375, 2
      %v1919 = vrot.slane %v376, 2
      %v1920 = vsel %vm697, %v1918, %v1919
      %v1921 = vrot.slane %v377, 2
      %v1922 = vrot.slane %v378, 2
      %v1923 = vsel %vm697, %v1921, %v1922
      %s1924 = scalar_lea.vmem %s3, 44
      %v1925 = vld [vmem:[%s1924] sm:$0xf]
      %v1926 = vsel %vm447, %v1902, 0
      %v1928 = vsel %vm447, %v1905, 0
      %v1930 = vsel %vm447, %v1908, 0
      %v1932 = vsel %vm447, %v1911, 0
      %v1934 = vsel %vm447, %v1914, 0
      %v1936 = vsel %vm447, %v1917, 0
      %v1938 = vsel %vm447, %v1920, 0
      %v1940 = vsel %vm447, %v1923, 0
      %v1943 = vsel %vm464, %v1925, 0
      %1945 = vmatprep.subr.mxu0 0.0
      %1946 = vmatpush1.msra.mxu0 %v1943
      %1947 = vmatprep.subr.mxu0 0.0
      %1948 = vmatpush1.msra.mxu0 0.0
      %1949 = vmatprep.subr.mxu0 0.0
      %1950 = vmatpush1.msra.mxu0 0.0
      %1951 = vmatprep.subr.mxu0 0.0
      %1952 = vmatpush1.msra.mxu0 0.0
      %1953 = vmatprep.subr.mxu0 0.0
      %1954 = vmatpush1.msra.mxu0 0.0
      %1955 = vmatprep.subr.mxu0 0.0
      %1956 = vmatpush1.msra.mxu0 0.0
      %1957 = vmatprep.subr.mxu0 0.0
      %1958 = vmatpush1.msra.mxu0 0.0
      %1959 = vmatprep.subr.mxu0 0.0
      %1960 = vmatpush1.msra.mxu0 0.0
      %1961 = vmatprep.subr.mxu0 0.0
      %1962 = vmatpush1.msra.mxu0 0.0
      %1963 = vmatprep.subr.mxu0 0.0
      %1964 = vmatpush1.msra.mxu0 0.0
      %1965 = vmatprep.subr.mxu0 0.0
      %1966 = vmatpush1.msra.mxu0 0.0
      %1967 = vmatprep.subr.mxu0 0.0
      %1968 = vmatpush1.msra.mxu0 0.0
      %1969 = vmatprep.subr.mxu0 0.0
      %1970 = vmatpush1.msra.mxu0 0.0
      %1971 = vmatprep.subr.mxu0 0.0
      %1972 = vmatpush1.msra.mxu0 0.0
      %1973 = vmatprep.subr.mxu0 0.0
      %1974 = vmatpush1.msra.mxu0 0.0
      %1975 = vmatprep.subr.mxu0 0.0
      %1976 = vmatpush1.msra.mxu0 0.0
      %1977 = vmatprep.subr.mxu0 0.0
      %1978 = vmatpush1.msra.mxu0 0.0
      %1979 = vmatprep.subr.mxu0 0.0
      %1980 = vmatpush1.msra.mxu0 0.0
      %1981 = vmatprep.subr.mxu0 0.0
      %1982 = vmatpush1.msra.mxu0 0.0
      %1983 = vmatprep.subr.mxu0 0.0
      %1984 = vmatpush1.msra.mxu0 0.0
      %1985 = vmatprep.subr.mxu0 0.0
      %1986 = vmatpush1.msra.mxu0 0.0
      %1987 = vmatprep.subr.mxu0 0.0
      %1988 = vmatpush1.msra.mxu0 0.0
      %1989 = vmatprep.subr.mxu0 0.0
      %1990 = vmatpush1.msra.mxu0 0.0
      %1991 = vmatprep.subr.mxu0 0.0
      %1992 = vmatpush1.msra.mxu0 0.0
      %1993 = vmatprep.subr.mxu0 0.0
      %1994 = vmatpush1.msra.mxu0 0.0
      %1995 = vmatprep.subr.mxu0 0.0
      %1996 = vmatpush1.msra.mxu0 0.0
      %1997 = vmatprep.subr.mxu0 0.0
      %1998 = vmatpush1.msra.mxu0 0.0
      %1999 = vmatprep.subr.mxu0 0.0
      %2000 = vmatpush1.msra.mxu0 0.0
      %2001 = vmatprep.subr.mxu0 0.0
      %2002 = vmatpush1.msra.mxu0 0.0
      %2003 = vmatprep.subr.mxu0 0.0
      %2004 = vmatpush1.msra.mxu0 0.0
      %2005 = vmatprep.subr.mxu0 0.0
      %2006 = vmatpush1.msra.mxu0 0.0
      %2007 = vmatprep.subr.mxu0 0.0
      %2008 = vmatpush1.msra.mxu0 0.0
      %2009 = vmatprep.mubr.f32.mxu0 0.0
      %2010 = vmatmul.mubr.f32.gmra.mrb[0].mxu0 %v1926
      %v2011 = vpop.f32.mrb[0].mxu0
      %v2012 = vadd.f32 0.0, %v2011
      %v2013 = vpop.f32.mrb[0].mxu0
      %2014 = vmatprep.mubr.f32.mxu0 0.0
      %2015 = vmatmul.mubr.f32.gmra.mrb[0].mxu0 %v1928
      %v2016 = vpop.f32.mrb[0].mxu0
      %v2017 = vadd.f32 0.0, %v2016
      %v2018 = vpop.f32.mrb[0].mxu0
      %2019 = vmatprep.mubr.f32.mxu0 0.0
      %2020 = vmatmul.mubr.f32.gmra.mrb[0].mxu0 %v1930
      %v2021 = vpop.f32.mrb[0].mxu0
      %v2022 = vadd.f32 0.0, %v2021
      %v2023 = vpop.f32.mrb[0].mxu0
      %2024 = vmatprep.mubr.f32.mxu0 0.0
      %2025 = vmatmul.mubr.f32.gmra.mrb[0].mxu0 %v1932
      %v2026 = vpop.f32.mrb[0].mxu0
      %v2027 = vadd.f32 0.0, %v2026
      %v2028 = vpop.f32.mrb[0].mxu0
      %2029 = vmatprep.mubr.f32.mxu0 0.0
      %2030 = vmatmul.mubr.f32.gmra.mrb[0].mxu0 %v1934
      %v2031 = vpop.f32.mrb[0].mxu0
      %v2032 = vadd.f32 0.0, %v2031
      %v2033 = vpop.f32.mrb[0].mxu0
      %2034 = vmatprep.mubr.f32.mxu0 0.0
      %2035 = vmatmul.mubr.f32.gmra.mrb[0].mxu0 %v1936
      %v2036 = vpop.f32.mrb[0].mxu0
      %v2037 = vadd.f32 0.0, %v2036
      %v2038 = vpop.f32.mrb[0].mxu0
      %2039 = vmatprep.mubr.f32.mxu0 0.0
      %2040 = vmatmul.mubr.f32.gmra.mrb[0].mxu0 %v1938
      %v2041 = vpop.f32.mrb[0].mxu0
      %v2042 = vadd.f32 0.0, %v2041
      %v2043 = vpop.f32.mrb[0].mxu0
      %2044 = vmatprep.mubr.f32.mxu0 0.0
      %2045 = vmatmul.mubr.f32.gmra.mrb[0].mxu0 %v1940
      %v2046 = vpop.f32.mrb[0].mxu0
      %v2047 = vadd.f32 0.0, %v2046
      %v2048 = vpop.f32.mrb[0].mxu0
      %2049 = vdwg.mxu0
      %v2050 = vadd.f32 %v1892, %v2012
      %v2051 = vadd.f32 %v1893, %v2017
      %v2052 = vadd.f32 %v1894, %v2022
      %v2053 = vadd.f32 %v1895, %v2027
      %v2054 = vadd.f32 %v1896, %v2032
      %v2055 = vadd.f32 %v1897, %v2037
      %v2056 = vadd.f32 %v1898, %v2042
      %v2057 = vadd.f32 %v1899, %v2047
      %s2058 = scalar_lea.vmem %s3, 48
      %v2059 = vld [vmem:[%s2058] sm:$0xf]
      %v2061 = vsel %vm447, %v379, 0
      %v2064 = vsel %vm464, %v2059, 0
      %2066 = vmatprep.subr.mxu0 0.0
      %2067 = vmatpush1.msra.mxu0 %v2064
      %2068 = vmatprep.subr.mxu0 0.0
      %2069 = vmatpush1.msra.mxu0 0.0
      %2070 = vmatprep.subr.mxu0 0.0
      %2071 = vmatpush1.msra.mxu0 0.0
      %2072 = vmatprep.subr.mxu0 0.0
      %2073 = vmatpush1.msra.mxu0 0.0
      %2074 = vmatprep.subr.mxu0 0.0
      %2075 = vmatpush1.msra.mxu0 0.0
      %2076 = vmatprep.subr.mxu0 0.0
      %2077 = vmatpush1.msra.mxu0 0.0
      %2078 = vmatprep.subr.mxu0 0.0
      %2079 = vmatpush1.msra.mxu0 0.0
      %2080 = vmatprep.subr.mxu0 0.0
      %2081 = vmatpush1.msra.mxu0 0.0
      %2082 = vmatprep.subr.mxu0 0.0
      %2083 = vmatpush1.msra.mxu0 0.0
      %2084 = vmatprep.subr.mxu0 0.0
      %2085 = vmatpush1.msra.mxu0 0.0
      %2086 = vmatprep.subr.mxu0 0.0
      %2087 = vmatpush1.msra.mxu0 0.0
      %2088 = vmatprep.subr.mxu0 0.0
      %2089 = vmatpush1.msra.mxu0 0.0
      %2090 = vmatprep.subr.mxu0 0.0
      %2091 = vmatpush1.msra.mxu0 0.0
      %2092 = vmatprep.subr.mxu0 0.0
      %2093 = vmatpush1.msra.mxu0 0.0
      %2094 = vmatprep.subr.mxu0 0.0
      %2095 = vmatpush1.msra.mxu0 0.0
      %2096 = vmatprep.subr.mxu0 0.0
      %2097 = vmatpush1.msra.mxu0 0.0
      %2098 = vmatprep.subr.mxu0 0.0
      %2099 = vmatpush1.msra.mxu0 0.0
      %2100 = vmatprep.subr.mxu0 0.0
      %2101 = vmatpush1.msra.mxu0 0.0
      %2102 = vmatprep.subr.mxu0 0.0
      %2103 = vmatpush1.msra.mxu0 0.0
      %2104 = vmatprep.subr.mxu0 0.0
      %2105 = vmatpush1.msra.mxu0 0.0
      %2106 = vmatprep.subr.mxu0 0.0
      %2107 = vmatpush1.msra.mxu0 0.0
      %2108 = vmatprep.subr.mxu0 0.0
      %2109 = vmatpush1.msra.mxu0 0.0
      %2110 = vmatprep.subr.mxu0 0.0
      %2111 = vmatpush1.msra.mxu0 0.0
      %2112 = vmatprep.subr.mxu0 0.0
      %2113 = vmatpush1.msra.mxu0 0.0
      %2114 = vmatprep.subr.mxu0 0.0
      %2115 = vmatpush1.msra.mxu0 0.0
      %2116 = vmatprep.subr.mxu0 0.0
      %2117 = vmatpush1.msra.mxu0 0.0
      %2118 = vmatprep.subr.mxu0 0.0
      %2119 = vmatpush1.msra.mxu0 0.0
      %2120 = vmatprep.subr.mxu0 0.0
      %2121 = vmatpush1.msra.mxu0 0.0
      %2122 = vmatprep.subr.mxu0 0.0
      %2123 = vmatpush1.msra.mxu0 0.0
      %2124 = vmatprep.subr.mxu0 0.0
      %2125 = vmatpush1.msra.mxu0 0.0
      %2126 = vmatprep.subr.mxu0 0.0
      %2127 = vmatpush1.msra.mxu0 0.0
      %2128 = vmatprep.subr.mxu0 0.0
      %2129 = vmatpush1.msra.mxu0 0.0
      %2130 = vmatprep.mubr.f32.mxu0 0.0
      %2131 = vmatmul.mubr.f32.gmra.mrb[0].mxu0 %v1598
      %v2132 = vpop.f32.mrb[0].mxu0
      %v2133 = vadd.f32 0.0, %v2132
      %v2134 = vpop.f32.mrb[0].mxu0
      %2135 = vmatprep.mubr.f32.mxu0 0.0
      %2136 = vmatmul.mubr.f32.gmra.mrb[0].mxu0 %v1601
      %v2137 = vpop.f32.mrb[0].mxu0
      %v2138 = vadd.f32 0.0, %v2137
      %v2139 = vpop.f32.mrb[0].mxu0
      %2140 = vmatprep.mubr.f32.mxu0 0.0
      %2141 = vmatmul.mubr.f32.gmra.mrb[0].mxu0 %v1604
      %v2142 = vpop.f32.mrb[0].mxu0
      %v2143 = vadd.f32 0.0, %v2142
      %v2144 = vpop.f32.mrb[0].mxu0
      %2145 = vmatprep.mubr.f32.mxu0 0.0
      %2146 = vmatmul.mubr.f32.gmra.mrb[0].mxu0 %v1607
      %v2147 = vpop.f32.mrb[0].mxu0
      %v2148 = vadd.f32 0.0, %v2147
      %v2149 = vpop.f32.mrb[0].mxu0
      %2150 = vmatprep.mubr.f32.mxu0 0.0
      %2151 = vmatmul.mubr.f32.gmra.mrb[0].mxu0 %v1610
      %v2152 = vpop.f32.mrb[0].mxu0
      %v2153 = vadd.f32 0.0, %v2152
      %v2154 = vpop.f32.mrb[0].mxu0
      %2155 = vmatprep.mubr.f32.mxu0 0.0
      %2156 = vmatmul.mubr.f32.gmra.mrb[0].mxu0 %v1613
      %v2157 = vpop.f32.mrb[0].mxu0
      %v2158 = vadd.f32 0.0, %v2157
      %v2159 = vpop.f32.mrb[0].mxu0
      %2160 = vmatprep.mubr.f32.mxu0 0.0
      %2161 = vmatmul.mubr.f32.gmra.mrb[0].mxu0 %v1616
      %v2162 = vpop.f32.mrb[0].mxu0
      %v2163 = vadd.f32 0.0, %v2162
      %v2164 = vpop.f32.mrb[0].mxu0
      %2165 = vmatprep.mubr.f32.mxu0 0.0
      %2166 = vmatmul.mubr.f32.gmra.mrb[0].mxu0 %v2061
      %v2167 = vpop.f32.mrb[0].mxu0
      %v2168 = vadd.f32 0.0, %v2167
      %v2169 = vpop.f32.mrb[0].mxu0
      %2170 = vdwg.mxu0
      %v2171 = vadd.f32 %v2050, %v2133
      %v2172 = vadd.f32 %v2051, %v2138
      %v2173 = vadd.f32 %v2052, %v2143
      %v2174 = vadd.f32 %v2053, %v2148
      %v2175 = vadd.f32 %v2054, %v2153
      %v2176 = vadd.f32 %v2055, %v2158
      %v2177 = vadd.f32 %v2056, %v2163
      %v2178 = vadd.f32 %v2057, %v2168
      %v2180 = vrot.slane %v379, 1
      %v2181 = vrot.slane %v380, 1
      %v2182 = vsel %vm420, %v2180, %v2181
      %s2183 = scalar_lea.vmem %s3, 52
      %v2184 = vld [vmem:[%s2183] sm:$0xf]
      %v2185 = vsel %vm447, %v2182, 0
      %v2188 = vsel %vm464, %v2184, 0
      %2190 = vmatprep.subr.mxu0 0.0
      %2191 = vmatpush1.msra.mxu0 %v2188
      %2192 = vmatprep.subr.mxu0 0.0
      %2193 = vmatpush1.msra.mxu0 0.0
      %2194 = vmatprep.subr.mxu0 0.0
      %2195 = vmatpush1.msra.mxu0 0.0
      %2196 = vmatprep.subr.mxu0 0.0
      %2197 = vmatpush1.msra.mxu0 0.0
      %2198 = vmatprep.subr.mxu0 0.0
      %2199 = vmatpush1.msra.mxu0 0.0
      %2200 = vmatprep.subr.mxu0 0.0
      %2201 = vmatpush1.msra.mxu0 0.0
      %2202 = vmatprep.subr.mxu0 0.0
      %2203 = vmatpush1.msra.mxu0 0.0
      %2204 = vmatprep.subr.mxu0 0.0
      %2205 = vmatpush1.msra.mxu0 0.0
      %2206 = vmatprep.subr.mxu0 0.0
      %2207 = vmatpush1.msra.mxu0 0.0
      %2208 = vmatprep.subr.mxu0 0.0
      %2209 = vmatpush1.msra.mxu0 0.0
      %2210 = vmatprep.subr.mxu0 0.0
      %2211 = vmatpush1.msra.mxu0 0.0
      %2212 = vmatprep.subr.mxu0 0.0
      %2213 = vmatpush1.msra.mxu0 0.0
      %2214 = vmatprep.subr.mxu0 0.0
      %2215 = vmatpush1.msra.mxu0 0.0
      %2216 = vmatprep.subr.mxu0 0.0
      %2217 = vmatpush1.msra.mxu0 0.0
      %2218 = vmatprep.subr.mxu0 0.0
      %2219 = vmatpush1.msra.mxu0 0.0
      %2220 = vmatprep.subr.mxu0 0.0
      %2221 = vmatpush1.msra.mxu0 0.0
      %2222 = vmatprep.subr.mxu0 0.0
      %2223 = vmatpush1.msra.mxu0 0.0
      %2224 = vmatprep.subr.mxu0 0.0
      %2225 = vmatpush1.msra.mxu0 0.0
      %2226 = vmatprep.subr.mxu0 0.0
      %2227 = vmatpush1.msra.mxu0 0.0
      %2228 = vmatprep.subr.mxu0 0.0
      %2229 = vmatpush1.msra.mxu0 0.0
      %2230 = vmatprep.subr.mxu0 0.0
      %2231 = vmatpush1.msra.mxu0 0.0
      %2232 = vmatprep.subr.mxu0 0.0
      %2233 = vmatpush1.msra.mxu0 0.0
      %2234 = vmatprep.subr.mxu0 0.0
      %2235 = vmatpush1.msra.mxu0 0.0
      %2236 = vmatprep.subr.mxu0 0.0
      %2237 = vmatpush1.msra.mxu0 0.0
      %2238 = vmatprep.subr.mxu0 0.0
      %2239 = vmatpush1.msra.mxu0 0.0
      %2240 = vmatprep.subr.mxu0 0.0
      %2241 = vmatpush1.msra.mxu0 0.0
      %2242 = vmatprep.subr.mxu0 0.0
      %2243 = vmatpush1.msra.mxu0 0.0
      %2244 = vmatprep.subr.mxu0 0.0
      %2245 = vmatpush1.msra.mxu0 0.0
      %2246 = vmatprep.subr.mxu0 0.0
      %2247 = vmatpush1.msra.mxu0 0.0
      %2248 = vmatprep.subr.mxu0 0.0
      %2249 = vmatpush1.msra.mxu0 0.0
      %2250 = vmatprep.subr.mxu0 0.0
      %2251 = vmatpush1.msra.mxu0 0.0
      %2252 = vmatprep.subr.mxu0 0.0
      %2253 = vmatpush1.msra.mxu0 0.0
      %2254 = vmatprep.mubr.f32.mxu0 0.0
      %2255 = vmatmul.mubr.f32.gmra.mrb[0].mxu0 %v1770
      %v2256 = vpop.f32.mrb[0].mxu0
      %v2257 = vadd.f32 0.0, %v2256
      %v2258 = vpop.f32.mrb[0].mxu0
      %2259 = vmatprep.mubr.f32.mxu0 0.0
      %2260 = vmatmul.mubr.f32.gmra.mrb[0].mxu0 %v1772
      %v2261 = vpop.f32.mrb[0].mxu0
      %v2262 = vadd.f32 0.0, %v2261
      %v2263 = vpop.f32.mrb[0].mxu0
      %2264 = vmatprep.mubr.f32.mxu0 0.0
      %2265 = vmatmul.mubr.f32.gmra.mrb[0].mxu0 %v1774
      %v2266 = vpop.f32.mrb[0].mxu0
      %v2267 = vadd.f32 0.0, %v2266
      %v2268 = vpop.f32.mrb[0].mxu0
      %2269 = vmatprep.mubr.f32.mxu0 0.0
      %2270 = vmatmul.mubr.f32.gmra.mrb[0].mxu0 %v1776
      %v2271 = vpop.f32.mrb[0].mxu0
      %v2272 = vadd.f32 0.0, %v2271
      %v2273 = vpop.f32.mrb[0].mxu0
      %2274 = vmatprep.mubr.f32.mxu0 0.0
      %2275 = vmatmul.mubr.f32.gmra.mrb[0].mxu0 %v1778
      %v2276 = vpop.f32.mrb[0].mxu0
      %v2277 = vadd.f32 0.0, %v2276
      %v2278 = vpop.f32.mrb[0].mxu0
      %2279 = vmatprep.mubr.f32.mxu0 0.0
      %2280 = vmatmul.mubr.f32.gmra.mrb[0].mxu0 %v1780
      %v2281 = vpop.f32.mrb[0].mxu0
      %v2282 = vadd.f32 0.0, %v2281
      %v2283 = vpop.f32.mrb[0].mxu0
      %2284 = vmatprep.mubr.f32.mxu0 0.0
      %2285 = vmatmul.mubr.f32.gmra.mrb[0].mxu0 %v1782
      %v2286 = vpop.f32.mrb[0].mxu0
      %v2287 = vadd.f32 0.0, %v2286
      %v2288 = vpop.f32.mrb[0].mxu0
      %2289 = vmatprep.mubr.f32.mxu0 0.0
      %2290 = vmatmul.mubr.f32.gmra.mrb[0].mxu0 %v2185
      %v2291 = vpop.f32.mrb[0].mxu0
      %v2292 = vadd.f32 0.0, %v2291
      %v2293 = vpop.f32.mrb[0].mxu0
      %2294 = vdwg.mxu0
      %v2295 = vadd.f32 %v2171, %v2257
      %v2296 = vadd.f32 %v2172, %v2262
      %v2297 = vadd.f32 %v2173, %v2267
      %v2298 = vadd.f32 %v2174, %v2272
      %v2299 = vadd.f32 %v2175, %v2277
      %v2300 = vadd.f32 %v2176, %v2282
      %v2301 = vadd.f32 %v2177, %v2287
      %v2302 = vadd.f32 %v2178, %v2292
      %v2303 = vrot.slane %v379, 2
      %v2304 = vrot.slane %v380, 2
      %v2305 = vsel %vm697, %v2303, %v2304
      %s2306 = scalar_lea.vmem %s3, 56
      %v2307 = vld [vmem:[%s2306] sm:$0xf]
      %v2308 = vsel %vm447, %v2305, 0
      %v2311 = vsel %vm464, %v2307, 0
      %2313 = vmatprep.subr.mxu0 0.0
      %2314 = vmatpush1.msra.mxu0 %v2311
      %2315 = vmatprep.subr.mxu0 0.0
      %2316 = vmatpush1.msra.mxu0 0.0
      %2317 = vmatprep.subr.mxu0 0.0
      %2318 = vmatpush1.msra.mxu0 0.0
      %2319 = vmatprep.subr.mxu0 0.0
      %2320 = vmatpush1.msra.mxu0 0.0
      %2321 = vmatprep.subr.mxu0 0.0
      %2322 = vmatpush1.msra.mxu0 0.0
      %2323 = vmatprep.subr.mxu0 0.0
      %2324 = vmatpush1.msra.mxu0 0.0
      %2325 = vmatprep.subr.mxu0 0.0
      %2326 = vmatpush1.msra.mxu0 0.0
      %2327 = vmatprep.subr.mxu0 0.0
      %2328 = vmatpush1.msra.mxu0 0.0
      %2329 = vmatprep.subr.mxu0 0.0
      %2330 = vmatpush1.msra.mxu0 0.0
      %2331 = vmatprep.subr.mxu0 0.0
      %2332 = vmatpush1.msra.mxu0 0.0
      %2333 = vmatprep.subr.mxu0 0.0
      %2334 = vmatpush1.msra.mxu0 0.0
      %2335 = vmatprep.subr.mxu0 0.0
      %2336 = vmatpush1.msra.mxu0 0.0
      %2337 = vmatprep.subr.mxu0 0.0
      %2338 = vmatpush1.msra.mxu0 0.0
      %2339 = vmatprep.subr.mxu0 0.0
      %2340 = vmatpush1.msra.mxu0 0.0
      %2341 = vmatprep.subr.mxu0 0.0
      %2342 = vmatpush1.msra.mxu0 0.0
      %2343 = vmatprep.subr.mxu0 0.0
      %2344 = vmatpush1.msra.mxu0 0.0
      %2345 = vmatprep.subr.mxu0 0.0
      %2346 = vmatpush1.msra.mxu0 0.0
      %2347 = vmatprep.subr.mxu0 0.0
      %2348 = vmatpush1.msra.mxu0 0.0
      %2349 = vmatprep.subr.mxu0 0.0
      %2350 = vmatpush1.msra.mxu0 0.0
      %2351 = vmatprep.subr.mxu0 0.0
      %2352 = vmatpush1.msra.mxu0 0.0
      %2353 = vmatprep.subr.mxu0 0.0
      %2354 = vmatpush1.msra.mxu0 0.0
      %2355 = vmatprep.subr.mxu0 0.0
      %2356 = vmatpush1.msra.mxu0 0.0
      %2357 = vmatprep.subr.mxu0 0.0
      %2358 = vmatpush1.msra.mxu0 0.0
      %2359 = vmatprep.subr.mxu0 0.0
      %2360 = vmatpush1.msra.mxu0 0.0
      %2361 = vmatprep.subr.mxu0 0.0
      %2362 = vmatpush1.msra.mxu0 0.0
      %2363 = vmatprep.subr.mxu0 0.0
      %2364 = vmatpush1.msra.mxu0 0.0
      %2365 = vmatprep.subr.mxu0 0.0
      %2366 = vmatpush1.msra.mxu0 0.0
      %2367 = vmatprep.subr.mxu0 0.0
      %2368 = vmatpush1.msra.mxu0 0.0
      %2369 = vmatprep.subr.mxu0 0.0
      %2370 = vmatpush1.msra.mxu0 0.0
      %2371 = vmatprep.subr.mxu0 0.0
      %2372 = vmatpush1.msra.mxu0 0.0
      %2373 = vmatprep.subr.mxu0 0.0
      %2374 = vmatpush1.msra.mxu0 0.0
      %2375 = vmatprep.subr.mxu0 0.0
      %2376 = vmatpush1.msra.mxu0 0.0
      %2377 = vmatprep.mubr.f32.mxu0 0.0
      %2378 = vmatmul.mubr.f32.gmra.mrb[0].mxu0 %v1928
      %v2379 = vpop.f32.mrb[0].mxu0
      %v2380 = vadd.f32 0.0, %v2379
      %v2381 = vpop.f32.mrb[0].mxu0
      %2382 = vmatprep.mubr.f32.mxu0 0.0
      %2383 = vmatmul.mubr.f32.gmra.mrb[0].mxu0 %v1930
      %v2384 = vpop.f32.mrb[0].mxu0
      %v2385 = vadd.f32 0.0, %v2384
      %v2386 = vpop.f32.mrb[0].mxu0
      %2387 = vmatprep.mubr.f32.mxu0 0.0
      %2388 = vmatmul.mubr.f32.gmra.mrb[0].mxu0 %v1932
      %v2389 = vpop.f32.mrb[0].mxu0
      %v2390 = vadd.f32 0.0, %v2389
      %v2391 = vpop.f32.mrb[0].mxu0
      %2392 = vmatprep.mubr.f32.mxu0 0.0
      %2393 = vmatmul.mubr.f32.gmra.mrb[0].mxu0 %v1934
      %v2394 = vpop.f32.mrb[0].mxu0
      %v2395 = vadd.f32 0.0, %v2394
      %v2396 = vpop.f32.mrb[0].mxu0
      %2397 = vmatprep.mubr.f32.mxu0 0.0
      %2398 = vmatmul.mubr.f32.gmra.mrb[0].mxu0 %v1936
      %v2399 = vpop.f32.mrb[0].mxu0
      %v2400 = vadd.f32 0.0, %v2399
      %v2401 = vpop.f32.mrb[0].mxu0
      %2402 = vmatprep.mubr.f32.mxu0 0.0
      %2403 = vmatmul.mubr.f32.gmra.mrb[0].mxu0 %v1938
      %v2404 = vpop.f32.mrb[0].mxu0
      %v2405 = vadd.f32 0.0, %v2404
      %v2406 = vpop.f32.mrb[0].mxu0
      %2407 = vmatprep.mubr.f32.mxu0 0.0
      %2408 = vmatmul.mubr.f32.gmra.mrb[0].mxu0 %v1940
      %v2409 = vpop.f32.mrb[0].mxu0
      %v2410 = vadd.f32 0.0, %v2409
      %v2411 = vpop.f32.mrb[0].mxu0
      %2412 = vmatprep.mubr.f32.mxu0 0.0
      %2413 = vmatmul.mubr.f32.gmra.mrb[0].mxu0 %v2308
      %v2414 = vpop.f32.mrb[0].mxu0
      %v2415 = vadd.f32 0.0, %v2414
      %v2416 = vpop.f32.mrb[0].mxu0
      %2417 = vdwg.mxu0
      %v2418 = vadd.f32 %v2295, %v2380
      %v2419 = vadd.f32 %v2296, %v2385
      %v2420 = vadd.f32 %v2297, %v2390
      %v2421 = vadd.f32 %v2298, %v2395
      %v2422 = vadd.f32 %v2299, %v2400
      %v2423 = vadd.f32 %v2300, %v2405
      %v2424 = vadd.f32 %v2301, %v2410
      %v2425 = vadd.f32 %v2302, %v2415
      %s2426 = scalar_lea.vmem %s3, 60
      %v2427 = vld [vmem:[%s2426] sm:$0xf]
      %v2429 = vsel %vm447, %v381, 0
      %v2432 = vsel %vm464, %v2427, 0
      %2434 = vmatprep.subr.mxu0 0.0
      %2435 = vmatpush1.msra.mxu0 %v2432
      %2436 = vmatprep.subr.mxu0 0.0
      %2437 = vmatpush1.msra.mxu0 0.0
      %2438 = vmatprep.subr.mxu0 0.0
      %2439 = vmatpush1.msra.mxu0 0.0
      %2440 = vmatprep.subr.mxu0 0.0
      %2441 = vmatpush1.msra.mxu0 0.0
      %2442 = vmatprep.subr.mxu0 0.0
      %2443 = vmatpush1.msra.mxu0 0.0
      %2444 = vmatprep.subr.mxu0 0.0
      %2445 = vmatpush1.msra.mxu0 0.0
      %2446 = vmatprep.subr.mxu0 0.0
      %2447 = vmatpush1.msra.mxu0 0.0
      %2448 = vmatprep.subr.mxu0 0.0
      %2449 = vmatpush1.msra.mxu0 0.0
      %2450 = vmatprep.subr.mxu0 0.0
      %2451 = vmatpush1.msra.mxu0 0.0
      %2452 = vmatprep.subr.mxu0 0.0
      %2453 = vmatpush1.msra.mxu0 0.0
      %2454 = vmatprep.subr.mxu0 0.0
      %2455 = vmatpush1.msra.mxu0 0.0
      %2456 = vmatprep.subr.mxu0 0.0
      %2457 = vmatpush1.msra.mxu0 0.0
      %2458 = vmatprep.subr.mxu0 0.0
      %2459 = vmatpush1.msra.mxu0 0.0
      %2460 = vmatprep.subr.mxu0 0.0
      %2461 = vmatpush1.msra.mxu0 0.0
      %2462 = vmatprep.subr.mxu0 0.0
      %2463 = vmatpush1.msra.mxu0 0.0
      %2464 = vmatprep.subr.mxu0 0.0
      %2465 = vmatpush1.msra.mxu0 0.0
      %2466 = vmatprep.subr.mxu0 0.0
      %2467 = vmatpush1.msra.mxu0 0.0
      %2468 = vmatprep.subr.mxu0 0.0
      %2469 = vmatpush1.msra.mxu0 0.0
      %2470 = vmatprep.subr.mxu0 0.0
      %2471 = vmatpush1.msra.mxu0 0.0
      %2472 = vmatprep.subr.mxu0 0.0
      %2473 = vmatpush1.msra.mxu0 0.0
      %2474 = vmatprep.subr.mxu0 0.0
      %2475 = vmatpush1.msra.mxu0 0.0
      %2476 = vmatprep.subr.mxu0 0.0
      %2477 = vmatpush1.msra.mxu0 0.0
      %2478 = vmatprep.subr.mxu0 0.0
      %2479 = vmatpush1.msra.mxu0 0.0
      %2480 = vmatprep.subr.mxu0 0.0
      %2481 = vmatpush1.msra.mxu0 0.0
      %2482 = vmatprep.subr.mxu0 0.0
      %2483 = vmatpush1.msra.mxu0 0.0
      %2484 = vmatprep.subr.mxu0 0.0
      %2485 = vmatpush1.msra.mxu0 0.0
      %2486 = vmatprep.subr.mxu0 0.0
      %2487 = vmatpush1.msra.mxu0 0.0
      %2488 = vmatprep.subr.mxu0 0.0
      %2489 = vmatpush1.msra.mxu0 0.0
      %2490 = vmatprep.subr.mxu0 0.0
      %2491 = vmatpush1.msra.mxu0 0.0
      %2492 = vmatprep.subr.mxu0 0.0
      %2493 = vmatpush1.msra.mxu0 0.0
      %2494 = vmatprep.subr.mxu0 0.0
      %2495 = vmatpush1.msra.mxu0 0.0
      %2496 = vmatprep.subr.mxu0 0.0
      %2497 = vmatpush1.msra.mxu0 0.0
      %2498 = vmatprep.mubr.f32.mxu0 0.0
      %2499 = vmatmul.mubr.f32.gmra.mrb[0].mxu0 %v1601
      %v2500 = vpop.f32.mrb[0].mxu0
      %v2501 = vadd.f32 0.0, %v2500
      %v2502 = vpop.f32.mrb[0].mxu0
      %2503 = vmatprep.mubr.f32.mxu0 0.0
      %2504 = vmatmul.mubr.f32.gmra.mrb[0].mxu0 %v1604
      %v2505 = vpop.f32.mrb[0].mxu0
      %v2506 = vadd.f32 0.0, %v2505
      %v2507 = vpop.f32.mrb[0].mxu0
      %2508 = vmatprep.mubr.f32.mxu0 0.0
      %2509 = vmatmul.mubr.f32.gmra.mrb[0].mxu0 %v1607
      %v2510 = vpop.f32.mrb[0].mxu0
      %v2511 = vadd.f32 0.0, %v2510
      %v2512 = vpop.f32.mrb[0].mxu0
      %2513 = vmatprep.mubr.f32.mxu0 0.0
      %2514 = vmatmul.mubr.f32.gmra.mrb[0].mxu0 %v1610
      %v2515 = vpop.f32.mrb[0].mxu0
      %v2516 = vadd.f32 0.0, %v2515
      %v2517 = vpop.f32.mrb[0].mxu0
      %2518 = vmatprep.mubr.f32.mxu0 0.0
      %2519 = vmatmul.mubr.f32.gmra.mrb[0].mxu0 %v1613
      %v2520 = vpop.f32.mrb[0].mxu0
      %v2521 = vadd.f32 0.0, %v2520
      %v2522 = vpop.f32.mrb[0].mxu0
      %2523 = vmatprep.mubr.f32.mxu0 0.0
      %2524 = vmatmul.mubr.f32.gmra.mrb[0].mxu0 %v1616
      %v2525 = vpop.f32.mrb[0].mxu0
      %v2526 = vadd.f32 0.0, %v2525
      %v2527 = vpop.f32.mrb[0].mxu0
      %2528 = vmatprep.mubr.f32.mxu0 0.0
      %2529 = vmatmul.mubr.f32.gmra.mrb[0].mxu0 %v2061
      %v2530 = vpop.f32.mrb[0].mxu0
      %v2531 = vadd.f32 0.0, %v2530
      %v2532 = vpop.f32.mrb[0].mxu0
      %2533 = vmatprep.mubr.f32.mxu0 0.0
      %2534 = vmatmul.mubr.f32.gmra.mrb[0].mxu0 %v2429
      %v2535 = vpop.f32.mrb[0].mxu0
      %v2536 = vadd.f32 0.0, %v2535
      %v2537 = vpop.f32.mrb[0].mxu0
      %2538 = vdwg.mxu0
      %v2539 = vadd.f32 %v2418, %v2501
      %v2540 = vadd.f32 %v2419, %v2506
      %v2541 = vadd.f32 %v2420, %v2511
      %v2542 = vadd.f32 %v2421, %v2516
      %v2543 = vadd.f32 %v2422, %v2521
      %v2544 = vadd.f32 %v2423, %v2526
      %v2545 = vadd.f32 %v2424, %v2531
      %v2546 = vadd.f32 %v2425, %v2536
      %v2548 = vrot.slane %v381, 1
      %v2549 = vrot.slane %v382, 1
      %v2550 = vsel %vm420, %v2548, %v2549
      %s2551 = scalar_lea.vmem %s3, 64
      %v2552 = vld [vmem:[%s2551] sm:$0xf]
      %v2553 = vsel %vm447, %v2550, 0
      %v2556 = vsel %vm464, %v2552, 0
      %2558 = vmatprep.subr.mxu0 0.0
      %2559 = vmatpush1.msra.mxu0 %v2556
      %2560 = vmatprep.subr.mxu0 0.0
      %2561 = vmatpush1.msra.mxu0 0.0
      %2562 = vmatprep.subr.mxu0 0.0
      %2563 = vmatpush1.msra.mxu0 0.0
      %2564 = vmatprep.subr.mxu0 0.0
      %2565 = vmatpush1.msra.mxu0 0.0
      %2566 = vmatprep.subr.mxu0 0.0
      %2567 = vmatpush1.msra.mxu0 0.0
      %2568 = vmatprep.subr.mxu0 0.0
      %2569 = vmatpush1.msra.mxu0 0.0
      %2570 = vmatprep.subr.mxu0 0.0
      %2571 = vmatpush1.msra.mxu0 0.0
      %2572 = vmatprep.subr.mxu0 0.0
      %2573 = vmatpush1.msra.mxu0 0.0
      %2574 = vmatprep.subr.mxu0 0.0
      %2575 = vmatpush1.msra.mxu0 0.0
      %2576 = vmatprep.subr.mxu0 0.0
      %2577 = vmatpush1.msra.mxu0 0.0
      %2578 = vmatprep.subr.mxu0 0.0
      %2579 = vmatpush1.msra.mxu0 0.0
      %2580 = vmatprep.subr.mxu0 0.0
      %2581 = vmatpush1.msra.mxu0 0.0
      %2582 = vmatprep.subr.mxu0 0.0
      %2583 = vmatpush1.msra.mxu0 0.0
      %2584 = vmatprep.subr.mxu0 0.0
      %2585 = vmatpush1.msra.mxu0 0.0
      %2586 = vmatprep.subr.mxu0 0.0
      %2587 = vmatpush1.msra.mxu0 0.0
      %2588 = vmatprep.subr.mxu0 0.0
      %2589 = vmatpush1.msra.mxu0 0.0
      %2590 = vmatprep.subr.mxu0 0.0
      %2591 = vmatpush1.msra.mxu0 0.0
      %2592 = vmatprep.subr.mxu0 0.0
      %2593 = vmatpush1.msra.mxu0 0.0
      %2594 = vmatprep.subr.mxu0 0.0
      %2595 = vmatpush1.msra.mxu0 0.0
      %2596 = vmatprep.subr.mxu0 0.0
      %2597 = vmatpush1.msra.mxu0 0.0
      %2598 = vmatprep.subr.mxu0 0.0
      %2599 = vmatpush1.msra.mxu0 0.0
      %2600 = vmatprep.subr.mxu0 0.0
      %2601 = vmatpush1.msra.mxu0 0.0
      %2602 = vmatprep.subr.mxu0 0.0
      %2603 = vmatpush1.msra.mxu0 0.0
      %2604 = vmatprep.subr.mxu0 0.0
      %2605 = vmatpush1.msra.mxu0 0.0
      %2606 = vmatprep.subr.mxu0 0.0
      %2607 = vmatpush1.msra.mxu0 0.0
      %2608 = vmatprep.subr.mxu0 0.0
      %2609 = vmatpush1.msra.mxu0 0.0
      %2610 = vmatprep.subr.mxu0 0.0
      %2611 = vmatpush1.msra.mxu0 0.0
      %2612 = vmatprep.subr.mxu0 0.0
      %2613 = vmatpush1.msra.mxu0 0.0
      %2614 = vmatprep.subr.mxu0 0.0
      %2615 = vmatpush1.msra.mxu0 0.0
      %2616 = vmatprep.subr.mxu0 0.0
      %2617 = vmatpush1.msra.mxu0 0.0
      %2618 = vmatprep.subr.mxu0 0.0
      %2619 = vmatpush1.msra.mxu0 0.0
      %2620 = vmatprep.subr.mxu0 0.0
      %2621 = vmatpush1.msra.mxu0 0.0
      %2622 = vmatprep.mubr.f32.mxu0 0.0
      %2623 = vmatmul.mubr.f32.gmra.mrb[0].mxu0 %v1772
      %v2624 = vpop.f32.mrb[0].mxu0
      %v2625 = vadd.f32 0.0, %v2624
      %v2626 = vpop.f32.mrb[0].mxu0
      %2627 = vmatprep.mubr.f32.mxu0 0.0
      %2628 = vmatmul.mubr.f32.gmra.mrb[0].mxu0 %v1774
      %v2629 = vpop.f32.mrb[0].mxu0
      %v2630 = vadd.f32 0.0, %v2629
      %v2631 = vpop.f32.mrb[0].mxu0
      %2632 = vmatprep.mubr.f32.mxu0 0.0
      %2633 = vmatmul.mubr.f32.gmra.mrb[0].mxu0 %v1776
      %v2634 = vpop.f32.mrb[0].mxu0
      %v2635 = vadd.f32 0.0, %v2634
      %v2636 = vpop.f32.mrb[0].mxu0
      %2637 = vmatprep.mubr.f32.mxu0 0.0
      %2638 = vmatmul.mubr.f32.gmra.mrb[0].mxu0 %v1778
      %v2639 = vpop.f32.mrb[0].mxu0
      %v2640 = vadd.f32 0.0, %v2639
      %v2641 = vpop.f32.mrb[0].mxu0
      %2642 = vmatprep.mubr.f32.mxu0 0.0
      %2643 = vmatmul.mubr.f32.gmra.mrb[0].mxu0 %v1780
      %v2644 = vpop.f32.mrb[0].mxu0
      %v2645 = vadd.f32 0.0, %v2644
      %v2646 = vpop.f32.mrb[0].mxu0
      %2647 = vmatprep.mubr.f32.mxu0 0.0
      %2648 = vmatmul.mubr.f32.gmra.mrb[0].mxu0 %v1782
      %v2649 = vpop.f32.mrb[0].mxu0
      %v2650 = vadd.f32 0.0, %v2649
      %v2651 = vpop.f32.mrb[0].mxu0
      %2652 = vmatprep.mubr.f32.mxu0 0.0
      %2653 = vmatmul.mubr.f32.gmra.mrb[0].mxu0 %v2185
      %v2654 = vpop.f32.mrb[0].mxu0
      %v2655 = vadd.f32 0.0, %v2654
      %v2656 = vpop.f32.mrb[0].mxu0
      %2657 = vmatprep.mubr.f32.mxu0 0.0
      %2658 = vmatmul.mubr.f32.gmra.mrb[0].mxu0 %v2553
      %v2659 = vpop.f32.mrb[0].mxu0
      %v2660 = vadd.f32 0.0, %v2659
      %v2661 = vpop.f32.mrb[0].mxu0
      %2662 = vdwg.mxu0
      %v2663 = vadd.f32 %v2539, %v2625
      %v2664 = vadd.f32 %v2540, %v2630
      %v2665 = vadd.f32 %v2541, %v2635
      %v2666 = vadd.f32 %v2542, %v2640
      %v2667 = vadd.f32 %v2543, %v2645
      %v2668 = vadd.f32 %v2544, %v2650
      %v2669 = vadd.f32 %v2545, %v2655
      %v2670 = vadd.f32 %v2546, %v2660
      %v2671 = vrot.slane %v381, 2
      %v2672 = vrot.slane %v382, 2
      %v2673 = vsel %vm697, %v2671, %v2672
      %s2674 = scalar_lea.vmem %s3, 68
      %v2675 = vld [vmem:[%s2674] sm:$0xf]
      %v2676 = vsel %vm447, %v2673, 0
      %v2679 = vsel %vm464, %v2675, 0
      %2681 = vmatprep.subr.mxu0 0.0
      %2682 = vmatpush1.msra.mxu0 %v2679
      %2683 = vmatprep.subr.mxu0 0.0
      %2684 = vmatpush1.msra.mxu0 0.0
      %2685 = vmatprep.subr.mxu0 0.0
      %2686 = vmatpush1.msra.mxu0 0.0
      %2687 = vmatprep.subr.mxu0 0.0
      %2688 = vmatpush1.msra.mxu0 0.0
      %2689 = vmatprep.subr.mxu0 0.0
      %2690 = vmatpush1.msra.mxu0 0.0
      %2691 = vmatprep.subr.mxu0 0.0
      %2692 = vmatpush1.msra.mxu0 0.0
      %2693 = vmatprep.subr.mxu0 0.0
      %2694 = vmatpush1.msra.mxu0 0.0
      %2695 = vmatprep.subr.mxu0 0.0
      %2696 = vmatpush1.msra.mxu0 0.0
      %2697 = vmatprep.subr.mxu0 0.0
      %2698 = vmatpush1.msra.mxu0 0.0
      %2699 = vmatprep.subr.mxu0 0.0
      %2700 = vmatpush1.msra.mxu0 0.0
      %2701 = vmatprep.subr.mxu0 0.0
      %2702 = vmatpush1.msra.mxu0 0.0
      %2703 = vmatprep.subr.mxu0 0.0
      %2704 = vmatpush1.msra.mxu0 0.0
      %2705 = vmatprep.subr.mxu0 0.0
      %2706 = vmatpush1.msra.mxu0 0.0
      %2707 = vmatprep.subr.mxu0 0.0
      %2708 = vmatpush1.msra.mxu0 0.0
      %2709 = vmatprep.subr.mxu0 0.0
      %2710 = vmatpush1.msra.mxu0 0.0
      %2711 = vmatprep.subr.mxu0 0.0
      %2712 = vmatpush1.msra.mxu0 0.0
      %2713 = vmatprep.subr.mxu0 0.0
      %2714 = vmatpush1.msra.mxu0 0.0
      %2715 = vmatprep.subr.mxu0 0.0
      %2716 = vmatpush1.msra.mxu0 0.0
      %2717 = vmatprep.subr.mxu0 0.0
      %2718 = vmatpush1.msra.mxu0 0.0
      %2719 = vmatprep.subr.mxu0 0.0
      %2720 = vmatpush1.msra.mxu0 0.0
      %2721 = vmatprep.subr.mxu0 0.0
      %2722 = vmatpush1.msra.mxu0 0.0
      %2723 = vmatprep.subr.mxu0 0.0
      %2724 = vmatpush1.msra.mxu0 0.0
      %2725 = vmatprep.subr.mxu0 0.0
      %2726 = vmatpush1.msra.mxu0 0.0
      %2727 = vmatprep.subr.mxu0 0.0
      %2728 = vmatpush1.msra.mxu0 0.0
      %2729 = vmatprep.subr.mxu0 0.0
      %2730 = vmatpush1.msra.mxu0 0.0
      %2731 = vmatprep.subr.mxu0 0.0
      %2732 = vmatpush1.msra.mxu0 0.0
      %2733 = vmatprep.subr.mxu0 0.0
      %2734 = vmatpush1.msra.mxu0 0.0
      %2735 = vmatprep.subr.mxu0 0.0
      %2736 = vmatpush1.msra.mxu0 0.0
      %2737 = vmatprep.subr.mxu0 0.0
      %2738 = vmatpush1.msra.mxu0 0.0
      %2739 = vmatprep.subr.mxu0 0.0
      %2740 = vmatpush1.msra.mxu0 0.0
      %2741 = vmatprep.subr.mxu0 0.0
      %2742 = vmatpush1.msra.mxu0 0.0
      %2743 = vmatprep.subr.mxu0 0.0
      %2744 = vmatpush1.msra.mxu0 0.0
      %2745 = vmatprep.mubr.f32.mxu0 0.0
      %2746 = vmatmul.mubr.f32.gmra.mrb[0].mxu0 %v1930
      %v2747 = vpop.f32.mrb[0].mxu0
      %v2748 = vadd.f32 0.0, %v2747
      %v2749 = vpop.f32.mrb[0].mxu0
      %2750 = vmatprep.mubr.f32.mxu0 0.0
      %2751 = vmatmul.mubr.f32.gmra.mrb[0].mxu0 %v1932
      %v2752 = vpop.f32.mrb[0].mxu0
      %v2753 = vadd.f32 0.0, %v2752
      %v2754 = vpop.f32.mrb[0].mxu0
      %2755 = vmatprep.mubr.f32.mxu0 0.0
      %2756 = vmatmul.mubr.f32.gmra.mrb[0].mxu0 %v1934
      %v2757 = vpop.f32.mrb[0].mxu0
      %v2758 = vadd.f32 0.0, %v2757
      %v2759 = vpop.f32.mrb[0].mxu0
      %2760 = vmatprep.mubr.f32.mxu0 0.0
      %2761 = vmatmul.mubr.f32.gmra.mrb[0].mxu0 %v1936
      %v2762 = vpop.f32.mrb[0].mxu0
      %v2763 = vadd.f32 0.0, %v2762
      %v2764 = vpop.f32.mrb[0].mxu0
      %2765 = vmatprep.mubr.f32.mxu0 0.0
      %2766 = vmatmul.mubr.f32.gmra.mrb[0].mxu0 %v1938
      %v2767 = vpop.f32.mrb[0].mxu0
      %v2768 = vadd.f32 0.0, %v2767
      %v2769 = vpop.f32.mrb[0].mxu0
      %2770 = vmatprep.mubr.f32.mxu0 0.0
      %2771 = vmatmul.mubr.f32.gmra.mrb[0].mxu0 %v1940
      %v2772 = vpop.f32.mrb[0].mxu0
      %v2773 = vadd.f32 0.0, %v2772
      %v2774 = vpop.f32.mrb[0].mxu0
      %2775 = vmatprep.mubr.f32.mxu0 0.0
      %2776 = vmatmul.mubr.f32.gmra.mrb[0].mxu0 %v2308
      %v2777 = vpop.f32.mrb[0].mxu0
      %v2778 = vadd.f32 0.0, %v2777
      %v2779 = vpop.f32.mrb[0].mxu0
      %2780 = vmatprep.mubr.f32.mxu0 0.0
      %2781 = vmatmul.mubr.f32.gmra.mrb[0].mxu0 %v2676
      %v2782 = vpop.f32.mrb[0].mxu0
      %v2783 = vadd.f32 0.0, %v2782
      %v2784 = vpop.f32.mrb[0].mxu0
      %2785 = vdwg.mxu0
      %v2786 = vadd.f32 %v2663, %v2748
      %v2787 = vadd.f32 %v2664, %v2753
      %v2788 = vadd.f32 %v2665, %v2758
      %v2789 = vadd.f32 %v2666, %v2763
      %v2790 = vadd.f32 %v2667, %v2768
      %v2791 = vadd.f32 %v2668, %v2773
      %v2792 = vadd.f32 %v2669, %v2778
      %v2793 = vadd.f32 %v2670, %v2783
      %s2794 = scalar_lea.vmem %s3, 72
      %v2795 = vld [vmem:[%s2794] sm:$0xf]
      %v2797 = vsel %vm447, %v383, 0
      %v2800 = vsel %vm447, %v385, 0
      %v2803 = vsel %vm447, %v387, 0
      %v2806 = vsel %vm447, %v389, 0
      %v2809 = vsel %vm447, %v391, 0
      %v2812 = vsel %vm447, %v393, 0
      %v2815 = vsel %vm447, %v395, 0
      %v2818 = vsel %vm447, %v397, 0
      %v2821 = vsel %vm464, %v2795, 0
      %2823 = vmatprep.subr.mxu0 0.0
      %2824 = vmatpush1.msra.mxu0 %v2821
      %2825 = vmatprep.subr.mxu0 0.0
      %2826 = vmatpush1.msra.mxu0 0.0
      %2827 = vmatprep.subr.mxu0 0.0
      %2828 = vmatpush1.msra.mxu0 0.0
      %2829 = vmatprep.subr.mxu0 0.0
      %2830 = vmatpush1.msra.mxu0 0.0
      %2831 = vmatprep.subr.mxu0 0.0
      %2832 = vmatpush1.msra.mxu0 0.0
      %2833 = vmatprep.subr.mxu0 0.0
      %2834 = vmatpush1.msra.mxu0 0.0
      %2835 = vmatprep.subr.mxu0 0.0
      %2836 = vmatpush1.msra.mxu0 0.0
      %2837 = vmatprep.subr.mxu0 0.0
      %2838 = vmatpush1.msra.mxu0 0.0
      %2839 = vmatprep.subr.mxu0 0.0
      %2840 = vmatpush1.msra.mxu0 0.0
      %2841 = vmatprep.subr.mxu0 0.0
      %2842 = vmatpush1.msra.mxu0 0.0
      %2843 = vmatprep.subr.mxu0 0.0
      %2844 = vmatpush1.msra.mxu0 0.0
      %2845 = vmatprep.subr.mxu0 0.0
      %2846 = vmatpush1.msra.mxu0 0.0
      %2847 = vmatprep.subr.mxu0 0.0
      %2848 = vmatpush1.msra.mxu0 0.0
      %2849 = vmatprep.subr.mxu0 0.0
      %2850 = vmatpush1.msra.mxu0 0.0
      %2851 = vmatprep.subr.mxu0 0.0
      %2852 = vmatpush1.msra.mxu0 0.0
      %2853 = vmatprep.subr.mxu0 0.0
      %2854 = vmatpush1.msra.mxu0 0.0
      %2855 = vmatprep.subr.mxu0 0.0
      %2856 = vmatpush1.msra.mxu0 0.0
      %2857 = vmatprep.subr.mxu0 0.0
      %2858 = vmatpush1.msra.mxu0 0.0
      %2859 = vmatprep.subr.mxu0 0.0
      %2860 = vmatpush1.msra.mxu0 0.0
      %2861 = vmatprep.subr.mxu0 0.0
      %2862 = vmatpush1.msra.mxu0 0.0
      %2863 = vmatprep.subr.mxu0 0.0
      %2864 = vmatpush1.msra.mxu0 0.0
      %2865 = vmatprep.subr.mxu0 0.0
      %2866 = vmatpush1.msra.mxu0 0.0
      %2867 = vmatprep.subr.mxu0 0.0
      %2868 = vmatpush1.msra.mxu0 0.0
      %2869 = vmatprep.subr.mxu0 0.0
      %2870 = vmatpush1.msra.mxu0 0.0
      %2871 = vmatprep.subr.mxu0 0.0
      %2872 = vmatpush1.msra.mxu0 0.0
      %2873 = vmatprep.subr.mxu0 0.0
      %2874 = vmatpush1.msra.mxu0 0.0
      %2875 = vmatprep.subr.mxu0 0.0
      %2876 = vmatpush1.msra.mxu0 0.0
      %2877 = vmatprep.subr.mxu0 0.0
      %2878 = vmatpush1.msra.mxu0 0.0
      %2879 = vmatprep.subr.mxu0 0.0
      %2880 = vmatpush1.msra.mxu0 0.0
      %2881 = vmatprep.subr.mxu0 0.0
      %2882 = vmatpush1.msra.mxu0 0.0
      %2883 = vmatprep.subr.mxu0 0.0
      %2884 = vmatpush1.msra.mxu0 0.0
      %2885 = vmatprep.subr.mxu0 0.0
      %2886 = vmatpush1.msra.mxu0 0.0
      %2887 = vmatprep.mubr.f32.mxu0 0.0
      %2888 = vmatmul.mubr.f32.gmra.mrb[0].mxu0 %v2797
      %v2889 = vpop.f32.mrb[0].mxu0
      %v2890 = vadd.f32 0.0, %v2889
      %v2891 = vpop.f32.mrb[0].mxu0
      %2892 = vmatprep.mubr.f32.mxu0 0.0
      %2893 = vmatmul.mubr.f32.gmra.mrb[0].mxu0 %v2800
      %v2894 = vpop.f32.mrb[0].mxu0
      %v2895 = vadd.f32 0.0, %v2894
      %v2896 = vpop.f32.mrb[0].mxu0
      %2897 = vmatprep.mubr.f32.mxu0 0.0
      %2898 = vmatmul.mubr.f32.gmra.mrb[0].mxu0 %v2803
      %v2899 = vpop.f32.mrb[0].mxu0
      %v2900 = vadd.f32 0.0, %v2899
      %v2901 = vpop.f32.mrb[0].mxu0
      %2902 = vmatprep.mubr.f32.mxu0 0.0
      %2903 = vmatmul.mubr.f32.gmra.mrb[0].mxu0 %v2806
      %v2904 = vpop.f32.mrb[0].mxu0
      %v2905 = vadd.f32 0.0, %v2904
      %v2906 = vpop.f32.mrb[0].mxu0
      %2907 = vmatprep.mubr.f32.mxu0 0.0
      %2908 = vmatmul.mubr.f32.gmra.mrb[0].mxu0 %v2809
      %v2909 = vpop.f32.mrb[0].mxu0
      %v2910 = vadd.f32 0.0, %v2909
      %v2911 = vpop.f32.mrb[0].mxu0
      %2912 = vmatprep.mubr.f32.mxu0 0.0
      %2913 = vmatmul.mubr.f32.gmra.mrb[0].mxu0 %v2812
      %v2914 = vpop.f32.mrb[0].mxu0
      %v2915 = vadd.f32 0.0, %v2914
      %v2916 = vpop.f32.mrb[0].mxu0
      %2917 = vmatprep.mubr.f32.mxu0 0.0
      %2918 = vmatmul.mubr.f32.gmra.mrb[0].mxu0 %v2815
      %v2919 = vpop.f32.mrb[0].mxu0
      %v2920 = vadd.f32 0.0, %v2919
      %v2921 = vpop.f32.mrb[0].mxu0
      %2922 = vmatprep.mubr.f32.mxu0 0.0
      %2923 = vmatmul.mubr.f32.gmra.mrb[0].mxu0 %v2818
      %v2924 = vpop.f32.mrb[0].mxu0
      %v2925 = vadd.f32 0.0, %v2924
      %v2926 = vpop.f32.mrb[0].mxu0
      %2927 = vdwg.mxu0
      %v2928 = vadd.f32 %v2786, %v2890
      %v2929 = vadd.f32 %v2787, %v2895
      %v2930 = vadd.f32 %v2788, %v2900
      %v2931 = vadd.f32 %v2789, %v2905
      %v2932 = vadd.f32 %v2790, %v2910
      %v2933 = vadd.f32 %v2791, %v2915
      %v2934 = vadd.f32 %v2792, %v2920
      %v2935 = vadd.f32 %v2793, %v2925
      %v2944 = vrot.slane %v383, 1
      %v2945 = vrot.slane %v384, 1
      %v2946 = vsel %vm420, %v2944, %v2945
      %v2947 = vrot.slane %v385, 1
      %v2948 = vrot.slane %v386, 1
      %v2949 = vsel %vm420, %v2947, %v2948
      %v2950 = vrot.slane %v387, 1
      %v2951 = vrot.slane %v388, 1
      %v2952 = vsel %vm420, %v2950, %v2951
      %v2953 = vrot.slane %v389, 1
      %v2954 = vrot.slane %v390, 1
      %v2955 = vsel %vm420, %v2953, %v2954
      %v2956 = vrot.slane %v391, 1
      %v2957 = vrot.slane %v392, 1
      %v2958 = vsel %vm420, %v2956, %v2957
      %v2959 = vrot.slane %v393, 1
      %v2960 = vrot.slane %v394, 1
      %v2961 = vsel %vm420, %v2959, %v2960
      %v2962 = vrot.slane %v395, 1
      %v2963 = vrot.slane %v396, 1
      %v2964 = vsel %vm420, %v2962, %v2963
      %v2965 = vrot.slane %v397, 1
      %v2966 = vrot.slane %v398, 1
      %v2967 = vsel %vm420, %v2965, %v2966
      %s2968 = scalar_lea.vmem %s3, 76
      %v2969 = vld [vmem:[%s2968] sm:$0xf]
      %v2970 = vsel %vm447, %v2946, 0
      %v2972 = vsel %vm447, %v2949, 0
      %v2974 = vsel %vm447, %v2952, 0
      %v2976 = vsel %vm447, %v2955, 0
      %v2978 = vsel %vm447, %v2958, 0
      %v2980 = vsel %vm447, %v2961, 0
      %v2982 = vsel %vm447, %v2964, 0
      %v2984 = vsel %vm447, %v2967, 0
      %v2987 = vsel %vm464, %v2969, 0
      %2989 = vmatprep.subr.mxu0 0.0
      %2990 = vmatpush1.msra.mxu0 %v2987
      %2991 = vmatprep.subr.mxu0 0.0
      %2992 = vmatpush1.msra.mxu0 0.0
      %2993 = vmatprep.subr.mxu0 0.0
      %2994 = vmatpush1.msra.mxu0 0.0
      %2995 = vmatprep.subr.mxu0 0.0
      %2996 = vmatpush1.msra.mxu0 0.0
      %2997 = vmatprep.subr.mxu0 0.0
      %2998 = vmatpush1.msra.mxu0 0.0
      %2999 = vmatprep.subr.mxu0 0.0
      %3000 = vmatpush1.msra.mxu0 0.0
      %3001 = vmatprep.subr.mxu0 0.0
      %3002 = vmatpush1.msra.mxu0 0.0
      %3003 = vmatprep.subr.mxu0 0.0
      %3004 = vmatpush1.msra.mxu0 0.0
      %3005 = vmatprep.subr.mxu0 0.0
      %3006 = vmatpush1.msra.mxu0 0.0
      %3007 = vmatprep.subr.mxu0 0.0
      %3008 = vmatpush1.msra.mxu0 0.0
      %3009 = vmatprep.subr.mxu0 0.0
      %3010 = vmatpush1.msra.mxu0 0.0
      %3011 = vmatprep.subr.mxu0 0.0
      %3012 = vmatpush1.msra.mxu0 0.0
      %3013 = vmatprep.subr.mxu0 0.0
      %3014 = vmatpush1.msra.mxu0 0.0
      %3015 = vmatprep.subr.mxu0 0.0
      %3016 = vmatpush1.msra.mxu0 0.0
      %3017 = vmatprep.subr.mxu0 0.0
      %3018 = vmatpush1.msra.mxu0 0.0
      %3019 = vmatprep.subr.mxu0 0.0
      %3020 = vmatpush1.msra.mxu0 0.0
      %3021 = vmatprep.subr.mxu0 0.0
      %3022 = vmatpush1.msra.mxu0 0.0
      %3023 = vmatprep.subr.mxu0 0.0
      %3024 = vmatpush1.msra.mxu0 0.0
      %3025 = vmatprep.subr.mxu0 0.0
      %3026 = vmatpush1.msra.mxu0 0.0
      %3027 = vmatprep.subr.mxu0 0.0
      %3028 = vmatpush1.msra.mxu0 0.0
      %3029 = vmatprep.subr.mxu0 0.0
      %3030 = vmatpush1.msra.mxu0 0.0
      %3031 = vmatprep.subr.mxu0 0.0
      %3032 = vmatpush1.msra.mxu0 0.0
      %3033 = vmatprep.subr.mxu0 0.0
      %3034 = vmatpush1.msra.mxu0 0.0
      %3035 = vmatprep.subr.mxu0 0.0
      %3036 = vmatpush1.msra.mxu0 0.0
      %3037 = vmatprep.subr.mxu0 0.0
      %3038 = vmatpush1.msra.mxu0 0.0
      %3039 = vmatprep.subr.mxu0 0.0
      %3040 = vmatpush1.msra.mxu0 0.0
      %3041 = vmatprep.subr.mxu0 0.0
      %3042 = vmatpush1.msra.mxu0 0.0
      %3043 = vmatprep.subr.mxu0 0.0
      %3044 = vmatpush1.msra.mxu0 0.0
      %3045 = vmatprep.subr.mxu0 0.0
      %3046 = vmatpush1.msra.mxu0 0.0
      %3047 = vmatprep.subr.mxu0 0.0
      %3048 = vmatpush1.msra.mxu0 0.0
      %3049 = vmatprep.subr.mxu0 0.0
      %3050 = vmatpush1.msra.mxu0 0.0
      %3051 = vmatprep.subr.mxu0 0.0
      %3052 = vmatpush1.msra.mxu0 0.0
      %3053 = vmatprep.mubr.f32.mxu0 0.0
      %3054 = vmatmul.mubr.f32.gmra.mrb[0].mxu0 %v2970
      %v3055 = vpop.f32.mrb[0].mxu0
      %v3056 = vadd.f32 0.0, %v3055
      %v3057 = vpop.f32.mrb[0].mxu0
      %3058 = vmatprep.mubr.f32.mxu0 0.0
      %3059 = vmatmul.mubr.f32.gmra.mrb[0].mxu0 %v2972
      %v3060 = vpop.f32.mrb[0].mxu0
      %v3061 = vadd.f32 0.0, %v3060
      %v3062 = vpop.f32.mrb[0].mxu0
      %3063 = vmatprep.mubr.f32.mxu0 0.0
      %3064 = vmatmul.mubr.f32.gmra.mrb[0].mxu0 %v2974
      %v3065 = vpop.f32.mrb[0].mxu0
      %v3066 = vadd.f32 0.0, %v3065
      %v3067 = vpop.f32.mrb[0].mxu0
      %3068 = vmatprep.mubr.f32.mxu0 0.0
      %3069 = vmatmul.mubr.f32.gmra.mrb[0].mxu0 %v2976
      %v3070 = vpop.f32.mrb[0].mxu0
      %v3071 = vadd.f32 0.0, %v3070
      %v3072 = vpop.f32.mrb[0].mxu0
      %3073 = vmatprep.mubr.f32.mxu0 0.0
      %3074 = vmatmul.mubr.f32.gmra.mrb[0].mxu0 %v2978
      %v3075 = vpop.f32.mrb[0].mxu0
      %v3076 = vadd.f32 0.0, %v3075
      %v3077 = vpop.f32.mrb[0].mxu0
      %3078 = vmatprep.mubr.f32.mxu0 0.0
      %3079 = vmatmul.mubr.f32.gmra.mrb[0].mxu0 %v2980
      %v3080 = vpop.f32.mrb[0].mxu0
      %v3081 = vadd.f32 0.0, %v3080
      %v3082 = vpop.f32.mrb[0].mxu0
      %3083 = vmatprep.mubr.f32.mxu0 0.0
      %3084 = vmatmul.mubr.f32.gmra.mrb[0].mxu0 %v2982
      %v3085 = vpop.f32.mrb[0].mxu0
      %v3086 = vadd.f32 0.0, %v3085
      %v3087 = vpop.f32.mrb[0].mxu0
      %3088 = vmatprep.mubr.f32.mxu0 0.0
      %3089 = vmatmul.mubr.f32.gmra.mrb[0].mxu0 %v2984
      %v3090 = vpop.f32.mrb[0].mxu0
      %v3091 = vadd.f32 0.0, %v3090
      %v3092 = vpop.f32.mrb[0].mxu0
      %3093 = vdwg.mxu0
      %v3094 = vadd.f32 %v2928, %v3056
      %v3095 = vadd.f32 %v2929, %v3061
      %v3096 = vadd.f32 %v2930, %v3066
      %v3097 = vadd.f32 %v2931, %v3071
      %v3098 = vadd.f32 %v2932, %v3076
      %v3099 = vadd.f32 %v2933, %v3081
      %v3100 = vadd.f32 %v2934, %v3086
      %v3101 = vadd.f32 %v2935, %v3091
      %v3102 = vrot.slane %v383, 2
      %v3103 = vrot.slane %v384, 2
      %v3104 = vsel %vm697, %v3102, %v3103
      %v3105 = vrot.slane %v385, 2
      %v3106 = vrot.slane %v386, 2
      %v3107 = vsel %vm697, %v3105, %v3106
      %v3108 = vrot.slane %v387, 2
      %v3109 = vrot.slane %v388, 2
      %v3110 = vsel %vm697, %v3108, %v3109
      %v3111 = vrot.slane %v389, 2
      %v3112 = vrot.slane %v390, 2
      %v3113 = vsel %vm697, %v3111, %v3112
      %v3114 = vrot.slane %v391, 2
      %v3115 = vrot.slane %v392, 2
      %v3116 = vsel %vm697, %v3114, %v3115
      %v3117 = vrot.slane %v393, 2
      %v3118 = vrot.slane %v394, 2
      %v3119 = vsel %vm697, %v3117, %v3118
      %v3120 = vrot.slane %v395, 2
      %v3121 = vrot.slane %v396, 2
      %v3122 = vsel %vm697, %v3120, %v3121
      %v3123 = vrot.slane %v397, 2
      %v3124 = vrot.slane %v398, 2
      %v3125 = vsel %vm697, %v3123, %v3124
      %s3126 = scalar_lea.vmem %s3, 80
      %v3127 = vld [vmem:[%s3126] sm:$0xf]
      %v3128 = vsel %vm447, %v3104, 0
      %v3130 = vsel %vm447, %v3107, 0
      %v3132 = vsel %vm447, %v3110, 0
      %v3134 = vsel %vm447, %v3113, 0
      %v3136 = vsel %vm447, %v3116, 0
      %v3138 = vsel %vm447, %v3119, 0
      %v3140 = vsel %vm447, %v3122, 0
      %v3142 = vsel %vm447, %v3125, 0
      %v3145 = vsel %vm464, %v3127, 0
      %3147 = vmatprep.subr.mxu0 0.0
      %3148 = vmatpush1.msra.mxu0 %v3145
      %3149 = vmatprep.subr.mxu0 0.0
      %3150 = vmatpush1.msra.mxu0 0.0
      %3151 = vmatprep.subr.mxu0 0.0
      %3152 = vmatpush1.msra.mxu0 0.0
      %3153 = vmatprep.subr.mxu0 0.0
      %3154 = vmatpush1.msra.mxu0 0.0
      %3155 = vmatprep.subr.mxu0 0.0
      %3156 = vmatpush1.msra.mxu0 0.0
      %3157 = vmatprep.subr.mxu0 0.0
      %3158 = vmatpush1.msra.mxu0 0.0
      %3159 = vmatprep.subr.mxu0 0.0
      %3160 = vmatpush1.msra.mxu0 0.0
      %3161 = vmatprep.subr.mxu0 0.0
      %3162 = vmatpush1.msra.mxu0 0.0
      %3163 = vmatprep.subr.mxu0 0.0
      %3164 = vmatpush1.msra.mxu0 0.0
      %3165 = vmatprep.subr.mxu0 0.0
      %3166 = vmatpush1.msra.mxu0 0.0
      %3167 = vmatprep.subr.mxu0 0.0
      %3168 = vmatpush1.msra.mxu0 0.0
      %3169 = vmatprep.subr.mxu0 0.0
      %3170 = vmatpush1.msra.mxu0 0.0
      %3171 = vmatprep.subr.mxu0 0.0
      %3172 = vmatpush1.msra.mxu0 0.0
      %3173 = vmatprep.subr.mxu0 0.0
      %3174 = vmatpush1.msra.mxu0 0.0
      %3175 = vmatprep.subr.mxu0 0.0
      %3176 = vmatpush1.msra.mxu0 0.0
      %3177 = vmatprep.subr.mxu0 0.0
      %3178 = vmatpush1.msra.mxu0 0.0
      %3179 = vmatprep.subr.mxu0 0.0
      %3180 = vmatpush1.msra.mxu0 0.0
      %3181 = vmatprep.subr.mxu0 0.0
      %3182 = vmatpush1.msra.mxu0 0.0
      %3183 = vmatprep.subr.mxu0 0.0
      %3184 = vmatpush1.msra.mxu0 0.0
      %3185 = vmatprep.subr.mxu0 0.0
      %3186 = vmatpush1.msra.mxu0 0.0
      %3187 = vmatprep.subr.mxu0 0.0
      %3188 = vmatpush1.msra.mxu0 0.0
      %3189 = vmatprep.subr.mxu0 0.0
      %3190 = vmatpush1.msra.mxu0 0.0
      %3191 = vmatprep.subr.mxu0 0.0
      %3192 = vmatpush1.msra.mxu0 0.0
      %3193 = vmatprep.subr.mxu0 0.0
      %3194 = vmatpush1.msra.mxu0 0.0
      %3195 = vmatprep.subr.mxu0 0.0
      %3196 = vmatpush1.msra.mxu0 0.0
      %3197 = vmatprep.subr.mxu0 0.0
      %3198 = vmatpush1.msra.mxu0 0.0
      %3199 = vmatprep.subr.mxu0 0.0
      %3200 = vmatpush1.msra.mxu0 0.0
      %3201 = vmatprep.subr.mxu0 0.0
      %3202 = vmatpush1.msra.mxu0 0.0
      %3203 = vmatprep.subr.mxu0 0.0
      %3204 = vmatpush1.msra.mxu0 0.0
      %3205 = vmatprep.subr.mxu0 0.0
      %3206 = vmatpush1.msra.mxu0 0.0
      %3207 = vmatprep.subr.mxu0 0.0
      %3208 = vmatpush1.msra.mxu0 0.0
      %3209 = vmatprep.subr.mxu0 0.0
      %3210 = vmatpush1.msra.mxu0 0.0
      %3211 = vmatprep.mubr.f32.mxu0 0.0
      %3212 = vmatmul.mubr.f32.gmra.mrb[0].mxu0 %v3128
      %v3213 = vpop.f32.mrb[0].mxu0
      %v3214 = vadd.f32 0.0, %v3213
      %v3215 = vpop.f32.mrb[0].mxu0
      %3216 = vmatprep.mubr.f32.mxu0 0.0
      %3217 = vmatmul.mubr.f32.gmra.mrb[0].mxu0 %v3130
      %v3218 = vpop.f32.mrb[0].mxu0
      %v3219 = vadd.f32 0.0, %v3218
      %v3220 = vpop.f32.mrb[0].mxu0
      %3221 = vmatprep.mubr.f32.mxu0 0.0
      %3222 = vmatmul.mubr.f32.gmra.mrb[0].mxu0 %v3132
      %v3223 = vpop.f32.mrb[0].mxu0
      %v3224 = vadd.f32 0.0, %v3223
      %v3225 = vpop.f32.mrb[0].mxu0
      %3226 = vmatprep.mubr.f32.mxu0 0.0
      %3227 = vmatmul.mubr.f32.gmra.mrb[0].mxu0 %v3134
      %v3228 = vpop.f32.mrb[0].mxu0
      %v3229 = vadd.f32 0.0, %v3228
      %v3230 = vpop.f32.mrb[0].mxu0
      %3231 = vmatprep.mubr.f32.mxu0 0.0
      %3232 = vmatmul.mubr.f32.gmra.mrb[0].mxu0 %v3136
      %v3233 = vpop.f32.mrb[0].mxu0
      %v3234 = vadd.f32 0.0, %v3233
      %v3235 = vpop.f32.mrb[0].mxu0
      %3236 = vmatprep.mubr.f32.mxu0 0.0
      %3237 = vmatmul.mubr.f32.gmra.mrb[0].mxu0 %v3138
      %v3238 = vpop.f32.mrb[0].mxu0
      %v3239 = vadd.f32 0.0, %v3238
      %v3240 = vpop.f32.mrb[0].mxu0
      %3241 = vmatprep.mubr.f32.mxu0 0.0
      %3242 = vmatmul.mubr.f32.gmra.mrb[0].mxu0 %v3140
      %v3243 = vpop.f32.mrb[0].mxu0
      %v3244 = vadd.f32 0.0, %v3243
      %v3245 = vpop.f32.mrb[0].mxu0
      %3246 = vmatprep.mubr.f32.mxu0 0.0
      %3247 = vmatmul.mubr.f32.gmra.mrb[0].mxu0 %v3142
      %v3248 = vpop.f32.mrb[0].mxu0
      %v3249 = vadd.f32 0.0, %v3248
      %v3250 = vpop.f32.mrb[0].mxu0
      %3251 = vdwg.mxu0
      %v3252 = vadd.f32 %v3094, %v3214
      %v3253 = vadd.f32 %v3095, %v3219
      %v3254 = vadd.f32 %v3096, %v3224
      %v3255 = vadd.f32 %v3097, %v3229
      %v3256 = vadd.f32 %v3098, %v3234
      %v3257 = vadd.f32 %v3099, %v3239
      %v3258 = vadd.f32 %v3100, %v3244
      %v3259 = vadd.f32 %v3101, %v3249
      %s3260 = scalar_lea.vmem %s3, 84
      %v3261 = vld [vmem:[%s3260] sm:$0xf]
      %v3263 = vsel %vm447, %v399, 0
      %v3266 = vsel %vm464, %v3261, 0
      %3268 = vmatprep.subr.mxu0 0.0
      %3269 = vmatpush1.msra.mxu0 %v3266
      %3270 = vmatprep.subr.mxu0 0.0
      %3271 = vmatpush1.msra.mxu0 0.0
      %3272 = vmatprep.subr.mxu0 0.0
      %3273 = vmatpush1.msra.mxu0 0.0
      %3274 = vmatprep.subr.mxu0 0.0
      %3275 = vmatpush1.msra.mxu0 0.0
      %3276 = vmatprep.subr.mxu0 0.0
      %3277 = vmatpush1.msra.mxu0 0.0
      %3278 = vmatprep.subr.mxu0 0.0
      %3279 = vmatpush1.msra.mxu0 0.0
      %3280 = vmatprep.subr.mxu0 0.0
      %3281 = vmatpush1.msra.mxu0 0.0
      %3282 = vmatprep.subr.mxu0 0.0
      %3283 = vmatpush1.msra.mxu0 0.0
      %3284 = vmatprep.subr.mxu0 0.0
      %3285 = vmatpush1.msra.mxu0 0.0
      %3286 = vmatprep.subr.mxu0 0.0
      %3287 = vmatpush1.msra.mxu0 0.0
      %3288 = vmatprep.subr.mxu0 0.0
      %3289 = vmatpush1.msra.mxu0 0.0
      %3290 = vmatprep.subr.mxu0 0.0
      %3291 = vmatpush1.msra.mxu0 0.0
      %3292 = vmatprep.subr.mxu0 0.0
      %3293 = vmatpush1.msra.mxu0 0.0
      %3294 = vmatprep.subr.mxu0 0.0
      %3295 = vmatpush1.msra.mxu0 0.0
      %3296 = vmatprep.subr.mxu0 0.0
      %3297 = vmatpush1.msra.mxu0 0.0
      %3298 = vmatprep.subr.mxu0 0.0
      %3299 = vmatpush1.msra.mxu0 0.0
      %3300 = vmatprep.subr.mxu0 0.0
      %3301 = vmatpush1.msra.mxu0 0.0
      %3302 = vmatprep.subr.mxu0 0.0
      %3303 = vmatpush1.msra.mxu0 0.0
      %3304 = vmatprep.subr.mxu0 0.0
      %3305 = vmatpush1.msra.mxu0 0.0
      %3306 = vmatprep.subr.mxu0 0.0
      %3307 = vmatpush1.msra.mxu0 0.0
      %3308 = vmatprep.subr.mxu0 0.0
      %3309 = vmatpush1.msra.mxu0 0.0
      %3310 = vmatprep.subr.mxu0 0.0
      %3311 = vmatpush1.msra.mxu0 0.0
      %3312 = vmatprep.subr.mxu0 0.0
      %3313 = vmatpush1.msra.mxu0 0.0
      %3314 = vmatprep.subr.mxu0 0.0
      %3315 = vmatpush1.msra.mxu0 0.0
      %3316 = vmatprep.subr.mxu0 0.0
      %3317 = vmatpush1.msra.mxu0 0.0
      %3318 = vmatprep.subr.mxu0 0.0
      %3319 = vmatpush1.msra.mxu0 0.0
      %3320 = vmatprep.subr.mxu0 0.0
      %3321 = vmatpush1.msra.mxu0 0.0
      %3322 = vmatprep.subr.mxu0 0.0
      %3323 = vmatpush1.msra.mxu0 0.0
      %3324 = vmatprep.subr.mxu0 0.0
      %3325 = vmatpush1.msra.mxu0 0.0
      %3326 = vmatprep.subr.mxu0 0.0
      %3327 = vmatpush1.msra.mxu0 0.0
      %3328 = vmatprep.subr.mxu0 0.0
      %3329 = vmatpush1.msra.mxu0 0.0
      %3330 = vmatprep.subr.mxu0 0.0
      %3331 = vmatpush1.msra.mxu0 0.0
      %3332 = vmatprep.mubr.f32.mxu0 0.0
      %3333 = vmatmul.mubr.f32.gmra.mrb[0].mxu0 %v2800
      %v3334 = vpop.f32.mrb[0].mxu0
      %v3335 = vadd.f32 0.0, %v3334
      %v3336 = vpop.f32.mrb[0].mxu0
      %3337 = vmatprep.mubr.f32.mxu0 0.0
      %3338 = vmatmul.mubr.f32.gmra.mrb[0].mxu0 %v2803
      %v3339 = vpop.f32.mrb[0].mxu0
      %v3340 = vadd.f32 0.0, %v3339
      %v3341 = vpop.f32.mrb[0].mxu0
      %3342 = vmatprep.mubr.f32.mxu0 0.0
      %3343 = vmatmul.mubr.f32.gmra.mrb[0].mxu0 %v2806
      %v3344 = vpop.f32.mrb[0].mxu0
      %v3345 = vadd.f32 0.0, %v3344
      %v3346 = vpop.f32.mrb[0].mxu0
      %3347 = vmatprep.mubr.f32.mxu0 0.0
      %3348 = vmatmul.mubr.f32.gmra.mrb[0].mxu0 %v2809
      %v3349 = vpop.f32.mrb[0].mxu0
      %v3350 = vadd.f32 0.0, %v3349
      %v3351 = vpop.f32.mrb[0].mxu0
      %3352 = vmatprep.mubr.f32.mxu0 0.0
      %3353 = vmatmul.mubr.f32.gmra.mrb[0].mxu0 %v2812
      %v3354 = vpop.f32.mrb[0].mxu0
      %v3355 = vadd.f32 0.0, %v3354
      %v3356 = vpop.f32.mrb[0].mxu0
      %3357 = vmatprep.mubr.f32.mxu0 0.0
      %3358 = vmatmul.mubr.f32.gmra.mrb[0].mxu0 %v2815
      %v3359 = vpop.f32.mrb[0].mxu0
      %v3360 = vadd.f32 0.0, %v3359
      %v3361 = vpop.f32.mrb[0].mxu0
      %3362 = vmatprep.mubr.f32.mxu0 0.0
      %3363 = vmatmul.mubr.f32.gmra.mrb[0].mxu0 %v2818
      %v3364 = vpop.f32.mrb[0].mxu0
      %v3365 = vadd.f32 0.0, %v3364
      %v3366 = vpop.f32.mrb[0].mxu0
      %3367 = vmatprep.mubr.f32.mxu0 0.0
      %3368 = vmatmul.mubr.f32.gmra.mrb[0].mxu0 %v3263
      %v3369 = vpop.f32.mrb[0].mxu0
      %v3370 = vadd.f32 0.0, %v3369
      %v3371 = vpop.f32.mrb[0].mxu0
      %3372 = vdwg.mxu0
      %v3373 = vadd.f32 %v3252, %v3335
      %v3374 = vadd.f32 %v3253, %v3340
      %v3375 = vadd.f32 %v3254, %v3345
      %v3376 = vadd.f32 %v3255, %v3350
      %v3377 = vadd.f32 %v3256, %v3355
      %v3378 = vadd.f32 %v3257, %v3360
      %v3379 = vadd.f32 %v3258, %v3365
      %v3380 = vadd.f32 %v3259, %v3370
      %v3382 = vrot.slane %v399, 1
      %v3383 = vrot.slane %v400, 1
      %v3384 = vsel %vm420, %v3382, %v3383
      %s3385 = scalar_lea.vmem %s3, 88
      %v3386 = vld [vmem:[%s3385] sm:$0xf]
      %v3387 = vsel %vm447, %v3384, 0
      %v3390 = vsel %vm464, %v3386, 0
      %3392 = vmatprep.subr.mxu0 0.0
      %3393 = vmatpush1.msra.mxu0 %v3390
      %3394 = vmatprep.subr.mxu0 0.0
      %3395 = vmatpush1.msra.mxu0 0.0
      %3396 = vmatprep.subr.mxu0 0.0
      %3397 = vmatpush1.msra.mxu0 0.0
      %3398 = vmatprep.subr.mxu0 0.0
      %3399 = vmatpush1.msra.mxu0 0.0
      %3400 = vmatprep.subr.mxu0 0.0
      %3401 = vmatpush1.msra.mxu0 0.0
      %3402 = vmatprep.subr.mxu0 0.0
      %3403 = vmatpush1.msra.mxu0 0.0
      %3404 = vmatprep.subr.mxu0 0.0
      %3405 = vmatpush1.msra.mxu0 0.0
      %3406 = vmatprep.subr.mxu0 0.0
      %3407 = vmatpush1.msra.mxu0 0.0
      %3408 = vmatprep.subr.mxu0 0.0
      %3409 = vmatpush1.msra.mxu0 0.0
      %3410 = vmatprep.subr.mxu0 0.0
      %3411 = vmatpush1.msra.mxu0 0.0
      %3412 = vmatprep.subr.mxu0 0.0
      %3413 = vmatpush1.msra.mxu0 0.0
      %3414 = vmatprep.subr.mxu0 0.0
      %3415 = vmatpush1.msra.mxu0 0.0
      %3416 = vmatprep.subr.mxu0 0.0
      %3417 = vmatpush1.msra.mxu0 0.0
      %3418 = vmatprep.subr.mxu0 0.0
      %3419 = vmatpush1.msra.mxu0 0.0
      %3420 = vmatprep.subr.mxu0 0.0
      %3421 = vmatpush1.msra.mxu0 0.0
      %3422 = vmatprep.subr.mxu0 0.0
      %3423 = vmatpush1.msra.mxu0 0.0
      %3424 = vmatprep.subr.mxu0 0.0
      %3425 = vmatpush1.msra.mxu0 0.0
      %3426 = vmatprep.subr.mxu0 0.0
      %3427 = vmatpush1.msra.mxu0 0.0
      %3428 = vmatprep.subr.mxu0 0.0
      %3429 = vmatpush1.msra.mxu0 0.0
      %3430 = vmatprep.subr.mxu0 0.0
      %3431 = vmatpush1.msra.mxu0 0.0
      %3432 = vmatprep.subr.mxu0 0.0
      %3433 = vmatpush1.msra.mxu0 0.0
      %3434 = vmatprep.subr.mxu0 0.0
      %3435 = vmatpush1.msra.mxu0 0.0
      %3436 = vmatprep.subr.mxu0 0.0
      %3437 = vmatpush1.msra.mxu0 0.0
      %3438 = vmatprep.subr.mxu0 0.0
      %3439 = vmatpush1.msra.mxu0 0.0
      %3440 = vmatprep.subr.mxu0 0.0
      %3441 = vmatpush1.msra.mxu0 0.0
      %3442 = vmatprep.subr.mxu0 0.0
      %3443 = vmatpush1.msra.mxu0 0.0
      %3444 = vmatprep.subr.mxu0 0.0
      %3445 = vmatpush1.msra.mxu0 0.0
      %3446 = vmatprep.subr.mxu0 0.0
      %3447 = vmatpush1.msra.mxu0 0.0
      %3448 = vmatprep.subr.mxu0 0.0
      %3449 = vmatpush1.msra.mxu0 0.0
      %3450 = vmatprep.subr.mxu0 0.0
      %3451 = vmatpush1.msra.mxu0 0.0
      %3452 = vmatprep.subr.mxu0 0.0
      %3453 = vmatpush1.msra.mxu0 0.0
      %3454 = vmatprep.subr.mxu0 0.0
      %3455 = vmatpush1.msra.mxu0 0.0
      %3456 = vmatprep.mubr.f32.mxu0 0.0
      %3457 = vmatmul.mubr.f32.gmra.mrb[0].mxu0 %v2972
      %v3458 = vpop.f32.mrb[0].mxu0
      %v3459 = vadd.f32 0.0, %v3458
      %v3460 = vpop.f32.mrb[0].mxu0
      %3461 = vmatprep.mubr.f32.mxu0 0.0
      %3462 = vmatmul.mubr.f32.gmra.mrb[0].mxu0 %v2974
      %v3463 = vpop.f32.mrb[0].mxu0
      %v3464 = vadd.f32 0.0, %v3463
      %v3465 = vpop.f32.mrb[0].mxu0
      %3466 = vmatprep.mubr.f32.mxu0 0.0
      %3467 = vmatmul.mubr.f32.gmra.mrb[0].mxu0 %v2976
      %v3468 = vpop.f32.mrb[0].mxu0
      %v3469 = vadd.f32 0.0, %v3468
      %v3470 = vpop.f32.mrb[0].mxu0
      %3471 = vmatprep.mubr.f32.mxu0 0.0
      %3472 = vmatmul.mubr.f32.gmra.mrb[0].mxu0 %v2978
      %v3473 = vpop.f32.mrb[0].mxu0
      %v3474 = vadd.f32 0.0, %v3473
      %v3475 = vpop.f32.mrb[0].mxu0
      %3476 = vmatprep.mubr.f32.mxu0 0.0
      %3477 = vmatmul.mubr.f32.gmra.mrb[0].mxu0 %v2980
      %v3478 = vpop.f32.mrb[0].mxu0
      %v3479 = vadd.f32 0.0, %v3478
      %v3480 = vpop.f32.mrb[0].mxu0
      %3481 = vmatprep.mubr.f32.mxu0 0.0
      %3482 = vmatmul.mubr.f32.gmra.mrb[0].mxu0 %v2982
      %v3483 = vpop.f32.mrb[0].mxu0
      %v3484 = vadd.f32 0.0, %v3483
      %v3485 = vpop.f32.mrb[0].mxu0
      %3486 = vmatprep.mubr.f32.mxu0 0.0
      %3487 = vmatmul.mubr.f32.gmra.mrb[0].mxu0 %v2984
      %v3488 = vpop.f32.mrb[0].mxu0
      %v3489 = vadd.f32 0.0, %v3488
      %v3490 = vpop.f32.mrb[0].mxu0
      %3491 = vmatprep.mubr.f32.mxu0 0.0
      %3492 = vmatmul.mubr.f32.gmra.mrb[0].mxu0 %v3387
      %v3493 = vpop.f32.mrb[0].mxu0
      %v3494 = vadd.f32 0.0, %v3493
      %v3495 = vpop.f32.mrb[0].mxu0
      %3496 = vdwg.mxu0
      %v3497 = vadd.f32 %v3373, %v3459
      %v3498 = vadd.f32 %v3374, %v3464
      %v3499 = vadd.f32 %v3375, %v3469
      %v3500 = vadd.f32 %v3376, %v3474
      %v3501 = vadd.f32 %v3377, %v3479
      %v3502 = vadd.f32 %v3378, %v3484
      %v3503 = vadd.f32 %v3379, %v3489
      %v3504 = vadd.f32 %v3380, %v3494
      %v3505 = vrot.slane %v399, 2
      %v3506 = vrot.slane %v400, 2
      %v3507 = vsel %vm697, %v3505, %v3506
      %s3508 = scalar_lea.vmem %s3, 92
      %v3509 = vld [vmem:[%s3508] sm:$0xf]
      %v3510 = vsel %vm447, %v3507, 0
      %v3513 = vsel %vm464, %v3509, 0
      %3515 = vmatprep.subr.mxu0 0.0
      %3516 = vmatpush1.msra.mxu0 %v3513
      %3517 = vmatprep.subr.mxu0 0.0
      %3518 = vmatpush1.msra.mxu0 0.0
      %3519 = vmatprep.subr.mxu0 0.0
      %3520 = vmatpush1.msra.mxu0 0.0
      %3521 = vmatprep.subr.mxu0 0.0
      %3522 = vmatpush1.msra.mxu0 0.0
      %3523 = vmatprep.subr.mxu0 0.0
      %3524 = vmatpush1.msra.mxu0 0.0
      %3525 = vmatprep.subr.mxu0 0.0
      %3526 = vmatpush1.msra.mxu0 0.0
      %3527 = vmatprep.subr.mxu0 0.0
      %3528 = vmatpush1.msra.mxu0 0.0
      %3529 = vmatprep.subr.mxu0 0.0
      %3530 = vmatpush1.msra.mxu0 0.0
      %3531 = vmatprep.subr.mxu0 0.0
      %3532 = vmatpush1.msra.mxu0 0.0
      %3533 = vmatprep.subr.mxu0 0.0
      %3534 = vmatpush1.msra.mxu0 0.0
      %3535 = vmatprep.subr.mxu0 0.0
      %3536 = vmatpush1.msra.mxu0 0.0
      %3537 = vmatprep.subr.mxu0 0.0
      %3538 = vmatpush1.msra.mxu0 0.0
      %3539 = vmatprep.subr.mxu0 0.0
      %3540 = vmatpush1.msra.mxu0 0.0
      %3541 = vmatprep.subr.mxu0 0.0
      %3542 = vmatpush1.msra.mxu0 0.0
      %3543 = vmatprep.subr.mxu0 0.0
      %3544 = vmatpush1.msra.mxu0 0.0
      %3545 = vmatprep.subr.mxu0 0.0
      %3546 = vmatpush1.msra.mxu0 0.0
      %3547 = vmatprep.subr.mxu0 0.0
      %3548 = vmatpush1.msra.mxu0 0.0
      %3549 = vmatprep.subr.mxu0 0.0
      %3550 = vmatpush1.msra.mxu0 0.0
      %3551 = vmatprep.subr.mxu0 0.0
      %3552 = vmatpush1.msra.mxu0 0.0
      %3553 = vmatprep.subr.mxu0 0.0
      %3554 = vmatpush1.msra.mxu0 0.0
      %3555 = vmatprep.subr.mxu0 0.0
      %3556 = vmatpush1.msra.mxu0 0.0
      %3557 = vmatprep.subr.mxu0 0.0
      %3558 = vmatpush1.msra.mxu0 0.0
      %3559 = vmatprep.subr.mxu0 0.0
      %3560 = vmatpush1.msra.mxu0 0.0
      %3561 = vmatprep.subr.mxu0 0.0
      %3562 = vmatpush1.msra.mxu0 0.0
      %3563 = vmatprep.subr.mxu0 0.0
      %3564 = vmatpush1.msra.mxu0 0.0
      %3565 = vmatprep.subr.mxu0 0.0
      %3566 = vmatpush1.msra.mxu0 0.0
      %3567 = vmatprep.subr.mxu0 0.0
      %3568 = vmatpush1.msra.mxu0 0.0
      %3569 = vmatprep.subr.mxu0 0.0
      %3570 = vmatpush1.msra.mxu0 0.0
      %3571 = vmatprep.subr.mxu0 0.0
      %3572 = vmatpush1.msra.mxu0 0.0
      %3573 = vmatprep.subr.mxu0 0.0
      %3574 = vmatpush1.msra.mxu0 0.0
      %3575 = vmatprep.subr.mxu0 0.0
      %3576 = vmatpush1.msra.mxu0 0.0
      %3577 = vmatprep.subr.mxu0 0.0
      %3578 = vmatpush1.msra.mxu0 0.0
      %3579 = vmatprep.mubr.f32.mxu0 0.0
      %3580 = vmatmul.mubr.f32.gmra.mrb[0].mxu0 %v3130
      %v3581 = vpop.f32.mrb[0].mxu0
      %v3582 = vadd.f32 0.0, %v3581
      %v3583 = vpop.f32.mrb[0].mxu0
      %3584 = vmatprep.mubr.f32.mxu0 0.0
      %3585 = vmatmul.mubr.f32.gmra.mrb[0].mxu0 %v3132
      %v3586 = vpop.f32.mrb[0].mxu0
      %v3587 = vadd.f32 0.0, %v3586
      %v3588 = vpop.f32.mrb[0].mxu0
      %3589 = vmatprep.mubr.f32.mxu0 0.0
      %3590 = vmatmul.mubr.f32.gmra.mrb[0].mxu0 %v3134
      %v3591 = vpop.f32.mrb[0].mxu0
      %v3592 = vadd.f32 0.0, %v3591
      %v3593 = vpop.f32.mrb[0].mxu0
      %3594 = vmatprep.mubr.f32.mxu0 0.0
      %3595 = vmatmul.mubr.f32.gmra.mrb[0].mxu0 %v3136
      %v3596 = vpop.f32.mrb[0].mxu0
      %v3597 = vadd.f32 0.0, %v3596
      %v3598 = vpop.f32.mrb[0].mxu0
      %3599 = vmatprep.mubr.f32.mxu0 0.0
      %3600 = vmatmul.mubr.f32.gmra.mrb[0].mxu0 %v3138
      %v3601 = vpop.f32.mrb[0].mxu0
      %v3602 = vadd.f32 0.0, %v3601
      %v3603 = vpop.f32.mrb[0].mxu0
      %3604 = vmatprep.mubr.f32.mxu0 0.0
      %3605 = vmatmul.mubr.f32.gmra.mrb[0].mxu0 %v3140
      %v3606 = vpop.f32.mrb[0].mxu0
      %v3607 = vadd.f32 0.0, %v3606
      %v3608 = vpop.f32.mrb[0].mxu0
      %3609 = vmatprep.mubr.f32.mxu0 0.0
      %3610 = vmatmul.mubr.f32.gmra.mrb[0].mxu0 %v3142
      %v3611 = vpop.f32.mrb[0].mxu0
      %v3612 = vadd.f32 0.0, %v3611
      %v3613 = vpop.f32.mrb[0].mxu0
      %3614 = vmatprep.mubr.f32.mxu0 0.0
      %3615 = vmatmul.mubr.f32.gmra.mrb[0].mxu0 %v3510
      %v3616 = vpop.f32.mrb[0].mxu0
      %v3617 = vadd.f32 0.0, %v3616
      %v3618 = vpop.f32.mrb[0].mxu0
      %3619 = vdwg.mxu0
      %v3620 = vadd.f32 %v3497, %v3582
      %v3621 = vadd.f32 %v3498, %v3587
      %v3622 = vadd.f32 %v3499, %v3592
      %v3623 = vadd.f32 %v3500, %v3597
      %v3624 = vadd.f32 %v3501, %v3602
      %v3625 = vadd.f32 %v3502, %v3607
      %v3626 = vadd.f32 %v3503, %v3612
      %v3627 = vadd.f32 %v3504, %v3617
      %s3628 = scalar_lea.vmem %s3, 96
      %v3629 = vld [vmem:[%s3628] sm:$0xf]
      %v3631 = vsel %vm447, %v401, 0
      %v3634 = vsel %vm464, %v3629, 0
      %3636 = vmatprep.subr.mxu0 0.0
      %3637 = vmatpush1.msra.mxu0 %v3634
      %3638 = vmatprep.subr.mxu0 0.0
      %3639 = vmatpush1.msra.mxu0 0.0
      %3640 = vmatprep.subr.mxu0 0.0
      %3641 = vmatpush1.msra.mxu0 0.0
      %3642 = vmatprep.subr.mxu0 0.0
      %3643 = vmatpush1.msra.mxu0 0.0
      %3644 = vmatprep.subr.mxu0 0.0
      %3645 = vmatpush1.msra.mxu0 0.0
      %3646 = vmatprep.subr.mxu0 0.0
      %3647 = vmatpush1.msra.mxu0 0.0
      %3648 = vmatprep.subr.mxu0 0.0
      %3649 = vmatpush1.msra.mxu0 0.0
      %3650 = vmatprep.subr.mxu0 0.0
      %3651 = vmatpush1.msra.mxu0 0.0
      %3652 = vmatprep.subr.mxu0 0.0
      %3653 = vmatpush1.msra.mxu0 0.0
      %3654 = vmatprep.subr.mxu0 0.0
      %3655 = vmatpush1.msra.mxu0 0.0
      %3656 = vmatprep.subr.mxu0 0.0
      %3657 = vmatpush1.msra.mxu0 0.0
      %3658 = vmatprep.subr.mxu0 0.0
      %3659 = vmatpush1.msra.mxu0 0.0
      %3660 = vmatprep.subr.mxu0 0.0
      %3661 = vmatpush1.msra.mxu0 0.0
      %3662 = vmatprep.subr.mxu0 0.0
      %3663 = vmatpush1.msra.mxu0 0.0
      %3664 = vmatprep.subr.mxu0 0.0
      %3665 = vmatpush1.msra.mxu0 0.0
      %3666 = vmatprep.subr.mxu0 0.0
      %3667 = vmatpush1.msra.mxu0 0.0
      %3668 = vmatprep.subr.mxu0 0.0
      %3669 = vmatpush1.msra.mxu0 0.0
      %3670 = vmatprep.subr.mxu0 0.0
      %3671 = vmatpush1.msra.mxu0 0.0
      %3672 = vmatprep.subr.mxu0 0.0
      %3673 = vmatpush1.msra.mxu0 0.0
      %3674 = vmatprep.subr.mxu0 0.0
      %3675 = vmatpush1.msra.mxu0 0.0
      %3676 = vmatprep.subr.mxu0 0.0
      %3677 = vmatpush1.msra.mxu0 0.0
      %3678 = vmatprep.subr.mxu0 0.0
      %3679 = vmatpush1.msra.mxu0 0.0
      %3680 = vmatprep.subr.mxu0 0.0
      %3681 = vmatpush1.msra.mxu0 0.0
      %3682 = vmatprep.subr.mxu0 0.0
      %3683 = vmatpush1.msra.mxu0 0.0
      %3684 = vmatprep.subr.mxu0 0.0
      %3685 = vmatpush1.msra.mxu0 0.0
      %3686 = vmatprep.subr.mxu0 0.0
      %3687 = vmatpush1.msra.mxu0 0.0
      %3688 = vmatprep.subr.mxu0 0.0
      %3689 = vmatpush1.msra.mxu0 0.0
      %3690 = vmatprep.subr.mxu0 0.0
      %3691 = vmatpush1.msra.mxu0 0.0
      %3692 = vmatprep.subr.mxu0 0.0
      %3693 = vmatpush1.msra.mxu0 0.0
      %3694 = vmatprep.subr.mxu0 0.0
      %3695 = vmatpush1.msra.mxu0 0.0
      %3696 = vmatprep.subr.mxu0 0.0
      %3697 = vmatpush1.msra.mxu0 0.0
      %3698 = vmatprep.subr.mxu0 0.0
      %3699 = vmatpush1.msra.mxu0 0.0
      %3700 = vmatprep.mubr.f32.mxu0 0.0
      %3701 = vmatmul.mubr.f32.gmra.mrb[0].mxu0 %v2803
      %v3702 = vpop.f32.mrb[0].mxu0
      %v3703 = vadd.f32 0.0, %v3702
      %v3704 = vpop.f32.mrb[0].mxu0
      %3705 = vmatprep.mubr.f32.mxu0 0.0
      %3706 = vmatmul.mubr.f32.gmra.mrb[0].mxu0 %v2806
      %v3707 = vpop.f32.mrb[0].mxu0
      %v3708 = vadd.f32 0.0, %v3707
      %v3709 = vpop.f32.mrb[0].mxu0
      %3710 = vmatprep.mubr.f32.mxu0 0.0
      %3711 = vmatmul.mubr.f32.gmra.mrb[0].mxu0 %v2809
      %v3712 = vpop.f32.mrb[0].mxu0
      %v3713 = vadd.f32 0.0, %v3712
      %v3714 = vpop.f32.mrb[0].mxu0
      %3715 = vmatprep.mubr.f32.mxu0 0.0
      %3716 = vmatmul.mubr.f32.gmra.mrb[0].mxu0 %v2812
      %v3717 = vpop.f32.mrb[0].mxu0
      %v3718 = vadd.f32 0.0, %v3717
      %v3719 = vpop.f32.mrb[0].mxu0
      %3720 = vmatprep.mubr.f32.mxu0 0.0
      %3721 = vmatmul.mubr.f32.gmra.mrb[0].mxu0 %v2815
      %v3722 = vpop.f32.mrb[0].mxu0
      %v3723 = vadd.f32 0.0, %v3722
      %v3724 = vpop.f32.mrb[0].mxu0
      %3725 = vmatprep.mubr.f32.mxu0 0.0
      %3726 = vmatmul.mubr.f32.gmra.mrb[0].mxu0 %v2818
      %v3727 = vpop.f32.mrb[0].mxu0
      %v3728 = vadd.f32 0.0, %v3727
      %v3729 = vpop.f32.mrb[0].mxu0
      %3730 = vmatprep.mubr.f32.mxu0 0.0
      %3731 = vmatmul.mubr.f32.gmra.mrb[0].mxu0 %v3263
      %v3732 = vpop.f32.mrb[0].mxu0
      %v3733 = vadd.f32 0.0, %v3732
      %v3734 = vpop.f32.mrb[0].mxu0
      %3735 = vmatprep.mubr.f32.mxu0 0.0
      %3736 = vmatmul.mubr.f32.gmra.mrb[0].mxu0 %v3631
      %v3737 = vpop.f32.mrb[0].mxu0
      %v3738 = vadd.f32 0.0, %v3737
      %v3739 = vpop.f32.mrb[0].mxu0
      %3740 = vdwg.mxu0
      %v3741 = vadd.f32 %v3620, %v3703
      %v3742 = vadd.f32 %v3621, %v3708
      %v3743 = vadd.f32 %v3622, %v3713
      %v3744 = vadd.f32 %v3623, %v3718
      %v3745 = vadd.f32 %v3624, %v3723
      %v3746 = vadd.f32 %v3625, %v3728
      %v3747 = vadd.f32 %v3626, %v3733
      %v3748 = vadd.f32 %v3627, %v3738
      %v3750 = vrot.slane %v401, 1
      %v3751 = vrot.slane %v402, 1
      %v3752 = vsel %vm420, %v3750, %v3751
      %s3753 = scalar_lea.vmem %s3, 100
      %v3754 = vld [vmem:[%s3753] sm:$0xf]
      %v3755 = vsel %vm447, %v3752, 0
      %v3758 = vsel %vm464, %v3754, 0
      %3760 = vmatprep.subr.mxu0 0.0
      %3761 = vmatpush1.msra.mxu0 %v3758
      %3762 = vmatprep.subr.mxu0 0.0
      %3763 = vmatpush1.msra.mxu0 0.0
      %3764 = vmatprep.subr.mxu0 0.0
      %3765 = vmatpush1.msra.mxu0 0.0
      %3766 = vmatprep.subr.mxu0 0.0
      %3767 = vmatpush1.msra.mxu0 0.0
      %3768 = vmatprep.subr.mxu0 0.0
      %3769 = vmatpush1.msra.mxu0 0.0
      %3770 = vmatprep.subr.mxu0 0.0
      %3771 = vmatpush1.msra.mxu0 0.0
      %3772 = vmatprep.subr.mxu0 0.0
      %3773 = vmatpush1.msra.mxu0 0.0
      %3774 = vmatprep.subr.mxu0 0.0
      %3775 = vmatpush1.msra.mxu0 0.0
      %3776 = vmatprep.subr.mxu0 0.0
      %3777 = vmatpush1.msra.mxu0 0.0
      %3778 = vmatprep.subr.mxu0 0.0
      %3779 = vmatpush1.msra.mxu0 0.0
      %3780 = vmatprep.subr.mxu0 0.0
      %3781 = vmatpush1.msra.mxu0 0.0
      %3782 = vmatprep.subr.mxu0 0.0
      %3783 = vmatpush1.msra.mxu0 0.0
      %3784 = vmatprep.subr.mxu0 0.0
      %3785 = vmatpush1.msra.mxu0 0.0
      %3786 = vmatprep.subr.mxu0 0.0
      %3787 = vmatpush1.msra.mxu0 0.0
      %3788 = vmatprep.subr.mxu0 0.0
      %3789 = vmatpush1.msra.mxu0 0.0
      %3790 = vmatprep.subr.mxu0 0.0
      %3791 = vmatpush1.msra.mxu0 0.0
      %3792 = vmatprep.subr.mxu0 0.0
      %3793 = vmatpush1.msra.mxu0 0.0
      %3794 = vmatprep.subr.mxu0 0.0
      %3795 = vmatpush1.msra.mxu0 0.0
      %3796 = vmatprep.subr.mxu0 0.0
      %3797 = vmatpush1.msra.mxu0 0.0
      %3798 = vmatprep.subr.mxu0 0.0
      %3799 = vmatpush1.msra.mxu0 0.0
      %3800 = vmatprep.subr.mxu0 0.0
      %3801 = vmatpush1.msra.mxu0 0.0
      %3802 = vmatprep.subr.mxu0 0.0
      %3803 = vmatpush1.msra.mxu0 0.0
      %3804 = vmatprep.subr.mxu0 0.0
      %3805 = vmatpush1.msra.mxu0 0.0
      %3806 = vmatprep.subr.mxu0 0.0
      %3807 = vmatpush1.msra.mxu0 0.0
      %3808 = vmatprep.subr.mxu0 0.0
      %3809 = vmatpush1.msra.mxu0 0.0
      %3810 = vmatprep.subr.mxu0 0.0
      %3811 = vmatpush1.msra.mxu0 0.0
      %3812 = vmatprep.subr.mxu0 0.0
      %3813 = vmatpush1.msra.mxu0 0.0
      %3814 = vmatprep.subr.mxu0 0.0
      %3815 = vmatpush1.msra.mxu0 0.0
      %3816 = vmatprep.subr.mxu0 0.0
      %3817 = vmatpush1.msra.mxu0 0.0
      %3818 = vmatprep.subr.mxu0 0.0
      %3819 = vmatpush1.msra.mxu0 0.0
      %3820 = vmatprep.subr.mxu0 0.0
      %3821 = vmatpush1.msra.mxu0 0.0
      %3822 = vmatprep.subr.mxu0 0.0
      %3823 = vmatpush1.msra.mxu0 0.0
      %3824 = vmatprep.mubr.f32.mxu0 0.0
      %3825 = vmatmul.mubr.f32.gmra.mrb[0].mxu0 %v2974
      %v3826 = vpop.f32.mrb[0].mxu0
      %v3827 = vadd.f32 0.0, %v3826
      %v3828 = vpop.f32.mrb[0].mxu0
      %3829 = vmatprep.mubr.f32.mxu0 0.0
      %3830 = vmatmul.mubr.f32.gmra.mrb[0].mxu0 %v2976
      %v3831 = vpop.f32.mrb[0].mxu0
      %v3832 = vadd.f32 0.0, %v3831
      %v3833 = vpop.f32.mrb[0].mxu0
      %3834 = vmatprep.mubr.f32.mxu0 0.0
      %3835 = vmatmul.mubr.f32.gmra.mrb[0].mxu0 %v2978
      %v3836 = vpop.f32.mrb[0].mxu0
      %v3837 = vadd.f32 0.0, %v3836
      %v3838 = vpop.f32.mrb[0].mxu0
      %3839 = vmatprep.mubr.f32.mxu0 0.0
      %3840 = vmatmul.mubr.f32.gmra.mrb[0].mxu0 %v2980
      %v3841 = vpop.f32.mrb[0].mxu0
      %v3842 = vadd.f32 0.0, %v3841
      %v3843 = vpop.f32.mrb[0].mxu0
      %3844 = vmatprep.mubr.f32.mxu0 0.0
      %3845 = vmatmul.mubr.f32.gmra.mrb[0].mxu0 %v2982
      %v3846 = vpop.f32.mrb[0].mxu0
      %v3847 = vadd.f32 0.0, %v3846
      %v3848 = vpop.f32.mrb[0].mxu0
      %3849 = vmatprep.mubr.f32.mxu0 0.0
      %3850 = vmatmul.mubr.f32.gmra.mrb[0].mxu0 %v2984
      %v3851 = vpop.f32.mrb[0].mxu0
      %v3852 = vadd.f32 0.0, %v3851
      %v3853 = vpop.f32.mrb[0].mxu0
      %3854 = vmatprep.mubr.f32.mxu0 0.0
      %3855 = vmatmul.mubr.f32.gmra.mrb[0].mxu0 %v3387
      %v3856 = vpop.f32.mrb[0].mxu0
      %v3857 = vadd.f32 0.0, %v3856
      %v3858 = vpop.f32.mrb[0].mxu0
      %3859 = vmatprep.mubr.f32.mxu0 0.0
      %3860 = vmatmul.mubr.f32.gmra.mrb[0].mxu0 %v3755
      %v3861 = vpop.f32.mrb[0].mxu0
      %v3862 = vadd.f32 0.0, %v3861
      %v3863 = vpop.f32.mrb[0].mxu0
      %3864 = vdwg.mxu0
      %v3865 = vadd.f32 %v3741, %v3827
      %v3866 = vadd.f32 %v3742, %v3832
      %v3867 = vadd.f32 %v3743, %v3837
      %v3868 = vadd.f32 %v3744, %v3842
      %v3869 = vadd.f32 %v3745, %v3847
      %v3870 = vadd.f32 %v3746, %v3852
      %v3871 = vadd.f32 %v3747, %v3857
      %v3872 = vadd.f32 %v3748, %v3862
      %v3873 = vrot.slane %v401, 2
      %v3874 = vrot.slane %v402, 2
      %v3875 = vsel %vm697, %v3873, %v3874
      %s3876 = scalar_lea.vmem %s3, 104
      %v3877 = vld [vmem:[%s3876] sm:$0xf]
      %v3878 = vsel %vm447, %v3875, 0
      %v3881 = vsel %vm464, %v3877, 0
      %3883 = vmatprep.subr.mxu0 0.0
      %3884 = vmatpush1.msra.mxu0 %v3881
      %3885 = vmatprep.subr.mxu0 0.0
      %3886 = vmatpush1.msra.mxu0 0.0
      %3887 = vmatprep.subr.mxu0 0.0
      %3888 = vmatpush1.msra.mxu0 0.0
      %3889 = vmatprep.subr.mxu0 0.0
      %3890 = vmatpush1.msra.mxu0 0.0
      %3891 = vmatprep.subr.mxu0 0.0
      %3892 = vmatpush1.msra.mxu0 0.0
      %3893 = vmatprep.subr.mxu0 0.0
      %3894 = vmatpush1.msra.mxu0 0.0
      %3895 = vmatprep.subr.mxu0 0.0
      %3896 = vmatpush1.msra.mxu0 0.0
      %3897 = vmatprep.subr.mxu0 0.0
      %3898 = vmatpush1.msra.mxu0 0.0
      %3899 = vmatprep.subr.mxu0 0.0
      %3900 = vmatpush1.msra.mxu0 0.0
      %3901 = vmatprep.subr.mxu0 0.0
      %3902 = vmatpush1.msra.mxu0 0.0
      %3903 = vmatprep.subr.mxu0 0.0
      %3904 = vmatpush1.msra.mxu0 0.0
      %3905 = vmatprep.subr.mxu0 0.0
      %3906 = vmatpush1.msra.mxu0 0.0
      %3907 = vmatprep.subr.mxu0 0.0
      %3908 = vmatpush1.msra.mxu0 0.0
      %3909 = vmatprep.subr.mxu0 0.0
      %3910 = vmatpush1.msra.mxu0 0.0
      %3911 = vmatprep.subr.mxu0 0.0
      %3912 = vmatpush1.msra.mxu0 0.0
      %3913 = vmatprep.subr.mxu0 0.0
      %3914 = vmatpush1.msra.mxu0 0.0
      %3915 = vmatprep.subr.mxu0 0.0
      %3916 = vmatpush1.msra.mxu0 0.0
      %3917 = vmatprep.subr.mxu0 0.0
      %3918 = vmatpush1.msra.mxu0 0.0
      %3919 = vmatprep.subr.mxu0 0.0
      %3920 = vmatpush1.msra.mxu0 0.0
      %3921 = vmatprep.subr.mxu0 0.0
      %3922 = vmatpush1.msra.mxu0 0.0
      %3923 = vmatprep.subr.mxu0 0.0
      %3924 = vmatpush1.msra.mxu0 0.0
      %3925 = vmatprep.subr.mxu0 0.0
      %3926 = vmatpush1.msra.mxu0 0.0
      %3927 = vmatprep.subr.mxu0 0.0
      %3928 = vmatpush1.msra.mxu0 0.0
      %3929 = vmatprep.subr.mxu0 0.0
      %3930 = vmatpush1.msra.mxu0 0.0
      %3931 = vmatprep.subr.mxu0 0.0
      %3932 = vmatpush1.msra.mxu0 0.0
      %3933 = vmatprep.subr.mxu0 0.0
      %3934 = vmatpush1.msra.mxu0 0.0
      %3935 = vmatprep.subr.mxu0 0.0
      %3936 = vmatpush1.msra.mxu0 0.0
      %3937 = vmatprep.subr.mxu0 0.0
      %3938 = vmatpush1.msra.mxu0 0.0
      %3939 = vmatprep.subr.mxu0 0.0
      %3940 = vmatpush1.msra.mxu0 0.0
      %3941 = vmatprep.subr.mxu0 0.0
      %3942 = vmatpush1.msra.mxu0 0.0
      %3943 = vmatprep.subr.mxu0 0.0
      %3944 = vmatpush1.msra.mxu0 0.0
      %3945 = vmatprep.subr.mxu0 0.0
      %3946 = vmatpush1.msra.mxu0 0.0
      %3947 = vmatprep.mubr.f32.mxu0 0.0
      %3948 = vmatmul.mubr.f32.gmra.mrb[0].mxu0 %v3132
      %v3949 = vpop.f32.mrb[0].mxu0
      %v3950 = vadd.f32 0.0, %v3949
      %v3951 = vpop.f32.mrb[0].mxu0
      %3952 = vmatprep.mubr.f32.mxu0 0.0
      %3953 = vmatmul.mubr.f32.gmra.mrb[0].mxu0 %v3134
      %v3954 = vpop.f32.mrb[0].mxu0
      %v3955 = vadd.f32 0.0, %v3954
      %v3956 = vpop.f32.mrb[0].mxu0
      %3957 = vmatprep.mubr.f32.mxu0 0.0
      %3958 = vmatmul.mubr.f32.gmra.mrb[0].mxu0 %v3136
      %v3959 = vpop.f32.mrb[0].mxu0
      %v3960 = vadd.f32 0.0, %v3959
      %v3961 = vpop.f32.mrb[0].mxu0
      %3962 = vmatprep.mubr.f32.mxu0 0.0
      %3963 = vmatmul.mubr.f32.gmra.mrb[0].mxu0 %v3138
      %v3964 = vpop.f32.mrb[0].mxu0
      %v3965 = vadd.f32 0.0, %v3964
      %v3966 = vpop.f32.mrb[0].mxu0
      %3967 = vmatprep.mubr.f32.mxu0 0.0
      %3968 = vmatmul.mubr.f32.gmra.mrb[0].mxu0 %v3140
      %v3969 = vpop.f32.mrb[0].mxu0
      %v3970 = vadd.f32 0.0, %v3969
      %v3971 = vpop.f32.mrb[0].mxu0
      %3972 = vmatprep.mubr.f32.mxu0 0.0
      %3973 = vmatmul.mubr.f32.gmra.mrb[0].mxu0 %v3142
      %v3974 = vpop.f32.mrb[0].mxu0
      %v3975 = vadd.f32 0.0, %v3974
      %v3976 = vpop.f32.mrb[0].mxu0
      %3977 = vmatprep.mubr.f32.mxu0 0.0
      %3978 = vmatmul.mubr.f32.gmra.mrb[0].mxu0 %v3510
      %v3979 = vpop.f32.mrb[0].mxu0
      %v3980 = vadd.f32 0.0, %v3979
      %v3981 = vpop.f32.mrb[0].mxu0
      %3982 = vmatprep.mubr.f32.mxu0 0.0
      %3983 = vmatmul.mubr.f32.gmra.mrb[0].mxu0 %v3878
      %v3984 = vpop.f32.mrb[0].mxu0
      %v3985 = vadd.f32 0.0, %v3984
      %v3986 = vpop.f32.mrb[0].mxu0
      %3987 = vdwg.mxu0
      %v3988 = vadd.f32 %v3865, %v3950
      %v3989 = vadd.f32 %v3866, %v3955
      %v3990 = vadd.f32 %v3867, %v3960
      %v3991 = vadd.f32 %v3868, %v3965
      %v3992 = vadd.f32 %v3869, %v3970
      %v3993 = vadd.f32 %v3870, %v3975
      %v3994 = vadd.f32 %v3871, %v3980
      %v3995 = vadd.f32 %v3872, %v3985
      %v3996 = vld [vmem:[%s4] sm:$0x1]
      %v3998 = vlaneseq
      %v3999 = vshrl.u32 %v3998, 7
      %v4000 = vsub.s32 0, %v3999
      %v4001 = vrot.slane %v3996, %v4000
      %v4003 = vadd.f32 %v3988, %v4001
      %v4004 = vadd.f32 %v3989, %v4001
      %v4005 = vadd.f32 %v3990, %v4001
      %v4006 = vadd.f32 %v3991, %v4001
      %v4007 = vadd.f32 %v3992, %v4001
      %v4008 = vadd.f32 %v3993, %v4001
      %v4009 = vadd.f32 %v3994, %v4001
      %v4010 = vadd.f32 %v3995, %v4001
      %v4011 = vmax.f32 %v4003, 0.0
      %v4012 = vmax.f32 %v4004, 0.0
      %v4013 = vmax.f32 %v4005, 0.0
      %v4014 = vmax.f32 %v4006, 0.0
      %v4015 = vmax.f32 %v4007, 0.0
      %v4016 = vmax.f32 %v4008, 0.0
      %v4017 = vmax.f32 %v4009, 0.0
      %v4018 = vmax.f32 %v4010, 0.0
      %4019 = vst.msk [vmem:[%s342] sm:$0xff] %vm447, %v4011
      %4020 = vst.msk [vmem:[%s342 + $0x8] sm:$0xff] %vm447, %v4012
      %4021 = vst.msk [vmem:[%s342 + $0x10] sm:$0xff] %vm447, %v4013
      %4022 = vst.msk [vmem:[%s342 + $0x18] sm:$0xff] %vm447, %v4014
      %4023 = vst.msk [vmem:[%s342 + $0x20] sm:$0xff] %vm447, %v4015
      %4024 = vst.msk [vmem:[%s342 + $0x28] sm:$0xff] %vm447, %v4016
      %4025 = vst.msk [vmem:[%s342 + $0x30] sm:$0xff] %vm447, %v4017
      %4026 = vst.msk [vmem:[%s342 + $0x38] sm:$0xff] %vm447, %v4018
      %p4027 = scmp.lt.s32.totalorder %s20, 1
      %s4028 = scalar_select %p4027, %s20, 1
      %p4029 = scmp.lt.s32.totalorder %s21, 7
      %s4030 = scalar_select %p4029, %s21, 7
      %s4031 = smul.addr %s4030, 8
      %s4032 = smul.addr %s4028, 64
      %s4033 = sadd.s32 %s4031, %s4032
      %s4034 = smul.addr %s4033, 8
      %s4035 = scalar_lea.vmem %s5, %s4034
      // Predicated region
      $region41: #{encoder_forward.4} parent=39 // pred_check
        %p4036 = pneg %p178
      $region42: #{encoder_forward.4} parent=39 // pred_check_branch
        %4038 = sbr.rel (%p4036) target = $region44
      $region43: #{encoder_forward.4} parent=39 // pred_region
        _
      $region44: #{encoder_forward.4} parent=39 // pred_fallthru
        _
    $region40: #{encoder_forward.4} parent=5 // pred_fallthru
      _
    %p4039 = scmp.le.s32.totalorder 2, %s11
    // Predicated region
    $region45: #{encoder_forward.4} parent=5 // pred_check
      %p4040 = pneg %p4039
    $region46: #{encoder_forward.4} parent=5 // pred_check_branch
      %4042 = sbr.rel (%p4040) target = $region48
    $region47: #{encoder_forward.4} parent=5 // pred_region
      %s4043 = ssub.s32 %s11, 2
      // Predicated region
      $region49: #{encoder_forward.4} parent=47 // pred_check
        %p4044 = pneg %p184
      $region50: #{encoder_forward.4} parent=47 // pred_check_branch
        %4046 = sbr.rel (%p4044) target = $region52
      $region51: #{encoder_forward.4} parent=47 // pred_region
        %p4047 = scmp.lt.s32.totalorder %s22, 1
        %s4048 = scalar_select %p4047, %s22, 1
        %p4049 = scmp.lt.s32.totalorder %s23, 7
        %s4050 = scalar_select %p4049, %s23, 7
        %s4051 = smul.addr %s4050, 8
        %s4052 = smul.addr %s4048, 64
        %s4053 = sadd.s32 %s4051, %s4052
        %s4054 = smul.addr %s4053, 8
        %s4055 = scalar_lea.vmem %s5, %s4054
      $region52: #{encoder_forward.4} parent=47 // pred_fallthru
        _
    $region48: #{encoder_forward.4} parent=5 // pred_fallthru
      _
  $region6: #{encoder_forward.4} parent=0 // loop_footer
    %s15 = sadd.s32 1, %s11
  $region7: #{encoder_forward.4} parent=0 // loop_footer_branch
    %10 = sbr.rel target = $region3
  $region8: #{encoder_forward.4} parent=0 // loop_exit
    _

// kernel: encoder_forward.5
$region0: #{encoder_forward.5}
  #allocation0 [shape = 'u32[]', space=smem, size = 0x4, offset = 0x4, fixed_abs, tag = 'smem constant byte address 0x4 - core index']
  #allocation1 [shape = 'u32[144,128]{1,0:T(1,128)}', space=vmem, size = 0x12000, scoped, tag = 'internal scratch']
  %s0 = inlined_call_operand.vmem [shape: f32[2,10,10,10,4], index: 0, kind: input, shape index: {}, may-alias: {0,1,2}]
  %s1 = inlined_call_operand.vmem [shape: f32[2,10,10,10,4], index: 1, kind: input, shape index: {}, may-alias: {0,1,2}]
  %s2 = inlined_call_operand.vmem [shape: f32[2,10,10,10,4], index: 2, kind: input, shape index: {}, may-alias: {0,1,2}]
  %s3 = inlined_call_operand.vmem [shape: f32[3,3,3,4,8], index: 3, kind: input, shape index: {}]
  %s4 = inlined_call_operand.vmem [shape: f32[1,8], index: 4, kind: input, shape index: {}]
  %s5 = inlined_call_operand.vmem [shape: f32[2,8,8,8,8], index: 5, kind: output, shape index: {}]
  %s6 = sld [smem:[#allocation0]]
  $region53: #{encoder_forward.5} parent=0
    _
  %s8 = ssub.s32 1, %s6
  %s9 = scalar_select 0, %s8, %s6
  loop: start=0, step=1, limit=18
  $region2: #{encoder_forward.5} parent=0 // loop_pre_header
    _
  $region3: #{encoder_forward.5} parent=0 // loop_header
    %s11 = sphi 0, %s15
    %p12 = scmp.ge.s32.totalorder %s11, 18
    %s18 = sphi 0, %s30
    %s19 = sphi 0, %s26
    %s20 = sphi 0, %s18
    %s21 = sphi 0, %s19
    %s22 = sphi 0, %s20
    %s23 = sphi 0, %s21
    %s35 = sphi 0, %s37
    %s38 = sphi 0, %s35
    %s39 = sphi 0, %s38
    %s55 = sphi 0, %s39
    %s65 = sphi 0, %s67
    %s68 = sphi 0, %s65
    %s69 = sphi 0, %s68
    %s85 = sphi 0, %s69
    %s95 = sphi 0, %s97
    %s98 = sphi 0, %s95
    %s99 = sphi 0, %s98
    %s115 = sphi 0, %s99
    %s119 = sphi 0, %s119
    %s121 = sphi 0, %s119
    %s122 = sphi 0, %s121
    %s136 = sphi 0, %s122
    %s140 = sphi 0, %s140
    %s142 = sphi 0, %s140
    %s143 = sphi 0, %s142
    %s157 = sphi 0, %s143
    %s165 = sphi 0, %s167
    %s168 = sphi 0, %s165
    %s169 = sphi 0, %s168
    %s185 = sphi 0, %s169
  $region4: #{encoder_forward.5} parent=0 // loop_header_branch
    %14 = sbr.rel (%p12) target = $region8
  $region5: #{encoder_forward.5} parent=0 // loop_body
    %s16 = ssub.s32 %s11, 1
    %s17 = ssub.s32 %s11, 2
    %s24 = sadd.s32 1, %s19
    %p25 = scmp.ge.s32.totalorder %s24, 8
    %s26 = scalar_select %p25, 0, %s24
    %s27 = sadd.s32 1, %s18
    %s28 = scalar_select %p25, %s27, %s18
    %p29 = scmp.ge.s32.totalorder %s28, 2
    %s30 = scalar_select %p29, 0, %s28
    %s31 = ssub.s32 %s18, %s30
    %s32 = ssub.s32 %s19, %s26
    %s33 = sor.u32 %s31, %s32
    %p34 = scmp.eq.s32.totalorder %s33, 0
    %s36 = sadd.s32 %s35, 1
    %s37 = scalar_select %p34, %s35, %s36
    %p40 = pneg %p34
    %p41 = scmp.eq.s32.totalorder %s11, 15
    %p42 = por %p40, %p41
    %p43 = scmp.ne.s32.totalorder %s35, %s38
    %p44 = scmp.eq.s32.totalorder %s11, 0
    %p45 = por %p43, %p44
    %p46 = scmp.ne.s32.totalorder %s35, %s38
    %p47 = scmp.eq.s32.totalorder %s16, 15
    %p48 = por %p46, %p47
    %p49 = scmp.ne.s32.totalorder %s38, %s39
    %p50 = scmp.eq.s32.totalorder %s16, 0
    %p51 = por %p49, %p50
    %p52 = scmp.ne.s32.totalorder %s38, %s39
    %p53 = scmp.eq.s32.totalorder %s17, 15
    %p54 = por %p52, %p53
    %p56 = scmp.ne.s32.totalorder %s39, %s55
    %p57 = scmp.eq.s32.totalorder %s17, 0
    %p58 = por %p56, %p57
    %s59 = sadd.s32 %s19, 1
    %s60 = sadd.s32 %s26, 1
    %s61 = ssub.s32 %s18, %s30
    %s62 = ssub.s32 %s59, %s60
    %s63 = sor.u32 %s61, %s62
    %p64 = scmp.eq.s32.totalorder %s63, 0
    %s66 = sadd.s32 %s65, 1
    %s67 = scalar_select %p64, %s65, %s66
    %p70 = pneg %p64
    %p71 = scmp.eq.s32.totalorder %s11, 15
    %p72 = por %p70, %p71
    %p73 = scmp.ne.s32.totalorder %s65, %s68
    %p74 = scmp.eq.s32.totalorder %s11, 0
    %p75 = por %p73, %p74
    %p76 = scmp.ne.s32.totalorder %s65, %s68
    %p77 = scmp.eq.s32.totalorder %s16, 15
    %p78 = por %p76, %p77
    %p79 = scmp.ne.s32.totalorder %s68, %s69
    %p80 = scmp.eq.s32.totalorder %s16, 0
    %p81 = por %p79, %p80
    %p82 = scmp.ne.s32.totalorder %s68, %s69
    %p83 = scmp.eq.s32.totalorder %s17, 15
    %p84 = por %p82, %p83
    %p86 = scmp.ne.s32.totalorder %s69, %s85
    %p87 = scmp.eq.s32.totalorder %s17, 0
    %p88 = por %p86, %p87
    %s89 = sadd.s32 %s19, 2
    %s90 = sadd.s32 %s26, 2
    %s91 = ssub.s32 %s18, %s30
    %s92 = ssub.s32 %s89, %s90
    %s93 = sor.u32 %s91, %s92
    %p94 = scmp.eq.s32.totalorder %s93, 0
    %s96 = sadd.s32 %s95, 1
    %s97 = scalar_select %p94, %s95, %s96
    %p100 = pneg %p94
    %p101 = scmp.eq.s32.totalorder %s11, 15
    %p102 = por %p100, %p101
    %p103 = scmp.ne.s32.totalorder %s95, %s98
    %p104 = scmp.eq.s32.totalorder %s11, 0
    %p105 = por %p103, %p104
    %p106 = scmp.ne.s32.totalorder %s95, %s98
    %p107 = scmp.eq.s32.totalorder %s16, 15
    %p108 = por %p106, %p107
    %p109 = scmp.ne.s32.totalorder %s98, %s99
    %p110 = scmp.eq.s32.totalorder %s16, 0
    %p111 = por %p109, %p110
    %p112 = scmp.ne.s32.totalorder %s98, %s99
    %p113 = scmp.eq.s32.totalorder %s17, 15
    %p114 = por %p112, %p113
    %p116 = scmp.ne.s32.totalorder %s99, %s115
    %p117 = scmp.eq.s32.totalorder %s17, 0
    %p118 = por %p116, %p117
    %s120 = sadd.s32 %s119, 1
    %p123 = scmp.eq.s32.totalorder %s11, 15
    %p124 = scmp.ne.s32.totalorder %s119, %s121
    %p125 = scmp.eq.s32.totalorder %s11, 0
    %p126 = por %p124, %p125
    %p127 = scmp.ne.s32.totalorder %s119, %s121
    %p128 = scmp.eq.s32.totalorder %s16, 15
    %p129 = por %p127, %p128
    %p130 = scmp.ne.s32.totalorder %s121, %s122
    %p131 = scmp.eq.s32.totalorder %s16, 0
    %p132 = por %p130, %p131
    %p133 = scmp.ne.s32.totalorder %s121, %s122
    %p134 = scmp.eq.s32.totalorder %s17, 15
    %p135 = por %p133, %p134
    %p137 = scmp.ne.s32.totalorder %s122, %s136
    %p138 = scmp.eq.s32.totalorder %s17, 0
    %p139 = por %p137, %p138
    %s141 = sadd.s32 %s140, 1
    %p144 = scmp.eq.s32.totalorder %s11, 15
    %p145 = scmp.ne.s32.totalorder %s140, %s142
    %p146 = scmp.eq.s32.totalorder %s11, 0
    %p147 = por %p145, %p146
    %p148 = scmp.ne.s32.totalorder %s140, %s142
    %p149 = scmp.eq.s32.totalorder %s16, 15
    %p150 = por %p148, %p149
    %p151 = scmp.ne.s32.totalorder %s142, %s143
    %p152 = scmp.eq.s32.totalorder %s16, 0
    %p153 = por %p151, %p152
    %p154 = scmp.ne.s32.totalorder %s142, %s143
    %p155 = scmp.eq.s32.totalorder %s17, 15
    %p156 = por %p154, %p155
    %p158 = scmp.ne.s32.totalorder %s143, %s157
    %p159 = scmp.eq.s32.totalorder %s17, 0
    %p160 = por %p158, %p159
    %s161 = ssub.s32 %s18, %s30
    %s162 = ssub.s32 %s19, %s26
    %s163 = sor.u32 %s161, %s162
    %p164 = scmp.eq.s32.totalorder %s163, 0
    %s166 = sadd.s32 %s165, 1
    %s167 = scalar_select %p164, %s165, %s166
    %p170 = pneg %p164
    %p171 = scmp.eq.s32.totalorder %s11, 15
    %p172 = por %p170, %p171
    %p173 = scmp.ne.s32.totalorder %s165, %s168
    %p174 = scmp.eq.s32.totalorder %s11, 0
    %p175 = por %p173, %p174
    %p176 = scmp.ne.s32.totalorder %s165, %s168
    %p177 = scmp.eq.s32.totalorder %s16, 15
    %p178 = por %p176, %p177
    %p179 = scmp.ne.s32.totalorder %s168, %s169
    %p180 = scmp.eq.s32.totalorder %s16, 0
    %p181 = por %p179, %p180
    %p182 = scmp.ne.s32.totalorder %s168, %s169
    %p183 = scmp.eq.s32.totalorder %s17, 15
    %p184 = por %p182, %p183
    %p186 = scmp.ne.s32.totalorder %s169, %s185
    %p187 = scmp.eq.s32.totalorder %s17, 0
    %p188 = por %p186, %p187
    %p189 = scmp.le.s32.totalorder 1, %s11
    %p190 = scmp.lt.s32.totalorder %s11, 17
    %p191 = pnand %p189, %p190
    %p192 = pneg %p191
    // Predicated region
    $region9: #{encoder_forward.5} parent=5 // pred_check
      _
    $region10: #{encoder_forward.5} parent=5 // pred_check_branch
      %194 = sbr.rel (%p191) target = $region12
    $region11: #{encoder_forward.5} parent=5 // pred_region
      %s195 = ssub.s32 %s11, 1
      // Predicated region
      $region13: #{encoder_forward.5} parent=11 // pred_check
        %p196 = pneg %p132
      $region14: #{encoder_forward.5} parent=11 // pred_check_branch
        %198 = sbr.rel (%p196) target = $region16
      $region15: #{encoder_forward.5} parent=11 // pred_region
        _
      $region16: #{encoder_forward.5} parent=11 // pred_fallthru
        _
      // Predicated region
      $region17: #{encoder_forward.5} parent=11 // pred_check
        %p199 = pneg %p153
      $region18: #{encoder_forward.5} parent=11 // pred_check_branch
        %201 = sbr.rel (%p199) target = $region20
      $region19: #{encoder_forward.5} parent=11 // pred_region
        _
      $region20: #{encoder_forward.5} parent=11 // pred_fallthru
        _
    $region12: #{encoder_forward.5} parent=5 // pred_fallthru
      _
    %p202 = scmp.lt.s32.totalorder %s11, 16
    // Predicated region
    $region21: #{encoder_forward.5} parent=5 // pred_check
      %p203 = pneg %p202
    $region22: #{encoder_forward.5} parent=5 // pred_check_branch
      %205 = sbr.rel (%p203) target = $region24
    $region23: #{encoder_forward.5} parent=5 // pred_region
      // Predicated region
      $region25: #{encoder_forward.5} parent=23 // pred_check
        %p206 = pneg %p45
      $region26: #{encoder_forward.5} parent=23 // pred_check_branch
        %208 = sbr.rel (%p206) target = $region28
      $region27: #{encoder_forward.5} parent=23 // pred_region
        %p209 = scmp.lt.s32.totalorder %s18, 1
        %s210 = scalar_select %p209, %s18, 1
        %p211 = scmp.lt.s32.totalorder %s19, 9
        %s212 = scalar_select %p211, %s19, 9
        %s213 = smul.addr %s212, 20
        %s214 = smul.addr %s210, 200
        %s215 = sadd.s32 %s213, %s214
        %s216 = smul.addr %s215, 8
        %s217 = scalar_lea.vmem %s0, %s216
      $region28: #{encoder_forward.5} parent=23 // pred_fallthru
        _
      // Predicated region
      $region29: #{encoder_forward.5} parent=23 // pred_check
        %p218 = pneg %p75
      $region30: #{encoder_forward.5} parent=23 // pred_check_branch
        %220 = sbr.rel (%p218) target = $region32
      $region31: #{encoder_forward.5} parent=23 // pred_region
        %s221 = sadd.s32 %s19, 1
        %p222 = scmp.lt.s32.totalorder %s18, 1
        %s223 = scalar_select %p222, %s18, 1
        %p224 = scmp.lt.s32.totalorder %s221, 9
        %s225 = scalar_select %p224, %s221, 9
        %s226 = smul.addr %s225, 20
        %s227 = smul.addr %s223, 200
        %s228 = sadd.s32 %s226, %s227
        %s229 = smul.addr %s228, 8
        %s230 = scalar_lea.vmem %s1, %s229
        %s231 = sadd.s32 %s19, 1
      $region32: #{encoder_forward.5} parent=23 // pred_fallthru
        _
      // Predicated region
      $region33: #{encoder_forward.5} parent=23 // pred_check
        %p232 = pneg %p105
      $region34: #{encoder_forward.5} parent=23 // pred_check_branch
        %234 = sbr.rel (%p232) target = $region36
      $region35: #{encoder_forward.5} parent=23 // pred_region
        %s235 = sadd.s32 %s19, 2
        %p236 = scmp.lt.s32.totalorder %s18, 1
        %s237 = scalar_select %p236, %s18, 1
        %p238 = scmp.lt.s32.totalorder %s235, 9
        %s239 = scalar_select %p238, %s235, 9
        %s240 = smul.addr %s239, 20
        %s241 = smul.addr %s237, 200
        %s242 = sadd.s32 %s240, %s241
        %s243 = smul.addr %s242, 8
        %s244 = scalar_lea.vmem %s2, %s243
        %s245 = sadd.s32 %s19, 2
      $region36: #{encoder_forward.5} parent=23 // pred_fallthru
        _
    $region24: #{encoder_forward.5} parent=5 // pred_fallthru
      _
    %p246 = scmp.le.s32.totalorder 1, %s11
    %p247 = scmp.lt.s32.totalorder %s11, 17
    %p248 = pnand %p246, %p247
    %p249 = pneg %p248
    // Predicated region
    $region37: #{encoder_forward.5} parent=5 // pred_check
      _
    $region38: #{encoder_forward.5} parent=5 // pred_check_branch
      %251 = sbr.rel (%p248) target = $region40
    $region39: #{encoder_forward.5} parent=5 // pred_region
      %s252 = ssub.s32 %s11, 1
      %p253 = scmp.lt.s32.totalorder %s20, 1
      %s254 = scalar_select %p253, %s20, 1
      %p255 = scmp.lt.s32.totalorder %s21, 9
      %s256 = scalar_select %p255, %s21, 9
      %s257 = smul.addr %s256, 20
      %s258 = smul.addr %s254, 200
      %s259 = sadd.s32 %s257, %s258
      %s260 = smul.addr %s259, 8
      %s261 = scalar_lea.vmem %s0, %s260
      %p262 = pneg %p51
      %p263 = pneg %p48
      %s264 = sadd.s32 %s21, 1
      %p265 = scmp.lt.s32.totalorder %s20, 1
      %s266 = scalar_select %p265, %s20, 1
      %p267 = scmp.lt.s32.totalorder %s264, 9
      %s268 = scalar_select %p267, %s264, 9
      %s269 = smul.addr %s268, 20
      %s270 = smul.addr %s266, 200
      %s271 = sadd.s32 %s269, %s270
      %s272 = smul.addr %s271, 8
      %s273 = scalar_lea.vmem %s1, %s272
      %p274 = pneg %p81
      %p275 = pneg %p78
      %s276 = sadd.s32 %s21, 2
      %p277 = scmp.lt.s32.totalorder %s20, 1
      %s278 = scalar_select %p277, %s20, 1
      %p279 = scmp.lt.s32.totalorder %s276, 9
      %s280 = scalar_select %p279, %s276, 9
      %s281 = smul.addr %s280, 20
      %s282 = smul.addr %s278, 200
      %s283 = sadd.s32 %s281, %s282
      %s284 = smul.addr %s283, 8
      %s285 = scalar_lea.vmem %s2, %s284
      %p286 = pneg %p111
      %p287 = pneg %p108
      %p288 = pneg %p132
      %p289 = pneg %p129
      %p290 = pneg %p153
      %p291 = pneg %p150
      %p292 = pneg %p181
      %p293 = pneg %p178
      %p294 = scmp.lt.s32.totalorder %s20, 1
      %s295 = scalar_select %p294, %s20, 1
      %p296 = scmp.lt.s32.totalorder %s21, 7
      %s297 = scalar_select %p296, %s21, 7
      %s298 = smul.addr %s297, 8
      %s299 = smul.addr %s295, 64
      %s300 = sadd.s32 %s298, %s299
      %s301 = smul.addr %s300, 8
      %s302 = scalar_lea.vmem %s5, %s301
      %p303 = scmp.lt.s32.totalorder %s20, 1
      %s304 = scalar_select %p303, %s20, 1
      %p305 = scmp.lt.s32.totalorder %s21, 9
      %s306 = scalar_select %p305, %s21, 9
      %s307 = smul.addr %s306, 20
      %s308 = smul.addr %s304, 200
      %s309 = sadd.s32 %s307, %s308
      %s310 = smul.addr %s309, 8
      %s311 = scalar_lea.vmem %s0, %s310
      %s312 = sadd.s32 %s21, 1
      %p313 = scmp.lt.s32.totalorder %s20, 1
      %s314 = scalar_select %p313, %s20, 1
      %p315 = scmp.lt.s32.totalorder %s312, 9
      %s316 = scalar_select %p315, %s312, 9
      %s317 = smul.addr %s316, 20
      %s318 = smul.addr %s314, 200
      %s319 = sadd.s32 %s317, %s318
      %s320 = smul.addr %s319, 8
      %s321 = scalar_lea.vmem %s1, %s320
      %s322 = sadd.s32 %s21, 1
      %s323 = sadd.s32 %s21, 2
      %p324 = scmp.lt.s32.totalorder %s20, 1
      %s325 = scalar_select %p324, %s20, 1
      %p326 = scmp.lt.s32.totalorder %s323, 9
      %s327 = scalar_select %p326, %s323, 9
      %s328 = smul.addr %s327, 20
      %s329 = smul.addr %s325, 200
      %s330 = sadd.s32 %s328, %s329
      %s331 = smul.addr %s330, 8
      %s332 = scalar_lea.vmem %s2, %s331
      %s333 = sadd.s32 %s21, 2
      %p334 = scmp.lt.s32.totalorder %s20, 1
      %s335 = scalar_select %p334, %s20, 1
      %p336 = scmp.lt.s32.totalorder %s21, 7
      %s337 = scalar_select %p336, %s21, 7
      %s338 = smul.addr %s337, 8
      %s339 = smul.addr %s335, 64
      %s340 = sadd.s32 %s338, %s339
      %s341 = smul.addr %s340, 8
      %s342 = scalar_lea.vmem %s5, %s341
      %v343 = vld [vmem:[%s311] sm:$0xff]
      %v344 = vld [vmem:[%s311 + $0x8] sm:$0x3]
      %v345 = vld [vmem:[%s311 + $0x10] sm:$0xff]
      %v346 = vld [vmem:[%s311 + $0x18] sm:$0x3]
      %v347 = vld [vmem:[%s311 + $0x20] sm:$0xff]
      %v348 = vld [vmem:[%s311 + $0x28] sm:$0x3]
      %v349 = vld [vmem:[%s311 + $0x30] sm:$0xff]
      %v350 = vld [vmem:[%s311 + $0x38] sm:$0x3]
      %v351 = vld [vmem:[%s311 + $0x40] sm:$0xff]
      %v352 = vld [vmem:[%s311 + $0x48] sm:$0x3]
      %v353 = vld [vmem:[%s311 + $0x50] sm:$0xff]
      %v354 = vld [vmem:[%s311 + $0x58] sm:$0x3]
      %v355 = vld [vmem:[%s311 + $0x60] sm:$0xff]
      %v356 = vld [vmem:[%s311 + $0x68] sm:$0x3]
      %v357 = vld [vmem:[%s311 + $0x70] sm:$0xff]
      %v358 = vld [vmem:[%s311 + $0x78] sm:$0x3]
      %v359 = vld [vmem:[%s311 + $0x80] sm:$0xff]
      %v360 = vld [vmem:[%s311 + $0x88] sm:$0x3]
      %v361 = vld [vmem:[%s311 + $0x90] sm:$0xff]
      %v362 = vld [vmem:[%s311 + $0x98] sm:$0x3]
      %v363 = vld [vmem:[%s321] sm:$0xff]
      %v364 = vld [vmem:[%s321 + $0x8] sm:$0x3]
      %v365 = vld [vmem:[%s321 + $0x10] sm:$0xff]
      %v366 = vld [vmem:[%s321 + $0x18] sm:$0x3]
      %v367 = vld [vmem:[%s321 + $0x20] sm:$0xff]
      %v368 = vld [vmem:[%s321 + $0x28] sm:$0x3]
      %v369 = vld [vmem:[%s321 + $0x30] sm:$0xff]
      %v370 = vld [vmem:[%s321 + $0x38] sm:$0x3]
      %v371 = vld [vmem:[%s321 + $0x40] sm:$0xff]
      %v372 = vld [vmem:[%s321 + $0x48] sm:$0x3]
      %v373 = vld [vmem:[%s321 + $0x50] sm:$0xff]
      %v374 = vld [vmem:[%s321 + $0x58] sm:$0x3]
      %v375 = vld [vmem:[%s321 + $0x60] sm:$0xff]
      %v376 = vld [vmem:[%s321 + $0x68] sm:$0x3]
      %v377 = vld [vmem:[%s321 + $0x70] sm:$0xff]
      %v378 = vld [vmem:[%s321 + $0x78] sm:$0x3]
      %v379 = vld [vmem:[%s321 + $0x80] sm:$0xff]
      %v380 = vld [vmem:[%s321 + $0x88] sm:$0x3]
      %v381 = vld [vmem:[%s321 + $0x90] sm:$0xff]
      %v382 = vld [vmem:[%s321 + $0x98] sm:$0x3]
      %v383 = vld [vmem:[%s332] sm:$0xff]
      %v384 = vld [vmem:[%s332 + $0x8] sm:$0x3]
      %v385 = vld [vmem:[%s332 + $0x10] sm:$0xff]
      %v386 = vld [vmem:[%s332 + $0x18] sm:$0x3]
      %v387 = vld [vmem:[%s332 + $0x20] sm:$0xff]
      %v388 = vld [vmem:[%s332 + $0x28] sm:$0x3]
      %v389 = vld [vmem:[%s332 + $0x30] sm:$0xff]
      %v390 = vld [vmem:[%s332 + $0x38] sm:$0x3]
      %v391 = vld [vmem:[%s332 + $0x40] sm:$0xff]
      %v392 = vld [vmem:[%s332 + $0x48] sm:$0x3]
      %v393 = vld [vmem:[%s332 + $0x50] sm:$0xff]
      %v394 = vld [vmem:[%s332 + $0x58] sm:$0x3]
      %v395 = vld [vmem:[%s332 + $0x60] sm:$0xff]
      %v396 = vld [vmem:[%s332 + $0x68] sm:$0x3]
      %v397 = vld [vmem:[%s332 + $0x70] sm:$0xff]
      %v398 = vld [vmem:[%s332 + $0x78] sm:$0x3]
      %v399 = vld [vmem:[%s332 + $0x80] sm:$0xff]
      %v400 = vld [vmem:[%s332 + $0x88] sm:$0x3]
      %v401 = vld [vmem:[%s332 + $0x90] sm:$0xff]
      %v402 = vld [vmem:[%s332 + $0x98] sm:$0x3]
      %v403 = vld [vmem:[%s3] sm:$0xf]
      %vm420 = vcmask 1046528
      %v421 = vrot.slane %v343, 1
      %v422 = vrot.slane %v344, 1
      %v423 = vsel %vm420, %v421, %v422
      %v424 = vrot.slane %v345, 1
      %v425 = vrot.slane %v346, 1
      %v426 = vsel %vm420, %v424, %v425
      %v427 = vrot.slane %v347, 1
      %v428 = vrot.slane %v348, 1
      %v429 = vsel %vm420, %v427, %v428
      %v430 = vrot.slane %v349, 1
      %v431 = vrot.slane %v350, 1
      %v432 = vsel %vm420, %v430, %v431
      %v433 = vrot.slane %v351, 1
      %v434 = vrot.slane %v352, 1
      %v435 = vsel %vm420, %v433, %v434
      %v436 = vrot.slane %v353, 1
      %v437 = vrot.slane %v354, 1
      %v438 = vsel %vm420, %v436, %v437
      %v439 = vrot.slane %v355, 1
      %v440 = vrot.slane %v356, 1
      %v441 = vsel %vm420, %v439, %v440
      %v442 = vrot.slane %v357, 1
      %v443 = vrot.slane %v358, 1
      %v444 = vsel %vm420, %v442, %v443
      %s445 = scalar_lea.vmem %s3, 4
      %v446 = vld [vmem:[%s445] sm:$0xf]
      %vm447 = vcmask 31744
      %v448 = vsel %vm447, %v423, 0
      %v450 = vsel %vm447, %v426, 0
      %v452 = vsel %vm447, %v429, 0
      %v454 = vsel %vm447, %v432, 0
      %v456 = vsel %vm447, %v435, 0
      %v458 = vsel %vm447, %v438, 0
      %v460 = vsel %vm447, %v441, 0
      %v462 = vsel %vm447, %v444, 0
      %vm464 = vcmask 1043456
      %v466 = vsel %vm464, %v446, 0
      %468 = vmatprep.subr.mxu0 0.0
      %469 = vmatpush1.msra.mxu0 %v466
      %470 = vmatprep.subr.mxu0 0.0
      %471 = vmatpush1.msra.mxu0 0.0
      %472 = vmatprep.subr.mxu0 0.0
      %473 = vmatpush1.msra.mxu0 0.0
      %474 = vmatprep.subr.mxu0 0.0
      %475 = vmatpush1.msra.mxu0 0.0
      %476 = vmatprep.subr.mxu0 0.0
      %477 = vmatpush1.msra.mxu0 0.0
      %478 = vmatprep.subr.mxu0 0.0
      %479 = vmatpush1.msra.mxu0 0.0
      %480 = vmatprep.subr.mxu0 0.0
      %481 = vmatpush1.msra.mxu0 0.0
      %482 = vmatprep.subr.mxu0 0.0
      %483 = vmatpush1.msra.mxu0 0.0
      %484 = vmatprep.subr.mxu0 0.0
      %485 = vmatpush1.msra.mxu0 0.0
      %486 = vmatprep.subr.mxu0 0.0
      %487 = vmatpush1.msra.mxu0 0.0
      %488 = vmatprep.subr.mxu0 0.0
      %489 = vmatpush1.msra.mxu0 0.0
      %490 = vmatprep.subr.mxu0 0.0
      %491 = vmatpush1.msra.mxu0 0.0
      %492 = vmatprep.subr.mxu0 0.0
      %493 = vmatpush1.msra.mxu0 0.0
      %494 = vmatprep.subr.mxu0 0.0
      %495 = vmatpush1.msra.mxu0 0.0
      %496 = vmatprep.subr.mxu0 0.0
      %497 = vmatpush1.msra.mxu0 0.0
      %498 = vmatprep.subr.mxu0 0.0
      %499 = vmatpush1.msra.mxu0 0.0
      %500 = vmatprep.subr.mxu0 0.0
      %501 = vmatpush1.msra.mxu0 0.0
      %502 = vmatprep.subr.mxu0 0.0
      %503 = vmatpush1.msra.mxu0 0.0
      %504 = vmatprep.subr.mxu0 0.0
      %505 = vmatpush1.msra.mxu0 0.0
      %506 = vmatprep.subr.mxu0 0.0
      %507 = vmatpush1.msra.mxu0 0.0
      %508 = vmatprep.subr.mxu0 0.0
      %509 = vmatpush1.msra.mxu0 0.0
      %510 = vmatprep.subr.mxu0 0.0
      %511 = vmatpush1.msra.mxu0 0.0
      %512 = vmatprep.subr.mxu0 0.0
      %513 = vmatpush1.msra.mxu0 0.0
      %514 = vmatprep.subr.mxu0 0.0
      %515 = vmatpush1.msra.mxu0 0.0
      %516 = vmatprep.subr.mxu0 0.0
      %517 = vmatpush1.msra.mxu0 0.0
      %518 = vmatprep.subr.mxu0 0.0
      %519 = vmatpush1.msra.mxu0 0.0
      %520 = vmatprep.subr.mxu0 0.0
      %521 = vmatpush1.msra.mxu0 0.0
      %522 = vmatprep.subr.mxu0 0.0
      %523 = vmatpush1.msra.mxu0 0.0
      %524 = vmatprep.subr.mxu0 0.0
      %525 = vmatpush1.msra.mxu0 0.0
      %526 = vmatprep.subr.mxu0 0.0
      %527 = vmatpush1.msra.mxu0 0.0
      %528 = vmatprep.subr.mxu0 0.0
      %529 = vmatpush1.msra.mxu0 0.0
      %530 = vmatprep.subr.mxu0 0.0
      %531 = vmatpush1.msra.mxu0 0.0
      %532 = vmatprep.mubr.f32.mxu0 0.0
      %533 = vmatmul.mubr.f32.gmra.mrb[0].mxu0 %v448
      %v534 = vpop.f32.mrb[0].mxu0
      %v535 = vadd.f32 0.0, %v534
      %v536 = vpop.f32.mrb[0].mxu0
      %537 = vmatprep.mubr.f32.mxu0 0.0
      %538 = vmatmul.mubr.f32.gmra.mrb[0].mxu0 %v450
      %v539 = vpop.f32.mrb[0].mxu0
      %v540 = vadd.f32 0.0, %v539
      %v541 = vpop.f32.mrb[0].mxu0
      %542 = vmatprep.mubr.f32.mxu0 0.0
      %543 = vmatmul.mubr.f32.gmra.mrb[0].mxu0 %v452
      %v544 = vpop.f32.mrb[0].mxu0
      %v545 = vadd.f32 0.0, %v544
      %v546 = vpop.f32.mrb[0].mxu0
      %547 = vmatprep.mubr.f32.mxu0 0.0
      %548 = vmatmul.mubr.f32.gmra.mrb[0].mxu0 %v454
      %v549 = vpop.f32.mrb[0].mxu0
      %v550 = vadd.f32 0.0, %v549
      %v551 = vpop.f32.mrb[0].mxu0
      %552 = vmatprep.mubr.f32.mxu0 0.0
      %553 = vmatmul.mubr.f32.gmra.mrb[0].mxu0 %v456
      %v554 = vpop.f32.mrb[0].mxu0
      %v555 = vadd.f32 0.0, %v554
      %v556 = vpop.f32.mrb[0].mxu0
      %557 = vmatprep.mubr.f32.mxu0 0.0
      %558 = vmatmul.mubr.f32.gmra.mrb[0].mxu0 %v458
      %v559 = vpop.f32.mrb[0].mxu0
      %v560 = vadd.f32 0.0, %v559
      %v561 = vpop.f32.mrb[0].mxu0
      %562 = vmatprep.mubr.f32.mxu0 0.0
      %563 = vmatmul.mubr.f32.gmra.mrb[0].mxu0 %v460
      %v564 = vpop.f32.mrb[0].mxu0
      %v565 = vadd.f32 0.0, %v564
      %v566 = vpop.f32.mrb[0].mxu0
      %567 = vmatprep.mubr.f32.mxu0 0.0
      %568 = vmatmul.mubr.f32.gmra.mrb[0].mxu0 %v462
      %v569 = vpop.f32.mrb[0].mxu0
      %v570 = vadd.f32 0.0, %v569
      %v571 = vpop.f32.mrb[0].mxu0
      %572 = vdwg.mxu0
      %v573 = vsel %vm447, %v343, 0
      %v575 = vsel %vm447, %v345, 0
      %v577 = vsel %vm447, %v347, 0
      %v579 = vsel %vm447, %v349, 0
      %v581 = vsel %vm447, %v351, 0
      %v583 = vsel %vm447, %v353, 0
      %v585 = vsel %vm447, %v355, 0
      %v587 = vsel %vm447, %v357, 0
      %v590 = vsel %vm464, %v403, 0
      %592 = vmatprep.subr.mxu0 0.0
      %593 = vmatpush1.msra.mxu0 %v590
      %594 = vmatprep.subr.mxu0 0.0
      %595 = vmatpush1.msra.mxu0 0.0
      %596 = vmatprep.subr.mxu0 0.0
      %597 = vmatpush1.msra.mxu0 0.0
      %598 = vmatprep.subr.mxu0 0.0
      %599 = vmatpush1.msra.mxu0 0.0
      %600 = vmatprep.subr.mxu0 0.0
      %601 = vmatpush1.msra.mxu0 0.0
      %602 = vmatprep.subr.mxu0 0.0
      %603 = vmatpush1.msra.mxu0 0.0
      %604 = vmatprep.subr.mxu0 0.0
      %605 = vmatpush1.msra.mxu0 0.0
      %606 = vmatprep.subr.mxu0 0.0
      %607 = vmatpush1.msra.mxu0 0.0
      %608 = vmatprep.subr.mxu0 0.0
      %609 = vmatpush1.msra.mxu0 0.0
      %610 = vmatprep.subr.mxu0 0.0
      %611 = vmatpush1.msra.mxu0 0.0
      %612 = vmatprep.subr.mxu0 0.0
      %613 = vmatpush1.msra.mxu0 0.0
      %614 = vmatprep.subr.mxu0 0.0
      %615 = vmatpush1.msra.mxu0 0.0
      %616 = vmatprep.subr.mxu0 0.0
      %617 = vmatpush1.msra.mxu0 0.0
      %618 = vmatprep.subr.mxu0 0.0
      %619 = vmatpush1.msra.mxu0 0.0
      %620 = vmatprep.subr.mxu0 0.0
      %621 = vmatpush1.msra.mxu0 0.0
      %622 = vmatprep.subr.mxu0 0.0
      %623 = vmatpush1.msra.mxu0 0.0
      %624 = vmatprep.subr.mxu0 0.0
      %625 = vmatpush1.msra.mxu0 0.0
      %626 = vmatprep.subr.mxu0 0.0
      %627 = vmatpush1.msra.mxu0 0.0
      %628 = vmatprep.subr.mxu0 0.0
      %629 = vmatpush1.msra.mxu0 0.0
      %630 = vmatprep.subr.mxu0 0.0
      %631 = vmatpush1.msra.mxu0 0.0
      %632 = vmatprep.subr.mxu0 0.0
      %633 = vmatpush1.msra.mxu0 0.0
      %634 = vmatprep.subr.mxu0 0.0
      %635 = vmatpush1.msra.mxu0 0.0
      %636 = vmatprep.subr.mxu0 0.0
      %637 = vmatpush1.msra.mxu0 0.0
      %638 = vmatprep.subr.mxu0 0.0
      %639 = vmatpush1.msra.mxu0 0.0
      %640 = vmatprep.subr.mxu0 0.0
      %641 = vmatpush1.msra.mxu0 0.0
      %642 = vmatprep.subr.mxu0 0.0
      %643 = vmatpush1.msra.mxu0 0.0
      %644 = vmatprep.subr.mxu0 0.0
      %645 = vmatpush1.msra.mxu0 0.0
      %646 = vmatprep.subr.mxu0 0.0
      %647 = vmatpush1.msra.mxu0 0.0
      %648 = vmatprep.subr.mxu0 0.0
      %649 = vmatpush1.msra.mxu0 0.0
      %650 = vmatprep.subr.mxu0 0.0
      %651 = vmatpush1.msra.mxu0 0.0
      %652 = vmatprep.subr.mxu0 0.0
      %653 = vmatpush1.msra.mxu0 0.0
      %654 = vmatprep.subr.mxu0 0.0
      %655 = vmatpush1.msra.mxu0 0.0
      %656 = vmatprep.mubr.f32.mxu0 0.0
      %657 = vmatmul.mubr.f32.gmra.mrb[0].mxu0 %v573
      %v658 = vpop.f32.mrb[0].mxu0
      %v659 = vadd.f32 %v535, %v658
      %v660 = vpop.f32.mrb[0].mxu0
      %661 = vmatprep.mubr.f32.mxu0 0.0
      %662 = vmatmul.mubr.f32.gmra.mrb[0].mxu0 %v575
      %v663 = vpop.f32.mrb[0].mxu0
      %v664 = vadd.f32 %v540, %v663
      %v665 = vpop.f32.mrb[0].mxu0
      %666 = vmatprep.mubr.f32.mxu0 0.0
      %667 = vmatmul.mubr.f32.gmra.mrb[0].mxu0 %v577
      %v668 = vpop.f32.mrb[0].mxu0
      %v669 = vadd.f32 %v545, %v668
      %v670 = vpop.f32.mrb[0].mxu0
      %671 = vmatprep.mubr.f32.mxu0 0.0
      %672 = vmatmul.mubr.f32.gmra.mrb[0].mxu0 %v579
      %v673 = vpop.f32.mrb[0].mxu0
      %v674 = vadd.f32 %v550, %v673
      %v675 = vpop.f32.mrb[0].mxu0
      %676 = vmatprep.mubr.f32.mxu0 0.0
      %677 = vmatmul.mubr.f32.gmra.mrb[0].mxu0 %v581
      %v678 = vpop.f32.mrb[0].mxu0
      %v679 = vadd.f32 %v555, %v678
      %v680 = vpop.f32.mrb[0].mxu0
      %681 = vmatprep.mubr.f32.mxu0 0.0
      %682 = vmatmul.mubr.f32.gmra.mrb[0].mxu0 %v583
      %v683 = vpop.f32.mrb[0].mxu0
      %v684 = vadd.f32 %v560, %v683
      %v685 = vpop.f32.mrb[0].mxu0
      %686 = vmatprep.mubr.f32.mxu0 0.0
      %687 = vmatmul.mubr.f32.gmra.mrb[0].mxu0 %v585
      %v688 = vpop.f32.mrb[0].mxu0
      %v689 = vadd.f32 %v565, %v688
      %v690 = vpop.f32.mrb[0].mxu0
      %691 = vmatprep.mubr.f32.mxu0 0.0
      %692 = vmatmul.mubr.f32.gmra.mrb[0].mxu0 %v587
      %v693 = vpop.f32.mrb[0].mxu0
      %v694 = vadd.f32 %v570, %v693
      %v695 = vpop.f32.mrb[0].mxu0
      %696 = vdwg.mxu0
      %vm697 = vcmask 1045504
      %v698 = vrot.slane %v343, 2
      %v699 = vrot.slane %v344, 2
      %v700 = vsel %vm697, %v698, %v699
      %v701 = vrot.slane %v345, 2
      %v702 = vrot.slane %v346, 2
      %v703 = vsel %vm697, %v701, %v702
      %v704 = vrot.slane %v347, 2
      %v705 = vrot.slane %v348, 2
      %v706 = vsel %vm697, %v704, %v705
      %v707 = vrot.slane %v349, 2
      %v708 = vrot.slane %v350, 2
      %v709 = vsel %vm697, %v707, %v708
      %v710 = vrot.slane %v351, 2
      %v711 = vrot.slane %v352, 2
      %v712 = vsel %vm697, %v710, %v711
      %v713 = vrot.slane %v353, 2
      %v714 = vrot.slane %v354, 2
      %v715 = vsel %vm697, %v713, %v714
      %v716 = vrot.slane %v355, 2
      %v717 = vrot.slane %v356, 2
      %v718 = vsel %vm697, %v716, %v717
      %v719 = vrot.slane %v357, 2
      %v720 = vrot.slane %v358, 2
      %v721 = vsel %vm697, %v719, %v720
      %s722 = scalar_lea.vmem %s3, 8
      %v723 = vld [vmem:[%s722] sm:$0xf]
      %v724 = vsel %vm447, %v700, 0
      %v726 = vsel %vm447, %v703, 0
      %v728 = vsel %vm447, %v706, 0
      %v730 = vsel %vm447, %v709, 0
      %v732 = vsel %vm447, %v712, 0
      %v734 = vsel %vm447, %v715, 0
      %v736 = vsel %vm447, %v718, 0
      %v738 = vsel %vm447, %v721, 0
      %v741 = vsel %vm464, %v723, 0
      %743 = vmatprep.subr.mxu0 0.0
      %744 = vmatpush1.msra.mxu0 %v741
      %745 = vmatprep.subr.mxu0 0.0
      %746 = vmatpush1.msra.mxu0 0.0
      %747 = vmatprep.subr.mxu0 0.0
      %748 = vmatpush1.msra.mxu0 0.0
      %749 = vmatprep.subr.mxu0 0.0
      %750 = vmatpush1.msra.mxu0 0.0
      %751 = vmatprep.subr.mxu0 0.0
      %752 = vmatpush1.msra.mxu0 0.0
      %753 = vmatprep.subr.mxu0 0.0
      %754 = vmatpush1.msra.mxu0 0.0
      %755 = vmatprep.subr.mxu0 0.0
      %756 = vmatpush1.msra.mxu0 0.0
      %757 = vmatprep.subr.mxu0 0.0
      %758 = vmatpush1.msra.mxu0 0.0
      %759 = vmatprep.subr.mxu0 0.0
      %760 = vmatpush1.msra.mxu0 0.0
      %761 = vmatprep.subr.mxu0 0.0
      %762 = vmatpush1.msra.mxu0 0.0
      %763 = vmatprep.subr.mxu0 0.0
      %764 = vmatpush1.msra.mxu0 0.0
      %765 = vmatprep.subr.mxu0 0.0
      %766 = vmatpush1.msra.mxu0 0.0
      %767 = vmatprep.subr.mxu0 0.0
      %768 = vmatpush1.msra.mxu0 0.0
      %769 = vmatprep.subr.mxu0 0.0
      %770 = vmatpush1.msra.mxu0 0.0
      %771 = vmatprep.subr.mxu0 0.0
      %772 = vmatpush1.msra.mxu0 0.0
      %773 = vmatprep.subr.mxu0 0.0
      %774 = vmatpush1.msra.mxu0 0.0
      %775 = vmatprep.subr.mxu0 0.0
      %776 = vmatpush1.msra.mxu0 0.0
      %777 = vmatprep.subr.mxu0 0.0
      %778 = vmatpush1.msra.mxu0 0.0
      %779 = vmatprep.subr.mxu0 0.0
      %780 = vmatpush1.msra.mxu0 0.0
      %781 = vmatprep.subr.mxu0 0.0
      %782 = vmatpush1.msra.mxu0 0.0
      %783 = vmatprep.subr.mxu0 0.0
      %784 = vmatpush1.msra.mxu0 0.0
      %785 = vmatprep.subr.mxu0 0.0
      %786 = vmatpush1.msra.mxu0 0.0
      %787 = vmatprep.subr.mxu0 0.0
      %788 = vmatpush1.msra.mxu0 0.0
      %789 = vmatprep.subr.mxu0 0.0
      %790 = vmatpush1.msra.mxu0 0.0
      %791 = vmatprep.subr.mxu0 0.0
      %792 = vmatpush1.msra.mxu0 0.0
      %793 = vmatprep.subr.mxu0 0.0
      %794 = vmatpush1.msra.mxu0 0.0
      %795 = vmatprep.subr.mxu0 0.0
      %796 = vmatpush1.msra.mxu0 0.0
      %797 = vmatprep.subr.mxu0 0.0
      %798 = vmatpush1.msra.mxu0 0.0
      %799 = vmatprep.subr.mxu0 0.0
      %800 = vmatpush1.msra.mxu0 0.0
      %801 = vmatprep.subr.mxu0 0.0
      %802 = vmatpush1.msra.mxu0 0.0
      %803 = vmatprep.subr.mxu0 0.0
      %804 = vmatpush1.msra.mxu0 0.0
      %805 = vmatprep.subr.mxu0 0.0
      %806 = vmatpush1.msra.mxu0 0.0
      %807 = vmatprep.mubr.f32.mxu0 0.0
      %808 = vmatmul.mubr.f32.gmra.mrb[0].mxu0 %v724
      %v809 = vpop.f32.mrb[0].mxu0
      %v810 = vadd.f32 0.0, %v809
      %v811 = vpop.f32.mrb[0].mxu0
      %812 = vmatprep.mubr.f32.mxu0 0.0
      %813 = vmatmul.mubr.f32.gmra.mrb[0].mxu0 %v726
      %v814 = vpop.f32.mrb[0].mxu0
      %v815 = vadd.f32 0.0, %v814
      %v816 = vpop.f32.mrb[0].mxu0
      %817 = vmatprep.mubr.f32.mxu0 0.0
      %818 = vmatmul.mubr.f32.gmra.mrb[0].mxu0 %v728
      %v819 = vpop.f32.mrb[0].mxu0
      %v820 = vadd.f32 0.0, %v819
      %v821 = vpop.f32.mrb[0].mxu0
      %822 = vmatprep.mubr.f32.mxu0 0.0
      %823 = vmatmul.mubr.f32.gmra.mrb[0].mxu0 %v730
      %v824 = vpop.f32.mrb[0].mxu0
      %v825 = vadd.f32 0.0, %v824
      %v826 = vpop.f32.mrb[0].mxu0
      %827 = vmatprep.mubr.f32.mxu0 0.0
      %828 = vmatmul.mubr.f32.gmra.mrb[0].mxu0 %v732
      %v829 = vpop.f32.mrb[0].mxu0
      %v830 = vadd.f32 0.0, %v829
      %v831 = vpop.f32.mrb[0].mxu0
      %832 = vmatprep.mubr.f32.mxu0 0.0
      %833 = vmatmul.mubr.f32.gmra.mrb[0].mxu0 %v734
      %v834 = vpop.f32.mrb[0].mxu0
      %v835 = vadd.f32 0.0, %v834
      %v836 = vpop.f32.mrb[0].mxu0
      %837 = vmatprep.mubr.f32.mxu0 0.0
      %838 = vmatmul.mubr.f32.gmra.mrb[0].mxu0 %v736
      %v839 = vpop.f32.mrb[0].mxu0
      %v840 = vadd.f32 0.0, %v839
      %v841 = vpop.f32.mrb[0].mxu0
      %842 = vmatprep.mubr.f32.mxu0 0.0
      %843 = vmatmul.mubr.f32.gmra.mrb[0].mxu0 %v738
      %v844 = vpop.f32.mrb[0].mxu0
      %v845 = vadd.f32 0.0, %v844
      %v846 = vpop.f32.mrb[0].mxu0
      %847 = vdwg.mxu0
      %v848 = vadd.f32 %v659, %v810
      %v849 = vadd.f32 %v664, %v815
      %v850 = vadd.f32 %v669, %v820
      %v851 = vadd.f32 %v674, %v825
      %v852 = vadd.f32 %v679, %v830
      %v853 = vadd.f32 %v684, %v835
      %v854 = vadd.f32 %v689, %v840
      %v855 = vadd.f32 %v694, %v845
      %s856 = scalar_lea.vmem %s3, 12
      %v857 = vld [vmem:[%s856] sm:$0xf]
      %v859 = vsel %vm447, %v359, 0
      %v862 = vsel %vm464, %v857, 0
      %864 = vmatprep.subr.mxu0 0.0
      %865 = vmatpush1.msra.mxu0 %v862
      %866 = vmatprep.subr.mxu0 0.0
      %867 = vmatpush1.msra.mxu0 0.0
      %868 = vmatprep.subr.mxu0 0.0
      %869 = vmatpush1.msra.mxu0 0.0
      %870 = vmatprep.subr.mxu0 0.0
      %871 = vmatpush1.msra.mxu0 0.0
      %872 = vmatprep.subr.mxu0 0.0
      %873 = vmatpush1.msra.mxu0 0.0
      %874 = vmatprep.subr.mxu0 0.0
      %875 = vmatpush1.msra.mxu0 0.0
      %876 = vmatprep.subr.mxu0 0.0
      %877 = vmatpush1.msra.mxu0 0.0
      %878 = vmatprep.subr.mxu0 0.0
      %879 = vmatpush1.msra.mxu0 0.0
      %880 = vmatprep.subr.mxu0 0.0
      %881 = vmatpush1.msra.mxu0 0.0
      %882 = vmatprep.subr.mxu0 0.0
      %883 = vmatpush1.msra.mxu0 0.0
      %884 = vmatprep.subr.mxu0 0.0
      %885 = vmatpush1.msra.mxu0 0.0
      %886 = vmatprep.subr.mxu0 0.0
      %887 = vmatpush1.msra.mxu0 0.0
      %888 = vmatprep.subr.mxu0 0.0
      %889 = vmatpush1.msra.mxu0 0.0
      %890 = vmatprep.subr.mxu0 0.0
      %891 = vmatpush1.msra.mxu0 0.0
      %892 = vmatprep.subr.mxu0 0.0
      %893 = vmatpush1.msra.mxu0 0.0
      %894 = vmatprep.subr.mxu0 0.0
      %895 = vmatpush1.msra.mxu0 0.0
      %896 = vmatprep.subr.mxu0 0.0
      %897 = vmatpush1.msra.mxu0 0.0
      %898 = vmatprep.subr.mxu0 0.0
      %899 = vmatpush1.msra.mxu0 0.0
      %900 = vmatprep.subr.mxu0 0.0
      %901 = vmatpush1.msra.mxu0 0.0
      %902 = vmatprep.subr.mxu0 0.0
      %903 = vmatpush1.msra.mxu0 0.0
      %904 = vmatprep.subr.mxu0 0.0
      %905 = vmatpush1.msra.mxu0 0.0
      %906 = vmatprep.subr.mxu0 0.0
      %907 = vmatpush1.msra.mxu0 0.0
      %908 = vmatprep.subr.mxu0 0.0
      %909 = vmatpush1.msra.mxu0 0.0
      %910 = vmatprep.subr.mxu0 0.0
      %911 = vmatpush1.msra.mxu0 0.0
      %912 = vmatprep.subr.mxu0 0.0
      %913 = vmatpush1.msra.mxu0 0.0
      %914 = vmatprep.subr.mxu0 0.0
      %915 = vmatpush1.msra.mxu0 0.0
      %916 = vmatprep.subr.mxu0 0.0
      %917 = vmatpush1.msra.mxu0 0.0
      %918 = vmatprep.subr.mxu0 0.0
      %919 = vmatpush1.msra.mxu0 0.0
      %920 = vmatprep.subr.mxu0 0.0
      %921 = vmatpush1.msra.mxu0 0.0
      %922 = vmatprep.subr.mxu0 0.0
      %923 = vmatpush1.msra.mxu0 0.0
      %924 = vmatprep.subr.mxu0 0.0
      %925 = vmatpush1.msra.mxu0 0.0
      %926 = vmatprep.subr.mxu0 0.0
      %927 = vmatpush1.msra.mxu0 0.0
      %928 = vmatprep.mubr.f32.mxu0 0.0
      %929 = vmatmul.mubr.f32.gmra.mrb[0].mxu0 %v575
      %v930 = vpop.f32.mrb[0].mxu0
      %v931 = vadd.f32 0.0, %v930
      %v932 = vpop.f32.mrb[0].mxu0
      %933 = vmatprep.mubr.f32.mxu0 0.0
      %934 = vmatmul.mubr.f32.gmra.mrb[0].mxu0 %v577
      %v935 = vpop.f32.mrb[0].mxu0
      %v936 = vadd.f32 0.0, %v935
      %v937 = vpop.f32.mrb[0].mxu0
      %938 = vmatprep.mubr.f32.mxu0 0.0
      %939 = vmatmul.mubr.f32.gmra.mrb[0].mxu0 %v579
      %v940 = vpop.f32.mrb[0].mxu0
      %v941 = vadd.f32 0.0, %v940
      %v942 = vpop.f32.mrb[0].mxu0
      %943 = vmatprep.mubr.f32.mxu0 0.0
      %944 = vmatmul.mubr.f32.gmra.mrb[0].mxu0 %v581
      %v945 = vpop.f32.mrb[0].mxu0
      %v946 = vadd.f32 0.0, %v945
      %v947 = vpop.f32.mrb[0].mxu0
      %948 = vmatprep.mubr.f32.mxu0 0.0
      %949 = vmatmul.mubr.f32.gmra.mrb[0].mxu0 %v583
      %v950 = vpop.f32.mrb[0].mxu0
      %v951 = vadd.f32 0.0, %v950
      %v952 = vpop.f32.mrb[0].mxu0
      %953 = vmatprep.mubr.f32.mxu0 0.0
      %954 = vmatmul.mubr.f32.gmra.mrb[0].mxu0 %v585
      %v955 = vpop.f32.mrb[0].mxu0
      %v956 = vadd.f32 0.0, %v955
      %v957 = vpop.f32.mrb[0].mxu0
      %958 = vmatprep.mubr.f32.mxu0 0.0
      %959 = vmatmul.mubr.f32.gmra.mrb[0].mxu0 %v587
      %v960 = vpop.f32.mrb[0].mxu0
      %v961 = vadd.f32 0.0, %v960
      %v962 = vpop.f32.mrb[0].mxu0
      %963 = vmatprep.mubr.f32.mxu0 0.0
      %964 = vmatmul.mubr.f32.gmra.mrb[0].mxu0 %v859
      %v965 = vpop.f32.mrb[0].mxu0
      %v966 = vadd.f32 0.0, %v965
      %v967 = vpop.f32.mrb[0].mxu0
      %968 = vdwg.mxu0
      %v969 = vadd.f32 %v848, %v931
      %v970 = vadd.f32 %v849, %v936
      %v971 = vadd.f32 %v850, %v941
      %v972 = vadd.f32 %v851, %v946
      %v973 = vadd.f32 %v852, %v951
      %v974 = vadd.f32 %v853, %v956
      %v975 = vadd.f32 %v854, %v961
      %v976 = vadd.f32 %v855, %v966
      %v978 = vrot.slane %v359, 1
      %v979 = vrot.slane %v360, 1
      %v980 = vsel %vm420, %v978, %v979
      %s981 = scalar_lea.vmem %s3, 16
      %v982 = vld [vmem:[%s981] sm:$0xf]
      %v983 = vsel %vm447, %v980, 0
      %v986 = vsel %vm464, %v982, 0
      %988 = vmatprep.subr.mxu0 0.0
      %989 = vmatpush1.msra.mxu0 %v986
      %990 = vmatprep.subr.mxu0 0.0
      %991 = vmatpush1.msra.mxu0 0.0
      %992 = vmatprep.subr.mxu0 0.0
      %993 = vmatpush1.msra.mxu0 0.0
      %994 = vmatprep.subr.mxu0 0.0
      %995 = vmatpush1.msra.mxu0 0.0
      %996 = vmatprep.subr.mxu0 0.0
      %997 = vmatpush1.msra.mxu0 0.0
      %998 = vmatprep.subr.mxu0 0.0
      %999 = vmatpush1.msra.mxu0 0.0
      %1000 = vmatprep.subr.mxu0 0.0
      %1001 = vmatpush1.msra.mxu0 0.0
      %1002 = vmatprep.subr.mxu0 0.0
      %1003 = vmatpush1.msra.mxu0 0.0
      %1004 = vmatprep.subr.mxu0 0.0
      %1005 = vmatpush1.msra.mxu0 0.0
      %1006 = vmatprep.subr.mxu0 0.0
      %1007 = vmatpush1.msra.mxu0 0.0
      %1008 = vmatprep.subr.mxu0 0.0
      %1009 = vmatpush1.msra.mxu0 0.0
      %1010 = vmatprep.subr.mxu0 0.0
      %1011 = vmatpush1.msra.mxu0 0.0
      %1012 = vmatprep.subr.mxu0 0.0
      %1013 = vmatpush1.msra.mxu0 0.0
      %1014 = vmatprep.subr.mxu0 0.0
      %1015 = vmatpush1.msra.mxu0 0.0
      %1016 = vmatprep.subr.mxu0 0.0
      %1017 = vmatpush1.msra.mxu0 0.0
      %1018 = vmatprep.subr.mxu0 0.0
      %1019 = vmatpush1.msra.mxu0 0.0
      %1020 = vmatprep.subr.mxu0 0.0
      %1021 = vmatpush1.msra.mxu0 0.0
      %1022 = vmatprep.subr.mxu0 0.0
      %1023 = vmatpush1.msra.mxu0 0.0
      %1024 = vmatprep.subr.mxu0 0.0
      %1025 = vmatpush1.msra.mxu0 0.0
      %1026 = vmatprep.subr.mxu0 0.0
      %1027 = vmatpush1.msra.mxu0 0.0
      %1028 = vmatprep.subr.mxu0 0.0
      %1029 = vmatpush1.msra.mxu0 0.0
      %1030 = vmatprep.subr.mxu0 0.0
      %1031 = vmatpush1.msra.mxu0 0.0
      %1032 = vmatprep.subr.mxu0 0.0
      %1033 = vmatpush1.msra.mxu0 0.0
      %1034 = vmatprep.subr.mxu0 0.0
      %1035 = vmatpush1.msra.mxu0 0.0
      %1036 = vmatprep.subr.mxu0 0.0
      %1037 = vmatpush1.msra.mxu0 0.0
      %1038 = vmatprep.subr.mxu0 0.0
      %1039 = vmatpush1.msra.mxu0 0.0
      %1040 = vmatprep.subr.mxu0 0.0
      %1041 = vmatpush1.msra.mxu0 0.0
      %1042 = vmatprep.subr.mxu0 0.0
      %1043 = vmatpush1.msra.mxu0 0.0
      %1044 = vmatprep.subr.mxu0 0.0
      %1045 = vmatpush1.msra.mxu0 0.0
      %1046 = vmatprep.subr.mxu0 0.0
      %1047 = vmatpush1.msra.mxu0 0.0
      %1048 = vmatprep.subr.mxu0 0.0
      %1049 = vmatpush1.msra.mxu0 0.0
      %1050 = vmatprep.subr.mxu0 0.0
      %1051 = vmatpush1.msra.mxu0 0.0
      %1052 = vmatprep.mubr.f32.mxu0 0.0
      %1053 = vmatmul.mubr.f32.gmra.mrb[0].mxu0 %v450
      %v1054 = vpop.f32.mrb[0].mxu0
      %v1055 = vadd.f32 0.0, %v1054
      %v1056 = vpop.f32.mrb[0].mxu0
      %1057 = vmatprep.mubr.f32.mxu0 0.0
      %1058 = vmatmul.mubr.f32.gmra.mrb[0].mxu0 %v452
      %v1059 = vpop.f32.mrb[0].mxu0
      %v1060 = vadd.f32 0.0, %v1059
      %v1061 = vpop.f32.mrb[0].mxu0
      %1062 = vmatprep.mubr.f32.mxu0 0.0
      %1063 = vmatmul.mubr.f32.gmra.mrb[0].mxu0 %v454
      %v1064 = vpop.f32.mrb[0].mxu0
      %v1065 = vadd.f32 0.0, %v1064
      %v1066 = vpop.f32.mrb[0].mxu0
      %1067 = vmatprep.mubr.f32.mxu0 0.0
      %1068 = vmatmul.mubr.f32.gmra.mrb[0].mxu0 %v456
      %v1069 = vpop.f32.mrb[0].mxu0
      %v1070 = vadd.f32 0.0, %v1069
      %v1071 = vpop.f32.mrb[0].mxu0
      %1072 = vmatprep.mubr.f32.mxu0 0.0
      %1073 = vmatmul.mubr.f32.gmra.mrb[0].mxu0 %v458
      %v1074 = vpop.f32.mrb[0].mxu0
      %v1075 = vadd.f32 0.0, %v1074
      %v1076 = vpop.f32.mrb[0].mxu0
      %1077 = vmatprep.mubr.f32.mxu0 0.0
      %1078 = vmatmul.mubr.f32.gmra.mrb[0].mxu0 %v460
      %v1079 = vpop.f32.mrb[0].mxu0
      %v1080 = vadd.f32 0.0, %v1079
      %v1081 = vpop.f32.mrb[0].mxu0
      %1082 = vmatprep.mubr.f32.mxu0 0.0
      %1083 = vmatmul.mubr.f32.gmra.mrb[0].mxu0 %v462
      %v1084 = vpop.f32.mrb[0].mxu0
      %v1085 = vadd.f32 0.0, %v1084
      %v1086 = vpop.f32.mrb[0].mxu0
      %1087 = vmatprep.mubr.f32.mxu0 0.0
      %1088 = vmatmul.mubr.f32.gmra.mrb[0].mxu0 %v983
      %v1089 = vpop.f32.mrb[0].mxu0
      %v1090 = vadd.f32 0.0, %v1089
      %v1091 = vpop.f32.mrb[0].mxu0
      %1092 = vdwg.mxu0
      %v1093 = vadd.f32 %v969, %v1055
      %v1094 = vadd.f32 %v970, %v1060
      %v1095 = vadd.f32 %v971, %v1065
      %v1096 = vadd.f32 %v972, %v1070
      %v1097 = vadd.f32 %v973, %v1075
      %v1098 = vadd.f32 %v974, %v1080
      %v1099 = vadd.f32 %v975, %v1085
      %v1100 = vadd.f32 %v976, %v1090
      %v1101 = vrot.slane %v359, 2
      %v1102 = vrot.slane %v360, 2
      %v1103 = vsel %vm697, %v1101, %v1102
      %s1104 = scalar_lea.vmem %s3, 20
      %v1105 = vld [vmem:[%s1104] sm:$0xf]
      %v1106 = vsel %vm447, %v1103, 0
      %v1109 = vsel %vm464, %v1105, 0
      %1111 = vmatprep.subr.mxu0 0.0
      %1112 = vmatpush1.msra.mxu0 %v1109
      %1113 = vmatprep.subr.mxu0 0.0
      %1114 = vmatpush1.msra.mxu0 0.0
      %1115 = vmatprep.subr.mxu0 0.0
      %1116 = vmatpush1.msra.mxu0 0.0
      %1117 = vmatprep.subr.mxu0 0.0
      %1118 = vmatpush1.msra.mxu0 0.0
      %1119 = vmatprep.subr.mxu0 0.0
      %1120 = vmatpush1.msra.mxu0 0.0
      %1121 = vmatprep.subr.mxu0 0.0
      %1122 = vmatpush1.msra.mxu0 0.0
      %1123 = vmatprep.subr.mxu0 0.0
      %1124 = vmatpush1.msra.mxu0 0.0
      %1125 = vmatprep.subr.mxu0 0.0
      %1126 = vmatpush1.msra.mxu0 0.0
      %1127 = vmatprep.subr.mxu0 0.0
      %1128 = vmatpush1.msra.mxu0 0.0
      %1129 = vmatprep.subr.mxu0 0.0
      %1130 = vmatpush1.msra.mxu0 0.0
      %1131 = vmatprep.subr.mxu0 0.0
      %1132 = vmatpush1.msra.mxu0 0.0
      %1133 = vmatprep.subr.mxu0 0.0
      %1134 = vmatpush1.msra.mxu0 0.0
      %1135 = vmatprep.subr.mxu0 0.0
      %1136 = vmatpush1.msra.mxu0 0.0
      %1137 = vmatprep.subr.mxu0 0.0
      %1138 = vmatpush1.msra.mxu0 0.0
      %1139 = vmatprep.subr.mxu0 0.0
      %1140 = vmatpush1.msra.mxu0 0.0
      %1141 = vmatprep.subr.mxu0 0.0
      %1142 = vmatpush1.msra.mxu0 0.0
      %1143 = vmatprep.subr.mxu0 0.0
      %1144 = vmatpush1.msra.mxu0 0.0
      %1145 = vmatprep.subr.mxu0 0.0
      %1146 = vmatpush1.msra.mxu0 0.0
      %1147 = vmatprep.subr.mxu0 0.0
      %1148 = vmatpush1.msra.mxu0 0.0
      %1149 = vmatprep.subr.mxu0 0.0
      %1150 = vmatpush1.msra.mxu0 0.0
      %1151 = vmatprep.subr.mxu0 0.0
      %1152 = vmatpush1.msra.mxu0 0.0
      %1153 = vmatprep.subr.mxu0 0.0
      %1154 = vmatpush1.msra.mxu0 0.0
      %1155 = vmatprep.subr.mxu0 0.0
      %1156 = vmatpush1.msra.mxu0 0.0
      %1157 = vmatprep.subr.mxu0 0.0
      %1158 = vmatpush1.msra.mxu0 0.0
      %1159 = vmatprep.subr.mxu0 0.0
      %1160 = vmatpush1.msra.mxu0 0.0
      %1161 = vmatprep.subr.mxu0 0.0
      %1162 = vmatpush1.msra.mxu0 0.0
      %1163 = vmatprep.subr.mxu0 0.0
      %1164 = vmatpush1.msra.mxu0 0.0
      %1165 = vmatprep.subr.mxu0 0.0
      %1166 = vmatpush1.msra.mxu0 0.0
      %1167 = vmatprep.subr.mxu0 0.0
      %1168 = vmatpush1.msra.mxu0 0.0
      %1169 = vmatprep.subr.mxu0 0.0
      %1170 = vmatpush1.msra.mxu0 0.0
      %1171 = vmatprep.subr.mxu0 0.0
      %1172 = vmatpush1.msra.mxu0 0.0
      %1173 = vmatprep.subr.mxu0 0.0
      %1174 = vmatpush1.msra.mxu0 0.0
      %1175 = vmatprep.mubr.f32.mxu0 0.0
      %1176 = vmatmul.mubr.f32.gmra.mrb[0].mxu0 %v726
      %v1177 = vpop.f32.mrb[0].mxu0
      %v1178 = vadd.f32 0.0, %v1177
      %v1179 = vpop.f32.mrb[0].mxu0
      %1180 = vmatprep.mubr.f32.mxu0 0.0
      %1181 = vmatmul.mubr.f32.gmra.mrb[0].mxu0 %v728
      %v1182 = vpop.f32.mrb[0].mxu0
      %v1183 = vadd.f32 0.0, %v1182
      %v1184 = vpop.f32.mrb[0].mxu0
      %1185 = vmatprep.mubr.f32.mxu0 0.0
      %1186 = vmatmul.mubr.f32.gmra.mrb[0].mxu0 %v730
      %v1187 = vpop.f32.mrb[0].mxu0
      %v1188 = vadd.f32 0.0, %v1187
      %v1189 = vpop.f32.mrb[0].mxu0
      %1190 = vmatprep.mubr.f32.mxu0 0.0
      %1191 = vmatmul.mubr.f32.gmra.mrb[0].mxu0 %v732
      %v1192 = vpop.f32.mrb[0].mxu0
      %v1193 = vadd.f32 0.0, %v1192
      %v1194 = vpop.f32.mrb[0].mxu0
      %1195 = vmatprep.mubr.f32.mxu0 0.0
      %1196 = vmatmul.mubr.f32.gmra.mrb[0].mxu0 %v734
      %v1197 = vpop.f32.mrb[0].mxu0
      %v1198 = vadd.f32 0.0, %v1197
      %v1199 = vpop.f32.mrb[0].mxu0
      %1200 = vmatprep.mubr.f32.mxu0 0.0
      %1201 = vmatmul.mubr.f32.gmra.mrb[0].mxu0 %v736
      %v1202 = vpop.f32.mrb[0].mxu0
      %v1203 = vadd.f32 0.0, %v1202
      %v1204 = vpop.f32.mrb[0].mxu0
      %1205 = vmatprep.mubr.f32.mxu0 0.0
      %1206 = vmatmul.mubr.f32.gmra.mrb[0].mxu0 %v738
      %v1207 = vpop.f32.mrb[0].mxu0
      %v1208 = vadd.f32 0.0, %v1207
      %v1209 = vpop.f32.mrb[0].mxu0
      %1210 = vmatprep.mubr.f32.mxu0 0.0
      %1211 = vmatmul.mubr.f32.gmra.mrb[0].mxu0 %v1106
      %v1212 = vpop.f32.mrb[0].mxu0
      %v1213 = vadd.f32 0.0, %v1212
      %v1214 = vpop.f32.mrb[0].mxu0
      %1215 = vdwg.mxu0
      %v1216 = vadd.f32 %v1093, %v1178
      %v1217 = vadd.f32 %v1094, %v1183
      %v1218 = vadd.f32 %v1095, %v1188
      %v1219 = vadd.f32 %v1096, %v1193
      %v1220 = vadd.f32 %v1097, %v1198
      %v1221 = vadd.f32 %v1098, %v1203
      %v1222 = vadd.f32 %v1099, %v1208
      %v1223 = vadd.f32 %v1100, %v1213
      %s1224 = scalar_lea.vmem %s3, 24
      %v1225 = vld [vmem:[%s1224] sm:$0xf]
      %v1227 = vsel %vm447, %v361, 0
      %v1230 = vsel %vm464, %v1225, 0
      %1232 = vmatprep.subr.mxu0 0.0
      %1233 = vmatpush1.msra.mxu0 %v1230
      %1234 = vmatprep.subr.mxu0 0.0
      %1235 = vmatpush1.msra.mxu0 0.0
      %1236 = vmatprep.subr.mxu0 0.0
      %1237 = vmatpush1.msra.mxu0 0.0
      %1238 = vmatprep.subr.mxu0 0.0
      %1239 = vmatpush1.msra.mxu0 0.0
      %1240 = vmatprep.subr.mxu0 0.0
      %1241 = vmatpush1.msra.mxu0 0.0
      %1242 = vmatprep.subr.mxu0 0.0
      %1243 = vmatpush1.msra.mxu0 0.0
      %1244 = vmatprep.subr.mxu0 0.0
      %1245 = vmatpush1.msra.mxu0 0.0
      %1246 = vmatprep.subr.mxu0 0.0
      %1247 = vmatpush1.msra.mxu0 0.0
      %1248 = vmatprep.subr.mxu0 0.0
      %1249 = vmatpush1.msra.mxu0 0.0
      %1250 = vmatprep.subr.mxu0 0.0
      %1251 = vmatpush1.msra.mxu0 0.0
      %1252 = vmatprep.subr.mxu0 0.0
      %1253 = vmatpush1.msra.mxu0 0.0
      %1254 = vmatprep.subr.mxu0 0.0
      %1255 = vmatpush1.msra.mxu0 0.0
      %1256 = vmatprep.subr.mxu0 0.0
      %1257 = vmatpush1.msra.mxu0 0.0
      %1258 = vmatprep.subr.mxu0 0.0
      %1259 = vmatpush1.msra.mxu0 0.0
      %1260 = vmatprep.subr.mxu0 0.0
      %1261 = vmatpush1.msra.mxu0 0.0
      %1262 = vmatprep.subr.mxu0 0.0
      %1263 = vmatpush1.msra.mxu0 0.0
      %1264 = vmatprep.subr.mxu0 0.0
      %1265 = vmatpush1.msra.mxu0 0.0
      %1266 = vmatprep.subr.mxu0 0.0
      %1267 = vmatpush1.msra.mxu0 0.0
      %1268 = vmatprep.subr.mxu0 0.0
      %1269 = vmatpush1.msra.mxu0 0.0
      %1270 = vmatprep.subr.mxu0 0.0
      %1271 = vmatpush1.msra.mxu0 0.0
      %1272 = vmatprep.subr.mxu0 0.0
      %1273 = vmatpush1.msra.mxu0 0.0
      %1274 = vmatprep.subr.mxu0 0.0
      %1275 = vmatpush1.msra.mxu0 0.0
      %1276 = vmatprep.subr.mxu0 0.0
      %1277 = vmatpush1.msra.mxu0 0.0
      %1278 = vmatprep.subr.mxu0 0.0
      %1279 = vmatpush1.msra.mxu0 0.0
      %1280 = vmatprep.subr.mxu0 0.0
      %1281 = vmatpush1.msra.mxu0 0.0
      %1282 = vmatprep.subr.mxu0 0.0
      %1283 = vmatpush1.msra.mxu0 0.0
      %1284 = vmatprep.subr.mxu0 0.0
      %1285 = vmatpush1.msra.mxu0 0.0
      %1286 = vmatprep.subr.mxu0 0.0
      %1287 = vmatpush1.msra.mxu0 0.0
      %1288 = vmatprep.subr.mxu0 0.0
      %1289 = vmatpush1.msra.mxu0 0.0
      %1290 = vmatprep.subr.mxu0 0.0
      %1291 = vmatpush1.msra.mxu0 0.0
      %1292 = vmatprep.subr.mxu0 0.0
      %1293 = vmatpush1.msra.mxu0 0.0
      %1294 = vmatprep.subr.mxu0 0.0
      %1295 = vmatpush1.msra.mxu0 0.0
      %1296 = vmatprep.mubr.f32.mxu0 0.0
      %1297 = vmatmul.mubr.f32.gmra.mrb[0].mxu0 %v577
      %v1298 = vpop.f32.mrb[0].mxu0
      %v1299 = vadd.f32 0.0, %v1298
      %v1300 = vpop.f32.mrb[0].mxu0
      %1301 = vmatprep.mubr.f32.mxu0 0.0
      %1302 = vmatmul.mubr.f32.gmra.mrb[0].mxu0 %v579
      %v1303 = vpop.f32.mrb[0].mxu0
      %v1304 = vadd.f32 0.0, %v1303
      %v1305 = vpop.f32.mrb[0].mxu0
      %1306 = vmatprep.mubr.f32.mxu0 0.0
      %1307 = vmatmul.mubr.f32.gmra.mrb[0].mxu0 %v581
      %v1308 = vpop.f32.mrb[0].mxu0
      %v1309 = vadd.f32 0.0, %v1308
      %v1310 = vpop.f32.mrb[0].mxu0
      %1311 = vmatprep.mubr.f32.mxu0 0.0
      %1312 = vmatmul.mubr.f32.gmra.mrb[0].mxu0 %v583
      %v1313 = vpop.f32.mrb[0].mxu0
      %v1314 = vadd.f32 0.0, %v1313
      %v1315 = vpop.f32.mrb[0].mxu0
      %1316 = vmatprep.mubr.f32.mxu0 0.0
      %1317 = vmatmul.mubr.f32.gmra.mrb[0].mxu0 %v585
      %v1318 = vpop.f32.mrb[0].mxu0
      %v1319 = vadd.f32 0.0, %v1318
      %v1320 = vpop.f32.mrb[0].mxu0
      %1321 = vmatprep.mubr.f32.mxu0 0.0
      %1322 = vmatmul.mubr.f32.gmra.mrb[0].mxu0 %v587
      %v1323 = vpop.f32.mrb[0].mxu0
      %v1324 = vadd.f32 0.0, %v1323
      %v1325 = vpop.f32.mrb[0].mxu0
      %1326 = vmatprep.mubr.f32.mxu0 0.0
      %1327 = vmatmul.mubr.f32.gmra.mrb[0].mxu0 %v859
      %v1328 = vpop.f32.mrb[0].mxu0
      %v1329 = vadd.f32 0.0, %v1328
      %v1330 = vpop.f32.mrb[0].mxu0
      %1331 = vmatprep.mubr.f32.mxu0 0.0
      %1332 = vmatmul.mubr.f32.gmra.mrb[0].mxu0 %v1227
      %v1333 = vpop.f32.mrb[0].mxu0
      %v1334 = vadd.f32 0.0, %v1333
      %v1335 = vpop.f32.mrb[0].mxu0
      %1336 = vdwg.mxu0
      %v1337 = vadd.f32 %v1216, %v1299
      %v1338 = vadd.f32 %v1217, %v1304
      %v1339 = vadd.f32 %v1218, %v1309
      %v1340 = vadd.f32 %v1219, %v1314
      %v1341 = vadd.f32 %v1220, %v1319
      %v1342 = vadd.f32 %v1221, %v1324
      %v1343 = vadd.f32 %v1222, %v1329
      %v1344 = vadd.f32 %v1223, %v1334
      %v1346 = vrot.slane %v361, 1
      %v1347 = vrot.slane %v362, 1
      %v1348 = vsel %vm420, %v1346, %v1347
      %s1349 = scalar_lea.vmem %s3, 28
      %v1350 = vld [vmem:[%s1349] sm:$0xf]
      %v1351 = vsel %vm447, %v1348, 0
      %v1354 = vsel %vm464, %v1350, 0
      %1356 = vmatprep.subr.mxu0 0.0
      %1357 = vmatpush1.msra.mxu0 %v1354
      %1358 = vmatprep.subr.mxu0 0.0
      %1359 = vmatpush1.msra.mxu0 0.0
      %1360 = vmatprep.subr.mxu0 0.0
      %1361 = vmatpush1.msra.mxu0 0.0
      %1362 = vmatprep.subr.mxu0 0.0
      %1363 = vmatpush1.msra.mxu0 0.0
      %1364 = vmatprep.subr.mxu0 0.0
      %1365 = vmatpush1.msra.mxu0 0.0
      %1366 = vmatprep.subr.mxu0 0.0
      %1367 = vmatpush1.msra.mxu0 0.0
      %1368 = vmatprep.subr.mxu0 0.0
      %1369 = vmatpush1.msra.mxu0 0.0
      %1370 = vmatprep.subr.mxu0 0.0
      %1371 = vmatpush1.msra.mxu0 0.0
      %1372 = vmatprep.subr.mxu0 0.0
      %1373 = vmatpush1.msra.mxu0 0.0
      %1374 = vmatprep.subr.mxu0 0.0
      %1375 = vmatpush1.msra.mxu0 0.0
      %1376 = vmatprep.subr.mxu0 0.0
      %1377 = vmatpush1.msra.mxu0 0.0
      %1378 = vmatprep.subr.mxu0 0.0
      %1379 = vmatpush1.msra.mxu0 0.0
      %1380 = vmatprep.subr.mxu0 0.0
      %1381 = vmatpush1.msra.mxu0 0.0
      %1382 = vmatprep.subr.mxu0 0.0
      %1383 = vmatpush1.msra.mxu0 0.0
      %1384 = vmatprep.subr.mxu0 0.0
      %1385 = vmatpush1.msra.mxu0 0.0
      %1386 = vmatprep.subr.mxu0 0.0
      %1387 = vmatpush1.msra.mxu0 0.0
      %1388 = vmatprep.subr.mxu0 0.0
      %1389 = vmatpush1.msra.mxu0 0.0
      %1390 = vmatprep.subr.mxu0 0.0
      %1391 = vmatpush1.msra.mxu0 0.0
      %1392 = vmatprep.subr.mxu0 0.0
      %1393 = vmatpush1.msra.mxu0 0.0
      %1394 = vmatprep.subr.mxu0 0.0
      %1395 = vmatpush1.msra.mxu0 0.0
      %1396 = vmatprep.subr.mxu0 0.0
      %1397 = vmatpush1.msra.mxu0 0.0
      %1398 = vmatprep.subr.mxu0 0.0
      %1399 = vmatpush1.msra.mxu0 0.0
      %1400 = vmatprep.subr.mxu0 0.0
      %1401 = vmatpush1.msra.mxu0 0.0
      %1402 = vmatprep.subr.mxu0 0.0
      %1403 = vmatpush1.msra.mxu0 0.0
      %1404 = vmatprep.subr.mxu0 0.0
      %1405 = vmatpush1.msra.mxu0 0.0
      %1406 = vmatprep.subr.mxu0 0.0
      %1407 = vmatpush1.msra.mxu0 0.0
      %1408 = vmatprep.subr.mxu0 0.0
      %1409 = vmatpush1.msra.mxu0 0.0
      %1410 = vmatprep.subr.mxu0 0.0
      %1411 = vmatpush1.msra.mxu0 0.0
      %1412 = vmatprep.subr.mxu0 0.0
      %1413 = vmatpush1.msra.mxu0 0.0
      %1414 = vmatprep.subr.mxu0 0.0
      %1415 = vmatpush1.msra.mxu0 0.0
      %1416 = vmatprep.subr.mxu0 0.0
      %1417 = vmatpush1.msra.mxu0 0.0
      %1418 = vmatprep.subr.mxu0 0.0
      %1419 = vmatpush1.msra.mxu0 0.0
      %1420 = vmatprep.mubr.f32.mxu0 0.0
      %1421 = vmatmul.mubr.f32.gmra.mrb[0].mxu0 %v452
      %v1422 = vpop.f32.mrb[0].mxu0
      %v1423 = vadd.f32 0.0, %v1422
      %v1424 = vpop.f32.mrb[0].mxu0
      %1425 = vmatprep.mubr.f32.mxu0 0.0
      %1426 = vmatmul.mubr.f32.gmra.mrb[0].mxu0 %v454
      %v1427 = vpop.f32.mrb[0].mxu0
      %v1428 = vadd.f32 0.0, %v1427
      %v1429 = vpop.f32.mrb[0].mxu0
      %1430 = vmatprep.mubr.f32.mxu0 0.0
      %1431 = vmatmul.mubr.f32.gmra.mrb[0].mxu0 %v456
      %v1432 = vpop.f32.mrb[0].mxu0
      %v1433 = vadd.f32 0.0, %v1432
      %v1434 = vpop.f32.mrb[0].mxu0
      %1435 = vmatprep.mubr.f32.mxu0 0.0
      %1436 = vmatmul.mubr.f32.gmra.mrb[0].mxu0 %v458
      %v1437 = vpop.f32.mrb[0].mxu0
      %v1438 = vadd.f32 0.0, %v1437
      %v1439 = vpop.f32.mrb[0].mxu0
      %1440 = vmatprep.mubr.f32.mxu0 0.0
      %1441 = vmatmul.mubr.f32.gmra.mrb[0].mxu0 %v460
      %v1442 = vpop.f32.mrb[0].mxu0
      %v1443 = vadd.f32 0.0, %v1442
      %v1444 = vpop.f32.mrb[0].mxu0
      %1445 = vmatprep.mubr.f32.mxu0 0.0
      %1446 = vmatmul.mubr.f32.gmra.mrb[0].mxu0 %v462
      %v1447 = vpop.f32.mrb[0].mxu0
      %v1448 = vadd.f32 0.0, %v1447
      %v1449 = vpop.f32.mrb[0].mxu0
      %1450 = vmatprep.mubr.f32.mxu0 0.0
      %1451 = vmatmul.mubr.f32.gmra.mrb[0].mxu0 %v983
      %v1452 = vpop.f32.mrb[0].mxu0
      %v1453 = vadd.f32 0.0, %v1452
      %v1454 = vpop.f32.mrb[0].mxu0
      %1455 = vmatprep.mubr.f32.mxu0 0.0
      %1456 = vmatmul.mubr.f32.gmra.mrb[0].mxu0 %v1351
      %v1457 = vpop.f32.mrb[0].mxu0
      %v1458 = vadd.f32 0.0, %v1457
      %v1459 = vpop.f32.mrb[0].mxu0
      %1460 = vdwg.mxu0
      %v1461 = vadd.f32 %v1337, %v1423
      %v1462 = vadd.f32 %v1338, %v1428
      %v1463 = vadd.f32 %v1339, %v1433
      %v1464 = vadd.f32 %v1340, %v1438
      %v1465 = vadd.f32 %v1341, %v1443
      %v1466 = vadd.f32 %v1342, %v1448
      %v1467 = vadd.f32 %v1343, %v1453
      %v1468 = vadd.f32 %v1344, %v1458
      %v1469 = vrot.slane %v361, 2
      %v1470 = vrot.slane %v362, 2
      %v1471 = vsel %vm697, %v1469, %v1470
      %s1472 = scalar_lea.vmem %s3, 32
      %v1473 = vld [vmem:[%s1472] sm:$0xf]
      %v1474 = vsel %vm447, %v1471, 0
      %v1477 = vsel %vm464, %v1473, 0
      %1479 = vmatprep.subr.mxu0 0.0
      %1480 = vmatpush1.msra.mxu0 %v1477
      %1481 = vmatprep.subr.mxu0 0.0
      %1482 = vmatpush1.msra.mxu0 0.0
      %1483 = vmatprep.subr.mxu0 0.0
      %1484 = vmatpush1.msra.mxu0 0.0
      %1485 = vmatprep.subr.mxu0 0.0
      %1486 = vmatpush1.msra.mxu0 0.0
      %1487 = vmatprep.subr.mxu0 0.0
      %1488 = vmatpush1.msra.mxu0 0.0
      %1489 = vmatprep.subr.mxu0 0.0
      %1490 = vmatpush1.msra.mxu0 0.0
      %1491 = vmatprep.subr.mxu0 0.0
      %1492 = vmatpush1.msra.mxu0 0.0
      %1493 = vmatprep.subr.mxu0 0.0
      %1494 = vmatpush1.msra.mxu0 0.0
      %1495 = vmatprep.subr.mxu0 0.0
      %1496 = vmatpush1.msra.mxu0 0.0
      %1497 = vmatprep.subr.mxu0 0.0
      %1498 = vmatpush1.msra.mxu0 0.0
      %1499 = vmatprep.subr.mxu0 0.0
      %1500 = vmatpush1.msra.mxu0 0.0
      %1501 = vmatprep.subr.mxu0 0.0
      %1502 = vmatpush1.msra.mxu0 0.0
      %1503 = vmatprep.subr.mxu0 0.0
      %1504 = vmatpush1.msra.mxu0 0.0
      %1505 = vmatprep.subr.mxu0 0.0
      %1506 = vmatpush1.msra.mxu0 0.0
      %1507 = vmatprep.subr.mxu0 0.0
      %1508 = vmatpush1.msra.mxu0 0.0
      %1509 = vmatprep.subr.mxu0 0.0
      %1510 = vmatpush1.msra.mxu0 0.0
      %1511 = vmatprep.subr.mxu0 0.0
      %1512 = vmatpush1.msra.mxu0 0.0
      %1513 = vmatprep.subr.mxu0 0.0
      %1514 = vmatpush1.msra.mxu0 0.0
      %1515 = vmatprep.subr.mxu0 0.0
      %1516 = vmatpush1.msra.mxu0 0.0
      %1517 = vmatprep.subr.mxu0 0.0
      %1518 = vmatpush1.msra.mxu0 0.0
      %1519 = vmatprep.subr.mxu0 0.0
      %1520 = vmatpush1.msra.mxu0 0.0
      %1521 = vmatprep.subr.mxu0 0.0
      %1522 = vmatpush1.msra.mxu0 0.0
      %1523 = vmatprep.subr.mxu0 0.0
      %1524 = vmatpush1.msra.mxu0 0.0
      %1525 = vmatprep.subr.mxu0 0.0
      %1526 = vmatpush1.msra.mxu0 0.0
      %1527 = vmatprep.subr.mxu0 0.0
      %1528 = vmatpush1.msra.mxu0 0.0
      %1529 = vmatprep.subr.mxu0 0.0
      %1530 = vmatpush1.msra.mxu0 0.0
      %1531 = vmatprep.subr.mxu0 0.0
      %1532 = vmatpush1.msra.mxu0 0.0
      %1533 = vmatprep.subr.mxu0 0.0
      %1534 = vmatpush1.msra.mxu0 0.0
      %1535 = vmatprep.subr.mxu0 0.0
      %1536 = vmatpush1.msra.mxu0 0.0
      %1537 = vmatprep.subr.mxu0 0.0
      %1538 = vmatpush1.msra.mxu0 0.0
      %1539 = vmatprep.subr.mxu0 0.0
      %1540 = vmatpush1.msra.mxu0 0.0
      %1541 = vmatprep.subr.mxu0 0.0
      %1542 = vmatpush1.msra.mxu0 0.0
      %1543 = vmatprep.mubr.f32.mxu0 0.0
      %1544 = vmatmul.mubr.f32.gmra.mrb[0].mxu0 %v728
      %v1545 = vpop.f32.mrb[0].mxu0
      %v1546 = vadd.f32 0.0, %v1545
      %v1547 = vpop.f32.mrb[0].mxu0
      %1548 = vmatprep.mubr.f32.mxu0 0.0
      %1549 = vmatmul.mubr.f32.gmra.mrb[0].mxu0 %v730
      %v1550 = vpop.f32.mrb[0].mxu0
      %v1551 = vadd.f32 0.0, %v1550
      %v1552 = vpop.f32.mrb[0].mxu0
      %1553 = vmatprep.mubr.f32.mxu0 0.0
      %1554 = vmatmul.mubr.f32.gmra.mrb[0].mxu0 %v732
      %v1555 = vpop.f32.mrb[0].mxu0
      %v1556 = vadd.f32 0.0, %v1555
      %v1557 = vpop.f32.mrb[0].mxu0
      %1558 = vmatprep.mubr.f32.mxu0 0.0
      %1559 = vmatmul.mubr.f32.gmra.mrb[0].mxu0 %v734
      %v1560 = vpop.f32.mrb[0].mxu0
      %v1561 = vadd.f32 0.0, %v1560
      %v1562 = vpop.f32.mrb[0].mxu0
      %1563 = vmatprep.mubr.f32.mxu0 0.0
      %1564 = vmatmul.mubr.f32.gmra.mrb[0].mxu0 %v736
      %v1565 = vpop.f32.mrb[0].mxu0
      %v1566 = vadd.f32 0.0, %v1565
      %v1567 = vpop.f32.mrb[0].mxu0
      %1568 = vmatprep.mubr.f32.mxu0 0.0
      %1569 = vmatmul.mubr.f32.gmra.mrb[0].mxu0 %v738
      %v1570 = vpop.f32.mrb[0].mxu0
      %v1571 = vadd.f32 0.0, %v1570
      %v1572 = vpop.f32.mrb[0].mxu0
      %1573 = vmatprep.mubr.f32.mxu0 0.0
      %1574 = vmatmul.mubr.f32.gmra.mrb[0].mxu0 %v1106
      %v1575 = vpop.f32.mrb[0].mxu0
      %v1576 = vadd.f32 0.0, %v1575
      %v1577 = vpop.f32.mrb[0].mxu0
      %1578 = vmatprep.mubr.f32.mxu0 0.0
      %1579 = vmatmul.mubr.f32.gmra.mrb[0].mxu0 %v1474
      %v1580 = vpop.f32.mrb[0].mxu0
      %v1581 = vadd.f32 0.0, %v1580
      %v1582 = vpop.f32.mrb[0].mxu0
      %1583 = vdwg.mxu0
      %v1584 = vadd.f32 %v1461, %v1546
      %v1585 = vadd.f32 %v1462, %v1551
      %v1586 = vadd.f32 %v1463, %v1556
      %v1587 = vadd.f32 %v1464, %v1561
      %v1588 = vadd.f32 %v1465, %v1566
      %v1589 = vadd.f32 %v1466, %v1571
      %v1590 = vadd.f32 %v1467, %v1576
      %v1591 = vadd.f32 %v1468, %v1581
      %s1592 = scalar_lea.vmem %s3, 36
      %v1593 = vld [vmem:[%s1592] sm:$0xf]
      %v1595 = vsel %vm447, %v363, 0
      %v1598 = vsel %vm447, %v365, 0
      %v1601 = vsel %vm447, %v367, 0
      %v1604 = vsel %vm447, %v369, 0
      %v1607 = vsel %vm447, %v371, 0
      %v1610 = vsel %vm447, %v373, 0
      %v1613 = vsel %vm447, %v375, 0
      %v1616 = vsel %vm447, %v377, 0
      %v1619 = vsel %vm464, %v1593, 0
      %1621 = vmatprep.subr.mxu0 0.0
      %1622 = vmatpush1.msra.mxu0 %v1619
      %1623 = vmatprep.subr.mxu0 0.0
      %1624 = vmatpush1.msra.mxu0 0.0
      %1625 = vmatprep.subr.mxu0 0.0
      %1626 = vmatpush1.msra.mxu0 0.0
      %1627 = vmatprep.subr.mxu0 0.0
      %1628 = vmatpush1.msra.mxu0 0.0
      %1629 = vmatprep.subr.mxu0 0.0
      %1630 = vmatpush1.msra.mxu0 0.0
      %1631 = vmatprep.subr.mxu0 0.0
      %1632 = vmatpush1.msra.mxu0 0.0
      %1633 = vmatprep.subr.mxu0 0.0
      %1634 = vmatpush1.msra.mxu0 0.0
      %1635 = vmatprep.subr.mxu0 0.0
      %1636 = vmatpush1.msra.mxu0 0.0
      %1637 = vmatprep.subr.mxu0 0.0
      %1638 = vmatpush1.msra.mxu0 0.0
      %1639 = vmatprep.subr.mxu0 0.0
      %1640 = vmatpush1.msra.mxu0 0.0
      %1641 = vmatprep.subr.mxu0 0.0
      %1642 = vmatpush1.msra.mxu0 0.0
      %1643 = vmatprep.subr.mxu0 0.0
      %1644 = vmatpush1.msra.mxu0 0.0
      %1645 = vmatprep.subr.mxu0 0.0
      %1646 = vmatpush1.msra.mxu0 0.0
      %1647 = vmatprep.subr.mxu0 0.0
      %1648 = vmatpush1.msra.mxu0 0.0
      %1649 = vmatprep.subr.mxu0 0.0
      %1650 = vmatpush1.msra.mxu0 0.0
      %1651 = vmatprep.subr.mxu0 0.0
      %1652 = vmatpush1.msra.mxu0 0.0
      %1653 = vmatprep.subr.mxu0 0.0
      %1654 = vmatpush1.msra.mxu0 0.0
      %1655 = vmatprep.subr.mxu0 0.0
      %1656 = vmatpush1.msra.mxu0 0.0
      %1657 = vmatprep.subr.mxu0 0.0
      %1658 = vmatpush1.msra.mxu0 0.0
      %1659 = vmatprep.subr.mxu0 0.0
      %1660 = vmatpush1.msra.mxu0 0.0
      %1661 = vmatprep.subr.mxu0 0.0
      %1662 = vmatpush1.msra.mxu0 0.0
      %1663 = vmatprep.subr.mxu0 0.0
      %1664 = vmatpush1.msra.mxu0 0.0
      %1665 = vmatprep.subr.mxu0 0.0
      %1666 = vmatpush1.msra.mxu0 0.0
      %1667 = vmatprep.subr.mxu0 0.0
      %1668 = vmatpush1.msra.mxu0 0.0
      %1669 = vmatprep.subr.mxu0 0.0
      %1670 = vmatpush1.msra.mxu0 0.0
      %1671 = vmatprep.subr.mxu0 0.0
      %1672 = vmatpush1.msra.mxu0 0.0
      %1673 = vmatprep.subr.mxu0 0.0
      %1674 = vmatpush1.msra.mxu0 0.0
      %1675 = vmatprep.subr.mxu0 0.0
      %1676 = vmatpush1.msra.mxu0 0.0
      %1677 = vmatprep.subr.mxu0 0.0
      %1678 = vmatpush1.msra.mxu0 0.0
      %1679 = vmatprep.subr.mxu0 0.0
      %1680 = vmatpush1.msra.mxu0 0.0
      %1681 = vmatprep.subr.mxu0 0.0
      %1682 = vmatpush1.msra.mxu0 0.0
      %1683 = vmatprep.subr.mxu0 0.0
      %1684 = vmatpush1.msra.mxu0 0.0
      %1685 = vmatprep.mubr.f32.mxu0 0.0
      %1686 = vmatmul.mubr.f32.gmra.mrb[0].mxu0 %v1595
      %v1687 = vpop.f32.mrb[0].mxu0
      %v1688 = vadd.f32 0.0, %v1687
      %v1689 = vpop.f32.mrb[0].mxu0
      %1690 = vmatprep.mubr.f32.mxu0 0.0
      %1691 = vmatmul.mubr.f32.gmra.mrb[0].mxu0 %v1598
      %v1692 = vpop.f32.mrb[0].mxu0
      %v1693 = vadd.f32 0.0, %v1692
      %v1694 = vpop.f32.mrb[0].mxu0
      %1695 = vmatprep.mubr.f32.mxu0 0.0
      %1696 = vmatmul.mubr.f32.gmra.mrb[0].mxu0 %v1601
      %v1697 = vpop.f32.mrb[0].mxu0
      %v1698 = vadd.f32 0.0, %v1697
      %v1699 = vpop.f32.mrb[0].mxu0
      %1700 = vmatprep.mubr.f32.mxu0 0.0
      %1701 = vmatmul.mubr.f32.gmra.mrb[0].mxu0 %v1604
      %v1702 = vpop.f32.mrb[0].mxu0
      %v1703 = vadd.f32 0.0, %v1702
      %v1704 = vpop.f32.mrb[0].mxu0
      %1705 = vmatprep.mubr.f32.mxu0 0.0
      %1706 = vmatmul.mubr.f32.gmra.mrb[0].mxu0 %v1607
      %v1707 = vpop.f32.mrb[0].mxu0
      %v1708 = vadd.f32 0.0, %v1707
      %v1709 = vpop.f32.mrb[0].mxu0
      %1710 = vmatprep.mubr.f32.mxu0 0.0
      %1711 = vmatmul.mubr.f32.gmra.mrb[0].mxu0 %v1610
      %v1712 = vpop.f32.mrb[0].mxu0
      %v1713 = vadd.f32 0.0, %v1712
      %v1714 = vpop.f32.mrb[0].mxu0
      %1715 = vmatprep.mubr.f32.mxu0 0.0
      %1716 = vmatmul.mubr.f32.gmra.mrb[0].mxu0 %v1613
      %v1717 = vpop.f32.mrb[0].mxu0
      %v1718 = vadd.f32 0.0, %v1717
      %v1719 = vpop.f32.mrb[0].mxu0
      %1720 = vmatprep.mubr.f32.mxu0 0.0
      %1721 = vmatmul.mubr.f32.gmra.mrb[0].mxu0 %v1616
      %v1722 = vpop.f32.mrb[0].mxu0
      %v1723 = vadd.f32 0.0, %v1722
      %v1724 = vpop.f32.mrb[0].mxu0
      %1725 = vdwg.mxu0
      %v1726 = vadd.f32 %v1584, %v1688
      %v1727 = vadd.f32 %v1585, %v1693
      %v1728 = vadd.f32 %v1586, %v1698
      %v1729 = vadd.f32 %v1587, %v1703
      %v1730 = vadd.f32 %v1588, %v1708
      %v1731 = vadd.f32 %v1589, %v1713
      %v1732 = vadd.f32 %v1590, %v1718
      %v1733 = vadd.f32 %v1591, %v1723
      %v1742 = vrot.slane %v363, 1
      %v1743 = vrot.slane %v364, 1
      %v1744 = vsel %vm420, %v1742, %v1743
      %v1745 = vrot.slane %v365, 1
      %v1746 = vrot.slane %v366, 1
      %v1747 = vsel %vm420, %v1745, %v1746
      %v1748 = vrot.slane %v367, 1
      %v1749 = vrot.slane %v368, 1
      %v1750 = vsel %vm420, %v1748, %v1749
      %v1751 = vrot.slane %v369, 1
      %v1752 = vrot.slane %v370, 1
      %v1753 = vsel %vm420, %v1751, %v1752
      %v1754 = vrot.slane %v371, 1
      %v1755 = vrot.slane %v372, 1
      %v1756 = vsel %vm420, %v1754, %v1755
      %v1757 = vrot.slane %v373, 1
      %v1758 = vrot.slane %v374, 1
      %v1759 = vsel %vm420, %v1757, %v1758
      %v1760 = vrot.slane %v375, 1
      %v1761 = vrot.slane %v376, 1
      %v1762 = vsel %vm420, %v1760, %v1761
      %v1763 = vrot.slane %v377, 1
      %v1764 = vrot.slane %v378, 1
      %v1765 = vsel %vm420, %v1763, %v1764
      %s1766 = scalar_lea.vmem %s3, 40
      %v1767 = vld [vmem:[%s1766] sm:$0xf]
      %v1768 = vsel %vm447, %v1744, 0
      %v1770 = vsel %vm447, %v1747, 0
      %v1772 = vsel %vm447, %v1750, 0
      %v1774 = vsel %vm447, %v1753, 0
      %v1776 = vsel %vm447, %v1756, 0
      %v1778 = vsel %vm447, %v1759, 0
      %v1780 = vsel %vm447, %v1762, 0
      %v1782 = vsel %vm447, %v1765, 0
      %v1785 = vsel %vm464, %v1767, 0
      %1787 = vmatprep.subr.mxu0 0.0
      %1788 = vmatpush1.msra.mxu0 %v1785
      %1789 = vmatprep.subr.mxu0 0.0
      %1790 = vmatpush1.msra.mxu0 0.0
      %1791 = vmatprep.subr.mxu0 0.0
      %1792 = vmatpush1.msra.mxu0 0.0
      %1793 = vmatprep.subr.mxu0 0.0
      %1794 = vmatpush1.msra.mxu0 0.0
      %1795 = vmatprep.subr.mxu0 0.0
      %1796 = vmatpush1.msra.mxu0 0.0
      %1797 = vmatprep.subr.mxu0 0.0
      %1798 = vmatpush1.msra.mxu0 0.0
      %1799 = vmatprep.subr.mxu0 0.0
      %1800 = vmatpush1.msra.mxu0 0.0
      %1801 = vmatprep.subr.mxu0 0.0
      %1802 = vmatpush1.msra.mxu0 0.0
      %1803 = vmatprep.subr.mxu0 0.0
      %1804 = vmatpush1.msra.mxu0 0.0
      %1805 = vmatprep.subr.mxu0 0.0
      %1806 = vmatpush1.msra.mxu0 0.0
      %1807 = vmatprep.subr.mxu0 0.0
      %1808 = vmatpush1.msra.mxu0 0.0
      %1809 = vmatprep.subr.mxu0 0.0
      %1810 = vmatpush1.msra.mxu0 0.0
      %1811 = vmatprep.subr.mxu0 0.0
      %1812 = vmatpush1.msra.mxu0 0.0
      %1813 = vmatprep.subr.mxu0 0.0
      %1814 = vmatpush1.msra.mxu0 0.0
      %1815 = vmatprep.subr.mxu0 0.0
      %1816 = vmatpush1.msra.mxu0 0.0
      %1817 = vmatprep.subr.mxu0 0.0
      %1818 = vmatpush1.msra.mxu0 0.0
      %1819 = vmatprep.subr.mxu0 0.0
      %1820 = vmatpush1.msra.mxu0 0.0
      %1821 = vmatprep.subr.mxu0 0.0
      %1822 = vmatpush1.msra.mxu0 0.0
      %1823 = vmatprep.subr.mxu0 0.0
      %1824 = vmatpush1.msra.mxu0 0.0
      %1825 = vmatprep.subr.mxu0 0.0
      %1826 = vmatpush1.msra.mxu0 0.0
      %1827 = vmatprep.subr.mxu0 0.0
      %1828 = vmatpush1.msra.mxu0 0.0
      %1829 = vmatprep.subr.mxu0 0.0
      %1830 = vmatpush1.msra.mxu0 0.0
      %1831 = vmatprep.subr.mxu0 0.0
      %1832 = vmatpush1.msra.mxu0 0.0
      %1833 = vmatprep.subr.mxu0 0.0
      %1834 = vmatpush1.msra.mxu0 0.0
      %1835 = vmatprep.subr.mxu0 0.0
      %1836 = vmatpush1.msra.mxu0 0.0
      %1837 = vmatprep.subr.mxu0 0.0
      %1838 = vmatpush1.msra.mxu0 0.0
      %1839 = vmatprep.subr.mxu0 0.0
      %1840 = vmatpush1.msra.mxu0 0.0
      %1841 = vmatprep.subr.mxu0 0.0
      %1842 = vmatpush1.msra.mxu0 0.0
      %1843 = vmatprep.subr.mxu0 0.0
      %1844 = vmatpush1.msra.mxu0 0.0
      %1845 = vmatprep.subr.mxu0 0.0
      %1846 = vmatpush1.msra.mxu0 0.0
      %1847 = vmatprep.subr.mxu0 0.0
      %1848 = vmatpush1.msra.mxu0 0.0
      %1849 = vmatprep.subr.mxu0 0.0
      %1850 = vmatpush1.msra.mxu0 0.0
      %1851 = vmatprep.mubr.f32.mxu0 0.0
      %1852 = vmatmul.mubr.f32.gmra.mrb[0].mxu0 %v1768
      %v1853 = vpop.f32.mrb[0].mxu0
      %v1854 = vadd.f32 0.0, %v1853
      %v1855 = vpop.f32.mrb[0].mxu0
      %1856 = vmatprep.mubr.f32.mxu0 0.0
      %1857 = vmatmul.mubr.f32.gmra.mrb[0].mxu0 %v1770
      %v1858 = vpop.f32.mrb[0].mxu0
      %v1859 = vadd.f32 0.0, %v1858
      %v1860 = vpop.f32.mrb[0].mxu0
      %1861 = vmatprep.mubr.f32.mxu0 0.0
      %1862 = vmatmul.mubr.f32.gmra.mrb[0].mxu0 %v1772
      %v1863 = vpop.f32.mrb[0].mxu0
      %v1864 = vadd.f32 0.0, %v1863
      %v1865 = vpop.f32.mrb[0].mxu0
      %1866 = vmatprep.mubr.f32.mxu0 0.0
      %1867 = vmatmul.mubr.f32.gmra.mrb[0].mxu0 %v1774
      %v1868 = vpop.f32.mrb[0].mxu0
      %v1869 = vadd.f32 0.0, %v1868
      %v1870 = vpop.f32.mrb[0].mxu0
      %1871 = vmatprep.mubr.f32.mxu0 0.0
      %1872 = vmatmul.mubr.f32.gmra.mrb[0].mxu0 %v1776
      %v1873 = vpop.f32.mrb[0].mxu0
      %v1874 = vadd.f32 0.0, %v1873
      %v1875 = vpop.f32.mrb[0].mxu0
      %1876 = vmatprep.mubr.f32.mxu0 0.0
      %1877 = vmatmul.mubr.f32.gmra.mrb[0].mxu0 %v1778
      %v1878 = vpop.f32.mrb[0].mxu0
      %v1879 = vadd.f32 0.0, %v1878
      %v1880 = vpop.f32.mrb[0].mxu0
      %1881 = vmatprep.mubr.f32.mxu0 0.0
      %1882 = vmatmul.mubr.f32.gmra.mrb[0].mxu0 %v1780
      %v1883 = vpop.f32.mrb[0].mxu0
      %v1884 = vadd.f32 0.0, %v1883
      %v1885 = vpop.f32.mrb[0].mxu0
      %1886 = vmatprep.mubr.f32.mxu0 0.0
      %1887 = vmatmul.mubr.f32.gmra.mrb[0].mxu0 %v1782
      %v1888 = vpop.f32.mrb[0].mxu0
      %v1889 = vadd.f32 0.0, %v1888
      %v1890 = vpop.f32.mrb[0].mxu0
      %1891 = vdwg.mxu0
      %v1892 = vadd.f32 %v1726, %v1854
      %v1893 = vadd.f32 %v1727, %v1859
      %v1894 = vadd.f32 %v1728, %v1864
      %v1895 = vadd.f32 %v1729, %v1869
      %v1896 = vadd.f32 %v1730, %v1874
      %v1897 = vadd.f32 %v1731, %v1879
      %v1898 = vadd.f32 %v1732, %v1884
      %v1899 = vadd.f32 %v1733, %v1889
      %v1900 = vrot.slane %v363, 2
      %v1901 = vrot.slane %v364, 2
      %v1902 = vsel %vm697, %v1900, %v1901
      %v1903 = vrot.slane %v365, 2
      %v1904 = vrot.slane %v366, 2
      %v1905 = vsel %vm697, %v1903, %v1904
      %v1906 = vrot.slane %v367, 2
      %v1907 = vrot.slane %v368, 2
      %v1908 = vsel %vm697, %v1906, %v1907
      %v1909 = vrot.slane %v369, 2
      %v1910 = vrot.slane %v370, 2
      %v1911 = vsel %vm697, %v1909, %v1910
      %v1912 = vrot.slane %v371, 2
      %v1913 = vrot.slane %v372, 2
      %v1914 = vsel %vm697, %v1912, %v1913
      %v1915 = vrot.slane %v373, 2
      %v1916 = vrot.slane %v374, 2
      %v1917 = vsel %vm697, %v1915, %v1916
      %v1918 = vrot.slane %v375, 2
      %v1919 = vrot.slane %v376, 2
      %v1920 = vsel %vm697, %v1918, %v1919
      %v1921 = vrot.slane %v377, 2
      %v1922 = vrot.slane %v378, 2
      %v1923 = vsel %vm697, %v1921, %v1922
      %s1924 = scalar_lea.vmem %s3, 44
      %v1925 = vld [vmem:[%s1924] sm:$0xf]
      %v1926 = vsel %vm447, %v1902, 0
      %v1928 = vsel %vm447, %v1905, 0
      %v1930 = vsel %vm447, %v1908, 0
      %v1932 = vsel %vm447, %v1911, 0
      %v1934 = vsel %vm447, %v1914, 0
      %v1936 = vsel %vm447, %v1917, 0
      %v1938 = vsel %vm447, %v1920, 0
      %v1940 = vsel %vm447, %v1923, 0
      %v1943 = vsel %vm464, %v1925, 0
      %1945 = vmatprep.subr.mxu0 0.0
      %1946 = vmatpush1.msra.mxu0 %v1943
      %1947 = vmatprep.subr.mxu0 0.0
      %1948 = vmatpush1.msra.mxu0 0.0
      %1949 = vmatprep.subr.mxu0 0.0
      %1950 = vmatpush1.msra.mxu0 0.0
      %1951 = vmatprep.subr.mxu0 0.0
      %1952 = vmatpush1.msra.mxu0 0.0
      %1953 = vmatprep.subr.mxu0 0.0
      %1954 = vmatpush1.msra.mxu0 0.0
      %1955 = vmatprep.subr.mxu0 0.0
      %1956 = vmatpush1.msra.mxu0 0.0
      %1957 = vmatprep.subr.mxu0 0.0
      %1958 = vmatpush1.msra.mxu0 0.0
      %1959 = vmatprep.subr.mxu0 0.0
      %1960 = vmatpush1.msra.mxu0 0.0
      %1961 = vmatprep.subr.mxu0 0.0
      %1962 = vmatpush1.msra.mxu0 0.0
      %1963 = vmatprep.subr.mxu0 0.0
      %1964 = vmatpush1.msra.mxu0 0.0
      %1965 = vmatprep.subr.mxu0 0.0
      %1966 = vmatpush1.msra.mxu0 0.0
      %1967 = vmatprep.subr.mxu0 0.0
      %1968 = vmatpush1.msra.mxu0 0.0
      %1969 = vmatprep.subr.mxu0 0.0
      %1970 = vmatpush1.msra.mxu0 0.0
      %1971 = vmatprep.subr.mxu0 0.0
      %1972 = vmatpush1.msra.mxu0 0.0
      %1973 = vmatprep.subr.mxu0 0.0
      %1974 = vmatpush1.msra.mxu0 0.0
      %1975 = vmatprep.subr.mxu0 0.0
      %1976 = vmatpush1.msra.mxu0 0.0
      %1977 = vmatprep.subr.mxu0 0.0
      %1978 = vmatpush1.msra.mxu0 0.0
      %1979 = vmatprep.subr.mxu0 0.0
      %1980 = vmatpush1.msra.mxu0 0.0
      %1981 = vmatprep.subr.mxu0 0.0
      %1982 = vmatpush1.msra.mxu0 0.0
      %1983 = vmatprep.subr.mxu0 0.0
      %1984 = vmatpush1.msra.mxu0 0.0
      %1985 = vmatprep.subr.mxu0 0.0
      %1986 = vmatpush1.msra.mxu0 0.0
      %1987 = vmatprep.subr.mxu0 0.0
      %1988 = vmatpush1.msra.mxu0 0.0
      %1989 = vmatprep.subr.mxu0 0.0
      %1990 = vmatpush1.msra.mxu0 0.0
      %1991 = vmatprep.subr.mxu0 0.0
      %1992 = vmatpush1.msra.mxu0 0.0
      %1993 = vmatprep.subr.mxu0 0.0
      %1994 = vmatpush1.msra.mxu0 0.0
      %1995 = vmatprep.subr.mxu0 0.0
      %1996 = vmatpush1.msra.mxu0 0.0
      %1997 = vmatprep.subr.mxu0 0.0
      %1998 = vmatpush1.msra.mxu0 0.0
      %1999 = vmatprep.subr.mxu0 0.0
      %2000 = vmatpush1.msra.mxu0 0.0
      %2001 = vmatprep.subr.mxu0 0.0
      %2002 = vmatpush1.msra.mxu0 0.0
      %2003 = vmatprep.subr.mxu0 0.0
      %2004 = vmatpush1.msra.mxu0 0.0
      %2005 = vmatprep.subr.mxu0 0.0
      %2006 = vmatpush1.msra.mxu0 0.0
      %2007 = vmatprep.subr.mxu0 0.0
      %2008 = vmatpush1.msra.mxu0 0.0
      %2009 = vmatprep.mubr.f32.mxu0 0.0
      %2010 = vmatmul.mubr.f32.gmra.mrb[0].mxu0 %v1926
      %v2011 = vpop.f32.mrb[0].mxu0
      %v2012 = vadd.f32 0.0, %v2011
      %v2013 = vpop.f32.mrb[0].mxu0
      %2014 = vmatprep.mubr.f32.mxu0 0.0
      %2015 = vmatmul.mubr.f32.gmra.mrb[0].mxu0 %v1928
      %v2016 = vpop.f32.mrb[0].mxu0
      %v2017 = vadd.f32 0.0, %v2016
      %v2018 = vpop.f32.mrb[0].mxu0
      %2019 = vmatprep.mubr.f32.mxu0 0.0
      %2020 = vmatmul.mubr.f32.gmra.mrb[0].mxu0 %v1930
      %v2021 = vpop.f32.mrb[0].mxu0
      %v2022 = vadd.f32 0.0, %v2021
      %v2023 = vpop.f32.mrb[0].mxu0
      %2024 = vmatprep.mubr.f32.mxu0 0.0
      %2025 = vmatmul.mubr.f32.gmra.mrb[0].mxu0 %v1932
      %v2026 = vpop.f32.mrb[0].mxu0
      %v2027 = vadd.f32 0.0, %v2026
      %v2028 = vpop.f32.mrb[0].mxu0
      %2029 = vmatprep.mubr.f32.mxu0 0.0
      %2030 = vmatmul.mubr.f32.gmra.mrb[0].mxu0 %v1934
      %v2031 = vpop.f32.mrb[0].mxu0
      %v2032 = vadd.f32 0.0, %v2031
      %v2033 = vpop.f32.mrb[0].mxu0
      %2034 = vmatprep.mubr.f32.mxu0 0.0
      %2035 = vmatmul.mubr.f32.gmra.mrb[0].mxu0 %v1936
      %v2036 = vpop.f32.mrb[0].mxu0
      %v2037 = vadd.f32 0.0, %v2036
      %v2038 = vpop.f32.mrb[0].mxu0
      %2039 = vmatprep.mubr.f32.mxu0 0.0
      %2040 = vmatmul.mubr.f32.gmra.mrb[0].mxu0 %v1938
      %v2041 = vpop.f32.mrb[0].mxu0
      %v2042 = vadd.f32 0.0, %v2041
      %v2043 = vpop.f32.mrb[0].mxu0
      %2044 = vmatprep.mubr.f32.mxu0 0.0
      %2045 = vmatmul.mubr.f32.gmra.mrb[0].mxu0 %v1940
      %v2046 = vpop.f32.mrb[0].mxu0
      %v2047 = vadd.f32 0.0, %v2046
      %v2048 = vpop.f32.mrb[0].mxu0
      %2049 = vdwg.mxu0
      %v2050 = vadd.f32 %v1892, %v2012
      %v2051 = vadd.f32 %v1893, %v2017
      %v2052 = vadd.f32 %v1894, %v2022
      %v2053 = vadd.f32 %v1895, %v2027
      %v2054 = vadd.f32 %v1896, %v2032
      %v2055 = vadd.f32 %v1897, %v2037
      %v2056 = vadd.f32 %v1898, %v2042
      %v2057 = vadd.f32 %v1899, %v2047
      %s2058 = scalar_lea.vmem %s3, 48
      %v2059 = vld [vmem:[%s2058] sm:$0xf]
      %v2061 = vsel %vm447, %v379, 0
      %v2064 = vsel %vm464, %v2059, 0
      %2066 = vmatprep.subr.mxu0 0.0
      %2067 = vmatpush1.msra.mxu0 %v2064
      %2068 = vmatprep.subr.mxu0 0.0
      %2069 = vmatpush1.msra.mxu0 0.0
      %2070 = vmatprep.subr.mxu0 0.0
      %2071 = vmatpush1.msra.mxu0 0.0
      %2072 = vmatprep.subr.mxu0 0.0
      %2073 = vmatpush1.msra.mxu0 0.0
      %2074 = vmatprep.subr.mxu0 0.0
      %2075 = vmatpush1.msra.mxu0 0.0
      %2076 = vmatprep.subr.mxu0 0.0
      %2077 = vmatpush1.msra.mxu0 0.0
      %2078 = vmatprep.subr.mxu0 0.0
      %2079 = vmatpush1.msra.mxu0 0.0
      %2080 = vmatprep.subr.mxu0 0.0
      %2081 = vmatpush1.msra.mxu0 0.0
      %2082 = vmatprep.subr.mxu0 0.0
      %2083 = vmatpush1.msra.mxu0 0.0
      %2084 = vmatprep.subr.mxu0 0.0
      %2085 = vmatpush1.msra.mxu0 0.0
      %2086 = vmatprep.subr.mxu0 0.0
      %2087 = vmatpush1.msra.mxu0 0.0
      %2088 = vmatprep.subr.mxu0 0.0
      %2089 = vmatpush1.msra.mxu0 0.0
      %2090 = vmatprep.subr.mxu0 0.0
      %2091 = vmatpush1.msra.mxu0 0.0
      %2092 = vmatprep.subr.mxu0 0.0
      %2093 = vmatpush1.msra.mxu0 0.0
      %2094 = vmatprep.subr.mxu0 0.0
      %2095 = vmatpush1.msra.mxu0 0.0
      %2096 = vmatprep.subr.mxu0 0.0
      %2097 = vmatpush1.msra.mxu0 0.0
      %2098 = vmatprep.subr.mxu0 0.0
      %2099 = vmatpush1.msra.mxu0 0.0
      %2100 = vmatprep.subr.mxu0 0.0
      %2101 = vmatpush1.msra.mxu0 0.0
      %2102 = vmatprep.subr.mxu0 0.0
      %2103 = vmatpush1.msra.mxu0 0.0
      %2104 = vmatprep.subr.mxu0 0.0
      %2105 = vmatpush1.msra.mxu0 0.0
      %2106 = vmatprep.subr.mxu0 0.0
      %2107 = vmatpush1.msra.mxu0 0.0
      %2108 = vmatprep.subr.mxu0 0.0
      %2109 = vmatpush1.msra.mxu0 0.0
      %2110 = vmatprep.subr.mxu0 0.0
      %2111 = vmatpush1.msra.mxu0 0.0
      %2112 = vmatprep.subr.mxu0 0.0
      %2113 = vmatpush1.msra.mxu0 0.0
      %2114 = vmatprep.subr.mxu0 0.0
      %2115 = vmatpush1.msra.mxu0 0.0
      %2116 = vmatprep.subr.mxu0 0.0
      %2117 = vmatpush1.msra.mxu0 0.0
      %2118 = vmatprep.subr.mxu0 0.0
      %2119 = vmatpush1.msra.mxu0 0.0
      %2120 = vmatprep.subr.mxu0 0.0
      %2121 = vmatpush1.msra.mxu0 0.0
      %2122 = vmatprep.subr.mxu0 0.0
      %2123 = vmatpush1.msra.mxu0 0.0
      %2124 = vmatprep.subr.mxu0 0.0
      %2125 = vmatpush1.msra.mxu0 0.0
      %2126 = vmatprep.subr.mxu0 0.0
      %2127 = vmatpush1.msra.mxu0 0.0
      %2128 = vmatprep.subr.mxu0 0.0
      %2129 = vmatpush1.msra.mxu0 0.0
      %2130 = vmatprep.mubr.f32.mxu0 0.0
      %2131 = vmatmul.mubr.f32.gmra.mrb[0].mxu0 %v1598
      %v2132 = vpop.f32.mrb[0].mxu0
      %v2133 = vadd.f32 0.0, %v2132
      %v2134 = vpop.f32.mrb[0].mxu0
      %2135 = vmatprep.mubr.f32.mxu0 0.0
      %2136 = vmatmul.mubr.f32.gmra.mrb[0].mxu0 %v1601
      %v2137 = vpop.f32.mrb[0].mxu0
      %v2138 = vadd.f32 0.0, %v2137
      %v2139 = vpop.f32.mrb[0].mxu0
      %2140 = vmatprep.mubr.f32.mxu0 0.0
      %2141 = vmatmul.mubr.f32.gmra.mrb[0].mxu0 %v1604
      %v2142 = vpop.f32.mrb[0].mxu0
      %v2143 = vadd.f32 0.0, %v2142
      %v2144 = vpop.f32.mrb[0].mxu0
      %2145 = vmatprep.mubr.f32.mxu0 0.0
      %2146 = vmatmul.mubr.f32.gmra.mrb[0].mxu0 %v1607
      %v2147 = vpop.f32.mrb[0].mxu0
      %v2148 = vadd.f32 0.0, %v2147
      %v2149 = vpop.f32.mrb[0].mxu0
      %2150 = vmatprep.mubr.f32.mxu0 0.0
      %2151 = vmatmul.mubr.f32.gmra.mrb[0].mxu0 %v1610
      %v2152 = vpop.f32.mrb[0].mxu0
      %v2153 = vadd.f32 0.0, %v2152
      %v2154 = vpop.f32.mrb[0].mxu0
      %2155 = vmatprep.mubr.f32.mxu0 0.0
      %2156 = vmatmul.mubr.f32.gmra.mrb[0].mxu0 %v1613
      %v2157 = vpop.f32.mrb[0].mxu0
      %v2158 = vadd.f32 0.0, %v2157
      %v2159 = vpop.f32.mrb[0].mxu0
      %2160 = vmatprep.mubr.f32.mxu0 0.0
      %2161 = vmatmul.mubr.f32.gmra.mrb[0].mxu0 %v1616
      %v2162 = vpop.f32.mrb[0].mxu0
      %v2163 = vadd.f32 0.0, %v2162
      %v2164 = vpop.f32.mrb[0].mxu0
      %2165 = vmatprep.mubr.f32.mxu0 0.0
      %2166 = vmatmul.mubr.f32.gmra.mrb[0].mxu0 %v2061
      %v2167 = vpop.f32.mrb[0].mxu0
      %v2168 = vadd.f32 0.0, %v2167
      %v2169 = vpop.f32.mrb[0].mxu0
      %2170 = vdwg.mxu0
      %v2171 = vadd.f32 %v2050, %v2133
      %v2172 = vadd.f32 %v2051, %v2138
      %v2173 = vadd.f32 %v2052, %v2143
      %v2174 = vadd.f32 %v2053, %v2148
      %v2175 = vadd.f32 %v2054, %v2153
      %v2176 = vadd.f32 %v2055, %v2158
      %v2177 = vadd.f32 %v2056, %v2163
      %v2178 = vadd.f32 %v2057, %v2168
      %v2180 = vrot.slane %v379, 1
      %v2181 = vrot.slane %v380, 1
      %v2182 = vsel %vm420, %v2180, %v2181
      %s2183 = scalar_lea.vmem %s3, 52
      %v2184 = vld [vmem:[%s2183] sm:$0xf]
      %v2185 = vsel %vm447, %v2182, 0
      %v2188 = vsel %vm464, %v2184, 0
      %2190 = vmatprep.subr.mxu0 0.0
      %2191 = vmatpush1.msra.mxu0 %v2188
      %2192 = vmatprep.subr.mxu0 0.0
      %2193 = vmatpush1.msra.mxu0 0.0
      %2194 = vmatprep.subr.mxu0 0.0
      %2195 = vmatpush1.msra.mxu0 0.0
      %2196 = vmatprep.subr.mxu0 0.0
      %2197 = vmatpush1.msra.mxu0 0.0
      %2198 = vmatprep.subr.mxu0 0.0
      %2199 = vmatpush1.msra.mxu0 0.0
      %2200 = vmatprep.subr.mxu0 0.0
      %2201 = vmatpush1.msra.mxu0 0.0
      %2202 = vmatprep.subr.mxu0 0.0
      %2203 = vmatpush1.msra.mxu0 0.0
      %2204 = vmatprep.subr.mxu0 0.0
      %2205 = vmatpush1.msra.mxu0 0.0
      %2206 = vmatprep.subr.mxu0 0.0
      %2207 = vmatpush1.msra.mxu0 0.0
      %2208 = vmatprep.subr.mxu0 0.0
      %2209 = vmatpush1.msra.mxu0 0.0
      %2210 = vmatprep.subr.mxu0 0.0
      %2211 = vmatpush1.msra.mxu0 0.0
      %2212 = vmatprep.subr.mxu0 0.0
      %2213 = vmatpush1.msra.mxu0 0.0
      %2214 = vmatprep.subr.mxu0 0.0
      %2215 = vmatpush1.msra.mxu0 0.0
      %2216 = vmatprep.subr.mxu0 0.0
      %2217 = vmatpush1.msra.mxu0 0.0
      %2218 = vmatprep.subr.mxu0 0.0
      %2219 = vmatpush1.msra.mxu0 0.0
      %2220 = vmatprep.subr.mxu0 0.0
      %2221 = vmatpush1.msra.mxu0 0.0
      %2222 = vmatprep.subr.mxu0 0.0
      %2223 = vmatpush1.msra.mxu0 0.0
      %2224 = vmatprep.subr.mxu0 0.0
      %2225 = vmatpush1.msra.mxu0 0.0
      %2226 = vmatprep.subr.mxu0 0.0
      %2227 = vmatpush1.msra.mxu0 0.0
      %2228 = vmatprep.subr.mxu0 0.0
      %2229 = vmatpush1.msra.mxu0 0.0
      %2230 = vmatprep.subr.mxu0 0.0
      %2231 = vmatpush1.msra.mxu0 0.0
      %2232 = vmatprep.subr.mxu0 0.0
      %2233 = vmatpush1.msra.mxu0 0.0
      %2234 = vmatprep.subr.mxu0 0.0
      %2235 = vmatpush1.msra.mxu0 0.0
      %2236 = vmatprep.subr.mxu0 0.0
      %2237 = vmatpush1.msra.mxu0 0.0
      %2238 = vmatprep.subr.mxu0 0.0
      %2239 = vmatpush1.msra.mxu0 0.0
      %2240 = vmatprep.subr.mxu0 0.0
      %2241 = vmatpush1.msra.mxu0 0.0
      %2242 = vmatprep.subr.mxu0 0.0
      %2243 = vmatpush1.msra.mxu0 0.0
      %2244 = vmatprep.subr.mxu0 0.0
      %2245 = vmatpush1.msra.mxu0 0.0
      %2246 = vmatprep.subr.mxu0 0.0
      %2247 = vmatpush1.msra.mxu0 0.0
      %2248 = vmatprep.subr.mxu0 0.0
      %2249 = vmatpush1.msra.mxu0 0.0
      %2250 = vmatprep.subr.mxu0 0.0
      %2251 = vmatpush1.msra.mxu0 0.0
      %2252 = vmatprep.subr.mxu0 0.0
      %2253 = vmatpush1.msra.mxu0 0.0
      %2254 = vmatprep.mubr.f32.mxu0 0.0
      %2255 = vmatmul.mubr.f32.gmra.mrb[0].mxu0 %v1770
      %v2256 = vpop.f32.mrb[0].mxu0
      %v2257 = vadd.f32 0.0, %v2256
      %v2258 = vpop.f32.mrb[0].mxu0
      %2259 = vmatprep.mubr.f32.mxu0 0.0
      %2260 = vmatmul.mubr.f32.gmra.mrb[0].mxu0 %v1772
      %v2261 = vpop.f32.mrb[0].mxu0
      %v2262 = vadd.f32 0.0, %v2261
      %v2263 = vpop.f32.mrb[0].mxu0
      %2264 = vmatprep.mubr.f32.mxu0 0.0
      %2265 = vmatmul.mubr.f32.gmra.mrb[0].mxu0 %v1774
      %v2266 = vpop.f32.mrb[0].mxu0
      %v2267 = vadd.f32 0.0, %v2266
      %v2268 = vpop.f32.mrb[0].mxu0
      %2269 = vmatprep.mubr.f32.mxu0 0.0
      %2270 = vmatmul.mubr.f32.gmra.mrb[0].mxu0 %v1776
      %v2271 = vpop.f32.mrb[0].mxu0
      %v2272 = vadd.f32 0.0, %v2271
      %v2273 = vpop.f32.mrb[0].mxu0
      %2274 = vmatprep.mubr.f32.mxu0 0.0
      %2275 = vmatmul.mubr.f32.gmra.mrb[0].mxu0 %v1778
      %v2276 = vpop.f32.mrb[0].mxu0
      %v2277 = vadd.f32 0.0, %v2276
      %v2278 = vpop.f32.mrb[0].mxu0
      %2279 = vmatprep.mubr.f32.mxu0 0.0
      %2280 = vmatmul.mubr.f32.gmra.mrb[0].mxu0 %v1780
      %v2281 = vpop.f32.mrb[0].mxu0
      %v2282 = vadd.f32 0.0, %v2281
      %v2283 = vpop.f32.mrb[0].mxu0
      %2284 = vmatprep.mubr.f32.mxu0 0.0
      %2285 = vmatmul.mubr.f32.gmra.mrb[0].mxu0 %v1782
      %v2286 = vpop.f32.mrb[0].mxu0
      %v2287 = vadd.f32 0.0, %v2286
      %v2288 = vpop.f32.mrb[0].mxu0
      %2289 = vmatprep.mubr.f32.mxu0 0.0
      %2290 = vmatmul.mubr.f32.gmra.mrb[0].mxu0 %v2185
      %v2291 = vpop.f32.mrb[0].mxu0
      %v2292 = vadd.f32 0.0, %v2291
      %v2293 = vpop.f32.mrb[0].mxu0
      %2294 = vdwg.mxu0
      %v2295 = vadd.f32 %v2171, %v2257
      %v2296 = vadd.f32 %v2172, %v2262
      %v2297 = vadd.f32 %v2173, %v2267
      %v2298 = vadd.f32 %v2174, %v2272
      %v2299 = vadd.f32 %v2175, %v2277
      %v2300 = vadd.f32 %v2176, %v2282
      %v2301 = vadd.f32 %v2177, %v2287
      %v2302 = vadd.f32 %v2178, %v2292
      %v2303 = vrot.slane %v379, 2
      %v2304 = vrot.slane %v380, 2
      %v2305 = vsel %vm697, %v2303, %v2304
      %s2306 = scalar_lea.vmem %s3, 56
      %v2307 = vld [vmem:[%s2306] sm:$0xf]
      %v2308 = vsel %vm447, %v2305, 0
      %v2311 = vsel %vm464, %v2307, 0
      %2313 = vmatprep.subr.mxu0 0.0
      %2314 = vmatpush1.msra.mxu0 %v2311
      %2315 = vmatprep.subr.mxu0 0.0
      %2316 = vmatpush1.msra.mxu0 0.0
      %2317 = vmatprep.subr.mxu0 0.0
      %2318 = vmatpush1.msra.mxu0 0.0
      %2319 = vmatprep.subr.mxu0 0.0
      %2320 = vmatpush1.msra.mxu0 0.0
      %2321 = vmatprep.subr.mxu0 0.0
      %2322 = vmatpush1.msra.mxu0 0.0
      %2323 = vmatprep.subr.mxu0 0.0
      %2324 = vmatpush1.msra.mxu0 0.0
      %2325 = vmatprep.subr.mxu0 0.0
      %2326 = vmatpush1.msra.mxu0 0.0
      %2327 = vmatprep.subr.mxu0 0.0
      %2328 = vmatpush1.msra.mxu0 0.0
      %2329 = vmatprep.subr.mxu0 0.0
      %2330 = vmatpush1.msra.mxu0 0.0
      %2331 = vmatprep.subr.mxu0 0.0
      %2332 = vmatpush1.msra.mxu0 0.0
      %2333 = vmatprep.subr.mxu0 0.0
      %2334 = vmatpush1.msra.mxu0 0.0
      %2335 = vmatprep.subr.mxu0 0.0
      %2336 = vmatpush1.msra.mxu0 0.0
      %2337 = vmatprep.subr.mxu0 0.0
      %2338 = vmatpush1.msra.mxu0 0.0
      %2339 = vmatprep.subr.mxu0 0.0
      %2340 = vmatpush1.msra.mxu0 0.0
      %2341 = vmatprep.subr.mxu0 0.0
      %2342 = vmatpush1.msra.mxu0 0.0
      %2343 = vmatprep.subr.mxu0 0.0
      %2344 = vmatpush1.msra.mxu0 0.0
      %2345 = vmatprep.subr.mxu0 0.0
      %2346 = vmatpush1.msra.mxu0 0.0
      %2347 = vmatprep.subr.mxu0 0.0
      %2348 = vmatpush1.msra.mxu0 0.0
      %2349 = vmatprep.subr.mxu0 0.0
      %2350 = vmatpush1.msra.mxu0 0.0
      %2351 = vmatprep.subr.mxu0 0.0
      %2352 = vmatpush1.msra.mxu0 0.0
      %2353 = vmatprep.subr.mxu0 0.0
      %2354 = vmatpush1.msra.mxu0 0.0
      %2355 = vmatprep.subr.mxu0 0.0
      %2356 = vmatpush1.msra.mxu0 0.0
      %2357 = vmatprep.subr.mxu0 0.0
      %2358 = vmatpush1.msra.mxu0 0.0
      %2359 = vmatprep.subr.mxu0 0.0
      %2360 = vmatpush1.msra.mxu0 0.0
      %2361 = vmatprep.subr.mxu0 0.0
      %2362 = vmatpush1.msra.mxu0 0.0
      %2363 = vmatprep.subr.mxu0 0.0
      %2364 = vmatpush1.msra.mxu0 0.0
      %2365 = vmatprep.subr.mxu0 0.0
      %2366 = vmatpush1.msra.mxu0 0.0
      %2367 = vmatprep.subr.mxu0 0.0
      %2368 = vmatpush1.msra.mxu0 0.0
      %2369 = vmatprep.subr.mxu0 0.0
      %2370 = vmatpush1.msra.mxu0 0.0
      %2371 = vmatprep.subr.mxu0 0.0
      %2372 = vmatpush1.msra.mxu0 0.0
      %2373 = vmatprep.subr.mxu0 0.0
      %2374 = vmatpush1.msra.mxu0 0.0
      %2375 = vmatprep.subr.mxu0 0.0
      %2376 = vmatpush1.msra.mxu0 0.0
      %2377 = vmatprep.mubr.f32.mxu0 0.0
      %2378 = vmatmul.mubr.f32.gmra.mrb[0].mxu0 %v1928
      %v2379 = vpop.f32.mrb[0].mxu0
      %v2380 = vadd.f32 0.0, %v2379
      %v2381 = vpop.f32.mrb[0].mxu0
      %2382 = vmatprep.mubr.f32.mxu0 0.0
      %2383 = vmatmul.mubr.f32.gmra.mrb[0].mxu0 %v1930
      %v2384 = vpop.f32.mrb[0].mxu0
      %v2385 = vadd.f32 0.0, %v2384
      %v2386 = vpop.f32.mrb[0].mxu0
      %2387 = vmatprep.mubr.f32.mxu0 0.0
      %2388 = vmatmul.mubr.f32.gmra.mrb[0].mxu0 %v1932
      %v2389 = vpop.f32.mrb[0].mxu0
      %v2390 = vadd.f32 0.0, %v2389
      %v2391 = vpop.f32.mrb[0].mxu0
      %2392 = vmatprep.mubr.f32.mxu0 0.0
      %2393 = vmatmul.mubr.f32.gmra.mrb[0].mxu0 %v1934
      %v2394 = vpop.f32.mrb[0].mxu0
      %v2395 = vadd.f32 0.0, %v2394
      %v2396 = vpop.f32.mrb[0].mxu0
      %2397 = vmatprep.mubr.f32.mxu0 0.0
      %2398 = vmatmul.mubr.f32.gmra.mrb[0].mxu0 %v1936
      %v2399 = vpop.f32.mrb[0].mxu0
      %v2400 = vadd.f32 0.0, %v2399
      %v2401 = vpop.f32.mrb[0].mxu0
      %2402 = vmatprep.mubr.f32.mxu0 0.0
      %2403 = vmatmul.mubr.f32.gmra.mrb[0].mxu0 %v1938
      %v2404 = vpop.f32.mrb[0].mxu0
      %v2405 = vadd.f32 0.0, %v2404
      %v2406 = vpop.f32.mrb[0].mxu0
      %2407 = vmatprep.mubr.f32.mxu0 0.0
      %2408 = vmatmul.mubr.f32.gmra.mrb[0].mxu0 %v1940
      %v2409 = vpop.f32.mrb[0].mxu0
      %v2410 = vadd.f32 0.0, %v2409
      %v2411 = vpop.f32.mrb[0].mxu0
      %2412 = vmatprep.mubr.f32.mxu0 0.0
      %2413 = vmatmul.mubr.f32.gmra.mrb[0].mxu0 %v2308
      %v2414 = vpop.f32.mrb[0].mxu0
      %v2415 = vadd.f32 0.0, %v2414
      %v2416 = vpop.f32.mrb[0].mxu0
      %2417 = vdwg.mxu0
      %v2418 = vadd.f32 %v2295, %v2380
      %v2419 = vadd.f32 %v2296, %v2385
      %v2420 = vadd.f32 %v2297, %v2390
      %v2421 = vadd.f32 %v2298, %v2395
      %v2422 = vadd.f32 %v2299, %v2400
      %v2423 = vadd.f32 %v2300, %v2405
      %v2424 = vadd.f32 %v2301, %v2410
      %v2425 = vadd.f32 %v2302, %v2415
      %s2426 = scalar_lea.vmem %s3, 60
      %v2427 = vld [vmem:[%s2426] sm:$0xf]
      %v2429 = vsel %vm447, %v381, 0
      %v2432 = vsel %vm464, %v2427, 0
      %2434 = vmatprep.subr.mxu0 0.0
      %2435 = vmatpush1.msra.mxu0 %v2432
      %2436 = vmatprep.subr.mxu0 0.0
      %2437 = vmatpush1.msra.mxu0 0.0
      %2438 = vmatprep.subr.mxu0 0.0
      %2439 = vmatpush1.msra.mxu0 0.0
      %2440 = vmatprep.subr.mxu0 0.0
      %2441 = vmatpush1.msra.mxu0 0.0
      %2442 = vmatprep.subr.mxu0 0.0
      %2443 = vmatpush1.msra.mxu0 0.0
      %2444 = vmatprep.subr.mxu0 0.0
      %2445 = vmatpush1.msra.mxu0 0.0
      %2446 = vmatprep.subr.mxu0 0.0
      %2447 = vmatpush1.msra.mxu0 0.0
      %2448 = vmatprep.subr.mxu0 0.0
      %2449 = vmatpush1.msra.mxu0 0.0
      %2450 = vmatprep.subr.mxu0 0.0
      %2451 = vmatpush1.msra.mxu0 0.0
      %2452 = vmatprep.subr.mxu0 0.0
      %2453 = vmatpush1.msra.mxu0 0.0
      %2454 = vmatprep.subr.mxu0 0.0
      %2455 = vmatpush1.msra.mxu0 0.0
      %2456 = vmatprep.subr.mxu0 0.0
      %2457 = vmatpush1.msra.mxu0 0.0
      %2458 = vmatprep.subr.mxu0 0.0
      %2459 = vmatpush1.msra.mxu0 0.0
      %2460 = vmatprep.subr.mxu0 0.0
      %2461 = vmatpush1.msra.mxu0 0.0
      %2462 = vmatprep.subr.mxu0 0.0
      %2463 = vmatpush1.msra.mxu0 0.0
      %2464 = vmatprep.subr.mxu0 0.0
      %2465 = vmatpush1.msra.mxu0 0.0
      %2466 = vmatprep.subr.mxu0 0.0
      %2467 = vmatpush1.msra.mxu0 0.0
      %2468 = vmatprep.subr.mxu0 0.0
      %2469 = vmatpush1.msra.mxu0 0.0
      %2470 = vmatprep.subr.mxu0 0.0
      %2471 = vmatpush1.msra.mxu0 0.0
      %2472 = vmatprep.subr.mxu0 0.0
      %2473 = vmatpush1.msra.mxu0 0.0
      %2474 = vmatprep.subr.mxu0 0.0
      %2475 = vmatpush1.msra.mxu0 0.0
      %2476 = vmatprep.subr.mxu0 0.0
      %2477 = vmatpush1.msra.mxu0 0.0
      %2478 = vmatprep.subr.mxu0 0.0
      %2479 = vmatpush1.msra.mxu0 0.0
      %2480 = vmatprep.subr.mxu0 0.0
      %2481 = vmatpush1.msra.mxu0 0.0
      %2482 = vmatprep.subr.mxu0 0.0
      %2483 = vmatpush1.msra.mxu0 0.0
      %2484 = vmatprep.subr.mxu0 0.0
      %2485 = vmatpush1.msra.mxu0 0.0
      %2486 = vmatprep.subr.mxu0 0.0
      %2487 = vmatpush1.msra.mxu0 0.0
      %2488 = vmatprep.subr.mxu0 0.0
      %2489 = vmatpush1.msra.mxu0 0.0
      %2490 = vmatprep.subr.mxu0 0.0
      %2491 = vmatpush1.msra.mxu0 0.0
      %2492 = vmatprep.subr.mxu0 0.0
      %2493 = vmatpush1.msra.mxu0 0.0
      %2494 = vmatprep.subr.mxu0 0.0
      %2495 = vmatpush1.msra.mxu0 0.0
      %2496 = vmatprep.subr.mxu0 0.0
      %2497 = vmatpush1.msra.mxu0 0.0
      %2498 = vmatprep.mubr.f32.mxu0 0.0
      %2499 = vmatmul.mubr.f32.gmra.mrb[0].mxu0 %v1601
      %v2500 = vpop.f32.mrb[0].mxu0
      %v2501 = vadd.f32 0.0, %v2500
      %v2502 = vpop.f32.mrb[0].mxu0
      %2503 = vmatprep.mubr.f32.mxu0 0.0
      %2504 = vmatmul.mubr.f32.gmra.mrb[0].mxu0 %v1604
      %v2505 = vpop.f32.mrb[0].mxu0
      %v2506 = vadd.f32 0.0, %v2505
      %v2507 = vpop.f32.mrb[0].mxu0
      %2508 = vmatprep.mubr.f32.mxu0 0.0
      %2509 = vmatmul.mubr.f32.gmra.mrb[0].mxu0 %v1607
      %v2510 = vpop.f32.mrb[0].mxu0
      %v2511 = vadd.f32 0.0, %v2510
      %v2512 = vpop.f32.mrb[0].mxu0
      %2513 = vmatprep.mubr.f32.mxu0 0.0
      %2514 = vmatmul.mubr.f32.gmra.mrb[0].mxu0 %v1610
      %v2515 = vpop.f32.mrb[0].mxu0
      %v2516 = vadd.f32 0.0, %v2515
      %v2517 = vpop.f32.mrb[0].mxu0
      %2518 = vmatprep.mubr.f32.mxu0 0.0
      %2519 = vmatmul.mubr.f32.gmra.mrb[0].mxu0 %v1613
      %v2520 = vpop.f32.mrb[0].mxu0
      %v2521 = vadd.f32 0.0, %v2520
      %v2522 = vpop.f32.mrb[0].mxu0
      %2523 = vmatprep.mubr.f32.mxu0 0.0
      %2524 = vmatmul.mubr.f32.gmra.mrb[0].mxu0 %v1616
      %v2525 = vpop.f32.mrb[0].mxu0
      %v2526 = vadd.f32 0.0, %v2525
      %v2527 = vpop.f32.mrb[0].mxu0
      %2528 = vmatprep.mubr.f32.mxu0 0.0
      %2529 = vmatmul.mubr.f32.gmra.mrb[0].mxu0 %v2061
      %v2530 = vpop.f32.mrb[0].mxu0
      %v2531 = vadd.f32 0.0, %v2530
      %v2532 = vpop.f32.mrb[0].mxu0
      %2533 = vmatprep.mubr.f32.mxu0 0.0
      %2534 = vmatmul.mubr.f32.gmra.mrb[0].mxu0 %v2429
      %v2535 = vpop.f32.mrb[0].mxu0
      %v2536 = vadd.f32 0.0, %v2535
      %v2537 = vpop.f32.mrb[0].mxu0
      %2538 = vdwg.mxu0
      %v2539 = vadd.f32 %v2418, %v2501
      %v2540 = vadd.f32 %v2419, %v2506
      %v2541 = vadd.f32 %v2420, %v2511
      %v2542 = vadd.f32 %v2421, %v2516
      %v2543 = vadd.f32 %v2422, %v2521
      %v2544 = vadd.f32 %v2423, %v2526
      %v2545 = vadd.f32 %v2424, %v2531
      %v2546 = vadd.f32 %v2425, %v2536
      %v2548 = vrot.slane %v381, 1
      %v2549 = vrot.slane %v382, 1
      %v2550 = vsel %vm420, %v2548, %v2549
      %s2551 = scalar_lea.vmem %s3, 64
      %v2552 = vld [vmem:[%s2551] sm:$0xf]
      %v2553 = vsel %vm447, %v2550, 0
      %v2556 = vsel %vm464, %v2552, 0
      %2558 = vmatprep.subr.mxu0 0.0
      %2559 = vmatpush1.msra.mxu0 %v2556
      %2560 = vmatprep.subr.mxu0 0.0
      %2561 = vmatpush1.msra.mxu0 0.0
      %2562 = vmatprep.subr.mxu0 0.0
      %2563 = vmatpush1.msra.mxu0 0.0
      %2564 = vmatprep.subr.mxu0 0.0
      %2565 = vmatpush1.msra.mxu0 0.0
      %2566 = vmatprep.subr.mxu0 0.0
      %2567 = vmatpush1.msra.mxu0 0.0
      %2568 = vmatprep.subr.mxu0 0.0
      %2569 = vmatpush1.msra.mxu0 0.0
      %2570 = vmatprep.subr.mxu0 0.0
      %2571 = vmatpush1.msra.mxu0 0.0
      %2572 = vmatprep.subr.mxu0 0.0
      %2573 = vmatpush1.msra.mxu0 0.0
      %2574 = vmatprep.subr.mxu0 0.0
      %2575 = vmatpush1.msra.mxu0 0.0
      %2576 = vmatprep.subr.mxu0 0.0
      %2577 = vmatpush1.msra.mxu0 0.0
      %2578 = vmatprep.subr.mxu0 0.0
      %2579 = vmatpush1.msra.mxu0 0.0
      %2580 = vmatprep.subr.mxu0 0.0
      %2581 = vmatpush1.msra.mxu0 0.0
      %2582 = vmatprep.subr.mxu0 0.0
      %2583 = vmatpush1.msra.mxu0 0.0
      %2584 = vmatprep.subr.mxu0 0.0
      %2585 = vmatpush1.msra.mxu0 0.0
      %2586 = vmatprep.subr.mxu0 0.0
      %2587 = vmatpush1.msra.mxu0 0.0
      %2588 = vmatprep.subr.mxu0 0.0
      %2589 = vmatpush1.msra.mxu0 0.0
      %2590 = vmatprep.subr.mxu0 0.0
      %2591 = vmatpush1.msra.mxu0 0.0
      %2592 = vmatprep.subr.mxu0 0.0
      %2593 = vmatpush1.msra.mxu0 0.0
      %2594 = vmatprep.subr.mxu0 0.0
      %2595 = vmatpush1.msra.mxu0 0.0
      %2596 = vmatprep.subr.mxu0 0.0
      %2597 = vmatpush1.msra.mxu0 0.0
      %2598 = vmatprep.subr.mxu0 0.0
      %2599 = vmatpush1.msra.mxu0 0.0
      %2600 = vmatprep.subr.mxu0 0.0
      %2601 = vmatpush1.msra.mxu0 0.0
      %2602 = vmatprep.subr.mxu0 0.0
      %2603 = vmatpush1.msra.mxu0 0.0
      %2604 = vmatprep.subr.mxu0 0.0
      %2605 = vmatpush1.msra.mxu0 0.0
      %2606 = vmatprep.subr.mxu0 0.0
      %2607 = vmatpush1.msra.mxu0 0.0
      %2608 = vmatprep.subr.mxu0 0.0
      %2609 = vmatpush1.msra.mxu0 0.0
      %2610 = vmatprep.subr.mxu0 0.0
      %2611 = vmatpush1.msra.mxu0 0.0
      %2612 = vmatprep.subr.mxu0 0.0
      %2613 = vmatpush1.msra.mxu0 0.0
      %2614 = vmatprep.subr.mxu0 0.0
      %2615 = vmatpush1.msra.mxu0 0.0
      %2616 = vmatprep.subr.mxu0 0.0
      %2617 = vmatpush1.msra.mxu0 0.0
      %2618 = vmatprep.subr.mxu0 0.0
      %2619 = vmatpush1.msra.mxu0 0.0
      %2620 = vmatprep.subr.mxu0 0.0
      %2621 = vmatpush1.msra.mxu0 0.0
      %2622 = vmatprep.mubr.f32.mxu0 0.0
      %2623 = vmatmul.mubr.f32.gmra.mrb[0].mxu0 %v1772
      %v2624 = vpop.f32.mrb[0].mxu0
      %v2625 = vadd.f32 0.0, %v2624
      %v2626 = vpop.f32.mrb[0].mxu0
      %2627 = vmatprep.mubr.f32.mxu0 0.0
      %2628 = vmatmul.mubr.f32.gmra.mrb[0].mxu0 %v1774
      %v2629 = vpop.f32.mrb[0].mxu0
      %v2630 = vadd.f32 0.0, %v2629
      %v2631 = vpop.f32.mrb[0].mxu0
      %2632 = vmatprep.mubr.f32.mxu0 0.0
      %2633 = vmatmul.mubr.f32.gmra.mrb[0].mxu0 %v1776
      %v2634 = vpop.f32.mrb[0].mxu0
      %v2635 = vadd.f32 0.0, %v2634
      %v2636 = vpop.f32.mrb[0].mxu0
      %2637 = vmatprep.mubr.f32.mxu0 0.0
      %2638 = vmatmul.mubr.f32.gmra.mrb[0].mxu0 %v1778
      %v2639 = vpop.f32.mrb[0].mxu0
      %v2640 = vadd.f32 0.0, %v2639
      %v2641 = vpop.f32.mrb[0].mxu0
      %2642 = vmatprep.mubr.f32.mxu0 0.0
      %2643 = vmatmul.mubr.f32.gmra.mrb[0].mxu0 %v1780
      %v2644 = vpop.f32.mrb[0].mxu0
      %v2645 = vadd.f32 0.0, %v2644
      %v2646 = vpop.f32.mrb[0].mxu0
      %2647 = vmatprep.mubr.f32.mxu0 0.0
      %2648 = vmatmul.mubr.f32.gmra.mrb[0].mxu0 %v1782
      %v2649 = vpop.f32.mrb[0].mxu0
      %v2650 = vadd.f32 0.0, %v2649
      %v2651 = vpop.f32.mrb[0].mxu0
      %2652 = vmatprep.mubr.f32.mxu0 0.0
      %2653 = vmatmul.mubr.f32.gmra.mrb[0].mxu0 %v2185
      %v2654 = vpop.f32.mrb[0].mxu0
      %v2655 = vadd.f32 0.0, %v2654
      %v2656 = vpop.f32.mrb[0].mxu0
      %2657 = vmatprep.mubr.f32.mxu0 0.0
      %2658 = vmatmul.mubr.f32.gmra.mrb[0].mxu0 %v2553
      %v2659 = vpop.f32.mrb[0].mxu0
      %v2660 = vadd.f32 0.0, %v2659
      %v2661 = vpop.f32.mrb[0].mxu0
      %2662 = vdwg.mxu0
      %v2663 = vadd.f32 %v2539, %v2625
      %v2664 = vadd.f32 %v2540, %v2630
      %v2665 = vadd.f32 %v2541, %v2635
      %v2666 = vadd.f32 %v2542, %v2640
      %v2667 = vadd.f32 %v2543, %v2645
      %v2668 = vadd.f32 %v2544, %v2650
      %v2669 = vadd.f32 %v2545, %v2655
      %v2670 = vadd.f32 %v2546, %v2660
      %v2671 = vrot.slane %v381, 2
      %v2672 = vrot.slane %v382, 2
      %v2673 = vsel %vm697, %v2671, %v2672
      %s2674 = scalar_lea.vmem %s3, 68
      %v2675 = vld [vmem:[%s2674] sm:$0xf]
      %v2676 = vsel %vm447, %v2673, 0
      %v2679 = vsel %vm464, %v2675, 0
      %2681 = vmatprep.subr.mxu0 0.0
      %2682 = vmatpush1.msra.mxu0 %v2679
      %2683 = vmatprep.subr.mxu0 0.0
      %2684 = vmatpush1.msra.mxu0 0.0
      %2685 = vmatprep.subr.mxu0 0.0
      %2686 = vmatpush1.msra.mxu0 0.0
      %2687 = vmatprep.subr.mxu0 0.0
      %2688 = vmatpush1.msra.mxu0 0.0
      %2689 = vmatprep.subr.mxu0 0.0
      %2690 = vmatpush1.msra.mxu0 0.0
      %2691 = vmatprep.subr.mxu0 0.0
      %2692 = vmatpush1.msra.mxu0 0.0
      %2693 = vmatprep.subr.mxu0 0.0
      %2694 = vmatpush1.msra.mxu0 0.0
      %2695 = vmatprep.subr.mxu0 0.0
      %2696 = vmatpush1.msra.mxu0 0.0
      %2697 = vmatprep.subr.mxu0 0.0
      %2698 = vmatpush1.msra.mxu0 0.0
      %2699 = vmatprep.subr.mxu0 0.0
      %2700 = vmatpush1.msra.mxu0 0.0
      %2701 = vmatprep.subr.mxu0 0.0
      %2702 = vmatpush1.msra.mxu0 0.0
      %2703 = vmatprep.subr.mxu0 0.0
      %2704 = vmatpush1.msra.mxu0 0.0
      %2705 = vmatprep.subr.mxu0 0.0
      %2706 = vmatpush1.msra.mxu0 0.0
      %2707 = vmatprep.subr.mxu0 0.0
      %2708 = vmatpush1.msra.mxu0 0.0
      %2709 = vmatprep.subr.mxu0 0.0
      %2710 = vmatpush1.msra.mxu0 0.0
      %2711 = vmatprep.subr.mxu0 0.0
      %2712 = vmatpush1.msra.mxu0 0.0
      %2713 = vmatprep.subr.mxu0 0.0
      %2714 = vmatpush1.msra.mxu0 0.0
      %2715 = vmatprep.subr.mxu0 0.0
      %2716 = vmatpush1.msra.mxu0 0.0
      %2717 = vmatprep.subr.mxu0 0.0
      %2718 = vmatpush1.msra.mxu0 0.0
      %2719 = vmatprep.subr.mxu0 0.0
      %2720 = vmatpush1.msra.mxu0 0.0
      %2721 = vmatprep.subr.mxu0 0.0
      %2722 = vmatpush1.msra.mxu0 0.0
      %2723 = vmatprep.subr.mxu0 0.0
      %2724 = vmatpush1.msra.mxu0 0.0
      %2725 = vmatprep.subr.mxu0 0.0
      %2726 = vmatpush1.msra.mxu0 0.0
      %2727 = vmatprep.subr.mxu0 0.0
      %2728 = vmatpush1.msra.mxu0 0.0
      %2729 = vmatprep.subr.mxu0 0.0
      %2730 = vmatpush1.msra.mxu0 0.0
      %2731 = vmatprep.subr.mxu0 0.0
      %2732 = vmatpush1.msra.mxu0 0.0
      %2733 = vmatprep.subr.mxu0 0.0
      %2734 = vmatpush1.msra.mxu0 0.0
      %2735 = vmatprep.subr.mxu0 0.0
      %2736 = vmatpush1.msra.mxu0 0.0
      %2737 = vmatprep.subr.mxu0 0.0
      %2738 = vmatpush1.msra.mxu0 0.0
      %2739 = vmatprep.subr.mxu0 0.0
      %2740 = vmatpush1.msra.mxu0 0.0
      %2741 = vmatprep.subr.mxu0 0.0
      %2742 = vmatpush1.msra.mxu0 0.0
      %2743 = vmatprep.subr.mxu0 0.0
      %2744 = vmatpush1.msra.mxu0 0.0
      %2745 = vmatprep.mubr.f32.mxu0 0.0
      %2746 = vmatmul.mubr.f32.gmra.mrb[0].mxu0 %v1930
      %v2747 = vpop.f32.mrb[0].mxu0
      %v2748 = vadd.f32 0.0, %v2747
      %v2749 = vpop.f32.mrb[0].mxu0
      %2750 = vmatprep.mubr.f32.mxu0 0.0
      %2751 = vmatmul.mubr.f32.gmra.mrb[0].mxu0 %v1932
      %v2752 = vpop.f32.mrb[0].mxu0
      %v2753 = vadd.f32 0.0, %v2752
      %v2754 = vpop.f32.mrb[0].mxu0
      %2755 = vmatprep.mubr.f32.mxu0 0.0
      %2756 = vmatmul.mubr.f32.gmra.mrb[0].mxu0 %v1934
      %v2757 = vpop.f32.mrb[0].mxu0
      %v2758 = vadd.f32 0.0, %v2757
      %v2759 = vpop.f32.mrb[0].mxu0
      %2760 = vmatprep.mubr.f32.mxu0 0.0
      %2761 = vmatmul.mubr.f32.gmra.mrb[0].mxu0 %v1936
      %v2762 = vpop.f32.mrb[0].mxu0
      %v2763 = vadd.f32 0.0, %v2762
      %v2764 = vpop.f32.mrb[0].mxu0
      %2765 = vmatprep.mubr.f32.mxu0 0.0
      %2766 = vmatmul.mubr.f32.gmra.mrb[0].mxu0 %v1938
      %v2767 = vpop.f32.mrb[0].mxu0
      %v2768 = vadd.f32 0.0, %v2767
      %v2769 = vpop.f32.mrb[0].mxu0
      %2770 = vmatprep.mubr.f32.mxu0 0.0
      %2771 = vmatmul.mubr.f32.gmra.mrb[0].mxu0 %v1940
      %v2772 = vpop.f32.mrb[0].mxu0
      %v2773 = vadd.f32 0.0, %v2772
      %v2774 = vpop.f32.mrb[0].mxu0
      %2775 = vmatprep.mubr.f32.mxu0 0.0
      %2776 = vmatmul.mubr.f32.gmra.mrb[0].mxu0 %v2308
      %v2777 = vpop.f32.mrb[0].mxu0
      %v2778 = vadd.f32 0.0, %v2777
      %v2779 = vpop.f32.mrb[0].mxu0
      %2780 = vmatprep.mubr.f32.mxu0 0.0
      %2781 = vmatmul.mubr.f32.gmra.mrb[0].mxu0 %v2676
      %v2782 = vpop.f32.mrb[0].mxu0
      %v2783 = vadd.f32 0.0, %v2782
      %v2784 = vpop.f32.mrb[0].mxu0
      %2785 = vdwg.mxu0
      %v2786 = vadd.f32 %v2663, %v2748
      %v2787 = vadd.f32 %v2664, %v2753
      %v2788 = vadd.f32 %v2665, %v2758
      %v2789 = vadd.f32 %v2666, %v2763
      %v2790 = vadd.f32 %v2667, %v2768
      %v2791 = vadd.f32 %v2668, %v2773
      %v2792 = vadd.f32 %v2669, %v2778
      %v2793 = vadd.f32 %v2670, %v2783
      %s2794 = scalar_lea.vmem %s3, 72
      %v2795 = vld [vmem:[%s2794] sm:$0xf]
      %v2797 = vsel %vm447, %v383, 0
      %v2800 = vsel %vm447, %v385, 0
      %v2803 = vsel %vm447, %v387, 0
      %v2806 = vsel %vm447, %v389, 0
      %v2809 = vsel %vm447, %v391, 0
      %v2812 = vsel %vm447, %v393, 0
      %v2815 = vsel %vm447, %v395, 0
      %v2818 = vsel %vm447, %v397, 0
      %v2821 = vsel %vm464, %v2795, 0
      %2823 = vmatprep.subr.mxu0 0.0
      %2824 = vmatpush1.msra.mxu0 %v2821
      %2825 = vmatprep.subr.mxu0 0.0
      %2826 = vmatpush1.msra.mxu0 0.0
      %2827 = vmatprep.subr.mxu0 0.0
      %2828 = vmatpush1.msra.mxu0 0.0
      %2829 = vmatprep.subr.mxu0 0.0
      %2830 = vmatpush1.msra.mxu0 0.0
      %2831 = vmatprep.subr.mxu0 0.0
      %2832 = vmatpush1.msra.mxu0 0.0
      %2833 = vmatprep.subr.mxu0 0.0
      %2834 = vmatpush1.msra.mxu0 0.0
      %2835 = vmatprep.subr.mxu0 0.0
      %2836 = vmatpush1.msra.mxu0 0.0
      %2837 = vmatprep.subr.mxu0 0.0
      %2838 = vmatpush1.msra.mxu0 0.0
      %2839 = vmatprep.subr.mxu0 0.0
      %2840 = vmatpush1.msra.mxu0 0.0
      %2841 = vmatprep.subr.mxu0 0.0
      %2842 = vmatpush1.msra.mxu0 0.0
      %2843 = vmatprep.subr.mxu0 0.0
      %2844 = vmatpush1.msra.mxu0 0.0
      %2845 = vmatprep.subr.mxu0 0.0
      %2846 = vmatpush1.msra.mxu0 0.0
      %2847 = vmatprep.subr.mxu0 0.0
      %2848 = vmatpush1.msra.mxu0 0.0
      %2849 = vmatprep.subr.mxu0 0.0
      %2850 = vmatpush1.msra.mxu0 0.0
      %2851 = vmatprep.subr.mxu0 0.0
      %2852 = vmatpush1.msra.mxu0 0.0
      %2853 = vmatprep.subr.mxu0 0.0
      %2854 = vmatpush1.msra.mxu0 0.0
      %2855 = vmatprep.subr.mxu0 0.0
      %2856 = vmatpush1.msra.mxu0 0.0
      %2857 = vmatprep.subr.mxu0 0.0
      %2858 = vmatpush1.msra.mxu0 0.0
      %2859 = vmatprep.subr.mxu0 0.0
      %2860 = vmatpush1.msra.mxu0 0.0
      %2861 = vmatprep.subr.mxu0 0.0
      %2862 = vmatpush1.msra.mxu0 0.0
      %2863 = vmatprep.subr.mxu0 0.0
      %2864 = vmatpush1.msra.mxu0 0.0
      %2865 = vmatprep.subr.mxu0 0.0
      %2866 = vmatpush1.msra.mxu0 0.0
      %2867 = vmatprep.subr.mxu0 0.0
      %2868 = vmatpush1.msra.mxu0 0.0
      %2869 = vmatprep.subr.mxu0 0.0
      %2870 = vmatpush1.msra.mxu0 0.0
      %2871 = vmatprep.subr.mxu0 0.0
      %2872 = vmatpush1.msra.mxu0 0.0
      %2873 = vmatprep.subr.mxu0 0.0
      %2874 = vmatpush1.msra.mxu0 0.0
      %2875 = vmatprep.subr.mxu0 0.0
      %2876 = vmatpush1.msra.mxu0 0.0
      %2877 = vmatprep.subr.mxu0 0.0
      %2878 = vmatpush1.msra.mxu0 0.0
      %2879 = vmatprep.subr.mxu0 0.0
      %2880 = vmatpush1.msra.mxu0 0.0
      %2881 = vmatprep.subr.mxu0 0.0
      %2882 = vmatpush1.msra.mxu0 0.0
      %2883 = vmatprep.subr.mxu0 0.0
      %2884 = vmatpush1.msra.mxu0 0.0
      %2885 = vmatprep.subr.mxu0 0.0
      %2886 = vmatpush1.msra.mxu0 0.0
      %2887 = vmatprep.mubr.f32.mxu0 0.0
      %2888 = vmatmul.mubr.f32.gmra.mrb[0].mxu0 %v2797
      %v2889 = vpop.f32.mrb[0].mxu0
      %v2890 = vadd.f32 0.0, %v2889
      %v2891 = vpop.f32.mrb[0].mxu0
      %2892 = vmatprep.mubr.f32.mxu0 0.0
      %2893 = vmatmul.mubr.f32.gmra.mrb[0].mxu0 %v2800
      %v2894 = vpop.f32.mrb[0].mxu0
      %v2895 = vadd.f32 0.0, %v2894
      %v2896 = vpop.f32.mrb[0].mxu0
      %2897 = vmatprep.mubr.f32.mxu0 0.0
      %2898 = vmatmul.mubr.f32.gmra.mrb[0].mxu0 %v2803
      %v2899 = vpop.f32.mrb[0].mxu0
      %v2900 = vadd.f32 0.0, %v2899
      %v2901 = vpop.f32.mrb[0].mxu0
      %2902 = vmatprep.mubr.f32.mxu0 0.0
      %2903 = vmatmul.mubr.f32.gmra.mrb[0].mxu0 %v2806
      %v2904 = vpop.f32.mrb[0].mxu0
      %v2905 = vadd.f32 0.0, %v2904
      %v2906 = vpop.f32.mrb[0].mxu0
      %2907 = vmatprep.mubr.f32.mxu0 0.0
      %2908 = vmatmul.mubr.f32.gmra.mrb[0].mxu0 %v2809
      %v2909 = vpop.f32.mrb[0].mxu0
      %v2910 = vadd.f32 0.0, %v2909
      %v2911 = vpop.f32.mrb[0].mxu0
      %2912 = vmatprep.mubr.f32.mxu0 0.0
      %2913 = vmatmul.mubr.f32.gmra.mrb[0].mxu0 %v2812
      %v2914 = vpop.f32.mrb[0].mxu0
      %v2915 = vadd.f32 0.0, %v2914
      %v2916 = vpop.f32.mrb[0].mxu0
      %2917 = vmatprep.mubr.f32.mxu0 0.0
      %2918 = vmatmul.mubr.f32.gmra.mrb[0].mxu0 %v2815
      %v2919 = vpop.f32.mrb[0].mxu0
      %v2920 = vadd.f32 0.0, %v2919
      %v2921 = vpop.f32.mrb[0].mxu0
      %2922 = vmatprep.mubr.f32.mxu0 0.0
      %2923 = vmatmul.mubr.f32.gmra.mrb[0].mxu0 %v2818
      %v2924 = vpop.f32.mrb[0].mxu0
      %v2925 = vadd.f32 0.0, %v2924
      %v2926 = vpop.f32.mrb[0].mxu0
      %2927 = vdwg.mxu0
      %v2928 = vadd.f32 %v2786, %v2890
      %v2929 = vadd.f32 %v2787, %v2895
      %v2930 = vadd.f32 %v2788, %v2900
      %v2931 = vadd.f32 %v2789, %v2905
      %v2932 = vadd.f32 %v2790, %v2910
      %v2933 = vadd.f32 %v2791, %v2915
      %v2934 = vadd.f32 %v2792, %v2920
      %v2935 = vadd.f32 %v2793, %v2925
      %v2944 = vrot.slane %v383, 1
      %v2945 = vrot.slane %v384, 1
      %v2946 = vsel %vm420, %v2944, %v2945
      %v2947 = vrot.slane %v385, 1
      %v2948 = vrot.slane %v386, 1
      %v2949 = vsel %vm420, %v2947, %v2948
      %v2950 = vrot.slane %v387, 1
      %v2951 = vrot.slane %v388, 1
      %v2952 = vsel %vm420, %v2950, %v2951
      %v2953 = vrot.slane %v389, 1
      %v2954 = vrot.slane %v390, 1
      %v2955 = vsel %vm420, %v2953, %v2954
      %v2956 = vrot.slane %v391, 1
      %v2957 = vrot.slane %v392, 1
      %v2958 = vsel %vm420, %v2956, %v2957
      %v2959 = vrot.slane %v393, 1
      %v2960 = vrot.slane %v394, 1
      %v2961 = vsel %vm420, %v2959, %v2960
      %v2962 = vrot.slane %v395, 1
      %v2963 = vrot.slane %v396, 1
      %v2964 = vsel %vm420, %v2962, %v2963
      %v2965 = vrot.slane %v397, 1
      %v2966 = vrot.slane %v398, 1
      %v2967 = vsel %vm420, %v2965, %v2966
      %s2968 = scalar_lea.vmem %s3, 76
      %v2969 = vld [vmem:[%s2968] sm:$0xf]
      %v2970 = vsel %vm447, %v2946, 0
      %v2972 = vsel %vm447, %v2949, 0
      %v2974 = vsel %vm447, %v2952, 0
      %v2976 = vsel %vm447, %v2955, 0
      %v2978 = vsel %vm447, %v2958, 0
      %v2980 = vsel %vm447, %v2961, 0
      %v2982 = vsel %vm447, %v2964, 0
      %v2984 = vsel %vm447, %v2967, 0
      %v2987 = vsel %vm464, %v2969, 0
      %2989 = vmatprep.subr.mxu0 0.0
      %2990 = vmatpush1.msra.mxu0 %v2987
      %2991 = vmatprep.subr.mxu0 0.0
      %2992 = vmatpush1.msra.mxu0 0.0
      %2993 = vmatprep.subr.mxu0 0.0
      %2994 = vmatpush1.msra.mxu0 0.0
      %2995 = vmatprep.subr.mxu0 0.0
      %2996 = vmatpush1.msra.mxu0 0.0
      %2997 = vmatprep.subr.mxu0 0.0
      %2998 = vmatpush1.msra.mxu0 0.0
      %2999 = vmatprep.subr.mxu0 0.0
      %3000 = vmatpush1.msra.mxu0 0.0
      %3001 = vmatprep.subr.mxu0 0.0
      %3002 = vmatpush1.msra.mxu0 0.0
      %3003 = vmatprep.subr.mxu0 0.0
      %3004 = vmatpush1.msra.mxu0 0.0
      %3005 = vmatprep.subr.mxu0 0.0
      %3006 = vmatpush1.msra.mxu0 0.0
      %3007 = vmatprep.subr.mxu0 0.0
      %3008 = vmatpush1.msra.mxu0 0.0
      %3009 = vmatprep.subr.mxu0 0.0
      %3010 = vmatpush1.msra.mxu0 0.0
      %3011 = vmatprep.subr.mxu0 0.0
      %3012 = vmatpush1.msra.mxu0 0.0
      %3013 = vmatprep.subr.mxu0 0.0
      %3014 = vmatpush1.msra.mxu0 0.0
      %3015 = vmatprep.subr.mxu0 0.0
      %3016 = vmatpush1.msra.mxu0 0.0
      %3017 = vmatprep.subr.mxu0 0.0
      %3018 = vmatpush1.msra.mxu0 0.0
      %3019 = vmatprep.subr.mxu0 0.0
      %3020 = vmatpush1.msra.mxu0 0.0
      %3021 = vmatprep.subr.mxu0 0.0
      %3022 = vmatpush1.msra.mxu0 0.0
      %3023 = vmatprep.subr.mxu0 0.0
      %3024 = vmatpush1.msra.mxu0 0.0
      %3025 = vmatprep.subr.mxu0 0.0
      %3026 = vmatpush1.msra.mxu0 0.0
      %3027 = vmatprep.subr.mxu0 0.0
      %3028 = vmatpush1.msra.mxu0 0.0
      %3029 = vmatprep.subr.mxu0 0.0
      %3030 = vmatpush1.msra.mxu0 0.0
      %3031 = vmatprep.subr.mxu0 0.0
      %3032 = vmatpush1.msra.mxu0 0.0
      %3033 = vmatprep.subr.mxu0 0.0
      %3034 = vmatpush1.msra.mxu0 0.0
      %3035 = vmatprep.subr.mxu0 0.0
      %3036 = vmatpush1.msra.mxu0 0.0
      %3037 = vmatprep.subr.mxu0 0.0
      %3038 = vmatpush1.msra.mxu0 0.0
      %3039 = vmatprep.subr.mxu0 0.0
      %3040 = vmatpush1.msra.mxu0 0.0
      %3041 = vmatprep.subr.mxu0 0.0
      %3042 = vmatpush1.msra.mxu0 0.0
      %3043 = vmatprep.subr.mxu0 0.0
      %3044 = vmatpush1.msra.mxu0 0.0
      %3045 = vmatprep.subr.mxu0 0.0
      %3046 = vmatpush1.msra.mxu0 0.0
      %3047 = vmatprep.subr.mxu0 0.0
      %3048 = vmatpush1.msra.mxu0 0.0
      %3049 = vmatprep.subr.mxu0 0.0
      %3050 = vmatpush1.msra.mxu0 0.0
      %3051 = vmatprep.subr.mxu0 0.0
      %3052 = vmatpush1.msra.mxu0 0.0
      %3053 = vmatprep.mubr.f32.mxu0 0.0
      %3054 = vmatmul.mubr.f32.gmra.mrb[0].mxu0 %v2970
      %v3055 = vpop.f32.mrb[0].mxu0
      %v3056 = vadd.f32 0.0, %v3055
      %v3057 = vpop.f32.mrb[0].mxu0
      %3058 = vmatprep.mubr.f32.mxu0 0.0
      %3059 = vmatmul.mubr.f32.gmra.mrb[0].mxu0 %v2972
      %v3060 = vpop.f32.mrb[0].mxu0
      %v3061 = vadd.f32 0.0, %v3060
      %v3062 = vpop.f32.mrb[0].mxu0
      %3063 = vmatprep.mubr.f32.mxu0 0.0
      %3064 = vmatmul.mubr.f32.gmra.mrb[0].mxu0 %v2974
      %v3065 = vpop.f32.mrb[0].mxu0
      %v3066 = vadd.f32 0.0, %v3065
      %v3067 = vpop.f32.mrb[0].mxu0
      %3068 = vmatprep.mubr.f32.mxu0 0.0
      %3069 = vmatmul.mubr.f32.gmra.mrb[0].mxu0 %v2976
      %v3070 = vpop.f32.mrb[0].mxu0
      %v3071 = vadd.f32 0.0, %v3070
      %v3072 = vpop.f32.mrb[0].mxu0
      %3073 = vmatprep.mubr.f32.mxu0 0.0
      %3074 = vmatmul.mubr.f32.gmra.mrb[0].mxu0 %v2978
      %v3075 = vpop.f32.mrb[0].mxu0
      %v3076 = vadd.f32 0.0, %v3075
      %v3077 = vpop.f32.mrb[0].mxu0
      %3078 = vmatprep.mubr.f32.mxu0 0.0
      %3079 = vmatmul.mubr.f32.gmra.mrb[0].mxu0 %v2980
      %v3080 = vpop.f32.mrb[0].mxu0
      %v3081 = vadd.f32 0.0, %v3080
      %v3082 = vpop.f32.mrb[0].mxu0
      %3083 = vmatprep.mubr.f32.mxu0 0.0
      %3084 = vmatmul.mubr.f32.gmra.mrb[0].mxu0 %v2982
      %v3085 = vpop.f32.mrb[0].mxu0
      %v3086 = vadd.f32 0.0, %v3085
      %v3087 = vpop.f32.mrb[0].mxu0
      %3088 = vmatprep.mubr.f32.mxu0 0.0
      %3089 = vmatmul.mubr.f32.gmra.mrb[0].mxu0 %v2984
      %v3090 = vpop.f32.mrb[0].mxu0
      %v3091 = vadd.f32 0.0, %v3090
      %v3092 = vpop.f32.mrb[0].mxu0
      %3093 = vdwg.mxu0
      %v3094 = vadd.f32 %v2928, %v3056
      %v3095 = vadd.f32 %v2929, %v3061
      %v3096 = vadd.f32 %v2930, %v3066
      %v3097 = vadd.f32 %v2931, %v3071
      %v3098 = vadd.f32 %v2932, %v3076
      %v3099 = vadd.f32 %v2933, %v3081
      %v3100 = vadd.f32 %v2934, %v3086
      %v3101 = vadd.f32 %v2935, %v3091
      %v3102 = vrot.slane %v383, 2
      %v3103 = vrot.slane %v384, 2
      %v3104 = vsel %vm697, %v3102, %v3103
      %v3105 = vrot.slane %v385, 2
      %v3106 = vrot.slane %v386, 2
      %v3107 = vsel %vm697, %v3105, %v3106
      %v3108 = vrot.slane %v387, 2
      %v3109 = vrot.slane %v388, 2
      %v3110 = vsel %vm697, %v3108, %v3109
      %v3111 = vrot.slane %v389, 2
      %v3112 = vrot.slane %v390, 2
      %v3113 = vsel %vm697, %v3111, %v3112
      %v3114 = vrot.slane %v391, 2
      %v3115 = vrot.slane %v392, 2
      %v3116 = vsel %vm697, %v3114, %v3115
      %v3117 = vrot.slane %v393, 2
      %v3118 = vrot.slane %v394, 2
      %v3119 = vsel %vm697, %v3117, %v3118
      %v3120 = vrot.slane %v395, 2
      %v3121 = vrot.slane %v396, 2
      %v3122 = vsel %vm697, %v3120, %v3121
      %v3123 = vrot.slane %v397, 2
      %v3124 = vrot.slane %v398, 2
      %v3125 = vsel %vm697, %v3123, %v3124
      %s3126 = scalar_lea.vmem %s3, 80
      %v3127 = vld [vmem:[%s3126] sm:$0xf]
      %v3128 = vsel %vm447, %v3104, 0
      %v3130 = vsel %vm447, %v3107, 0
      %v3132 = vsel %vm447, %v3110, 0
      %v3134 = vsel %vm447, %v3113, 0
      %v3136 = vsel %vm447, %v3116, 0
      %v3138 = vsel %vm447, %v3119, 0
      %v3140 = vsel %vm447, %v3122, 0
      %v3142 = vsel %vm447, %v3125, 0
      %v3145 = vsel %vm464, %v3127, 0
      %3147 = vmatprep.subr.mxu0 0.0
      %3148 = vmatpush1.msra.mxu0 %v3145
      %3149 = vmatprep.subr.mxu0 0.0
      %3150 = vmatpush1.msra.mxu0 0.0
      %3151 = vmatprep.subr.mxu0 0.0
      %3152 = vmatpush1.msra.mxu0 0.0
      %3153 = vmatprep.subr.mxu0 0.0
      %3154 = vmatpush1.msra.mxu0 0.0
      %3155 = vmatprep.subr.mxu0 0.0
      %3156 = vmatpush1.msra.mxu0 0.0
      %3157 = vmatprep.subr.mxu0 0.0
      %3158 = vmatpush1.msra.mxu0 0.0
      %3159 = vmatprep.subr.mxu0 0.0
      %3160 = vmatpush1.msra.mxu0 0.0
      %3161 = vmatprep.subr.mxu0 0.0
      %3162 = vmatpush1.msra.mxu0 0.0
      %3163 = vmatprep.subr.mxu0 0.0
      %3164 = vmatpush1.msra.mxu0 0.0
      %3165 = vmatprep.subr.mxu0 0.0
      %3166 = vmatpush1.msra.mxu0 0.0
      %3167 = vmatprep.subr.mxu0 0.0
      %3168 = vmatpush1.msra.mxu0 0.0
      %3169 = vmatprep.subr.mxu0 0.0
      %3170 = vmatpush1.msra.mxu0 0.0
      %3171 = vmatprep.subr.mxu0 0.0
      %3172 = vmatpush1.msra.mxu0 0.0
      %3173 = vmatprep.subr.mxu0 0.0
      %3174 = vmatpush1.msra.mxu0 0.0
      %3175 = vmatprep.subr.mxu0 0.0
      %3176 = vmatpush1.msra.mxu0 0.0
      %3177 = vmatprep.subr.mxu0 0.0
      %3178 = vmatpush1.msra.mxu0 0.0
      %3179 = vmatprep.subr.mxu0 0.0
      %3180 = vmatpush1.msra.mxu0 0.0
      %3181 = vmatprep.subr.mxu0 0.0
      %3182 = vmatpush1.msra.mxu0 0.0
      %3183 = vmatprep.subr.mxu0 0.0
      %3184 = vmatpush1.msra.mxu0 0.0
      %3185 = vmatprep.subr.mxu0 0.0
      %3186 = vmatpush1.msra.mxu0 0.0
      %3187 = vmatprep.subr.mxu0 0.0
      %3188 = vmatpush1.msra.mxu0 0.0
      %3189 = vmatprep.subr.mxu0 0.0
      %3190 = vmatpush1.msra.mxu0 0.0
      %3191 = vmatprep.subr.mxu0 0.0
      %3192 = vmatpush1.msra.mxu0 0.0
      %3193 = vmatprep.subr.mxu0 0.0
      %3194 = vmatpush1.msra.mxu0 0.0
      %3195 = vmatprep.subr.mxu0 0.0
      %3196 = vmatpush1.msra.mxu0 0.0
      %3197 = vmatprep.subr.mxu0 0.0
      %3198 = vmatpush1.msra.mxu0 0.0
      %3199 = vmatprep.subr.mxu0 0.0
      %3200 = vmatpush1.msra.mxu0 0.0
      %3201 = vmatprep.subr.mxu0 0.0
      %3202 = vmatpush1.msra.mxu0 0.0
      %3203 = vmatprep.subr.mxu0 0.0
      %3204 = vmatpush1.msra.mxu0 0.0
      %3205 = vmatprep.subr.mxu0 0.0
      %3206 = vmatpush1.msra.mxu0 0.0
      %3207 = vmatprep.subr.mxu0 0.0
      %3208 = vmatpush1.msra.mxu0 0.0
      %3209 = vmatprep.subr.mxu0 0.0
      %3210 = vmatpush1.msra.mxu0 0.0
      %3211 = vmatprep.mubr.f32.mxu0 0.0
      %3212 = vmatmul.mubr.f32.gmra.mrb[0].mxu0 %v3128
      %v3213 = vpop.f32.mrb[0].mxu0
      %v3214 = vadd.f32 0.0, %v3213
      %v3215 = vpop.f32.mrb[0].mxu0
      %3216 = vmatprep.mubr.f32.mxu0 0.0
      %3217 = vmatmul.mubr.f32.gmra.mrb[0].mxu0 %v3130
      %v3218 = vpop.f32.mrb[0].mxu0
      %v3219 = vadd.f32 0.0, %v3218
      %v3220 = vpop.f32.mrb[0].mxu0
      %3221 = vmatprep.mubr.f32.mxu0 0.0
      %3222 = vmatmul.mubr.f32.gmra.mrb[0].mxu0 %v3132
      %v3223 = vpop.f32.mrb[0].mxu0
      %v3224 = vadd.f32 0.0, %v3223
      %v3225 = vpop.f32.mrb[0].mxu0
      %3226 = vmatprep.mubr.f32.mxu0 0.0
      %3227 = vmatmul.mubr.f32.gmra.mrb[0].mxu0 %v3134
      %v3228 = vpop.f32.mrb[0].mxu0
      %v3229 = vadd.f32 0.0, %v3228
      %v3230 = vpop.f32.mrb[0].mxu0
      %3231 = vmatprep.mubr.f32.mxu0 0.0
      %3232 = vmatmul.mubr.f32.gmra.mrb[0].mxu0 %v3136
      %v3233 = vpop.f32.mrb[0].mxu0
      %v3234 = vadd.f32 0.0, %v3233
      %v3235 = vpop.f32.mrb[0].mxu0
      %3236 = vmatprep.mubr.f32.mxu0 0.0
      %3237 = vmatmul.mubr.f32.gmra.mrb[0].mxu0 %v3138
      %v3238 = vpop.f32.mrb[0].mxu0
      %v3239 = vadd.f32 0.0, %v3238
      %v3240 = vpop.f32.mrb[0].mxu0
      %3241 = vmatprep.mubr.f32.mxu0 0.0
      %3242 = vmatmul.mubr.f32.gmra.mrb[0].mxu0 %v3140
      %v3243 = vpop.f32.mrb[0].mxu0
      %v3244 = vadd.f32 0.0, %v3243
      %v3245 = vpop.f32.mrb[0].mxu0
      %3246 = vmatprep.mubr.f32.mxu0 0.0
      %3247 = vmatmul.mubr.f32.gmra.mrb[0].mxu0 %v3142
      %v3248 = vpop.f32.mrb[0].mxu0
      %v3249 = vadd.f32 0.0, %v3248
      %v3250 = vpop.f32.mrb[0].mxu0
      %3251 = vdwg.mxu0
      %v3252 = vadd.f32 %v3094, %v3214
      %v3253 = vadd.f32 %v3095, %v3219
      %v3254 = vadd.f32 %v3096, %v3224
      %v3255 = vadd.f32 %v3097, %v3229
      %v3256 = vadd.f32 %v3098, %v3234
      %v3257 = vadd.f32 %v3099, %v3239
      %v3258 = vadd.f32 %v3100, %v3244
      %v3259 = vadd.f32 %v3101, %v3249
      %s3260 = scalar_lea.vmem %s3, 84
      %v3261 = vld [vmem:[%s3260] sm:$0xf]
      %v3263 = vsel %vm447, %v399, 0
      %v3266 = vsel %vm464, %v3261, 0
      %3268 = vmatprep.subr.mxu0 0.0
      %3269 = vmatpush1.msra.mxu0 %v3266
      %3270 = vmatprep.subr.mxu0 0.0
      %3271 = vmatpush1.msra.mxu0 0.0
      %3272 = vmatprep.subr.mxu0 0.0
      %3273 = vmatpush1.msra.mxu0 0.0
      %3274 = vmatprep.subr.mxu0 0.0
      %3275 = vmatpush1.msra.mxu0 0.0
      %3276 = vmatprep.subr.mxu0 0.0
      %3277 = vmatpush1.msra.mxu0 0.0
      %3278 = vmatprep.subr.mxu0 0.0
      %3279 = vmatpush1.msra.mxu0 0.0
      %3280 = vmatprep.subr.mxu0 0.0
      %3281 = vmatpush1.msra.mxu0 0.0
      %3282 = vmatprep.subr.mxu0 0.0
      %3283 = vmatpush1.msra.mxu0 0.0
      %3284 = vmatprep.subr.mxu0 0.0
      %3285 = vmatpush1.msra.mxu0 0.0
      %3286 = vmatprep.subr.mxu0 0.0
      %3287 = vmatpush1.msra.mxu0 0.0
      %3288 = vmatprep.subr.mxu0 0.0
      %3289 = vmatpush1.msra.mxu0 0.0
      %3290 = vmatprep.subr.mxu0 0.0
      %3291 = vmatpush1.msra.mxu0 0.0
      %3292 = vmatprep.subr.mxu0 0.0
      %3293 = vmatpush1.msra.mxu0 0.0
      %3294 = vmatprep.subr.mxu0 0.0
      %3295 = vmatpush1.msra.mxu0 0.0
      %3296 = vmatprep.subr.mxu0 0.0
      %3297 = vmatpush1.msra.mxu0 0.0
      %3298 = vmatprep.subr.mxu0 0.0
      %3299 = vmatpush1.msra.mxu0 0.0
      %3300 = vmatprep.subr.mxu0 0.0
      %3301 = vmatpush1.msra.mxu0 0.0
      %3302 = vmatprep.subr.mxu0 0.0
      %3303 = vmatpush1.msra.mxu0 0.0
      %3304 = vmatprep.subr.mxu0 0.0
      %3305 = vmatpush1.msra.mxu0 0.0
      %3306 = vmatprep.subr.mxu0 0.0
      %3307 = vmatpush1.msra.mxu0 0.0
      %3308 = vmatprep.subr.mxu0 0.0
      %3309 = vmatpush1.msra.mxu0 0.0
      %3310 = vmatprep.subr.mxu0 0.0
      %3311 = vmatpush1.msra.mxu0 0.0
      %3312 = vmatprep.subr.mxu0 0.0
      %3313 = vmatpush1.msra.mxu0 0.0
      %3314 = vmatprep.subr.mxu0 0.0
      %3315 = vmatpush1.msra.mxu0 0.0
      %3316 = vmatprep.subr.mxu0 0.0
      %3317 = vmatpush1.msra.mxu0 0.0
      %3318 = vmatprep.subr.mxu0 0.0
      %3319 = vmatpush1.msra.mxu0 0.0
      %3320 = vmatprep.subr.mxu0 0.0
      %3321 = vmatpush1.msra.mxu0 0.0
      %3322 = vmatprep.subr.mxu0 0.0
      %3323 = vmatpush1.msra.mxu0 0.0
      %3324 = vmatprep.subr.mxu0 0.0
      %3325 = vmatpush1.msra.mxu0 0.0
      %3326 = vmatprep.subr.mxu0 0.0
      %3327 = vmatpush1.msra.mxu0 0.0
      %3328 = vmatprep.subr.mxu0 0.0
      %3329 = vmatpush1.msra.mxu0 0.0
      %3330 = vmatprep.subr.mxu0 0.0
      %3331 = vmatpush1.msra.mxu0 0.0
      %3332 = vmatprep.mubr.f32.mxu0 0.0
      %3333 = vmatmul.mubr.f32.gmra.mrb[0].mxu0 %v2800
      %v3334 = vpop.f32.mrb[0].mxu0
      %v3335 = vadd.f32 0.0, %v3334
      %v3336 = vpop.f32.mrb[0].mxu0
      %3337 = vmatprep.mubr.f32.mxu0 0.0
      %3338 = vmatmul.mubr.f32.gmra.mrb[0].mxu0 %v2803
      %v3339 = vpop.f32.mrb[0].mxu0
      %v3340 = vadd.f32 0.0, %v3339
      %v3341 = vpop.f32.mrb[0].mxu0
      %3342 = vmatprep.mubr.f32.mxu0 0.0
      %3343 = vmatmul.mubr.f32.gmra.mrb[0].mxu0 %v2806
      %v3344 = vpop.f32.mrb[0].mxu0
      %v3345 = vadd.f32 0.0, %v3344
      %v3346 = vpop.f32.mrb[0].mxu0
      %3347 = vmatprep.mubr.f32.mxu0 0.0
      %3348 = vmatmul.mubr.f32.gmra.mrb[0].mxu0 %v2809
      %v3349 = vpop.f32.mrb[0].mxu0
      %v3350 = vadd.f32 0.0, %v3349
      %v3351 = vpop.f32.mrb[0].mxu0
      %3352 = vmatprep.mubr.f32.mxu0 0.0
      %3353 = vmatmul.mubr.f32.gmra.mrb[0].mxu0 %v2812
      %v3354 = vpop.f32.mrb[0].mxu0
      %v3355 = vadd.f32 0.0, %v3354
      %v3356 = vpop.f32.mrb[0].mxu0
      %3357 = vmatprep.mubr.f32.mxu0 0.0
      %3358 = vmatmul.mubr.f32.gmra.mrb[0].mxu0 %v2815
      %v3359 = vpop.f32.mrb[0].mxu0
      %v3360 = vadd.f32 0.0, %v3359
      %v3361 = vpop.f32.mrb[0].mxu0
      %3362 = vmatprep.mubr.f32.mxu0 0.0
      %3363 = vmatmul.mubr.f32.gmra.mrb[0].mxu0 %v2818
      %v3364 = vpop.f32.mrb[0].mxu0
      %v3365 = vadd.f32 0.0, %v3364
      %v3366 = vpop.f32.mrb[0].mxu0
      %3367 = vmatprep.mubr.f32.mxu0 0.0
      %3368 = vmatmul.mubr.f32.gmra.mrb[0].mxu0 %v3263
      %v3369 = vpop.f32.mrb[0].mxu0
      %v3370 = vadd.f32 0.0, %v3369
      %v3371 = vpop.f32.mrb[0].mxu0
      %3372 = vdwg.mxu0
      %v3373 = vadd.f32 %v3252, %v3335
      %v3374 = vadd.f32 %v3253, %v3340
      %v3375 = vadd.f32 %v3254, %v3345
      %v3376 = vadd.f32 %v3255, %v3350
      %v3377 = vadd.f32 %v3256, %v3355
      %v3378 = vadd.f32 %v3257, %v3360
      %v3379 = vadd.f32 %v3258, %v3365
      %v3380 = vadd.f32 %v3259, %v3370
      %v3382 = vrot.slane %v399, 1
      %v3383 = vrot.slane %v400, 1
      %v3384 = vsel %vm420, %v3382, %v3383
      %s3385 = scalar_lea.vmem %s3, 88
      %v3386 = vld [vmem:[%s3385] sm:$0xf]
      %v3387 = vsel %vm447, %v3384, 0
      %v3390 = vsel %vm464, %v3386, 0
      %3392 = vmatprep.subr.mxu0 0.0
      %3393 = vmatpush1.msra.mxu0 %v3390
      %3394 = vmatprep.subr.mxu0 0.0
      %3395 = vmatpush1.msra.mxu0 0.0
      %3396 = vmatprep.subr.mxu0 0.0
      %3397 = vmatpush1.msra.mxu0 0.0
      %3398 = vmatprep.subr.mxu0 0.0
      %3399 = vmatpush1.msra.mxu0 0.0
      %3400 = vmatprep.subr.mxu0 0.0
      %3401 = vmatpush1.msra.mxu0 0.0
      %3402 = vmatprep.subr.mxu0 0.0
      %3403 = vmatpush1.msra.mxu0 0.0
      %3404 = vmatprep.subr.mxu0 0.0
      %3405 = vmatpush1.msra.mxu0 0.0
      %3406 = vmatprep.subr.mxu0 0.0
      %3407 = vmatpush1.msra.mxu0 0.0
      %3408 = vmatprep.subr.mxu0 0.0
      %3409 = vmatpush1.msra.mxu0 0.0
      %3410 = vmatprep.subr.mxu0 0.0
      %3411 = vmatpush1.msra.mxu0 0.0
      %3412 = vmatprep.subr.mxu0 0.0
      %3413 = vmatpush1.msra.mxu0 0.0
      %3414 = vmatprep.subr.mxu0 0.0
      %3415 = vmatpush1.msra.mxu0 0.0
      %3416 = vmatprep.subr.mxu0 0.0
      %3417 = vmatpush1.msra.mxu0 0.0
      %3418 = vmatprep.subr.mxu0 0.0
      %3419 = vmatpush1.msra.mxu0 0.0
      %3420 = vmatprep.subr.mxu0 0.0
      %3421 = vmatpush1.msra.mxu0 0.0
      %3422 = vmatprep.subr.mxu0 0.0
      %3423 = vmatpush1.msra.mxu0 0.0
      %3424 = vmatprep.subr.mxu0 0.0
      %3425 = vmatpush1.msra.mxu0 0.0
      %3426 = vmatprep.subr.mxu0 0.0
      %3427 = vmatpush1.msra.mxu0 0.0
      %3428 = vmatprep.subr.mxu0 0.0
      %3429 = vmatpush1.msra.mxu0 0.0
      %3430 = vmatprep.subr.mxu0 0.0
      %3431 = vmatpush1.msra.mxu0 0.0
      %3432 = vmatprep.subr.mxu0 0.0
      %3433 = vmatpush1.msra.mxu0 0.0
      %3434 = vmatprep.subr.mxu0 0.0
      %3435 = vmatpush1.msra.mxu0 0.0
      %3436 = vmatprep.subr.mxu0 0.0
      %3437 = vmatpush1.msra.mxu0 0.0
      %3438 = vmatprep.subr.mxu0 0.0
      %3439 = vmatpush1.msra.mxu0 0.0
      %3440 = vmatprep.subr.mxu0 0.0
      %3441 = vmatpush1.msra.mxu0 0.0
      %3442 = vmatprep.subr.mxu0 0.0
      %3443 = vmatpush1.msra.mxu0 0.0
      %3444 = vmatprep.subr.mxu0 0.0
      %3445 = vmatpush1.msra.mxu0 0.0
      %3446 = vmatprep.subr.mxu0 0.0
      %3447 = vmatpush1.msra.mxu0 0.0
      %3448 = vmatprep.subr.mxu0 0.0
      %3449 = vmatpush1.msra.mxu0 0.0
      %3450 = vmatprep.subr.mxu0 0.0
      %3451 = vmatpush1.msra.mxu0 0.0
      %3452 = vmatprep.subr.mxu0 0.0
      %3453 = vmatpush1.msra.mxu0 0.0
      %3454 = vmatprep.subr.mxu0 0.0
      %3455 = vmatpush1.msra.mxu0 0.0
      %3456 = vmatprep.mubr.f32.mxu0 0.0
      %3457 = vmatmul.mubr.f32.gmra.mrb[0].mxu0 %v2972
      %v3458 = vpop.f32.mrb[0].mxu0
      %v3459 = vadd.f32 0.0, %v3458
      %v3460 = vpop.f32.mrb[0].mxu0
      %3461 = vmatprep.mubr.f32.mxu0 0.0
      %3462 = vmatmul.mubr.f32.gmra.mrb[0].mxu0 %v2974
      %v3463 = vpop.f32.mrb[0].mxu0
      %v3464 = vadd.f32 0.0, %v3463
      %v3465 = vpop.f32.mrb[0].mxu0
      %3466 = vmatprep.mubr.f32.mxu0 0.0
      %3467 = vmatmul.mubr.f32.gmra.mrb[0].mxu0 %v2976
      %v3468 = vpop.f32.mrb[0].mxu0
      %v3469 = vadd.f32 0.0, %v3468
      %v3470 = vpop.f32.mrb[0].mxu0
      %3471 = vmatprep.mubr.f32.mxu0 0.0
      %3472 = vmatmul.mubr.f32.gmra.mrb[0].mxu0 %v2978
      %v3473 = vpop.f32.mrb[0].mxu0
      %v3474 = vadd.f32 0.0, %v3473
      %v3475 = vpop.f32.mrb[0].mxu0
      %3476 = vmatprep.mubr.f32.mxu0 0.0
      %3477 = vmatmul.mubr.f32.gmra.mrb[0].mxu0 %v2980
      %v3478 = vpop.f32.mrb[0].mxu0
      %v3479 = vadd.f32 0.0, %v3478
      %v3480 = vpop.f32.mrb[0].mxu0
      %3481 = vmatprep.mubr.f32.mxu0 0.0
      %3482 = vmatmul.mubr.f32.gmra.mrb[0].mxu0 %v2982
      %v3483 = vpop.f32.mrb[0].mxu0
      %v3484 = vadd.f32 0.0, %v3483
      %v3485 = vpop.f32.mrb[0].mxu0
      %3486 = vmatprep.mubr.f32.mxu0 0.0
      %3487 = vmatmul.mubr.f32.gmra.mrb[0].mxu0 %v2984
      %v3488 = vpop.f32.mrb[0].mxu0
      %v3489 = vadd.f32 0.0, %v3488
      %v3490 = vpop.f32.mrb[0].mxu0
      %3491 = vmatprep.mubr.f32.mxu0 0.0
      %3492 = vmatmul.mubr.f32.gmra.mrb[0].mxu0 %v3387
      %v3493 = vpop.f32.mrb[0].mxu0
      %v3494 = vadd.f32 0.0, %v3493
      %v3495 = vpop.f32.mrb[0].mxu0
      %3496 = vdwg.mxu0
      %v3497 = vadd.f32 %v3373, %v3459
      %v3498 = vadd.f32 %v3374, %v3464
      %v3499 = vadd.f32 %v3375, %v3469
      %v3500 = vadd.f32 %v3376, %v3474
      %v3501 = vadd.f32 %v3377, %v3479
      %v3502 = vadd.f32 %v3378, %v3484
      %v3503 = vadd.f32 %v3379, %v3489
      %v3504 = vadd.f32 %v3380, %v3494
      %v3505 = vrot.slane %v399, 2
      %v3506 = vrot.slane %v400, 2
      %v3507 = vsel %vm697, %v3505, %v3506
      %s3508 = scalar_lea.vmem %s3, 92
      %v3509 = vld [vmem:[%s3508] sm:$0xf]
      %v3510 = vsel %vm447, %v3507, 0
      %v3513 = vsel %vm464, %v3509, 0
      %3515 = vmatprep.subr.mxu0 0.0
      %3516 = vmatpush1.msra.mxu0 %v3513
      %3517 = vmatprep.subr.mxu0 0.0
      %3518 = vmatpush1.msra.mxu0 0.0
      %3519 = vmatprep.subr.mxu0 0.0
      %3520 = vmatpush1.msra.mxu0 0.0
      %3521 = vmatprep.subr.mxu0 0.0
      %3522 = vmatpush1.msra.mxu0 0.0
      %3523 = vmatprep.subr.mxu0 0.0
      %3524 = vmatpush1.msra.mxu0 0.0
      %3525 = vmatprep.subr.mxu0 0.0
      %3526 = vmatpush1.msra.mxu0 0.0
      %3527 = vmatprep.subr.mxu0 0.0
      %3528 = vmatpush1.msra.mxu0 0.0
      %3529 = vmatprep.subr.mxu0 0.0
      %3530 = vmatpush1.msra.mxu0 0.0
      %3531 = vmatprep.subr.mxu0 0.0
      %3532 = vmatpush1.msra.mxu0 0.0
      %3533 = vmatprep.subr.mxu0 0.0
      %3534 = vmatpush1.msra.mxu0 0.0
      %3535 = vmatprep.subr.mxu0 0.0
      %3536 = vmatpush1.msra.mxu0 0.0
      %3537 = vmatprep.subr.mxu0 0.0
      %3538 = vmatpush1.msra.mxu0 0.0
      %3539 = vmatprep.subr.mxu0 0.0
      %3540 = vmatpush1.msra.mxu0 0.0
      %3541 = vmatprep.subr.mxu0 0.0
      %3542 = vmatpush1.msra.mxu0 0.0
      %3543 = vmatprep.subr.mxu0 0.0
      %3544 = vmatpush1.msra.mxu0 0.0
      %3545 = vmatprep.subr.mxu0 0.0
      %3546 = vmatpush1.msra.mxu0 0.0
      %3547 = vmatprep.subr.mxu0 0.0
      %3548 = vmatpush1.msra.mxu0 0.0
      %3549 = vmatprep.subr.mxu0 0.0
      %3550 = vmatpush1.msra.mxu0 0.0
      %3551 = vmatprep.subr.mxu0 0.0
      %3552 = vmatpush1.msra.mxu0 0.0
      %3553 = vmatprep.subr.mxu0 0.0
      %3554 = vmatpush1.msra.mxu0 0.0
      %3555 = vmatprep.subr.mxu0 0.0
      %3556 = vmatpush1.msra.mxu0 0.0
      %3557 = vmatprep.subr.mxu0 0.0
      %3558 = vmatpush1.msra.mxu0 0.0
      %3559 = vmatprep.subr.mxu0 0.0
      %3560 = vmatpush1.msra.mxu0 0.0
      %3561 = vmatprep.subr.mxu0 0.0
      %3562 = vmatpush1.msra.mxu0 0.0
      %3563 = vmatprep.subr.mxu0 0.0
      %3564 = vmatpush1.msra.mxu0 0.0
      %3565 = vmatprep.subr.mxu0 0.0
      %3566 = vmatpush1.msra.mxu0 0.0
      %3567 = vmatprep.subr.mxu0 0.0
      %3568 = vmatpush1.msra.mxu0 0.0
      %3569 = vmatprep.subr.mxu0 0.0
      %3570 = vmatpush1.msra.mxu0 0.0
      %3571 = vmatprep.subr.mxu0 0.0
      %3572 = vmatpush1.msra.mxu0 0.0
      %3573 = vmatprep.subr.mxu0 0.0
      %3574 = vmatpush1.msra.mxu0 0.0
      %3575 = vmatprep.subr.mxu0 0.0
      %3576 = vmatpush1.msra.mxu0 0.0
      %3577 = vmatprep.subr.mxu0 0.0
      %3578 = vmatpush1.msra.mxu0 0.0
      %3579 = vmatprep.mubr.f32.mxu0 0.0
      %3580 = vmatmul.mubr.f32.gmra.mrb[0].mxu0 %v3130
      %v3581 = vpop.f32.mrb[0].mxu0
      %v3582 = vadd.f32 0.0, %v3581
      %v3583 = vpop.f32.mrb[0].mxu0
      %3584 = vmatprep.mubr.f32.mxu0 0.0
      %3585 = vmatmul.mubr.f32.gmra.mrb[0].mxu0 %v3132
      %v3586 = vpop.f32.mrb[0].mxu0
      %v3587 = vadd.f32 0.0, %v3586
      %v3588 = vpop.f32.mrb[0].mxu0
      %3589 = vmatprep.mubr.f32.mxu0 0.0
      %3590 = vmatmul.mubr.f32.gmra.mrb[0].mxu0 %v3134
      %v3591 = vpop.f32.mrb[0].mxu0
      %v3592 = vadd.f32 0.0, %v3591
      %v3593 = vpop.f32.mrb[0].mxu0
      %3594 = vmatprep.mubr.f32.mxu0 0.0
      %3595 = vmatmul.mubr.f32.gmra.mrb[0].mxu0 %v3136
      %v3596 = vpop.f32.mrb[0].mxu0
      %v3597 = vadd.f32 0.0, %v3596
      %v3598 = vpop.f32.mrb[0].mxu0
      %3599 = vmatprep.mubr.f32.mxu0 0.0
      %3600 = vmatmul.mubr.f32.gmra.mrb[0].mxu0 %v3138
      %v3601 = vpop.f32.mrb[0].mxu0
      %v3602 = vadd.f32 0.0, %v3601
      %v3603 = vpop.f32.mrb[0].mxu0
      %3604 = vmatprep.mubr.f32.mxu0 0.0
      %3605 = vmatmul.mubr.f32.gmra.mrb[0].mxu0 %v3140
      %v3606 = vpop.f32.mrb[0].mxu0
      %v3607 = vadd.f32 0.0, %v3606
      %v3608 = vpop.f32.mrb[0].mxu0
      %3609 = vmatprep.mubr.f32.mxu0 0.0
      %3610 = vmatmul.mubr.f32.gmra.mrb[0].mxu0 %v3142
      %v3611 = vpop.f32.mrb[0].mxu0
      %v3612 = vadd.f32 0.0, %v3611
      %v3613 = vpop.f32.mrb[0].mxu0
      %3614 = vmatprep.mubr.f32.mxu0 0.0
      %3615 = vmatmul.mubr.f32.gmra.mrb[0].mxu0 %v3510
      %v3616 = vpop.f32.mrb[0].mxu0
      %v3617 = vadd.f32 0.0, %v3616
      %v3618 = vpop.f32.mrb[0].mxu0
      %3619 = vdwg.mxu0
      %v3620 = vadd.f32 %v3497, %v3582
      %v3621 = vadd.f32 %v3498, %v3587
      %v3622 = vadd.f32 %v3499, %v3592
      %v3623 = vadd.f32 %v3500, %v3597
      %v3624 = vadd.f32 %v3501, %v3602
      %v3625 = vadd.f32 %v3502, %v3607
      %v3626 = vadd.f32 %v3503, %v3612
      %v3627 = vadd.f32 %v3504, %v3617
      %s3628 = scalar_lea.vmem %s3, 96
      %v3629 = vld [vmem:[%s3628] sm:$0xf]
      %v3631 = vsel %vm447, %v401, 0
      %v3634 = vsel %vm464, %v3629, 0
      %3636 = vmatprep.subr.mxu0 0.0
      %3637 = vmatpush1.msra.mxu0 %v3634
      %3638 = vmatprep.subr.mxu0 0.0
      %3639 = vmatpush1.msra.mxu0 0.0
      %3640 = vmatprep.subr.mxu0 0.0
      %3641 = vmatpush1.msra.mxu0 0.0
      %3642 = vmatprep.subr.mxu0 0.0
      %3643 = vmatpush1.msra.mxu0 0.0
      %3644 = vmatprep.subr.mxu0 0.0
      %3645 = vmatpush1.msra.mxu0 0.0
      %3646 = vmatprep.subr.mxu0 0.0
      %3647 = vmatpush1.msra.mxu0 0.0
      %3648 = vmatprep.subr.mxu0 0.0
      %3649 = vmatpush1.msra.mxu0 0.0
      %3650 = vmatprep.subr.mxu0 0.0
      %3651 = vmatpush1.msra.mxu0 0.0
      %3652 = vmatprep.subr.mxu0 0.0
      %3653 = vmatpush1.msra.mxu0 0.0
      %3654 = vmatprep.subr.mxu0 0.0
      %3655 = vmatpush1.msra.mxu0 0.0
      %3656 = vmatprep.subr.mxu0 0.0
      %3657 = vmatpush1.msra.mxu0 0.0
      %3658 = vmatprep.subr.mxu0 0.0
      %3659 = vmatpush1.msra.mxu0 0.0
      %3660 = vmatprep.subr.mxu0 0.0
      %3661 = vmatpush1.msra.mxu0 0.0
      %3662 = vmatprep.subr.mxu0 0.0
      %3663 = vmatpush1.msra.mxu0 0.0
      %3664 = vmatprep.subr.mxu0 0.0
      %3665 = vmatpush1.msra.mxu0 0.0
      %3666 = vmatprep.subr.mxu0 0.0
      %3667 = vmatpush1.msra.mxu0 0.0
      %3668 = vmatprep.subr.mxu0 0.0
      %3669 = vmatpush1.msra.mxu0 0.0
      %3670 = vmatprep.subr.mxu0 0.0
      %3671 = vmatpush1.msra.mxu0 0.0
      %3672 = vmatprep.subr.mxu0 0.0
      %3673 = vmatpush1.msra.mxu0 0.0
      %3674 = vmatprep.subr.mxu0 0.0
      %3675 = vmatpush1.msra.mxu0 0.0
      %3676 = vmatprep.subr.mxu0 0.0
      %3677 = vmatpush1.msra.mxu0 0.0
      %3678 = vmatprep.subr.mxu0 0.0
      %3679 = vmatpush1.msra.mxu0 0.0
      %3680 = vmatprep.subr.mxu0 0.0
      %3681 = vmatpush1.msra.mxu0 0.0
      %3682 = vmatprep.subr.mxu0 0.0
      %3683 = vmatpush1.msra.mxu0 0.0
      %3684 = vmatprep.subr.mxu0 0.0
      %3685 = vmatpush1.msra.mxu0 0.0
      %3686 = vmatprep.subr.mxu0 0.0
      %3687 = vmatpush1.msra.mxu0 0.0
      %3688 = vmatprep.subr.mxu0 0.0
      %3689 = vmatpush1.msra.mxu0 0.0
      %3690 = vmatprep.subr.mxu0 0.0
      %3691 = vmatpush1.msra.mxu0 0.0
      %3692 = vmatprep.subr.mxu0 0.0
      %3693 = vmatpush1.msra.mxu0 0.0
      %3694 = vmatprep.subr.mxu0 0.0
      %3695 = vmatpush1.msra.mxu0 0.0
      %3696 = vmatprep.subr.mxu0 0.0
      %3697 = vmatpush1.msra.mxu0 0.0
      %3698 = vmatprep.subr.mxu0 0.0
      %3699 = vmatpush1.msra.mxu0 0.0
      %3700 = vmatprep.mubr.f32.mxu0 0.0
      %3701 = vmatmul.mubr.f32.gmra.mrb[0].mxu0 %v2803
      %v3702 = vpop.f32.mrb[0].mxu0
      %v3703 = vadd.f32 0.0, %v3702
      %v3704 = vpop.f32.mrb[0].mxu0
      %3705 = vmatprep.mubr.f32.mxu0 0.0
      %3706 = vmatmul.mubr.f32.gmra.mrb[0].mxu0 %v2806
      %v3707 = vpop.f32.mrb[0].mxu0
      %v3708 = vadd.f32 0.0, %v3707
      %v3709 = vpop.f32.mrb[0].mxu0
      %3710 = vmatprep.mubr.f32.mxu0 0.0
      %3711 = vmatmul.mubr.f32.gmra.mrb[0].mxu0 %v2809
      %v3712 = vpop.f32.mrb[0].mxu0
      %v3713 = vadd.f32 0.0, %v3712
      %v3714 = vpop.f32.mrb[0].mxu0
      %3715 = vmatprep.mubr.f32.mxu0 0.0
      %3716 = vmatmul.mubr.f32.gmra.mrb[0].mxu0 %v2812
      %v3717 = vpop.f32.mrb[0].mxu0
      %v3718 = vadd.f32 0.0, %v3717
      %v3719 = vpop.f32.mrb[0].mxu0
      %3720 = vmatprep.mubr.f32.mxu0 0.0
      %3721 = vmatmul.mubr.f32.gmra.mrb[0].mxu0 %v2815
      %v3722 = vpop.f32.mrb[0].mxu0
      %v3723 = vadd.f32 0.0, %v3722
      %v3724 = vpop.f32.mrb[0].mxu0
      %3725 = vmatprep.mubr.f32.mxu0 0.0
      %3726 = vmatmul.mubr.f32.gmra.mrb[0].mxu0 %v2818
      %v3727 = vpop.f32.mrb[0].mxu0
      %v3728 = vadd.f32 0.0, %v3727
      %v3729 = vpop.f32.mrb[0].mxu0
      %3730 = vmatprep.mubr.f32.mxu0 0.0
      %3731 = vmatmul.mubr.f32.gmra.mrb[0].mxu0 %v3263
      %v3732 = vpop.f32.mrb[0].mxu0
      %v3733 = vadd.f32 0.0, %v3732
      %v3734 = vpop.f32.mrb[0].mxu0
      %3735 = vmatprep.mubr.f32.mxu0 0.0
      %3736 = vmatmul.mubr.f32.gmra.mrb[0].mxu0 %v3631
      %v3737 = vpop.f32.mrb[0].mxu0
      %v3738 = vadd.f32 0.0, %v3737
      %v3739 = vpop.f32.mrb[0].mxu0
      %3740 = vdwg.mxu0
      %v3741 = vadd.f32 %v3620, %v3703
      %v3742 = vadd.f32 %v3621, %v3708
      %v3743 = vadd.f32 %v3622, %v3713
      %v3744 = vadd.f32 %v3623, %v3718
      %v3745 = vadd.f32 %v3624, %v3723
      %v3746 = vadd.f32 %v3625, %v3728
      %v3747 = vadd.f32 %v3626, %v3733
      %v3748 = vadd.f32 %v3627, %v3738
      %v3750 = vrot.slane %v401, 1
      %v3751 = vrot.slane %v402, 1
      %v3752 = vsel %vm420, %v3750, %v3751
      %s3753 = scalar_lea.vmem %s3, 100
      %v3754 = vld [vmem:[%s3753] sm:$0xf]
      %v3755 = vsel %vm447, %v3752, 0
      %v3758 = vsel %vm464, %v3754, 0
      %3760 = vmatprep.subr.mxu0 0.0
      %3761 = vmatpush1.msra.mxu0 %v3758
      %3762 = vmatprep.subr.mxu0 0.0
      %3763 = vmatpush1.msra.mxu0 0.0
      %3764 = vmatprep.subr.mxu0 0.0
      %3765 = vmatpush1.msra.mxu0 0.0
      %3766 = vmatprep.subr.mxu0 0.0
      %3767 = vmatpush1.msra.mxu0 0.0
      %3768 = vmatprep.subr.mxu0 0.0
      %3769 = vmatpush1.msra.mxu0 0.0
      %3770 = vmatprep.subr.mxu0 0.0
      %3771 = vmatpush1.msra.mxu0 0.0
      %3772 = vmatprep.subr.mxu0 0.0
      %3773 = vmatpush1.msra.mxu0 0.0
      %3774 = vmatprep.subr.mxu0 0.0
      %3775 = vmatpush1.msra.mxu0 0.0
      %3776 = vmatprep.subr.mxu0 0.0
      %3777 = vmatpush1.msra.mxu0 0.0
      %3778 = vmatprep.subr.mxu0 0.0
      %3779 = vmatpush1.msra.mxu0 0.0
      %3780 = vmatprep.subr.mxu0 0.0
      %3781 = vmatpush1.msra.mxu0 0.0
      %3782 = vmatprep.subr.mxu0 0.0
      %3783 = vmatpush1.msra.mxu0 0.0
      %3784 = vmatprep.subr.mxu0 0.0
      %3785 = vmatpush1.msra.mxu0 0.0
      %3786 = vmatprep.subr.mxu0 0.0
      %3787 = vmatpush1.msra.mxu0 0.0
      %3788 = vmatprep.subr.mxu0 0.0
      %3789 = vmatpush1.msra.mxu0 0.0
      %3790 = vmatprep.subr.mxu0 0.0
      %3791 = vmatpush1.msra.mxu0 0.0
      %3792 = vmatprep.subr.mxu0 0.0
      %3793 = vmatpush1.msra.mxu0 0.0
      %3794 = vmatprep.subr.mxu0 0.0
      %3795 = vmatpush1.msra.mxu0 0.0
      %3796 = vmatprep.subr.mxu0 0.0
      %3797 = vmatpush1.msra.mxu0 0.0
      %3798 = vmatprep.subr.mxu0 0.0
      %3799 = vmatpush1.msra.mxu0 0.0
      %3800 = vmatprep.subr.mxu0 0.0
      %3801 = vmatpush1.msra.mxu0 0.0
      %3802 = vmatprep.subr.mxu0 0.0
      %3803 = vmatpush1.msra.mxu0 0.0
      %3804 = vmatprep.subr.mxu0 0.0
      %3805 = vmatpush1.msra.mxu0 0.0
      %3806 = vmatprep.subr.mxu0 0.0
      %3807 = vmatpush1.msra.mxu0 0.0
      %3808 = vmatprep.subr.mxu0 0.0
      %3809 = vmatpush1.msra.mxu0 0.0
      %3810 = vmatprep.subr.mxu0 0.0
      %3811 = vmatpush1.msra.mxu0 0.0
      %3812 = vmatprep.subr.mxu0 0.0
      %3813 = vmatpush1.msra.mxu0 0.0
      %3814 = vmatprep.subr.mxu0 0.0
      %3815 = vmatpush1.msra.mxu0 0.0
      %3816 = vmatprep.subr.mxu0 0.0
      %3817 = vmatpush1.msra.mxu0 0.0
      %3818 = vmatprep.subr.mxu0 0.0
      %3819 = vmatpush1.msra.mxu0 0.0
      %3820 = vmatprep.subr.mxu0 0.0
      %3821 = vmatpush1.msra.mxu0 0.0
      %3822 = vmatprep.subr.mxu0 0.0
      %3823 = vmatpush1.msra.mxu0 0.0
      %3824 = vmatprep.mubr.f32.mxu0 0.0
      %3825 = vmatmul.mubr.f32.gmra.mrb[0].mxu0 %v2974
      %v3826 = vpop.f32.mrb[0].mxu0
      %v3827 = vadd.f32 0.0, %v3826
      %v3828 = vpop.f32.mrb[0].mxu0
      %3829 = vmatprep.mubr.f32.mxu0 0.0
      %3830 = vmatmul.mubr.f32.gmra.mrb[0].mxu0 %v2976
      %v3831 = vpop.f32.mrb[0].mxu0
      %v3832 = vadd.f32 0.0, %v3831
      %v3833 = vpop.f32.mrb[0].mxu0
      %3834 = vmatprep.mubr.f32.mxu0 0.0
      %3835 = vmatmul.mubr.f32.gmra.mrb[0].mxu0 %v2978
      %v3836 = vpop.f32.mrb[0].mxu0
      %v3837 = vadd.f32 0.0, %v3836
      %v3838 = vpop.f32.mrb[0].mxu0
      %3839 = vmatprep.mubr.f32.mxu0 0.0
      %3840 = vmatmul.mubr.f32.gmra.mrb[0].mxu0 %v2980
      %v3841 = vpop.f32.mrb[0].mxu0
      %v3842 = vadd.f32 0.0, %v3841
      %v3843 = vpop.f32.mrb[0].mxu0
      %3844 = vmatprep.mubr.f32.mxu0 0.0
      %3845 = vmatmul.mubr.f32.gmra.mrb[0].mxu0 %v2982
      %v3846 = vpop.f32.mrb[0].mxu0
      %v3847 = vadd.f32 0.0, %v3846
      %v3848 = vpop.f32.mrb[0].mxu0
      %3849 = vmatprep.mubr.f32.mxu0 0.0
      %3850 = vmatmul.mubr.f32.gmra.mrb[0].mxu0 %v2984
      %v3851 = vpop.f32.mrb[0].mxu0
      %v3852 = vadd.f32 0.0, %v3851
      %v3853 = vpop.f32.mrb[0].mxu0
      %3854 = vmatprep.mubr.f32.mxu0 0.0
      %3855 = vmatmul.mubr.f32.gmra.mrb[0].mxu0 %v3387
      %v3856 = vpop.f32.mrb[0].mxu0
      %v3857 = vadd.f32 0.0, %v3856
      %v3858 = vpop.f32.mrb[0].mxu0
      %3859 = vmatprep.mubr.f32.mxu0 0.0
      %3860 = vmatmul.mubr.f32.gmra.mrb[0].mxu0 %v3755
      %v3861 = vpop.f32.mrb[0].mxu0
      %v3862 = vadd.f32 0.0, %v3861
      %v3863 = vpop.f32.mrb[0].mxu0
      %3864 = vdwg.mxu0
      %v3865 = vadd.f32 %v3741, %v3827
      %v3866 = vadd.f32 %v3742, %v3832
      %v3867 = vadd.f32 %v3743, %v3837
      %v3868 = vadd.f32 %v3744, %v3842
      %v3869 = vadd.f32 %v3745, %v3847
      %v3870 = vadd.f32 %v3746, %v3852
      %v3871 = vadd.f32 %v3747, %v3857
      %v3872 = vadd.f32 %v3748, %v3862
      %v3873 = vrot.slane %v401, 2
      %v3874 = vrot.slane %v402, 2
      %v3875 = vsel %vm697, %v3873, %v3874
      %s3876 = scalar_lea.vmem %s3, 104
      %v3877 = vld [vmem:[%s3876] sm:$0xf]
      %v3878 = vsel %vm447, %v3875, 0
      %v3881 = vsel %vm464, %v3877, 0
      %3883 = vmatprep.subr.mxu0 0.0
      %3884 = vmatpush1.msra.mxu0 %v3881
      %3885 = vmatprep.subr.mxu0 0.0
      %3886 = vmatpush1.msra.mxu0 0.0
      %3887 = vmatprep.subr.mxu0 0.0
      %3888 = vmatpush1.msra.mxu0 0.0
      %3889 = vmatprep.subr.mxu0 0.0
      %3890 = vmatpush1.msra.mxu0 0.0
      %3891 = vmatprep.subr.mxu0 0.0
      %3892 = vmatpush1.msra.mxu0 0.0
      %3893 = vmatprep.subr.mxu0 0.0
      %3894 = vmatpush1.msra.mxu0 0.0
      %3895 = vmatprep.subr.mxu0 0.0
      %3896 = vmatpush1.msra.mxu0 0.0
      %3897 = vmatprep.subr.mxu0 0.0
      %3898 = vmatpush1.msra.mxu0 0.0
      %3899 = vmatprep.subr.mxu0 0.0
      %3900 = vmatpush1.msra.mxu0 0.0
      %3901 = vmatprep.subr.mxu0 0.0
      %3902 = vmatpush1.msra.mxu0 0.0
      %3903 = vmatprep.subr.mxu0 0.0
      %3904 = vmatpush1.msra.mxu0 0.0
      %3905 = vmatprep.subr.mxu0 0.0
      %3906 = vmatpush1.msra.mxu0 0.0
      %3907 = vmatprep.subr.mxu0 0.0
      %3908 = vmatpush1.msra.mxu0 0.0
      %3909 = vmatprep.subr.mxu0 0.0
      %3910 = vmatpush1.msra.mxu0 0.0
      %3911 = vmatprep.subr.mxu0 0.0
      %3912 = vmatpush1.msra.mxu0 0.0
      %3913 = vmatprep.subr.mxu0 0.0
      %3914 = vmatpush1.msra.mxu0 0.0
      %3915 = vmatprep.subr.mxu0 0.0
      %3916 = vmatpush1.msra.mxu0 0.0
      %3917 = vmatprep.subr.mxu0 0.0
      %3918 = vmatpush1.msra.mxu0 0.0
      %3919 = vmatprep.subr.mxu0 0.0
      %3920 = vmatpush1.msra.mxu0 0.0
      %3921 = vmatprep.subr.mxu0 0.0
      %3922 = vmatpush1.msra.mxu0 0.0
      %3923 = vmatprep.subr.mxu0 0.0
      %3924 = vmatpush1.msra.mxu0 0.0
      %3925 = vmatprep.subr.mxu0 0.0
      %3926 = vmatpush1.msra.mxu0 0.0
      %3927 = vmatprep.subr.mxu0 0.0
      %3928 = vmatpush1.msra.mxu0 0.0
      %3929 = vmatprep.subr.mxu0 0.0
      %3930 = vmatpush1.msra.mxu0 0.0
      %3931 = vmatprep.subr.mxu0 0.0
      %3932 = vmatpush1.msra.mxu0 0.0
      %3933 = vmatprep.subr.mxu0 0.0
      %3934 = vmatpush1.msra.mxu0 0.0
      %3935 = vmatprep.subr.mxu0 0.0
      %3936 = vmatpush1.msra.mxu0 0.0
      %3937 = vmatprep.subr.mxu0 0.0
      %3938 = vmatpush1.msra.mxu0 0.0
      %3939 = vmatprep.subr.mxu0 0.0
      %3940 = vmatpush1.msra.mxu0 0.0
      %3941 = vmatprep.subr.mxu0 0.0
      %3942 = vmatpush1.msra.mxu0 0.0
      %3943 = vmatprep.subr.mxu0 0.0
      %3944 = vmatpush1.msra.mxu0 0.0
      %3945 = vmatprep.subr.mxu0 0.0
      %3946 = vmatpush1.msra.mxu0 0.0
      %3947 = vmatprep.mubr.f32.mxu0 0.0
      %3948 = vmatmul.mubr.f32.gmra.mrb[0].mxu0 %v3132
      %v3949 = vpop.f32.mrb[0].mxu0
      %v3950 = vadd.f32 0.0, %v3949
      %v3951 = vpop.f32.mrb[0].mxu0
      %3952 = vmatprep.mubr.f32.mxu0 0.0
      %3953 = vmatmul.mubr.f32.gmra.mrb[0].mxu0 %v3134
      %v3954 = vpop.f32.mrb[0].mxu0
      %v3955 = vadd.f32 0.0, %v3954
      %v3956 = vpop.f32.mrb[0].mxu0
      %3957 = vmatprep.mubr.f32.mxu0 0.0
      %3958 = vmatmul.mubr.f32.gmra.mrb[0].mxu0 %v3136
      %v3959 = vpop.f32.mrb[0].mxu0
      %v3960 = vadd.f32 0.0, %v3959
      %v3961 = vpop.f32.mrb[0].mxu0
      %3962 = vmatprep.mubr.f32.mxu0 0.0
      %3963 = vmatmul.mubr.f32.gmra.mrb[0].mxu0 %v3138
      %v3964 = vpop.f32.mrb[0].mxu0
      %v3965 = vadd.f32 0.0, %v3964
      %v3966 = vpop.f32.mrb[0].mxu0
      %3967 = vmatprep.mubr.f32.mxu0 0.0
      %3968 = vmatmul.mubr.f32.gmra.mrb[0].mxu0 %v3140
      %v3969 = vpop.f32.mrb[0].mxu0
      %v3970 = vadd.f32 0.0, %v3969
      %v3971 = vpop.f32.mrb[0].mxu0
      %3972 = vmatprep.mubr.f32.mxu0 0.0
      %3973 = vmatmul.mubr.f32.gmra.mrb[0].mxu0 %v3142
      %v3974 = vpop.f32.mrb[0].mxu0
      %v3975 = vadd.f32 0.0, %v3974
      %v3976 = vpop.f32.mrb[0].mxu0
      %3977 = vmatprep.mubr.f32.mxu0 0.0
      %3978 = vmatmul.mubr.f32.gmra.mrb[0].mxu0 %v3510
      %v3979 = vpop.f32.mrb[0].mxu0
      %v3980 = vadd.f32 0.0, %v3979
      %v3981 = vpop.f32.mrb[0].mxu0
      %3982 = vmatprep.mubr.f32.mxu0 0.0
      %3983 = vmatmul.mubr.f32.gmra.mrb[0].mxu0 %v3878
      %v3984 = vpop.f32.mrb[0].mxu0
      %v3985 = vadd.f32 0.0, %v3984
      %v3986 = vpop.f32.mrb[0].mxu0
      %3987 = vdwg.mxu0
      %v3988 = vadd.f32 %v3865, %v3950
      %v3989 = vadd.f32 %v3866, %v3955
      %v3990 = vadd.f32 %v3867, %v3960
      %v3991 = vadd.f32 %v3868, %v3965
      %v3992 = vadd.f32 %v3869, %v3970
      %v3993 = vadd.f32 %v3870, %v3975
      %v3994 = vadd.f32 %v3871, %v3980
      %v3995 = vadd.f32 %v3872, %v3985
      %v3996 = vld [vmem:[%s4] sm:$0x1]
      %v3998 = vlaneseq
      %v3999 = vshrl.u32 %v3998, 7
      %v4000 = vsub.s32 0, %v3999
      %v4001 = vrot.slane %v3996, %v4000
      %v4003 = vadd.f32 %v3988, %v4001
      %v4004 = vadd.f32 %v3989, %v4001
      %v4005 = vadd.f32 %v3990, %v4001
      %v4006 = vadd.f32 %v3991, %v4001
      %v4007 = vadd.f32 %v3992, %v4001
      %v4008 = vadd.f32 %v3993, %v4001
      %v4009 = vadd.f32 %v3994, %v4001
      %v4010 = vadd.f32 %v3995, %v4001
      %v4011 = vmax.f32 %v4003, 0.0
      %v4012 = vmax.f32 %v4004, 0.0
      %v4013 = vmax.f32 %v4005, 0.0
      %v4014 = vmax.f32 %v4006, 0.0
      %v4015 = vmax.f32 %v4007, 0.0
      %v4016 = vmax.f32 %v4008, 0.0
      %v4017 = vmax.f32 %v4009, 0.0
      %v4018 = vmax.f32 %v4010, 0.0
      %vm4019 = vcmask 64512
      %4020 = vst.msk [vmem:[%s342] sm:$0xff] %vm4019, %v4011
      %4021 = vst.msk [vmem:[%s342 + $0x8] sm:$0xff] %vm4019, %v4012
      %4022 = vst.msk [vmem:[%s342 + $0x10] sm:$0xff] %vm4019, %v4013
      %4023 = vst.msk [vmem:[%s342 + $0x18] sm:$0xff] %vm4019, %v4014
      %4024 = vst.msk [vmem:[%s342 + $0x20] sm:$0xff] %vm4019, %v4015
      %4025 = vst.msk [vmem:[%s342 + $0x28] sm:$0xff] %vm4019, %v4016
      %4026 = vst.msk [vmem:[%s342 + $0x30] sm:$0xff] %vm4019, %v4017
      %4027 = vst.msk [vmem:[%s342 + $0x38] sm:$0xff] %vm4019, %v4018
      %p4028 = scmp.lt.s32.totalorder %s20, 1
      %s4029 = scalar_select %p4028, %s20, 1
      %p4030 = scmp.lt.s32.totalorder %s21, 7
      %s4031 = scalar_select %p4030, %s21, 7
      %s4032 = smul.addr %s4031, 8
      %s4033 = smul.addr %s4029, 64
      %s4034 = sadd.s32 %s4032, %s4033
      %s4035 = smul.addr %s4034, 8
      %s4036 = scalar_lea.vmem %s5, %s4035
      // Predicated region
      $region41: #{encoder_forward.5} parent=39 // pred_check
        %p4037 = pneg %p178
      $region42: #{encoder_forward.5} parent=39 // pred_check_branch
        %4039 = sbr.rel (%p4037) target = $region44
      $region43: #{encoder_forward.5} parent=39 // pred_region
        _
      $region44: #{encoder_forward.5} parent=39 // pred_fallthru
        _
    $region40: #{encoder_forward.5} parent=5 // pred_fallthru
      _
    %p4040 = scmp.le.s32.totalorder 2, %s11
    // Predicated region
    $region45: #{encoder_forward.5} parent=5 // pred_check
      %p4041 = pneg %p4040
    $region46: #{encoder_forward.5} parent=5 // pred_check_branch
      %4043 = sbr.rel (%p4041) target = $region48
    $region47: #{encoder_forward.5} parent=5 // pred_region
      %s4044 = ssub.s32 %s11, 2
      // Predicated region
      $region49: #{encoder_forward.5} parent=47 // pred_check
        %p4045 = pneg %p184
      $region50: #{encoder_forward.5} parent=47 // pred_check_branch
        %4047 = sbr.rel (%p4045) target = $region52
      $region51: #{encoder_forward.5} parent=47 // pred_region
        %p4048 = scmp.lt.s32.totalorder %s22, 1
        %s4049 = scalar_select %p4048, %s22, 1
        %p4050 = scmp.lt.s32.totalorder %s23, 7
        %s4051 = scalar_select %p4050, %s23, 7
        %s4052 = smul.addr %s4051, 8
        %s4053 = smul.addr %s4049, 64
        %s4054 = sadd.s32 %s4052, %s4053
        %s4055 = smul.addr %s4054, 8
        %s4056 = scalar_lea.vmem %s5, %s4055
      $region52: #{encoder_forward.5} parent=47 // pred_fallthru
        _
    $region48: #{encoder_forward.5} parent=5 // pred_fallthru
      _
  $region6: #{encoder_forward.5} parent=0 // loop_footer
    %s15 = sadd.s32 1, %s11
  $region7: #{encoder_forward.5} parent=0 // loop_footer_branch
    %10 = sbr.rel target = $region3
  $region8: #{encoder_forward.5} parent=0 // loop_exit
    _

</llo_original>
